<compile_context>
chip_gen: v7x
topology: tpu7x:2x2x1
jax: 0.10.0
libtpu: 0.0.40
codegen_flags: <defaults>
</compile_context>

<pallas_src>
import jax
import jax.numpy as jnp
import numpy as np
from jax.experimental import pallas as pl
from jax.experimental.pallas import tpu as pltpu

NEG_SLOPE = 0.01      # nn.LeakyReLU default negative_slope
LANE = 128            # TPU lane width


def _leaky(x):
    return jnp.where(x > 0, x, NEG_SLOPE * x)


def _round_up(n, m):
    return ((n + m - 1) // m) * m


# ---------------- in-kernel 3x3 conv as 9 shifted matmuls ----------------

def _conv3x3_from_padded(src_ref, w_ref, H, W, cout, lead_index=None):
    """acc[p, o] = sum_{kh,kw} src[.., kh+h, kw+w, :] @ w[kh*3+kw][:, o]  (f32 accum)."""
    acc = jnp.zeros((H * W, cout), jnp.float32)
    for kh in range(3):
        for kw in range(3):
            if lead_index is None:
                tap = src_ref[pl.ds(kh, H), pl.ds(kw, W), :]
            else:
                tap = src_ref[lead_index, pl.ds(kh, H), pl.ds(kw, W), :]
            lhs = tap.reshape(H * W, tap.shape[-1])
            acc = acc + jnp.dot(lhs, w_ref[kh * 3 + kw],
                                preferred_element_type=jnp.float32)
    return acc


# ---------------- fused kernels ----------------

def _resblock_skip_kernel(x_ref, w1_ref, b1_ref, w2_ref, b2_ref, ws_ref, bs_ref,
                          o_ref, h1p_ref):
    """x_ref: (1, H+2, W+2, Cip) bf16 spatially padded.  o_ref: (1, H, W, Cop) f32."""
    _, Hp, Wp, _ = x_ref.shape
    H, W = Hp - 2, Wp - 2
    cout = o_ref.shape[-1]

    # conv1 + LeakyReLU; keep h1 in VMEM scratch with a zero halo (never hits HBM).
    acc1 = _conv3x3_from_padded(x_ref, w1_ref, H, W, cout, lead_index=0)
    h1 = _leaky(acc1 + b1_ref[...])
    h1p_ref[...] = jnp.zeros_like(h1p_ref)
    h1p_ref[pl.ds(1, H), pl.ds(1, W), :] = h1.reshape(H, W, cout).astype(h1p_ref.dtype)

    # conv2 + LeakyReLU
    acc2 = _conv3x3_from_padded(h1p_ref, w2_ref, H, W, cout)
    out = _leaky(acc2 + b2_ref[...])

    # 1x1-conv skip on the original (center) pixels + residual add
    xs = x_ref[0, pl.ds(1, H), pl.ds(1, W), :].reshape(H * W, x_ref.shape[-1])
    skip = jnp.dot(xs, ws_ref[...], preferred_element_type=jnp.float32) + bs_ref[...]

    o_ref[...] = (out + skip).reshape(1, H, W, cout).astype(o_ref.dtype)


def _resblock_noskip_kernel(x_ref, w1_ref, b1_ref, w2_ref, b2_ref,
                            o_ref, h1p_ref):
    """in_ch == out_ch: identity skip is a plain VPU add (no eye-matrix GEMM)."""
    _, Hp, Wp, _ = x_ref.shape
    H, W = Hp - 2, Wp - 2
    cout = o_ref.shape[-1]

    acc1 = _conv3x3_from_padded(x_ref, w1_ref, H, W, cout, lead_index=0)
    h1 = _leaky(acc1 + b1_ref[...])
    h1p_ref[...] = jnp.zeros_like(h1p_ref)
    h1p_ref[pl.ds(1, H), pl.ds(1, W), :] = h1.reshape(H, W, cout).astype(h1p_ref.dtype)

    acc2 = _conv3x3_from_padded(h1p_ref, w2_ref, H, W, cout)
    out = _leaky(acc2 + b2_ref[...])

    xs = x_ref[0, pl.ds(1, H), pl.ds(1, W), :].reshape(H * W, x_ref.shape[-1])
    o_ref[...] = (out + xs.astype(jnp.float32)).reshape(1, H, W, cout).astype(o_ref.dtype)


# ---------------- wrapper ----------------

@jax.jit
def residual_block_pallas(x_nchw, params):
    B, Cin, H, W = x_nchw.shape
    Cout = params["w1"].shape[0]
    has_skip = "ws" in params

    CPi = _round_up(Cin, LANE)     # lane-pad channels -> dense loads / MXU / stores
    CPo = _round_up(Cout, LANE)

    # NHWC, spatial pad of 1, channel pad to CPi, bf16 for the MXU.
    x = jnp.transpose(x_nchw, (0, 2, 3, 1)).astype(jnp.float32)
    xpad = jnp.pad(x, ((0, 0), (1, 1), (1, 1), (0, CPi - Cin))).astype(jnp.bfloat16)

    # PyTorch OIHW -> per-tap (Cin, Cout) matrices, tap-major; lane/channel padded, bf16.
    def tap_weights(w, ci, cip):
        m = jnp.transpose(w, (2, 3, 1, 0)).reshape(9, ci, -1)          # (9, ci, co)
        return jnp.pad(m, ((0, 0), (0, cip - ci), (0, CPo - m.shape[-1]))).astype(jnp.bfloat16)

    w1 = tap_weights(params["w1"], Cin, CPi)
    w2 = tap_weights(params["w2"], Cout, CPo)
    b1 = jnp.pad(params["b1"], (0, CPo - Cout)).reshape(1, CPo).astype(jnp.float32)
    b2 = jnp.pad(params["b2"], (0, CPo - Cout)).reshape(1, CPo).astype(jnp.float32)

    args = [xpad, w1, b1, w2, b2]
    in_specs = [
        pl.BlockSpec((1, H + 2, W + 2, CPi), lambda b: (b, 0, 0, 0)),
        pl.BlockSpec((9, CPi, CPo), lambda b: (0, 0, 0)),
        pl.BlockSpec((1, CPo), lambda b: (0, 0)),
        pl.BlockSpec((9, CPo, CPo), lambda b: (0, 0, 0)),
        pl.BlockSpec((1, CPo), lambda b: (0, 0)),
    ]
    if has_skip:
        ws = jnp.pad(params["ws"][:, :, 0, 0].T,
                     ((0, CPi - Cin), (0, CPo - Cout))).astype(jnp.bfloat16)
        bs = jnp.pad(params["bs"], (0, CPo - Cout)).reshape(1, CPo).astype(jnp.float32)
        args += [ws, bs]
        in_specs += [
            pl.BlockSpec((CPi, CPo), lambda b: (0, 0)),
            pl.BlockSpec((1, CPo), lambda b: (0, 0)),
        ]
        kernel = _resblock_skip_kernel
    else:
        kernel = _resblock_noskip_kernel

    out = pl.pallas_call(
        kernel,
        out_shape=jax.ShapeDtypeStruct((B, H, W, CPo), jnp.float32),
        grid_spec=pltpu.PrefetchScalarGridSpec(
            num_scalar_prefetch=0,
            grid=(B,),
            in_specs=in_specs,
            out_specs=pl.BlockSpec((1, H, W, CPo), lambda b: (b, 0, 0, 0)),
            scratch_shapes=[pltpu.VMEM((H + 2, W + 2, CPo), jnp.bfloat16)],  # padded h1
        ),
        compiler_params=pltpu.CompilerParams(
            dimension_semantics=("parallel",),          # batch steps shard across TCs
            vmem_limit_bytes=32 * 1024 * 1024,
        ),
    )(*args)

    out = out[..., :Cout]                               # drop lane padding
    return jnp.transpose(out, (0, 3, 1, 2))             # back to NCHW


# ---------------- deterministic parameter init (matches nn.Conv2d defaults) ----------------

def init_params(key, in_ch, out_ch):
    k1, k2, k3, k4, k5, k6 = jax.random.split(key, 6)

    def conv_init(kw_key, kb_key, cin, cout, ksize):
        fan_in = cin * ksize * ksize
        bound = 1.0 / np.sqrt(fan_in)
        w = jax.random.uniform(kw_key, (cout, cin, ksize, ksize), jnp.float32, -bound, bound)
        b = jax.random.uniform(kb_key, (cout,), jnp.float32, -bound, bound)
        return w, b

    w1, b1 = conv_init(k1, k2, in_ch, out_ch, 3)
    w2, b2 = conv_init(k3, k4, out_ch, out_ch, 3)
    p = dict(w1=w1, b1=b1, w2=w2, b2=b2)
    if in_ch != out_ch:
        ws, bs = conv_init(k5, k6, in_ch, out_ch, 1)
        p.update(ws=ws, bs=bs)
    # in_ch == out_ch -> skip is None in the module: handled by the no-skip kernel (pure add)
    return p


# ---------------- pure-JAX f32 reference ----------------

def _conv2d_ref(x, w, b, padding):
    y = jax.lax.conv_general_dilated(
        x, w, window_strides=(1, 1), padding=padding,
        dimension_numbers=("NCHW", "OIHW", "NCHW"))
    return y + b[None, :, None, None]


def residual_block_ref(x, params):
    h = _leaky(_conv2d_ref(x, params["w1"], params["b1"], ((1, 1), (1, 1))))
    h = _leaky(_conv2d_ref(h, params["w2"], params["b2"], ((1, 1), (1, 1))))
    if "ws" in params:
        identity = _conv2d_ref(x, params["ws"], params["bs"], ((0, 0), (0, 0)))
    else:
        identity = x
    return h + identity


if __name__ == "__main__":
    key = jax.random.PRNGKey(0)
    kx, kp, kx2, kp2 = jax.random.split(key, 4)

    # Case 1: in_ch != out_ch (1x1-conv skip path)
    B, Cin, Cout, H, W = 2, 4, 8, 16, 16
    x = jax.random.normal(kx, (B, Cin, H, W), dtype=jnp.float32)
    params = init_params(kp, Cin, Cout)
    out = jax.block_until_ready(residual_block_pallas(x, params))
    assert out.shape == (B, Cout, H, W) and out.dtype == jnp.float32
    ref = residual_block_ref(x, params)
    np.testing.assert_allclose(np.asarray(out), np.asarray(ref), atol=3e-2, rtol=3e-2)

    # Case 2: in_ch == out_ch (identity skip -> plain add, no skip GEMM)
    C2 = 8
    x2 = jax.random.normal(kx2, (B, C2, H, W), dtype=jnp.float32)
    params2 = init_params(kp2, C2, C2)
    out2 = jax.block_until_ready(residual_block_pallas(x2, params2))
    assert out2.shape == (B, C2, H, W)
    ref2 = residual_block_ref(x2, params2)
    np.testing.assert_allclose(np.asarray(out2), np.asarray(ref2), atol=3e-2, rtol=3e-2)

    print("KERNEL_OK")
</pallas_src>

<mosaic_0001>
module attributes {stable_mosaic.version = 11 : i64} {
  func.func @_resblock_skip_kernel(%arg0: i32, %arg1: memref<1x18x18x128xbf16, #tpu.memory_space<vmem>>, %arg2: memref<9x128x128xbf16, #tpu.memory_space<vmem>>, %arg3: memref<1x128xf32, #tpu.memory_space<vmem>>, %arg4: memref<9x128x128xbf16, #tpu.memory_space<vmem>>, %arg5: memref<1x128xf32, #tpu.memory_space<vmem>>, %arg6: memref<128x128xbf16, #tpu.memory_space<vmem>>, %arg7: memref<1x128xf32, #tpu.memory_space<vmem>>, %arg8: memref<1x16x16x128xf32, #tpu.memory_space<vmem>>, %arg9: memref<18x18x128xbf16, #tpu.memory_space<vmem>>) attributes {dimension_semantics = [#tpu.dimension_semantics<parallel>], iteration_bounds = array<i64: 2>, scalar_prefetch = 0 : i64, scratch_operands = 1 : i64, tpu.core_type = #tpu.core_type<tc>, window_params = [{transform_indices = @transform_0, window_bounds = array<i64: 1, 18, 18, 128>}, {pipeline_mode = #tpu.pipeline_mode<synchronous>, transform_indices = @transform_1, window_bounds = array<i64: 9, 128, 128>}, {pipeline_mode = #tpu.pipeline_mode<synchronous>, transform_indices = @transform_2, window_bounds = array<i64: 1, 128>}, {pipeline_mode = #tpu.pipeline_mode<synchronous>, transform_indices = @transform_3, window_bounds = array<i64: 9, 128, 128>}, {pipeline_mode = #tpu.pipeline_mode<synchronous>, transform_indices = @transform_4, window_bounds = array<i64: 1, 128>}, {pipeline_mode = #tpu.pipeline_mode<synchronous>, transform_indices = @transform_5, window_bounds = array<i64: 128, 128>}, {pipeline_mode = #tpu.pipeline_mode<synchronous>, transform_indices = @transform_6, window_bounds = array<i64: 1, 128>}, {transform_indices = @transform_7, window_bounds = array<i64: 1, 16, 16, 128>}]} {
    %cst = arith.constant 0.000000e+00 : f32
    %0 = vector.broadcast %cst : f32 to vector<256x128xf32>
    %c0 = arith.constant 0 : index
    %c0_0 = arith.constant 0 : index
    %c0_1 = arith.constant 0 : index
    %c0_2 = arith.constant 0 : index
    %1 = vector.load %arg1[%c0, %c0_0, %c0_1, %c0_2] : memref<1x18x18x128xbf16, #tpu.memory_space<vmem>>, vector<1x16x16x128xbf16>
    %2 = vector.shape_cast %1 : vector<1x16x16x128xbf16> to vector<16x16x128xbf16>
    %3 = vector.shape_cast %2 : vector<16x16x128xbf16> to vector<256x128xbf16>
    %c0_3 = arith.constant 0 : index
    %c0_4 = arith.constant 0 : index
    %c0_5 = arith.constant 0 : index
    %4 = vector.load %arg2[%c0_3, %c0_4, %c0_5] : memref<9x128x128xbf16, #tpu.memory_space<vmem>>, vector<1x128x128xbf16>
    %5 = vector.shape_cast %4 : vector<1x128x128xbf16> to vector<128x128xbf16>
    %cst_6 = arith.constant dense<0.000000e+00> : vector<256x128xf32>
    %6 = tpu.matmul %3, %5, %cst_6 {dimension_numbers = #tpu.dot_dimension_numbers<[1], [0], [0], [1], [0, 0, 1, 1], [], []>} : vector<256x128xbf16>, vector<128x128xbf16>, vector<256x128xf32> -> vector<256x128xf32>
    %7 = arith.addf %0, %6 : vector<256x128xf32>
    %c0_7 = arith.constant 0 : index
    %c0_8 = arith.constant 0 : index
    %c1 = arith.constant 1 : index
    %c0_9 = arith.constant 0 : index
    %8 = vector.load %arg1[%c0_7, %c0_8, %c1, %c0_9] : memref<1x18x18x128xbf16, #tpu.memory_space<vmem>>, vector<1x16x16x128xbf16>
    %9 = vector.shape_cast %8 : vector<1x16x16x128xbf16> to vector<16x16x128xbf16>
    %10 = vector.shape_cast %9 : vector<16x16x128xbf16> to vector<256x128xbf16>
    %c1_10 = arith.constant 1 : index
    %c0_11 = arith.constant 0 : index
    %c0_12 = arith.constant 0 : index
    %11 = vector.load %arg2[%c1_10, %c0_11, %c0_12] : memref<9x128x128xbf16, #tpu.memory_space<vmem>>, vector<1x128x128xbf16>
    %12 = vector.shape_cast %11 : vector<1x128x128xbf16> to vector<128x128xbf16>
    %cst_13 = arith.constant dense<0.000000e+00> : vector<256x128xf32>
    %13 = tpu.matmul %10, %12, %cst_13 {dimension_numbers = #tpu.dot_dimension_numbers<[1], [0], [0], [1], [0, 0, 1, 1], [], []>} : vector<256x128xbf16>, vector<128x128xbf16>, vector<256x128xf32> -> vector<256x128xf32>
    %14 = arith.addf %7, %13 : vector<256x128xf32>
    %c0_14 = arith.constant 0 : index
    %c0_15 = arith.constant 0 : index
    %c2 = arith.constant 2 : index
    %c0_16 = arith.constant 0 : index
    %15 = vector.load %arg1[%c0_14, %c0_15, %c2, %c0_16] : memref<1x18x18x128xbf16, #tpu.memory_space<vmem>>, vector<1x16x16x128xbf16>
    %16 = vector.shape_cast %15 : vector<1x16x16x128xbf16> to vector<16x16x128xbf16>
    %17 = vector.shape_cast %16 : vector<16x16x128xbf16> to vector<256x128xbf16>
    %c2_17 = arith.constant 2 : index
    %c0_18 = arith.constant 0 : index
    %c0_19 = arith.constant 0 : index
    %18 = vector.load %arg2[%c2_17, %c0_18, %c0_19] : memref<9x128x128xbf16, #tpu.memory_space<vmem>>, vector<1x128x128xbf16>
    %19 = vector.shape_cast %18 : vector<1x128x128xbf16> to vector<128x128xbf16>
    %cst_20 = arith.constant dense<0.000000e+00> : vector<256x128xf32>
    %20 = tpu.matmul %17, %19, %cst_20 {dimension_numbers = #tpu.dot_dimension_numbers<[1], [0], [0], [1], [0, 0, 1, 1], [], []>} : vector<256x128xbf16>, vector<128x128xbf16>, vector<256x128xf32> -> vector<256x128xf32>
    %21 = arith.addf %14, %20 : vector<256x128xf32>
    %c0_21 = arith.constant 0 : index
    %c1_22 = arith.constant 1 : index
    %c0_23 = arith.constant 0 : index
    %c0_24 = arith.constant 0 : index
    %22 = vector.load %arg1[%c0_21, %c1_22, %c0_23, %c0_24] : memref<1x18x18x128xbf16, #tpu.memory_space<vmem>>, vector<1x16x16x128xbf16>
    %23 = vector.shape_cast %22 : vector<1x16x16x128xbf16> to vector<16x16x128xbf16>
    %24 = vector.shape_cast %23 : vector<16x16x128xbf16> to vector<256x128xbf16>
    %c3 = arith.constant 3 : index
    %c0_25 = arith.constant 0 : index
    %c0_26 = arith.constant 0 : index
    %25 = vector.load %arg2[%c3, %c0_25, %c0_26] : memref<9x128x128xbf16, #tpu.memory_space<vmem>>, vector<1x128x128xbf16>
    %26 = vector.shape_cast %25 : vector<1x128x128xbf16> to vector<128x128xbf16>
    %cst_27 = arith.constant dense<0.000000e+00> : vector<256x128xf32>
    %27 = tpu.matmul %24, %26, %cst_27 {dimension_numbers = #tpu.dot_dimension_numbers<[1], [0], [0], [1], [0, 0, 1, 1], [], []>} : vector<256x128xbf16>, vector<128x128xbf16>, vector<256x128xf32> -> vector<256x128xf32>
    %28 = arith.addf %21, %27 : vector<256x128xf32>
    %c0_28 = arith.constant 0 : index
    %c1_29 = arith.constant 1 : index
    %c1_30 = arith.constant 1 : index
    %c0_31 = arith.constant 0 : index
    %29 = vector.load %arg1[%c0_28, %c1_29, %c1_30, %c0_31] : memref<1x18x18x128xbf16, #tpu.memory_space<vmem>>, vector<1x16x16x128xbf16>
    %30 = vector.shape_cast %29 : vector<1x16x16x128xbf16> to vector<16x16x128xbf16>
    %31 = vector.shape_cast %30 : vector<16x16x128xbf16> to vector<256x128xbf16>
    %c4 = arith.constant 4 : index
    %c0_32 = arith.constant 0 : index
    %c0_33 = arith.constant 0 : index
    %32 = vector.load %arg2[%c4, %c0_32, %c0_33] : memref<9x128x128xbf16, #tpu.memory_space<vmem>>, vector<1x128x128xbf16>
    %33 = vector.shape_cast %32 : vector<1x128x128xbf16> to vector<128x128xbf16>
    %cst_34 = arith.constant dense<0.000000e+00> : vector<256x128xf32>
    %34 = tpu.matmul %31, %33, %cst_34 {dimension_numbers = #tpu.dot_dimension_numbers<[1], [0], [0], [1], [0, 0, 1, 1], [], []>} : vector<256x128xbf16>, vector<128x128xbf16>, vector<256x128xf32> -> vector<256x128xf32>
    %35 = arith.addf %28, %34 : vector<256x128xf32>
    %c0_35 = arith.constant 0 : index
    %c1_36 = arith.constant 1 : index
    %c2_37 = arith.constant 2 : index
    %c0_38 = arith.constant 0 : index
    %36 = vector.load %arg1[%c0_35, %c1_36, %c2_37, %c0_38] : memref<1x18x18x128xbf16, #tpu.memory_space<vmem>>, vector<1x16x16x128xbf16>
    %37 = vector.shape_cast %36 : vector<1x16x16x128xbf16> to vector<16x16x128xbf16>
    %38 = vector.shape_cast %37 : vector<16x16x128xbf16> to vector<256x128xbf16>
    %c5 = arith.constant 5 : index
    %c0_39 = arith.constant 0 : index
    %c0_40 = arith.constant 0 : index
    %39 = vector.load %arg2[%c5, %c0_39, %c0_40] : memref<9x128x128xbf16, #tpu.memory_space<vmem>>, vector<1x128x128xbf16>
    %40 = vector.shape_cast %39 : vector<1x128x128xbf16> to vector<128x128xbf16>
    %cst_41 = arith.constant dense<0.000000e+00> : vector<256x128xf32>
    %41 = tpu.matmul %38, %40, %cst_41 {dimension_numbers = #tpu.dot_dimension_numbers<[1], [0], [0], [1], [0, 0, 1, 1], [], []>} : vector<256x128xbf16>, vector<128x128xbf16>, vector<256x128xf32> -> vector<256x128xf32>
    %42 = arith.addf %35, %41 : vector<256x128xf32>
    %c0_42 = arith.constant 0 : index
    %c2_43 = arith.constant 2 : index
    %c0_44 = arith.constant 0 : index
    %c0_45 = arith.constant 0 : index
    %43 = vector.load %arg1[%c0_42, %c2_43, %c0_44, %c0_45] : memref<1x18x18x128xbf16, #tpu.memory_space<vmem>>, vector<1x16x16x128xbf16>
    %44 = vector.shape_cast %43 : vector<1x16x16x128xbf16> to vector<16x16x128xbf16>
    %45 = vector.shape_cast %44 : vector<16x16x128xbf16> to vector<256x128xbf16>
    %c6 = arith.constant 6 : index
    %c0_46 = arith.constant 0 : index
    %c0_47 = arith.constant 0 : index
    %46 = vector.load %arg2[%c6, %c0_46, %c0_47] : memref<9x128x128xbf16, #tpu.memory_space<vmem>>, vector<1x128x128xbf16>
    %47 = vector.shape_cast %46 : vector<1x128x128xbf16> to vector<128x128xbf16>
    %cst_48 = arith.constant dense<0.000000e+00> : vector<256x128xf32>
    %48 = tpu.matmul %45, %47, %cst_48 {dimension_numbers = #tpu.dot_dimension_numbers<[1], [0], [0], [1], [0, 0, 1, 1], [], []>} : vector<256x128xbf16>, vector<128x128xbf16>, vector<256x128xf32> -> vector<256x128xf32>
    %49 = arith.addf %42, %48 : vector<256x128xf32>
    %c0_49 = arith.constant 0 : index
    %c2_50 = arith.constant 2 : index
    %c1_51 = arith.constant 1 : index
    %c0_52 = arith.constant 0 : index
    %50 = vector.load %arg1[%c0_49, %c2_50, %c1_51, %c0_52] : memref<1x18x18x128xbf16, #tpu.memory_space<vmem>>, vector<1x16x16x128xbf16>
    %51 = vector.shape_cast %50 : vector<1x16x16x128xbf16> to vector<16x16x128xbf16>
    %52 = vector.shape_cast %51 : vector<16x16x128xbf16> to vector<256x128xbf16>
    %c7 = arith.constant 7 : index
    %c0_53 = arith.constant 0 : index
    %c0_54 = arith.constant 0 : index
    %53 = vector.load %arg2[%c7, %c0_53, %c0_54] : memref<9x128x128xbf16, #tpu.memory_space<vmem>>, vector<1x128x128xbf16>
    %54 = vector.shape_cast %53 : vector<1x128x128xbf16> to vector<128x128xbf16>
    %cst_55 = arith.constant dense<0.000000e+00> : vector<256x128xf32>
    %55 = tpu.matmul %52, %54, %cst_55 {dimension_numbers = #tpu.dot_dimension_numbers<[1], [0], [0], [1], [0, 0, 1, 1], [], []>} : vector<256x128xbf16>, vector<128x128xbf16>, vector<256x128xf32> -> vector<256x128xf32>
    %56 = arith.addf %49, %55 : vector<256x128xf32>
    %c0_56 = arith.constant 0 : index
    %c2_57 = arith.constant 2 : index
    %c2_58 = arith.constant 2 : index
    %c0_59 = arith.constant 0 : index
    %57 = vector.load %arg1[%c0_56, %c2_57, %c2_58, %c0_59] : memref<1x18x18x128xbf16, #tpu.memory_space<vmem>>, vector<1x16x16x128xbf16>
    %58 = vector.shape_cast %57 : vector<1x16x16x128xbf16> to vector<16x16x128xbf16>
    %59 = vector.shape_cast %58 : vector<16x16x128xbf16> to vector<256x128xbf16>
    %c8 = arith.constant 8 : index
    %c0_60 = arith.constant 0 : index
    %c0_61 = arith.constant 0 : index
    %60 = vector.load %arg2[%c8, %c0_60, %c0_61] : memref<9x128x128xbf16, #tpu.memory_space<vmem>>, vector<1x128x128xbf16>
    %61 = vector.shape_cast %60 : vector<1x128x128xbf16> to vector<128x128xbf16>
    %cst_62 = arith.constant dense<0.000000e+00> : vector<256x128xf32>
    %62 = tpu.matmul %59, %61, %cst_62 {dimension_numbers = #tpu.dot_dimension_numbers<[1], [0], [0], [1], [0, 0, 1, 1], [], []>} : vector<256x128xbf16>, vector<128x128xbf16>, vector<256x128xf32> -> vector<256x128xf32>
    %63 = arith.addf %56, %62 : vector<256x128xf32>
    %c0_63 = arith.constant 0 : index
    %c0_64 = arith.constant 0 : index
    %64 = vector.load %arg3[%c0_63, %c0_64] : memref<1x128xf32, #tpu.memory_space<vmem>>, vector<1x128xf32>
    %65 = vector.broadcast %64 : vector<1x128xf32> to vector<256x128xf32>
    %66 = arith.addf %63, %65 : vector<256x128xf32>
    %cst_65 = arith.constant 0.000000e+00 : f32
    %67 = vector.broadcast %cst_65 : f32 to vector<256x128xf32>
    %68 = arith.cmpf ogt, %66, %67 : vector<256x128xf32>
    %cst_66 = arith.constant 0.00999999977 : f32
    %69 = vector.broadcast %cst_66 : f32 to vector<256x128xf32>
    %70 = arith.mulf %69, %66 : vector<256x128xf32>
    %71 = arith.select %68, %66, %70 : vector<256x128xi1>, vector<256x128xf32>
    %cst_67 = arith.constant 0.000000e+00 : bf16
    %72 = vector.broadcast %cst_67 : bf16 to vector<18x18x128xbf16>
    %c0_68 = arith.constant 0 : index
    %c0_69 = arith.constant 0 : index
    %c0_70 = arith.constant 0 : index
    %73 = vector.load %arg9[%c0_68, %c0_69, %c0_70] : memref<18x18x128xbf16, #tpu.memory_space<vmem>>, vector<18x18x128xbf16>
    tpu.vector_store %arg9[%c0_68, %c0_69, %c0_70], %72 {strides = array<i32>} : memref<18x18x128xbf16, #tpu.memory_space<vmem>>, vector<18x18x128xbf16>,
    %74 = vector.shape_cast %71 : vector<256x128xf32> to vector<16x16x128xf32>
    %75 = arith.truncf %74 : vector<16x16x128xf32> to vector<16x16x128xbf16>
    %c1_71 = arith.constant 1 : index
    %c1_72 = arith.constant 1 : index
    %c0_73 = arith.constant 0 : index
    %76 = vector.load %arg9[%c1_71, %c1_72, %c0_73] : memref<18x18x128xbf16, #tpu.memory_space<vmem>>, vector<16x16x128xbf16>
    tpu.vector_store %arg9[%c1_71, %c1_72, %c0_73], %75 {strides = array<i32>} : memref<18x18x128xbf16, #tpu.memory_space<vmem>>, vector<16x16x128xbf16>,
    %cst_74 = arith.constant 0.000000e+00 : f32
    %77 = vector.broadcast %cst_74 : f32 to vector<256x128xf32>
    %c0_75 = arith.constant 0 : index
    %c0_76 = arith.constant 0 : index
    %c0_77 = arith.constant 0 : index
    %78 = vector.load %arg9[%c0_75, %c0_76, %c0_77] : memref<18x18x128xbf16, #tpu.memory_space<vmem>>, vector<16x16x128xbf16>
    %79 = vector.shape_cast %78 : vector<16x16x128xbf16> to vector<256x128xbf16>
    %c0_78 = arith.constant 0 : index
    %c0_79 = arith.constant 0 : index
    %c0_80 = arith.constant 0 : index
    %80 = vector.load %arg4[%c0_78, %c0_79, %c0_80] : memref<9x128x128xbf16, #tpu.memory_space<vmem>>, vector<1x128x128xbf16>
    %81 = vector.shape_cast %80 : vector<1x128x128xbf16> to vector<128x128xbf16>
    %cst_81 = arith.constant dense<0.000000e+00> : vector<256x128xf32>
    %82 = tpu.matmul %79, %81, %cst_81 {dimension_numbers = #tpu.dot_dimension_numbers<[1], [0], [0], [1], [0, 0, 1, 1], [], []>} : vector<256x128xbf16>, vector<128x128xbf16>, vector<256x128xf32> -> vector<256x128xf32>
    %83 = arith.addf %77, %82 : vector<256x128xf32>
    %c0_82 = arith.constant 0 : index
    %c1_83 = arith.constant 1 : index
    %c0_84 = arith.constant 0 : index
    %84 = vector.load %arg9[%c0_82, %c1_83, %c0_84] : memref<18x18x128xbf16, #tpu.memory_space<vmem>>, vector<16x16x128xbf16>
    %85 = vector.shape_cast %84 : vector<16x16x128xbf16> to vector<256x128xbf16>
    %c1_85 = arith.constant 1 : index
    %c0_86 = arith.constant 0 : index
    %c0_87 = arith.constant 0 : index
    %86 = vector.load %arg4[%c1_85, %c0_86, %c0_87] : memref<9x128x128xbf16, #tpu.memory_space<vmem>>, vector<1x128x128xbf16>
    %87 = vector.shape_cast %86 : vector<1x128x128xbf16> to vector<128x128xbf16>
    %cst_88 = arith.constant dense<0.000000e+00> : vector<256x128xf32>
    %88 = tpu.matmul %85, %87, %cst_88 {dimension_numbers = #tpu.dot_dimension_numbers<[1], [0], [0], [1], [0, 0, 1, 1], [], []>} : vector<256x128xbf16>, vector<128x128xbf16>, vector<256x128xf32> -> vector<256x128xf32>
    %89 = arith.addf %83, %88 : vector<256x128xf32>
    %c0_89 = arith.constant 0 : index
    %c2_90 = arith.constant 2 : index
    %c0_91 = arith.constant 0 : index
    %90 = vector.load %arg9[%c0_89, %c2_90, %c0_91] : memref<18x18x128xbf16, #tpu.memory_space<vmem>>, vector<16x16x128xbf16>
    %91 = vector.shape_cast %90 : vector<16x16x128xbf16> to vector<256x128xbf16>
    %c2_92 = arith.constant 2 : index
    %c0_93 = arith.constant 0 : index
    %c0_94 = arith.constant 0 : index
    %92 = vector.load %arg4[%c2_92, %c0_93, %c0_94] : memref<9x128x128xbf16, #tpu.memory_space<vmem>>, vector<1x128x128xbf16>
    %93 = vector.shape_cast %92 : vector<1x128x128xbf16> to vector<128x128xbf16>
    %cst_95 = arith.constant dense<0.000000e+00> : vector<256x128xf32>
    %94 = tpu.matmul %91, %93, %cst_95 {dimension_numbers = #tpu.dot_dimension_numbers<[1], [0], [0], [1], [0, 0, 1, 1], [], []>} : vector<256x128xbf16>, vector<128x128xbf16>, vector<256x128xf32> -> vector<256x128xf32>
    %95 = arith.addf %89, %94 : vector<256x128xf32>
    %c1_96 = arith.constant 1 : index
    %c0_97 = arith.constant 0 : index
    %c0_98 = arith.constant 0 : index
    %96 = vector.load %arg9[%c1_96, %c0_97, %c0_98] : memref<18x18x128xbf16, #tpu.memory_space<vmem>>, vector<16x16x128xbf16>
    %97 = vector.shape_cast %96 : vector<16x16x128xbf16> to vector<256x128xbf16>
    %c3_99 = arith.constant 3 : index
    %c0_100 = arith.constant 0 : index
    %c0_101 = arith.constant 0 : index
    %98 = vector.load %arg4[%c3_99, %c0_100, %c0_101] : memref<9x128x128xbf16, #tpu.memory_space<vmem>>, vector<1x128x128xbf16>
    %99 = vector.shape_cast %98 : vector<1x128x128xbf16> to vector<128x128xbf16>
    %cst_102 = arith.constant dense<0.000000e+00> : vector<256x128xf32>
    %100 = tpu.matmul %97, %99, %cst_102 {dimension_numbers = #tpu.dot_dimension_numbers<[1], [0], [0], [1], [0, 0, 1, 1], [], []>} : vector<256x128xbf16>, vector<128x128xbf16>, vector<256x128xf32> -> vector<256x128xf32>
    %101 = arith.addf %95, %100 : vector<256x128xf32>
    %c1_103 = arith.constant 1 : index
    %c1_104 = arith.constant 1 : index
    %c0_105 = arith.constant 0 : index
    %102 = vector.load %arg9[%c1_103, %c1_104, %c0_105] : memref<18x18x128xbf16, #tpu.memory_space<vmem>>, vector<16x16x128xbf16>
    %103 = vector.shape_cast %102 : vector<16x16x128xbf16> to vector<256x128xbf16>
    %c4_106 = arith.constant 4 : index
    %c0_107 = arith.constant 0 : index
    %c0_108 = arith.constant 0 : index
    %104 = vector.load %arg4[%c4_106, %c0_107, %c0_108] : memref<9x128x128xbf16, #tpu.memory_space<vmem>>, vector<1x128x128xbf16>
    %105 = vector.shape_cast %104 : vector<1x128x128xbf16> to vector<128x128xbf16>
    %cst_109 = arith.constant dense<0.000000e+00> : vector<256x128xf32>
    %106 = tpu.matmul %103, %105, %cst_109 {dimension_numbers = #tpu.dot_dimension_numbers<[1], [0], [0], [1], [0, 0, 1, 1], [], []>} : vector<256x128xbf16>, vector<128x128xbf16>, vector<256x128xf32> -> vector<256x128xf32>
    %107 = arith.addf %101, %106 : vector<256x128xf32>
    %c1_110 = arith.constant 1 : index
    %c2_111 = arith.constant 2 : index
    %c0_112 = arith.constant 0 : index
    %108 = vector.load %arg9[%c1_110, %c2_111, %c0_112] : memref<18x18x128xbf16, #tpu.memory_space<vmem>>, vector<16x16x128xbf16>
    %109 = vector.shape_cast %108 : vector<16x16x128xbf16> to vector<256x128xbf16>
    %c5_113 = arith.constant 5 : index
    %c0_114 = arith.constant 0 : index
    %c0_115 = arith.constant 0 : index
    %110 = vector.load %arg4[%c5_113, %c0_114, %c0_115] : memref<9x128x128xbf16, #tpu.memory_space<vmem>>, vector<1x128x128xbf16>
    %111 = vector.shape_cast %110 : vector<1x128x128xbf16> to vector<128x128xbf16>
    %cst_116 = arith.constant dense<0.000000e+00> : vector<256x128xf32>
    %112 = tpu.matmul %109, %111, %cst_116 {dimension_numbers = #tpu.dot_dimension_numbers<[1], [0], [0], [1], [0, 0, 1, 1], [], []>} : vector<256x128xbf16>, vector<128x128xbf16>, vector<256x128xf32> -> vector<256x128xf32>
    %113 = arith.addf %107, %112 : vector<256x128xf32>
    %c2_117 = arith.constant 2 : index
    %c0_118 = arith.constant 0 : index
    %c0_119 = arith.constant 0 : index
    %114 = vector.load %arg9[%c2_117, %c0_118, %c0_119] : memref<18x18x128xbf16, #tpu.memory_space<vmem>>, vector<16x16x128xbf16>
    %115 = vector.shape_cast %114 : vector<16x16x128xbf16> to vector<256x128xbf16>
    %c6_120 = arith.constant 6 : index
    %c0_121 = arith.constant 0 : index
    %c0_122 = arith.constant 0 : index
    %116 = vector.load %arg4[%c6_120, %c0_121, %c0_122] : memref<9x128x128xbf16, #tpu.memory_space<vmem>>, vector<1x128x128xbf16>
    %117 = vector.shape_cast %116 : vector<1x128x128xbf16> to vector<128x128xbf16>
    %cst_123 = arith.constant dense<0.000000e+00> : vector<256x128xf32>
    %118 = tpu.matmul %115, %117, %cst_123 {dimension_numbers = #tpu.dot_dimension_numbers<[1], [0], [0], [1], [0, 0, 1, 1], [], []>} : vector<256x128xbf16>, vector<128x128xbf16>, vector<256x128xf32> -> vector<256x128xf32>
    %119 = arith.addf %113, %118 : vector<256x128xf32>
    %c2_124 = arith.constant 2 : index
    %c1_125 = arith.constant 1 : index
    %c0_126 = arith.constant 0 : index
    %120 = vector.load %arg9[%c2_124, %c1_125, %c0_126] : memref<18x18x128xbf16, #tpu.memory_space<vmem>>, vector<16x16x128xbf16>
    %121 = vector.shape_cast %120 : vector<16x16x128xbf16> to vector<256x128xbf16>
    %c7_127 = arith.constant 7 : index
    %c0_128 = arith.constant 0 : index
    %c0_129 = arith.constant 0 : index
    %122 = vector.load %arg4[%c7_127, %c0_128, %c0_129] : memref<9x128x128xbf16, #tpu.memory_space<vmem>>, vector<1x128x128xbf16>
    %123 = vector.shape_cast %122 : vector<1x128x128xbf16> to vector<128x128xbf16>
    %cst_130 = arith.constant dense<0.000000e+00> : vector<256x128xf32>
    %124 = tpu.matmul %121, %123, %cst_130 {dimension_numbers = #tpu.dot_dimension_numbers<[1], [0], [0], [1], [0, 0, 1, 1], [], []>} : vector<256x128xbf16>, vector<128x128xbf16>, vector<256x128xf32> -> vector<256x128xf32>
    %125 = arith.addf %119, %124 : vector<256x128xf32>
    %c2_131 = arith.constant 2 : index
    %c2_132 = arith.constant 2 : index
    %c0_133 = arith.constant 0 : index
    %126 = vector.load %arg9[%c2_131, %c2_132, %c0_133] : memref<18x18x128xbf16, #tpu.memory_space<vmem>>, vector<16x16x128xbf16>
    %127 = vector.shape_cast %126 : vector<16x16x128xbf16> to vector<256x128xbf16>
    %c8_134 = arith.constant 8 : index
    %c0_135 = arith.constant 0 : index
    %c0_136 = arith.constant 0 : index
    %128 = vector.load %arg4[%c8_134, %c0_135, %c0_136] : memref<9x128x128xbf16, #tpu.memory_space<vmem>>, vector<1x128x128xbf16>
    %129 = vector.shape_cast %128 : vector<1x128x128xbf16> to vector<128x128xbf16>
    %cst_137 = arith.constant dense<0.000000e+00> : vector<256x128xf32>
    %130 = tpu.matmul %127, %129, %cst_137 {dimension_numbers = #tpu.dot_dimension_numbers<[1], [0], [0], [1], [0, 0, 1, 1], [], []>} : vector<256x128xbf16>, vector<128x128xbf16>, vector<256x128xf32> -> vector<256x128xf32>
    %131 = arith.addf %125, %130 : vector<256x128xf32>
    %c0_138 = arith.constant 0 : index
    %c0_139 = arith.constant 0 : index
    %132 = vector.load %arg5[%c0_138, %c0_139] : memref<1x128xf32, #tpu.memory_space<vmem>>, vector<1x128xf32>
    %133 = vector.broadcast %132 : vector<1x128xf32> to vector<256x128xf32>
    %134 = arith.addf %131, %133 : vector<256x128xf32>
    %cst_140 = arith.constant 0.000000e+00 : f32
    %135 = vector.broadcast %cst_140 : f32 to vector<256x128xf32>
    %136 = arith.cmpf ogt, %134, %135 : vector<256x128xf32>
    %cst_141 = arith.constant 0.00999999977 : f32
    %137 = vector.broadcast %cst_141 : f32 to vector<256x128xf32>
    %138 = arith.mulf %137, %134 : vector<256x128xf32>
    %139 = arith.select %136, %134, %138 : vector<256x128xi1>, vector<256x128xf32>
    %c0_142 = arith.constant 0 : index
    %c1_143 = arith.constant 1 : index
    %c1_144 = arith.constant 1 : index
    %c0_145 = arith.constant 0 : index
    %140 = vector.load %arg1[%c0_142, %c1_143, %c1_144, %c0_145] : memref<1x18x18x128xbf16, #tpu.memory_space<vmem>>, vector<1x16x16x128xbf16>
    %141 = vector.shape_cast %140 : vector<1x16x16x128xbf16> to vector<16x16x128xbf16>
    %142 = vector.shape_cast %141 : vector<16x16x128xbf16> to vector<256x128xbf16>
    %c0_146 = arith.constant 0 : index
    %c0_147 = arith.constant 0 : index
    %143 = vector.load %arg6[%c0_146, %c0_147] : memref<128x128xbf16, #tpu.memory_space<vmem>>, vector<128x128xbf16>
    %cst_148 = arith.constant dense<0.000000e+00> : vector<256x128xf32>
    %144 = tpu.matmul %142, %143, %cst_148 {dimension_numbers = #tpu.dot_dimension_numbers<[1], [0], [0], [1], [0, 0, 1, 1], [], []>} : vector<256x128xbf16>, vector<128x128xbf16>, vector<256x128xf32> -> vector<256x128xf32>
    %c0_149 = arith.constant 0 : index
    %c0_150 = arith.constant 0 : index
    %145 = vector.load %arg7[%c0_149, %c0_150] : memref<1x128xf32, #tpu.memory_space<vmem>>, vector<1x128xf32>
    %146 = vector.broadcast %145 : vector<1x128xf32> to vector<256x128xf32>
    %147 = arith.addf %144, %146 : vector<256x128xf32>
    %148 = arith.addf %139, %147 : vector<256x128xf32>
    %149 = vector.shape_cast %148 : vector<256x128xf32> to vector<1x16x16x128xf32>
    %c0_151 = arith.constant 0 : index
    %c0_152 = arith.constant 0 : index
    %c0_153 = arith.constant 0 : index
    %c0_154 = arith.constant 0 : index
    %150 = vector.load %arg8[%c0_151, %c0_152, %c0_153, %c0_154] : memref<1x16x16x128xf32, #tpu.memory_space<vmem>>, vector<1x16x16x128xf32>
    tpu.vector_store %arg8[%c0_151, %c0_152, %c0_153, %c0_154], %149 {strides = array<i32>} : memref<1x16x16x128xf32, #tpu.memory_space<vmem>>, vector<1x16x16x128xf32>,
    return
  }
  func.func @transform_0(%arg0: i32) -> (i32, i32, i32, i32) {
    %c0_i32 = arith.constant 0 : i32
    %c0_i32_0 = arith.constant 0 : i32
    %c0_i32_1 = arith.constant 0 : i32
    %c0_i32_2 = arith.constant 0 : i32
    return %arg0, %c0_i32, %c0_i32_0, %c0_i32_1 : i32, i32, i32, i32
  }
  func.func @transform_1(%arg0: i32) -> (i32, i32, i32) {
    %c0_i32 = arith.constant 0 : i32
    %c0_i32_0 = arith.constant 0 : i32
    %c0_i32_1 = arith.constant 0 : i32
    %c0_i32_2 = arith.constant 0 : i32
    return %c0_i32, %c0_i32_0, %c0_i32_1 : i32, i32, i32
  }
  func.func @transform_2(%arg0: i32) -> (i32, i32) {
    %c0_i32 = arith.constant 0 : i32
    %c0_i32_0 = arith.constant 0 : i32
    %c0_i32_1 = arith.constant 0 : i32
    return %c0_i32, %c0_i32_0 : i32, i32
  }
  func.func @transform_3(%arg0: i32) -> (i32, i32, i32) {
    %c0_i32 = arith.constant 0 : i32
    %c0_i32_0 = arith.constant 0 : i32
    %c0_i32_1 = arith.constant 0 : i32
    %c0_i32_2 = arith.constant 0 : i32
    return %c0_i32, %c0_i32_0, %c0_i32_1 : i32, i32, i32
  }
  func.func @transform_4(%arg0: i32) -> (i32, i32) {
    %c0_i32 = arith.constant 0 : i32
    %c0_i32_0 = arith.constant 0 : i32
    %c0_i32_1 = arith.constant 0 : i32
    return %c0_i32, %c0_i32_0 : i32, i32
  }
  func.func @transform_5(%arg0: i32) -> (i32, i32) {
    %c0_i32 = arith.constant 0 : i32
    %c0_i32_0 = arith.constant 0 : i32
    %c0_i32_1 = arith.constant 0 : i32
    return %c0_i32, %c0_i32_0 : i32, i32
  }
  func.func @transform_6(%arg0: i32) -> (i32, i32) {
    %c0_i32 = arith.constant 0 : i32
    %c0_i32_0 = arith.constant 0 : i32
    %c0_i32_1 = arith.constant 0 : i32
    return %c0_i32, %c0_i32_0 : i32, i32
  }
  func.func @transform_7(%arg0: i32) -> (i32, i32, i32, i32) {
    %c0_i32 = arith.constant 0 : i32
    %c0_i32_0 = arith.constant 0 : i32
    %c0_i32_1 = arith.constant 0 : i32
    %c0_i32_2 = arith.constant 0 : i32
    return %arg0, %c0_i32, %c0_i32_0, %c0_i32_1 : i32, i32, i32, i32
  }
}

</mosaic_0001>

<llo_original>
// kernel: residual_block_pallas.1
$region0: #{residual_block_pallas.1}
  #allocation0 [shape = 'u32[]', space=smem, size = 0x4, offset = 0x4, fixed_abs, tag = 'smem constant byte address 0x4 - core index']
  #allocation1 [shape = 'u32[144,128]{1,0:T(1,128)}', space=vmem, size = 0x12000, scoped, tag = 'internal scratch']
  #allocation2 [shape = 'bf16[18,18,128]{2,1,0:T(8,128)(2,1)}', space=vmem, size = 0x1b000, scoped, tag = 'scratch operand']
  %s0 = inlined_call_operand.vmem [shape: bf16[2,18,18,128], index: 0, kind: input, shape index: {}]
  %s1 = inlined_call_operand.vmem [shape: bf16[9,128,128], index: 1, kind: input, shape index: {}]
  %s2 = inlined_call_operand.vmem [shape: f32[1,128], index: 2, kind: input, shape index: {}]
  %s3 = inlined_call_operand.vmem [shape: bf16[9,128,128], index: 3, kind: input, shape index: {}]
  %s4 = inlined_call_operand.vmem [shape: f32[1,128], index: 4, kind: input, shape index: {}]
  %s5 = inlined_call_operand.vmem [shape: bf16[128,128], index: 5, kind: input, shape index: {}]
  %s6 = inlined_call_operand.vmem [shape: f32[1,128], index: 6, kind: input, shape index: {}]
  %s7 = inlined_call_operand.vmem [shape: f32[2,16,16,128], index: 7, kind: output, shape index: {}]
  %s8 = sld [smem:[#allocation0]]
  $region61: #{residual_block_pallas.1} parent=0
    _
  %s10 = ssub.s32 1, %s8
  %s11 = scalar_select 0, %s10, %s8
  loop: start=0, step=1, limit=4
  $region2: #{residual_block_pallas.1} parent=0 // loop_pre_header
    _
  $region3: #{residual_block_pallas.1} parent=0 // loop_header
    %s13 = sphi 0, %s17
    %p14 = scmp.ge.s32.totalorder %s13, 4
    %s23 = sphi 0, %s25
    %s26 = sphi 0, %s23
    %s27 = sphi 0, %s26
    %s43 = sphi 0, %s27
    %s47 = sphi 0, %s47
    %s49 = sphi 0, %s47
    %s50 = sphi 0, %s49
    %s64 = sphi 0, %s50
    %s68 = sphi 0, %s68
    %s70 = sphi 0, %s68
    %s71 = sphi 0, %s70
    %s85 = sphi 0, %s71
    %s89 = sphi 0, %s89
    %s91 = sphi 0, %s89
    %s92 = sphi 0, %s91
    %s106 = sphi 0, %s92
    %s110 = sphi 0, %s110
    %s112 = sphi 0, %s110
    %s113 = sphi 0, %s112
    %s127 = sphi 0, %s113
    %s131 = sphi 0, %s131
    %s133 = sphi 0, %s131
    %s134 = sphi 0, %s133
    %s148 = sphi 0, %s134
    %s152 = sphi 0, %s152
    %s154 = sphi 0, %s152
    %s155 = sphi 0, %s154
    %s169 = sphi 0, %s155
    %s175 = sphi 0, %s177
    %s178 = sphi 0, %s175
    %s179 = sphi 0, %s178
    %s195 = sphi 0, %s179
  $region4: #{residual_block_pallas.1} parent=0 // loop_header_branch
    %16 = sbr.rel (%p14) target = $region8
  $region5: #{residual_block_pallas.1} parent=0 // loop_body
    %s18 = ssub.s32 %s13, 1
    %s19 = ssub.s32 %s13, 2
    %s20 = sadd.s32 %s13, 1
    %s21 = ssub.s32 %s13, %s20
    %p22 = scmp.eq.s32.totalorder %s21, 0
    %s24 = sadd.s32 %s23, 1
    %s25 = scalar_select %p22, %s23, %s24
    %p28 = pneg %p22
    %p29 = scmp.eq.s32.totalorder %s13, 1
    %p30 = por %p28, %p29
    %p31 = scmp.ne.s32.totalorder %s23, %s26
    %p32 = scmp.eq.s32.totalorder %s13, 0
    %p33 = por %p31, %p32
    %p34 = scmp.ne.s32.totalorder %s23, %s26
    %p35 = scmp.eq.s32.totalorder %s18, 1
    %p36 = por %p34, %p35
    %p37 = scmp.ne.s32.totalorder %s26, %s27
    %p38 = scmp.eq.s32.totalorder %s18, 0
    %p39 = por %p37, %p38
    %p40 = scmp.ne.s32.totalorder %s26, %s27
    %p41 = scmp.eq.s32.totalorder %s19, 1
    %p42 = por %p40, %p41
    %p44 = scmp.ne.s32.totalorder %s27, %s43
    %p45 = scmp.eq.s32.totalorder %s19, 0
    %p46 = por %p44, %p45
    %s48 = sadd.s32 %s47, 1
    %p51 = scmp.eq.s32.totalorder %s13, 1
    %p52 = scmp.ne.s32.totalorder %s47, %s49
    %p53 = scmp.eq.s32.totalorder %s13, 0
    %p54 = por %p52, %p53
    %p55 = scmp.ne.s32.totalorder %s47, %s49
    %p56 = scmp.eq.s32.totalorder %s18, 1
    %p57 = por %p55, %p56
    %p58 = scmp.ne.s32.totalorder %s49, %s50
    %p59 = scmp.eq.s32.totalorder %s18, 0
    %p60 = por %p58, %p59
    %p61 = scmp.ne.s32.totalorder %s49, %s50
    %p62 = scmp.eq.s32.totalorder %s19, 1
    %p63 = por %p61, %p62
    %p65 = scmp.ne.s32.totalorder %s50, %s64
    %p66 = scmp.eq.s32.totalorder %s19, 0
    %p67 = por %p65, %p66
    %s69 = sadd.s32 %s68, 1
    %p72 = scmp.eq.s32.totalorder %s13, 1
    %p73 = scmp.ne.s32.totalorder %s68, %s70
    %p74 = scmp.eq.s32.totalorder %s13, 0
    %p75 = por %p73, %p74
    %p76 = scmp.ne.s32.totalorder %s68, %s70
    %p77 = scmp.eq.s32.totalorder %s18, 1
    %p78 = por %p76, %p77
    %p79 = scmp.ne.s32.totalorder %s70, %s71
    %p80 = scmp.eq.s32.totalorder %s18, 0
    %p81 = por %p79, %p80
    %p82 = scmp.ne.s32.totalorder %s70, %s71
    %p83 = scmp.eq.s32.totalorder %s19, 1
    %p84 = por %p82, %p83
    %p86 = scmp.ne.s32.totalorder %s71, %s85
    %p87 = scmp.eq.s32.totalorder %s19, 0
    %p88 = por %p86, %p87
    %s90 = sadd.s32 %s89, 1
    %p93 = scmp.eq.s32.totalorder %s13, 1
    %p94 = scmp.ne.s32.totalorder %s89, %s91
    %p95 = scmp.eq.s32.totalorder %s13, 0
    %p96 = por %p94, %p95
    %p97 = scmp.ne.s32.totalorder %s89, %s91
    %p98 = scmp.eq.s32.totalorder %s18, 1
    %p99 = por %p97, %p98
    %p100 = scmp.ne.s32.totalorder %s91, %s92
    %p101 = scmp.eq.s32.totalorder %s18, 0
    %p102 = por %p100, %p101
    %p103 = scmp.ne.s32.totalorder %s91, %s92
    %p104 = scmp.eq.s32.totalorder %s19, 1
    %p105 = por %p103, %p104
    %p107 = scmp.ne.s32.totalorder %s92, %s106
    %p108 = scmp.eq.s32.totalorder %s19, 0
    %p109 = por %p107, %p108
    %s111 = sadd.s32 %s110, 1
    %p114 = scmp.eq.s32.totalorder %s13, 1
    %p115 = scmp.ne.s32.totalorder %s110, %s112
    %p116 = scmp.eq.s32.totalorder %s13, 0
    %p117 = por %p115, %p116
    %p118 = scmp.ne.s32.totalorder %s110, %s112
    %p119 = scmp.eq.s32.totalorder %s18, 1
    %p120 = por %p118, %p119
    %p121 = scmp.ne.s32.totalorder %s112, %s113
    %p122 = scmp.eq.s32.totalorder %s18, 0
    %p123 = por %p121, %p122
    %p124 = scmp.ne.s32.totalorder %s112, %s113
    %p125 = scmp.eq.s32.totalorder %s19, 1
    %p126 = por %p124, %p125
    %p128 = scmp.ne.s32.totalorder %s113, %s127
    %p129 = scmp.eq.s32.totalorder %s19, 0
    %p130 = por %p128, %p129
    %s132 = sadd.s32 %s131, 1
    %p135 = scmp.eq.s32.totalorder %s13, 1
    %p136 = scmp.ne.s32.totalorder %s131, %s133
    %p137 = scmp.eq.s32.totalorder %s13, 0
    %p138 = por %p136, %p137
    %p139 = scmp.ne.s32.totalorder %s131, %s133
    %p140 = scmp.eq.s32.totalorder %s18, 1
    %p141 = por %p139, %p140
    %p142 = scmp.ne.s32.totalorder %s133, %s134
    %p143 = scmp.eq.s32.totalorder %s18, 0
    %p144 = por %p142, %p143
    %p145 = scmp.ne.s32.totalorder %s133, %s134
    %p146 = scmp.eq.s32.totalorder %s19, 1
    %p147 = por %p145, %p146
    %p149 = scmp.ne.s32.totalorder %s134, %s148
    %p150 = scmp.eq.s32.totalorder %s19, 0
    %p151 = por %p149, %p150
    %s153 = sadd.s32 %s152, 1
    %p156 = scmp.eq.s32.totalorder %s13, 1
    %p157 = scmp.ne.s32.totalorder %s152, %s154
    %p158 = scmp.eq.s32.totalorder %s13, 0
    %p159 = por %p157, %p158
    %p160 = scmp.ne.s32.totalorder %s152, %s154
    %p161 = scmp.eq.s32.totalorder %s18, 1
    %p162 = por %p160, %p161
    %p163 = scmp.ne.s32.totalorder %s154, %s155
    %p164 = scmp.eq.s32.totalorder %s18, 0
    %p165 = por %p163, %p164
    %p166 = scmp.ne.s32.totalorder %s154, %s155
    %p167 = scmp.eq.s32.totalorder %s19, 1
    %p168 = por %p166, %p167
    %p170 = scmp.ne.s32.totalorder %s155, %s169
    %p171 = scmp.eq.s32.totalorder %s19, 0
    %p172 = por %p170, %p171
    %s173 = ssub.s32 %s13, %s20
    %p174 = scmp.eq.s32.totalorder %s173, 0
    %s176 = sadd.s32 %s175, 1
    %s177 = scalar_select %p174, %s175, %s176
    %p180 = pneg %p174
    %p181 = scmp.eq.s32.totalorder %s13, 1
    %p182 = por %p180, %p181
    %p183 = scmp.ne.s32.totalorder %s175, %s178
    %p184 = scmp.eq.s32.totalorder %s13, 0
    %p185 = por %p183, %p184
    %p186 = scmp.ne.s32.totalorder %s175, %s178
    %p187 = scmp.eq.s32.totalorder %s18, 1
    %p188 = por %p186, %p187
    %p189 = scmp.ne.s32.totalorder %s178, %s179
    %p190 = scmp.eq.s32.totalorder %s18, 0
    %p191 = por %p189, %p190
    %p192 = scmp.ne.s32.totalorder %s178, %s179
    %p193 = scmp.eq.s32.totalorder %s19, 1
    %p194 = por %p192, %p193
    %p196 = scmp.ne.s32.totalorder %s179, %s195
    %p197 = scmp.eq.s32.totalorder %s19, 0
    %p198 = por %p196, %p197
    %p199 = scmp.le.s32.totalorder 1, %s13
    %p200 = scmp.lt.s32.totalorder %s13, 3
    %p201 = pnand %p199, %p200
    %p202 = pneg %p201
    // Predicated region
    $region9: #{residual_block_pallas.1} parent=5 // pred_check
      _
    $region10: #{residual_block_pallas.1} parent=5 // pred_check_branch
      %204 = sbr.rel (%p201) target = $region12
    $region11: #{residual_block_pallas.1} parent=5 // pred_region
      %s205 = ssub.s32 %s13, 1
      // Predicated region
      $region13: #{residual_block_pallas.1} parent=11 // pred_check
        %p206 = pneg %p60
      $region14: #{residual_block_pallas.1} parent=11 // pred_check_branch
        %208 = sbr.rel (%p206) target = $region16
      $region15: #{residual_block_pallas.1} parent=11 // pred_region
        _
      $region16: #{residual_block_pallas.1} parent=11 // pred_fallthru
        _
      // Predicated region
      $region17: #{residual_block_pallas.1} parent=11 // pred_check
        %p209 = pneg %p81
      $region18: #{residual_block_pallas.1} parent=11 // pred_check_branch
        %211 = sbr.rel (%p209) target = $region20
      $region19: #{residual_block_pallas.1} parent=11 // pred_region
        _
      $region20: #{residual_block_pallas.1} parent=11 // pred_fallthru
        _
      // Predicated region
      $region21: #{residual_block_pallas.1} parent=11 // pred_check
        %p212 = pneg %p102
      $region22: #{residual_block_pallas.1} parent=11 // pred_check_branch
        %214 = sbr.rel (%p212) target = $region24
      $region23: #{residual_block_pallas.1} parent=11 // pred_region
        _
      $region24: #{residual_block_pallas.1} parent=11 // pred_fallthru
        _
      // Predicated region
      $region25: #{residual_block_pallas.1} parent=11 // pred_check
        %p215 = pneg %p123
      $region26: #{residual_block_pallas.1} parent=11 // pred_check_branch
        %217 = sbr.rel (%p215) target = $region28
      $region27: #{residual_block_pallas.1} parent=11 // pred_region
        _
      $region28: #{residual_block_pallas.1} parent=11 // pred_fallthru
        _
      // Predicated region
      $region29: #{residual_block_pallas.1} parent=11 // pred_check
        %p218 = pneg %p144
      $region30: #{residual_block_pallas.1} parent=11 // pred_check_branch
        %220 = sbr.rel (%p218) target = $region32
      $region31: #{residual_block_pallas.1} parent=11 // pred_region
        _
      $region32: #{residual_block_pallas.1} parent=11 // pred_fallthru
        _
      // Predicated region
      $region33: #{residual_block_pallas.1} parent=11 // pred_check
        %p221 = pneg %p165
      $region34: #{residual_block_pallas.1} parent=11 // pred_check_branch
        %223 = sbr.rel (%p221) target = $region36
      $region35: #{residual_block_pallas.1} parent=11 // pred_region
        _
      $region36: #{residual_block_pallas.1} parent=11 // pred_fallthru
        _
    $region12: #{residual_block_pallas.1} parent=5 // pred_fallthru
      _
    %p224 = scmp.lt.s32.totalorder %s13, 2
    // Predicated region
    $region37: #{residual_block_pallas.1} parent=5 // pred_check
      %p225 = pneg %p224
    $region38: #{residual_block_pallas.1} parent=5 // pred_check_branch
      %227 = sbr.rel (%p225) target = $region40
    $region39: #{residual_block_pallas.1} parent=5 // pred_region
      // Predicated region
      $region41: #{residual_block_pallas.1} parent=39 // pred_check
        %p228 = pneg %p33
      $region42: #{residual_block_pallas.1} parent=39 // pred_check_branch
        %230 = sbr.rel (%p228) target = $region44
      $region43: #{residual_block_pallas.1} parent=39 // pred_region
        %p231 = scmp.lt.s32.totalorder %s13, 1
        %s232 = scalar_select %p231, %s13, 1
        %s233 = smul.addr %s232, 54
        %s234 = smul.addr %s233, 4
        %s235 = scalar_lea.vmem %s0, %s234
      $region44: #{residual_block_pallas.1} parent=39 // pred_fallthru
        _
    $region40: #{residual_block_pallas.1} parent=5 // pred_fallthru
      _
    %p236 = scmp.le.s32.totalorder 1, %s13
    %p237 = scmp.lt.s32.totalorder %s13, 3
    %p238 = pnand %p236, %p237
    %p239 = pneg %p238
    // Predicated region
    $region45: #{residual_block_pallas.1} parent=5 // pred_check
      _
    $region46: #{residual_block_pallas.1} parent=5 // pred_check_branch
      %241 = sbr.rel (%p238) target = $region48
    $region47: #{residual_block_pallas.1} parent=5 // pred_region
      %s242 = ssub.s32 %s13, 1
      %p243 = scmp.lt.s32.totalorder %s18, 1
      %s244 = scalar_select %p243, %s18, 1
      %s245 = smul.addr %s244, 54
      %s246 = smul.addr %s245, 4
      %s247 = scalar_lea.vmem %s0, %s246
      %p248 = pneg %p39
      %p249 = pneg %p36
      %p250 = pneg %p60
      %p251 = pneg %p57
      %p252 = pneg %p81
      %p253 = pneg %p78
      %p254 = pneg %p102
      %p255 = pneg %p99
      %p256 = pneg %p123
      %p257 = pneg %p120
      %p258 = pneg %p144
      %p259 = pneg %p141
      %p260 = pneg %p165
      %p261 = pneg %p162
      %p262 = pneg %p191
      %p263 = pneg %p188
      %p264 = scmp.lt.s32.totalorder %s18, 1
      %s265 = scalar_select %p264, %s18, 1
      %s266 = smul.addr %s265, 32
      %s267 = smul.addr %s266, 8
      %s268 = scalar_lea.vmem %s7, %s267
      %p269 = scmp.lt.s32.totalorder %s18, 1
      %s270 = scalar_select %p269, %s18, 1
      %s271 = smul.addr %s270, 54
      %s272 = smul.addr %s271, 4
      %s273 = scalar_lea.vmem %s0, %s272
      %p274 = scmp.lt.s32.totalorder %s18, 1
      %s275 = scalar_select %p274, %s18, 1
      %s276 = smul.addr %s275, 32
      %s277 = smul.addr %s276, 8
      %s278 = scalar_lea.vmem %s7, %s277
      %v280 = vld [vmem:[%s273] sm:$0xf]
      %v281 = vld [vmem:[%s273 + $0x4] sm:$0xf]
      %v282 = vld [vmem:[%s273 + $0xc] sm:$0xf]
      %v283 = vld [vmem:[%s273 + $0x10] sm:$0xf]
      %v284 = vld [vmem:[%s273 + $0x18] sm:$0xf]
      %v285 = vld [vmem:[%s273 + $0x1c] sm:$0xf]
      %v286 = vld [vmem:[%s273 + $0x24] sm:$0xf]
      %v287 = vld [vmem:[%s273 + $0x28] sm:$0xf]
      %v288 = vld [vmem:[%s273 + $0x30] sm:$0xf]
      %v289 = vld [vmem:[%s273 + $0x34] sm:$0xf]
      %v290 = vld [vmem:[%s273 + $0x3c] sm:$0xf]
      %v291 = vld [vmem:[%s273 + $0x40] sm:$0xf]
      %v292 = vld [vmem:[%s273 + $0x48] sm:$0xf]
      %v293 = vld [vmem:[%s273 + $0x4c] sm:$0xf]
      %v294 = vld [vmem:[%s273 + $0x54] sm:$0xf]
      %v295 = vld [vmem:[%s273 + $0x58] sm:$0xf]
      %v296 = vld [vmem:[%s273 + $0x60] sm:$0xf]
      %v297 = vld [vmem:[%s273 + $0x64] sm:$0xf]
      %v298 = vld [vmem:[%s273 + $0x6c] sm:$0xf]
      %v299 = vld [vmem:[%s273 + $0x70] sm:$0xf]
      %v300 = vld [vmem:[%s273 + $0x78] sm:$0xf]
      %v301 = vld [vmem:[%s273 + $0x7c] sm:$0xf]
      %v302 = vld [vmem:[%s273 + $0x84] sm:$0xf]
      %v303 = vld [vmem:[%s273 + $0x88] sm:$0xf]
      %v304 = vld [vmem:[%s273 + $0x90] sm:$0xf]
      %v305 = vld [vmem:[%s273 + $0x94] sm:$0xf]
      %v306 = vld [vmem:[%s273 + $0x9c] sm:$0xf]
      %v307 = vld [vmem:[%s273 + $0xa0] sm:$0xf]
      %v308 = vld [vmem:[%s273 + $0xa8] sm:$0xf]
      %v309 = vld [vmem:[%s273 + $0xac] sm:$0xf]
      %v310 = vld [vmem:[%s273 + $0xb4] sm:$0xf]
      %v311 = vld [vmem:[%s273 + $0xb8] sm:$0xf]
      %v312 = vld [vmem:[%s1] sm:$0xf]
      %v313 = vld [vmem:[%s1 + $0x4] sm:$0xf]
      %v314 = vld [vmem:[%s1 + $0x8] sm:$0xf]
      %v315 = vld [vmem:[%s1 + $0xc] sm:$0xf]
      %v316 = vld [vmem:[%s1 + $0x10] sm:$0xf]
      %v317 = vld [vmem:[%s1 + $0x14] sm:$0xf]
      %v318 = vld [vmem:[%s1 + $0x18] sm:$0xf]
      %v319 = vld [vmem:[%s1 + $0x1c] sm:$0xf]
      %v320 = vld [vmem:[%s1 + $0x20] sm:$0xf]
      %v321 = vld [vmem:[%s1 + $0x24] sm:$0xf]
      %v322 = vld [vmem:[%s1 + $0x28] sm:$0xf]
      %v323 = vld [vmem:[%s1 + $0x2c] sm:$0xf]
      %v324 = vld [vmem:[%s1 + $0x30] sm:$0xf]
      %v325 = vld [vmem:[%s1 + $0x34] sm:$0xf]
      %v326 = vld [vmem:[%s1 + $0x38] sm:$0xf]
      %v327 = vld [vmem:[%s1 + $0x3c] sm:$0xf]
      %v328 = vld [vmem:[%s273 + $0x8] sm:$0x1]
      %v329 = vld [vmem:[%s273 + $0x14] sm:$0x1]
      %v330 = vld [vmem:[%s273 + $0x20] sm:$0x1]
      %v331 = vld [vmem:[%s273 + $0x2c] sm:$0x1]
      %v332 = vld [vmem:[%s273 + $0x38] sm:$0x1]
      %v333 = vld [vmem:[%s273 + $0x44] sm:$0x1]
      %v334 = vld [vmem:[%s273 + $0x50] sm:$0x1]
      %v335 = vld [vmem:[%s273 + $0x5c] sm:$0x1]
      %v336 = vld [vmem:[%s273 + $0x68] sm:$0x1]
      %v337 = vld [vmem:[%s273 + $0x74] sm:$0x1]
      %v338 = vld [vmem:[%s273 + $0x80] sm:$0x1]
      %v339 = vld [vmem:[%s273 + $0x8c] sm:$0x1]
      %v340 = vld [vmem:[%s273 + $0x98] sm:$0x1]
      %v341 = vld [vmem:[%s273 + $0xa4] sm:$0x1]
      %v342 = vld [vmem:[%s273 + $0xb0] sm:$0x1]
      %v343 = vld [vmem:[%s273 + $0xbc] sm:$0x1]
      %vm344 = vsmask.f32 3328
      %vm345 = vsmask.f32 7440
      %vm346 = vmor %vm344, %vm345
      %v348 = vshrl.u32 %v280, 16
      %v350 = vrot.slane %v348, 4
      %v351 = vshll.u32 %v280, 16
      %v353 = vrot.slane %v351, 5
      %v354 = vor.u32 %v350, %v353
      %v355 = vrot.slane %v354, 4
      %v357 = vshll.u32 %v281, 16
      %v359 = vrot.slane %v357, 5
      %v360 = vsel %vm346, %v355, %v359
      %v361 = vshrl.u32 %v281, 16
      %v363 = vrot.slane %v361, 4
      %v364 = vor.u32 %v363, %v359
      %v365 = vrot.slane %v364, 4
      %v367 = vshll.u32 %v328, 16
      %v369 = vrot.slane %v367, 5
      %v370 = vsel %vm346, %v365, %v369
      %v372 = vshrl.u32 %v282, 16
      %v374 = vrot.slane %v372, 4
      %v375 = vshll.u32 %v282, 16
      %v377 = vrot.slane %v375, 5
      %v378 = vor.u32 %v374, %v377
      %v379 = vrot.slane %v378, 4
      %v381 = vshll.u32 %v283, 16
      %v383 = vrot.slane %v381, 5
      %v384 = vsel %vm346, %v379, %v383
      %v385 = vshrl.u32 %v283, 16
      %v387 = vrot.slane %v385, 4
      %v388 = vor.u32 %v387, %v383
      %v389 = vrot.slane %v388, 4
      %v391 = vshll.u32 %v329, 16
      %v393 = vrot.slane %v391, 5
      %v394 = vsel %vm346, %v389, %v393
      %v396 = vshrl.u32 %v284, 16
      %v398 = vrot.slane %v396, 4
      %v399 = vshll.u32 %v284, 16
      %v401 = vrot.slane %v399, 5
      %v402 = vor.u32 %v398, %v401
      %v403 = vrot.slane %v402, 4
      %v405 = vshll.u32 %v285, 16
      %v407 = vrot.slane %v405, 5
      %v408 = vsel %vm346, %v403, %v407
      %v409 = vshrl.u32 %v285, 16
      %v411 = vrot.slane %v409, 4
      %v412 = vor.u32 %v411, %v407
      %v413 = vrot.slane %v412, 4
      %v415 = vshll.u32 %v330, 16
      %v417 = vrot.slane %v415, 5
      %v418 = vsel %vm346, %v413, %v417
      %v420 = vshrl.u32 %v286, 16
      %v422 = vrot.slane %v420, 4
      %v423 = vshll.u32 %v286, 16
      %v425 = vrot.slane %v423, 5
      %v426 = vor.u32 %v422, %v425
      %v427 = vrot.slane %v426, 4
      %v429 = vshll.u32 %v287, 16
      %v431 = vrot.slane %v429, 5
      %v432 = vsel %vm346, %v427, %v431
      %v433 = vshrl.u32 %v287, 16
      %v435 = vrot.slane %v433, 4
      %v436 = vor.u32 %v435, %v431
      %v437 = vrot.slane %v436, 4
      %v439 = vshll.u32 %v331, 16
      %v441 = vrot.slane %v439, 5
      %v442 = vsel %vm346, %v437, %v441
      %v444 = vshrl.u32 %v288, 16
      %v446 = vrot.slane %v444, 4
      %v447 = vshll.u32 %v288, 16
      %v449 = vrot.slane %v447, 5
      %v450 = vor.u32 %v446, %v449
      %v451 = vrot.slane %v450, 4
      %v453 = vshll.u32 %v289, 16
      %v455 = vrot.slane %v453, 5
      %v456 = vsel %vm346, %v451, %v455
      %v457 = vshrl.u32 %v289, 16
      %v459 = vrot.slane %v457, 4
      %v460 = vor.u32 %v459, %v455
      %v461 = vrot.slane %v460, 4
      %v463 = vshll.u32 %v332, 16
      %v465 = vrot.slane %v463, 5
      %v466 = vsel %vm346, %v461, %v465
      %v468 = vshrl.u32 %v290, 16
      %v470 = vrot.slane %v468, 4
      %v471 = vshll.u32 %v290, 16
      %v473 = vrot.slane %v471, 5
      %v474 = vor.u32 %v470, %v473
      %v475 = vrot.slane %v474, 4
      %v477 = vshll.u32 %v291, 16
      %v479 = vrot.slane %v477, 5
      %v480 = vsel %vm346, %v475, %v479
      %v481 = vshrl.u32 %v291, 16
      %v483 = vrot.slane %v481, 4
      %v484 = vor.u32 %v483, %v479
      %v485 = vrot.slane %v484, 4
      %v487 = vshll.u32 %v333, 16
      %v489 = vrot.slane %v487, 5
      %v490 = vsel %vm346, %v485, %v489
      %v492 = vshrl.u32 %v292, 16
      %v494 = vrot.slane %v492, 4
      %v495 = vshll.u32 %v292, 16
      %v497 = vrot.slane %v495, 5
      %v498 = vor.u32 %v494, %v497
      %v499 = vrot.slane %v498, 4
      %v501 = vshll.u32 %v293, 16
      %v503 = vrot.slane %v501, 5
      %v504 = vsel %vm346, %v499, %v503
      %v505 = vshrl.u32 %v293, 16
      %v507 = vrot.slane %v505, 4
      %v508 = vor.u32 %v507, %v503
      %v509 = vrot.slane %v508, 4
      %v511 = vshll.u32 %v334, 16
      %v513 = vrot.slane %v511, 5
      %v514 = vsel %vm346, %v509, %v513
      %v516 = vshrl.u32 %v294, 16
      %v518 = vrot.slane %v516, 4
      %v519 = vshll.u32 %v294, 16
      %v521 = vrot.slane %v519, 5
      %v522 = vor.u32 %v518, %v521
      %v523 = vrot.slane %v522, 4
      %v525 = vshll.u32 %v295, 16
      %v527 = vrot.slane %v525, 5
      %v528 = vsel %vm346, %v523, %v527
      %v529 = vshrl.u32 %v295, 16
      %v531 = vrot.slane %v529, 4
      %v532 = vor.u32 %v531, %v527
      %v533 = vrot.slane %v532, 4
      %v535 = vshll.u32 %v335, 16
      %v537 = vrot.slane %v535, 5
      %v538 = vsel %vm346, %v533, %v537
      %v540 = vshrl.u32 %v296, 16
      %v542 = vrot.slane %v540, 4
      %v543 = vshll.u32 %v296, 16
      %v545 = vrot.slane %v543, 5
      %v546 = vor.u32 %v542, %v545
      %v547 = vrot.slane %v546, 4
      %v549 = vshll.u32 %v297, 16
      %v551 = vrot.slane %v549, 5
      %v552 = vsel %vm346, %v547, %v551
      %v553 = vshrl.u32 %v297, 16
      %v555 = vrot.slane %v553, 4
      %v556 = vor.u32 %v555, %v551
      %v557 = vrot.slane %v556, 4
      %v559 = vshll.u32 %v336, 16
      %v561 = vrot.slane %v559, 5
      %v562 = vsel %vm346, %v557, %v561
      %v564 = vshrl.u32 %v298, 16
      %v566 = vrot.slane %v564, 4
      %v567 = vshll.u32 %v298, 16
      %v569 = vrot.slane %v567, 5
      %v570 = vor.u32 %v566, %v569
      %v571 = vrot.slane %v570, 4
      %v573 = vshll.u32 %v299, 16
      %v575 = vrot.slane %v573, 5
      %v576 = vsel %vm346, %v571, %v575
      %v577 = vshrl.u32 %v299, 16
      %v579 = vrot.slane %v577, 4
      %v580 = vor.u32 %v579, %v575
      %v581 = vrot.slane %v580, 4
      %v583 = vshll.u32 %v337, 16
      %v585 = vrot.slane %v583, 5
      %v586 = vsel %vm346, %v581, %v585
      %v588 = vshrl.u32 %v300, 16
      %v590 = vrot.slane %v588, 4
      %v591 = vshll.u32 %v300, 16
      %v593 = vrot.slane %v591, 5
      %v594 = vor.u32 %v590, %v593
      %v595 = vrot.slane %v594, 4
      %v597 = vshll.u32 %v301, 16
      %v599 = vrot.slane %v597, 5
      %v600 = vsel %vm346, %v595, %v599
      %v601 = vshrl.u32 %v301, 16
      %v603 = vrot.slane %v601, 4
      %v604 = vor.u32 %v603, %v599
      %v605 = vrot.slane %v604, 4
      %v607 = vshll.u32 %v338, 16
      %v609 = vrot.slane %v607, 5
      %v610 = vsel %vm346, %v605, %v609
      %v612 = vshrl.u32 %v302, 16
      %v614 = vrot.slane %v612, 4
      %v615 = vshll.u32 %v302, 16
      %v617 = vrot.slane %v615, 5
      %v618 = vor.u32 %v614, %v617
      %v619 = vrot.slane %v618, 4
      %v621 = vshll.u32 %v303, 16
      %v623 = vrot.slane %v621, 5
      %v624 = vsel %vm346, %v619, %v623
      %v625 = vshrl.u32 %v303, 16
      %v627 = vrot.slane %v625, 4
      %v628 = vor.u32 %v627, %v623
      %v629 = vrot.slane %v628, 4
      %v631 = vshll.u32 %v339, 16
      %v633 = vrot.slane %v631, 5
      %v634 = vsel %vm346, %v629, %v633
      %v636 = vshrl.u32 %v304, 16
      %v638 = vrot.slane %v636, 4
      %v639 = vshll.u32 %v304, 16
      %v641 = vrot.slane %v639, 5
      %v642 = vor.u32 %v638, %v641
      %v643 = vrot.slane %v642, 4
      %v645 = vshll.u32 %v305, 16
      %v647 = vrot.slane %v645, 5
      %v648 = vsel %vm346, %v643, %v647
      %v649 = vshrl.u32 %v305, 16
      %v651 = vrot.slane %v649, 4
      %v652 = vor.u32 %v651, %v647
      %v653 = vrot.slane %v652, 4
      %v655 = vshll.u32 %v340, 16
      %v657 = vrot.slane %v655, 5
      %v658 = vsel %vm346, %v653, %v657
      %v660 = vshrl.u32 %v306, 16
      %v662 = vrot.slane %v660, 4
      %v663 = vshll.u32 %v306, 16
      %v665 = vrot.slane %v663, 5
      %v666 = vor.u32 %v662, %v665
      %v667 = vrot.slane %v666, 4
      %v669 = vshll.u32 %v307, 16
      %v671 = vrot.slane %v669, 5
      %v672 = vsel %vm346, %v667, %v671
      %v673 = vshrl.u32 %v307, 16
      %v675 = vrot.slane %v673, 4
      %v676 = vor.u32 %v675, %v671
      %v677 = vrot.slane %v676, 4
      %v679 = vshll.u32 %v341, 16
      %v681 = vrot.slane %v679, 5
      %v682 = vsel %vm346, %v677, %v681
      %v684 = vshrl.u32 %v308, 16
      %v686 = vrot.slane %v684, 4
      %v687 = vshll.u32 %v308, 16
      %v689 = vrot.slane %v687, 5
      %v690 = vor.u32 %v686, %v689
      %v691 = vrot.slane %v690, 4
      %v693 = vshll.u32 %v309, 16
      %v695 = vrot.slane %v693, 5
      %v696 = vsel %vm346, %v691, %v695
      %v697 = vshrl.u32 %v309, 16
      %v699 = vrot.slane %v697, 4
      %v700 = vor.u32 %v699, %v695
      %v701 = vrot.slane %v700, 4
      %v703 = vshll.u32 %v342, 16
      %v705 = vrot.slane %v703, 5
      %v706 = vsel %vm346, %v701, %v705
      %v708 = vshrl.u32 %v310, 16
      %v710 = vrot.slane %v708, 4
      %v711 = vshll.u32 %v310, 16
      %v713 = vrot.slane %v711, 5
      %v714 = vor.u32 %v710, %v713
      %v715 = vrot.slane %v714, 4
      %v717 = vshll.u32 %v311, 16
      %v719 = vrot.slane %v717, 5
      %v720 = vsel %vm346, %v715, %v719
      %v721 = vshrl.u32 %v311, 16
      %v723 = vrot.slane %v721, 4
      %v724 = vor.u32 %v723, %v719
      %v725 = vrot.slane %v724, 4
      %v727 = vshll.u32 %v343, 16
      %v729 = vrot.slane %v727, 5
      %v730 = vsel %vm346, %v725, %v729
      %s731 = scalar_lea.vmem %s1, 64
      %v732 = vld [vmem:[%s731] sm:$0xf]
      %v733 = vld [vmem:[%s731 + $0x4] sm:$0xf]
      %v734 = vld [vmem:[%s731 + $0x8] sm:$0xf]
      %v735 = vld [vmem:[%s731 + $0xc] sm:$0xf]
      %v736 = vld [vmem:[%s731 + $0x10] sm:$0xf]
      %v737 = vld [vmem:[%s731 + $0x14] sm:$0xf]
      %v738 = vld [vmem:[%s731 + $0x18] sm:$0xf]
      %v739 = vld [vmem:[%s731 + $0x1c] sm:$0xf]
      %v740 = vld [vmem:[%s731 + $0x20] sm:$0xf]
      %v741 = vld [vmem:[%s731 + $0x24] sm:$0xf]
      %v742 = vld [vmem:[%s731 + $0x28] sm:$0xf]
      %v743 = vld [vmem:[%s731 + $0x2c] sm:$0xf]
      %v744 = vld [vmem:[%s731 + $0x30] sm:$0xf]
      %v745 = vld [vmem:[%s731 + $0x34] sm:$0xf]
      %v746 = vld [vmem:[%s731 + $0x38] sm:$0xf]
      %v747 = vld [vmem:[%s731 + $0x3c] sm:$0xf]
      %v748 = vunpack.c.l.b16 %v360
      %v749 = vunpack.c.l.b16 %v370
      %v750 = vunpack.c.l.b16 %v384
      %v751 = vunpack.c.l.b16 %v394
      %v752 = vunpack.c.l.b16 %v408
      %v753 = vunpack.c.l.b16 %v418
      %v754 = vunpack.c.l.b16 %v432
      %v755 = vunpack.c.l.b16 %v442
      %v756 = vunpack.c.l.b16 %v456
      %v757 = vunpack.c.l.b16 %v466
      %v758 = vunpack.c.l.b16 %v480
      %v759 = vunpack.c.l.b16 %v490
      %v760 = vunpack.c.l.b16 %v504
      %v761 = vunpack.c.l.b16 %v514
      %v762 = vunpack.c.l.b16 %v528
      %v763 = vunpack.c.l.b16 %v538
      %v764 = vunpack.c.l.b16 %v552
      %v765 = vunpack.c.l.b16 %v562
      %v766 = vunpack.c.l.b16 %v576
      %v767 = vunpack.c.l.b16 %v586
      %v768 = vunpack.c.l.b16 %v600
      %v769 = vunpack.c.l.b16 %v610
      %v770 = vunpack.c.l.b16 %v624
      %v771 = vunpack.c.l.b16 %v634
      %v772 = vunpack.c.l.b16 %v648
      %v773 = vunpack.c.l.b16 %v658
      %v774 = vunpack.c.l.b16 %v672
      %v775 = vunpack.c.l.b16 %v682
      %v776 = vunpack.c.l.b16 %v696
      %v777 = vunpack.c.l.b16 %v706
      %v778 = vunpack.c.l.b16 %v720
      %v779 = vunpack.c.l.b16 %v730
      %v780 = vpack.c.b16 %v749, %v748
      %v781 = vpack.c.b16 %v751, %v750
      %v782 = vpack.c.b16 %v753, %v752
      %v783 = vpack.c.b16 %v755, %v754
      %v784 = vpack.c.b16 %v757, %v756
      %v785 = vpack.c.b16 %v759, %v758
      %v786 = vpack.c.b16 %v761, %v760
      %v787 = vpack.c.b16 %v763, %v762
      %v788 = vpack.c.b16 %v765, %v764
      %v789 = vpack.c.b16 %v767, %v766
      %v790 = vpack.c.b16 %v769, %v768
      %v791 = vpack.c.b16 %v771, %v770
      %v792 = vpack.c.b16 %v773, %v772
      %v793 = vpack.c.b16 %v775, %v774
      %v794 = vpack.c.b16 %v777, %v776
      %v795 = vpack.c.b16 %v779, %v778
      %v828 = vunpack.c.l.b16 %v732
      %v829 = vunpack.c.l.b16 %v733
      %v830 = vunpack.c.l.b16 %v734
      %v831 = vunpack.c.l.b16 %v735
      %v832 = vunpack.c.l.b16 %v736
      %v833 = vunpack.c.l.b16 %v737
      %v834 = vunpack.c.l.b16 %v738
      %v835 = vunpack.c.l.b16 %v739
      %v836 = vunpack.c.l.b16 %v740
      %v837 = vunpack.c.l.b16 %v741
      %v838 = vunpack.c.l.b16 %v742
      %v839 = vunpack.c.l.b16 %v743
      %v840 = vunpack.c.l.b16 %v744
      %v841 = vunpack.c.l.b16 %v745
      %v842 = vunpack.c.l.b16 %v746
      %v843 = vunpack.c.l.b16 %v747
      %v844 = vpack.c.b16 %v829, %v828
      %v845 = vpack.c.b16 %v831, %v830
      %v846 = vpack.c.b16 %v833, %v832
      %v847 = vpack.c.b16 %v835, %v834
      %v848 = vpack.c.b16 %v837, %v836
      %v849 = vpack.c.b16 %v839, %v838
      %v850 = vpack.c.b16 %v841, %v840
      %v851 = vpack.c.b16 %v843, %v842
      %860 = vmatprep.subr.bf16.mxu0 0
      %861 = vmatpush1.bf16.msra.mxu0 %v844
      %862 = vmatprep.subr.bf16.mxu0 0
      %863 = vmatpush1.bf16.msra.mxu0 %v845
      %864 = vmatprep.subr.bf16.mxu0 0
      %865 = vmatpush1.bf16.msra.mxu0 %v846
      %866 = vmatprep.subr.bf16.mxu0 0
      %867 = vmatpush1.bf16.msra.mxu0 %v847
      %868 = vmatprep.subr.bf16.mxu0 0
      %869 = vmatpush1.bf16.msra.mxu0 %v848
      %870 = vmatprep.subr.bf16.mxu0 0
      %871 = vmatpush1.bf16.msra.mxu0 %v849
      %872 = vmatprep.subr.bf16.mxu0 0
      %873 = vmatpush1.bf16.msra.mxu0 %v850
      %874 = vmatprep.subr.bf16.mxu0 0
      %875 = vmatpush1.bf16.msra.mxu0 %v851
      %876 = vmatprep.subr.bf16.mxu0 0
      %877 = vmatpush1.bf16.msra.mxu0 0
      %878 = vmatprep.subr.bf16.mxu0 0
      %879 = vmatpush1.bf16.msra.mxu0 0
      %880 = vmatprep.subr.bf16.mxu0 0
      %881 = vmatpush1.bf16.msra.mxu0 0
      %882 = vmatprep.subr.bf16.mxu0 0
      %883 = vmatpush1.bf16.msra.mxu0 0
      %884 = vmatprep.subr.bf16.mxu0 0
      %885 = vmatpush1.bf16.msra.mxu0 0
      %886 = vmatprep.subr.bf16.mxu0 0
      %887 = vmatpush1.bf16.msra.mxu0 0
      %888 = vmatprep.subr.bf16.mxu0 0
      %889 = vmatpush1.bf16.msra.mxu0 0
      %890 = vmatprep.subr.bf16.mxu0 0
      %891 = vmatpush1.bf16.msra.mxu0 0
      %892 = vmatprep.mubr.bf16.mxu0 0
      %893 = vmatmul.mubr.bf16.gmra.mrb[0].mxu0 %v780
      %v894 = vpop.f32.mrb[0].mxu0
      %v895 = vadd.f32 0.0, %v894
      %v896 = vpop.f32.mrb[0].mxu0
      %v897 = vpop.f32.mrb[0].mxu0
      %v898 = vadd.f32 0.0, %v897
      %v899 = vpop.f32.mrb[0].mxu0
      %900 = vmatprep.mubr.bf16.mxu0 0
      %901 = vmatmul.mubr.bf16.gmra.mrb[0].mxu0 %v781
      %v902 = vpop.f32.mrb[0].mxu0
      %v903 = vadd.f32 0.0, %v902
      %v904 = vpop.f32.mrb[0].mxu0
      %v905 = vpop.f32.mrb[0].mxu0
      %v906 = vadd.f32 0.0, %v905
      %v907 = vpop.f32.mrb[0].mxu0
      %908 = vmatprep.mubr.bf16.mxu0 0
      %909 = vmatmul.mubr.bf16.gmra.mrb[0].mxu0 %v782
      %v910 = vpop.f32.mrb[0].mxu0
      %v911 = vadd.f32 0.0, %v910
      %v912 = vpop.f32.mrb[0].mxu0
      %v913 = vpop.f32.mrb[0].mxu0
      %v914 = vadd.f32 0.0, %v913
      %v915 = vpop.f32.mrb[0].mxu0
      %916 = vmatprep.mubr.bf16.mxu0 0
      %917 = vmatmul.mubr.bf16.gmra.mrb[0].mxu0 %v783
      %v918 = vpop.f32.mrb[0].mxu0
      %v919 = vadd.f32 0.0, %v918
      %v920 = vpop.f32.mrb[0].mxu0
      %v921 = vpop.f32.mrb[0].mxu0
      %v922 = vadd.f32 0.0, %v921
      %v923 = vpop.f32.mrb[0].mxu0
      %924 = vmatprep.mubr.bf16.mxu0 0
      %925 = vmatmul.mubr.bf16.gmra.mrb[0].mxu0 %v784
      %v926 = vpop.f32.mrb[0].mxu0
      %v927 = vadd.f32 0.0, %v926
      %v928 = vpop.f32.mrb[0].mxu0
      %v929 = vpop.f32.mrb[0].mxu0
      %v930 = vadd.f32 0.0, %v929
      %v931 = vpop.f32.mrb[0].mxu0
      %932 = vmatprep.mubr.bf16.mxu0 0
      %933 = vmatmul.mubr.bf16.gmra.mrb[0].mxu0 %v785
      %v934 = vpop.f32.mrb[0].mxu0
      %v935 = vadd.f32 0.0, %v934
      %v936 = vpop.f32.mrb[0].mxu0
      %v937 = vpop.f32.mrb[0].mxu0
      %v938 = vadd.f32 0.0, %v937
      %v939 = vpop.f32.mrb[0].mxu0
      %940 = vmatprep.mubr.bf16.mxu0 0
      %941 = vmatmul.mubr.bf16.gmra.mrb[0].mxu0 %v786
      %v942 = vpop.f32.mrb[0].mxu0
      %v943 = vadd.f32 0.0, %v942
      %v944 = vpop.f32.mrb[0].mxu0
      %v945 = vpop.f32.mrb[0].mxu0
      %v946 = vadd.f32 0.0, %v945
      %v947 = vpop.f32.mrb[0].mxu0
      %948 = vmatprep.mubr.bf16.mxu0 0
      %949 = vmatmul.mubr.bf16.gmra.mrb[0].mxu0 %v787
      %v950 = vpop.f32.mrb[0].mxu0
      %v951 = vadd.f32 0.0, %v950
      %v952 = vpop.f32.mrb[0].mxu0
      %v953 = vpop.f32.mrb[0].mxu0
      %v954 = vadd.f32 0.0, %v953
      %v955 = vpop.f32.mrb[0].mxu0
      %956 = vmatprep.mubr.bf16.mxu0 0
      %957 = vmatmul.mubr.bf16.gmra.mrb[0].mxu0 %v788
      %v958 = vpop.f32.mrb[0].mxu0
      %v959 = vadd.f32 0.0, %v958
      %v960 = vpop.f32.mrb[0].mxu0
      %v961 = vpop.f32.mrb[0].mxu0
      %v962 = vadd.f32 0.0, %v961
      %v963 = vpop.f32.mrb[0].mxu0
      %964 = vmatprep.mubr.bf16.mxu0 0
      %965 = vmatmul.mubr.bf16.gmra.mrb[0].mxu0 %v789
      %v966 = vpop.f32.mrb[0].mxu0
      %v967 = vadd.f32 0.0, %v966
      %v968 = vpop.f32.mrb[0].mxu0
      %v969 = vpop.f32.mrb[0].mxu0
      %v970 = vadd.f32 0.0, %v969
      %v971 = vpop.f32.mrb[0].mxu0
      %972 = vmatprep.mubr.bf16.mxu0 0
      %973 = vmatmul.mubr.bf16.gmra.mrb[0].mxu0 %v790
      %v974 = vpop.f32.mrb[0].mxu0
      %v975 = vadd.f32 0.0, %v974
      %v976 = vpop.f32.mrb[0].mxu0
      %v977 = vpop.f32.mrb[0].mxu0
      %v978 = vadd.f32 0.0, %v977
      %v979 = vpop.f32.mrb[0].mxu0
      %980 = vmatprep.mubr.bf16.mxu0 0
      %981 = vmatmul.mubr.bf16.gmra.mrb[0].mxu0 %v791
      %v982 = vpop.f32.mrb[0].mxu0
      %v983 = vadd.f32 0.0, %v982
      %v984 = vpop.f32.mrb[0].mxu0
      %v985 = vpop.f32.mrb[0].mxu0
      %v986 = vadd.f32 0.0, %v985
      %v987 = vpop.f32.mrb[0].mxu0
      %988 = vmatprep.mubr.bf16.mxu0 0
      %989 = vmatmul.mubr.bf16.gmra.mrb[0].mxu0 %v792
      %v990 = vpop.f32.mrb[0].mxu0
      %v991 = vadd.f32 0.0, %v990
      %v992 = vpop.f32.mrb[0].mxu0
      %v993 = vpop.f32.mrb[0].mxu0
      %v994 = vadd.f32 0.0, %v993
      %v995 = vpop.f32.mrb[0].mxu0
      %996 = vmatprep.mubr.bf16.mxu0 0
      %997 = vmatmul.mubr.bf16.gmra.mrb[0].mxu0 %v793
      %v998 = vpop.f32.mrb[0].mxu0
      %v999 = vadd.f32 0.0, %v998
      %v1000 = vpop.f32.mrb[0].mxu0
      %v1001 = vpop.f32.mrb[0].mxu0
      %v1002 = vadd.f32 0.0, %v1001
      %v1003 = vpop.f32.mrb[0].mxu0
      %1004 = vmatprep.mubr.bf16.mxu0 0
      %1005 = vmatmul.mubr.bf16.gmra.mrb[0].mxu0 %v794
      %v1006 = vpop.f32.mrb[0].mxu0
      %v1007 = vadd.f32 0.0, %v1006
      %v1008 = vpop.f32.mrb[0].mxu0
      %v1009 = vpop.f32.mrb[0].mxu0
      %v1010 = vadd.f32 0.0, %v1009
      %v1011 = vpop.f32.mrb[0].mxu0
      %1012 = vmatprep.mubr.bf16.mxu0 0
      %1013 = vmatmul.mubr.bf16.gmra.mrb[0].mxu0 %v795
      %v1014 = vpop.f32.mrb[0].mxu0
      %v1015 = vadd.f32 0.0, %v1014
      %v1016 = vpop.f32.mrb[0].mxu0
      %v1017 = vpop.f32.mrb[0].mxu0
      %v1018 = vadd.f32 0.0, %v1017
      %v1019 = vpop.f32.mrb[0].mxu0
      %1020 = vdwg.mxu0
      %v1053 = vunpack.c.l.b16 %v280
      %v1054 = vunpack.c.l.b16 %v281
      %v1055 = vunpack.c.l.b16 %v282
      %v1056 = vunpack.c.l.b16 %v283
      %v1057 = vunpack.c.l.b16 %v284
      %v1058 = vunpack.c.l.b16 %v285
      %v1059 = vunpack.c.l.b16 %v286
      %v1060 = vunpack.c.l.b16 %v287
      %v1061 = vunpack.c.l.b16 %v288
      %v1062 = vunpack.c.l.b16 %v289
      %v1063 = vunpack.c.l.b16 %v290
      %v1064 = vunpack.c.l.b16 %v291
      %v1065 = vunpack.c.l.b16 %v292
      %v1066 = vunpack.c.l.b16 %v293
      %v1067 = vunpack.c.l.b16 %v294
      %v1068 = vunpack.c.l.b16 %v295
      %v1069 = vunpack.c.l.b16 %v296
      %v1070 = vunpack.c.l.b16 %v297
      %v1071 = vunpack.c.l.b16 %v298
      %v1072 = vunpack.c.l.b16 %v299
      %v1073 = vunpack.c.l.b16 %v300
      %v1074 = vunpack.c.l.b16 %v301
      %v1075 = vunpack.c.l.b16 %v302
      %v1076 = vunpack.c.l.b16 %v303
      %v1077 = vunpack.c.l.b16 %v304
      %v1078 = vunpack.c.l.b16 %v305
      %v1079 = vunpack.c.l.b16 %v306
      %v1080 = vunpack.c.l.b16 %v307
      %v1081 = vunpack.c.l.b16 %v308
      %v1082 = vunpack.c.l.b16 %v309
      %v1083 = vunpack.c.l.b16 %v310
      %v1084 = vunpack.c.l.b16 %v311
      %v1085 = vpack.c.b16 %v1054, %v1053
      %v1086 = vpack.c.b16 %v1056, %v1055
      %v1087 = vpack.c.b16 %v1058, %v1057
      %v1088 = vpack.c.b16 %v1060, %v1059
      %v1089 = vpack.c.b16 %v1062, %v1061
      %v1090 = vpack.c.b16 %v1064, %v1063
      %v1091 = vpack.c.b16 %v1066, %v1065
      %v1092 = vpack.c.b16 %v1068, %v1067
      %v1093 = vpack.c.b16 %v1070, %v1069
      %v1094 = vpack.c.b16 %v1072, %v1071
      %v1095 = vpack.c.b16 %v1074, %v1073
      %v1096 = vpack.c.b16 %v1076, %v1075
      %v1097 = vpack.c.b16 %v1078, %v1077
      %v1098 = vpack.c.b16 %v1080, %v1079
      %v1099 = vpack.c.b16 %v1082, %v1081
      %v1100 = vpack.c.b16 %v1084, %v1083
      %v1133 = vunpack.c.l.b16 %v312
      %v1134 = vunpack.c.l.b16 %v313
      %v1135 = vunpack.c.l.b16 %v314
      %v1136 = vunpack.c.l.b16 %v315
      %v1137 = vunpack.c.l.b16 %v316
      %v1138 = vunpack.c.l.b16 %v317
      %v1139 = vunpack.c.l.b16 %v318
      %v1140 = vunpack.c.l.b16 %v319
      %v1141 = vunpack.c.l.b16 %v320
      %v1142 = vunpack.c.l.b16 %v321
      %v1143 = vunpack.c.l.b16 %v322
      %v1144 = vunpack.c.l.b16 %v323
      %v1145 = vunpack.c.l.b16 %v324
      %v1146 = vunpack.c.l.b16 %v325
      %v1147 = vunpack.c.l.b16 %v326
      %v1148 = vunpack.c.l.b16 %v327
      %v1149 = vpack.c.b16 %v1134, %v1133
      %v1150 = vpack.c.b16 %v1136, %v1135
      %v1151 = vpack.c.b16 %v1138, %v1137
      %v1152 = vpack.c.b16 %v1140, %v1139
      %v1153 = vpack.c.b16 %v1142, %v1141
      %v1154 = vpack.c.b16 %v1144, %v1143
      %v1155 = vpack.c.b16 %v1146, %v1145
      %v1156 = vpack.c.b16 %v1148, %v1147
      %1165 = vmatprep.subr.bf16.mxu0 0
      %1166 = vmatpush1.bf16.msra.mxu0 %v1149
      %1167 = vmatprep.subr.bf16.mxu0 0
      %1168 = vmatpush1.bf16.msra.mxu0 %v1150
      %1169 = vmatprep.subr.bf16.mxu0 0
      %1170 = vmatpush1.bf16.msra.mxu0 %v1151
      %1171 = vmatprep.subr.bf16.mxu0 0
      %1172 = vmatpush1.bf16.msra.mxu0 %v1152
      %1173 = vmatprep.subr.bf16.mxu0 0
      %1174 = vmatpush1.bf16.msra.mxu0 %v1153
      %1175 = vmatprep.subr.bf16.mxu0 0
      %1176 = vmatpush1.bf16.msra.mxu0 %v1154
      %1177 = vmatprep.subr.bf16.mxu0 0
      %1178 = vmatpush1.bf16.msra.mxu0 %v1155
      %1179 = vmatprep.subr.bf16.mxu0 0
      %1180 = vmatpush1.bf16.msra.mxu0 %v1156
      %1181 = vmatprep.subr.bf16.mxu0 0
      %1182 = vmatpush1.bf16.msra.mxu0 0
      %1183 = vmatprep.subr.bf16.mxu0 0
      %1184 = vmatpush1.bf16.msra.mxu0 0
      %1185 = vmatprep.subr.bf16.mxu0 0
      %1186 = vmatpush1.bf16.msra.mxu0 0
      %1187 = vmatprep.subr.bf16.mxu0 0
      %1188 = vmatpush1.bf16.msra.mxu0 0
      %1189 = vmatprep.subr.bf16.mxu0 0
      %1190 = vmatpush1.bf16.msra.mxu0 0
      %1191 = vmatprep.subr.bf16.mxu0 0
      %1192 = vmatpush1.bf16.msra.mxu0 0
      %1193 = vmatprep.subr.bf16.mxu0 0
      %1194 = vmatpush1.bf16.msra.mxu0 0
      %1195 = vmatprep.subr.bf16.mxu0 0
      %1196 = vmatpush1.bf16.msra.mxu0 0
      %1197 = vmatprep.mubr.bf16.mxu0 0
      %1198 = vmatmul.mubr.bf16.gmra.mrb[0].mxu0 %v1085
      %v1199 = vpop.f32.mrb[0].mxu0
      %v1200 = vadd.f32 %v895, %v1199
      %v1201 = vpop.f32.mrb[0].mxu0
      %v1202 = vpop.f32.mrb[0].mxu0
      %v1203 = vadd.f32 %v898, %v1202
      %v1204 = vpop.f32.mrb[0].mxu0
      %1205 = vmatprep.mubr.bf16.mxu0 0
      %1206 = vmatmul.mubr.bf16.gmra.mrb[0].mxu0 %v1086
      %v1207 = vpop.f32.mrb[0].mxu0
      %v1208 = vadd.f32 %v903, %v1207
      %v1209 = vpop.f32.mrb[0].mxu0
      %v1210 = vpop.f32.mrb[0].mxu0
      %v1211 = vadd.f32 %v906, %v1210
      %v1212 = vpop.f32.mrb[0].mxu0
      %1213 = vmatprep.mubr.bf16.mxu0 0
      %1214 = vmatmul.mubr.bf16.gmra.mrb[0].mxu0 %v1087
      %v1215 = vpop.f32.mrb[0].mxu0
      %v1216 = vadd.f32 %v911, %v1215
      %v1217 = vpop.f32.mrb[0].mxu0
      %v1218 = vpop.f32.mrb[0].mxu0
      %v1219 = vadd.f32 %v914, %v1218
      %v1220 = vpop.f32.mrb[0].mxu0
      %1221 = vmatprep.mubr.bf16.mxu0 0
      %1222 = vmatmul.mubr.bf16.gmra.mrb[0].mxu0 %v1088
      %v1223 = vpop.f32.mrb[0].mxu0
      %v1224 = vadd.f32 %v919, %v1223
      %v1225 = vpop.f32.mrb[0].mxu0
      %v1226 = vpop.f32.mrb[0].mxu0
      %v1227 = vadd.f32 %v922, %v1226
      %v1228 = vpop.f32.mrb[0].mxu0
      %1229 = vmatprep.mubr.bf16.mxu0 0
      %1230 = vmatmul.mubr.bf16.gmra.mrb[0].mxu0 %v1089
      %v1231 = vpop.f32.mrb[0].mxu0
      %v1232 = vadd.f32 %v927, %v1231
      %v1233 = vpop.f32.mrb[0].mxu0
      %v1234 = vpop.f32.mrb[0].mxu0
      %v1235 = vadd.f32 %v930, %v1234
      %v1236 = vpop.f32.mrb[0].mxu0
      %1237 = vmatprep.mubr.bf16.mxu0 0
      %1238 = vmatmul.mubr.bf16.gmra.mrb[0].mxu0 %v1090
      %v1239 = vpop.f32.mrb[0].mxu0
      %v1240 = vadd.f32 %v935, %v1239
      %v1241 = vpop.f32.mrb[0].mxu0
      %v1242 = vpop.f32.mrb[0].mxu0
      %v1243 = vadd.f32 %v938, %v1242
      %v1244 = vpop.f32.mrb[0].mxu0
      %1245 = vmatprep.mubr.bf16.mxu0 0
      %1246 = vmatmul.mubr.bf16.gmra.mrb[0].mxu0 %v1091
      %v1247 = vpop.f32.mrb[0].mxu0
      %v1248 = vadd.f32 %v943, %v1247
      %v1249 = vpop.f32.mrb[0].mxu0
      %v1250 = vpop.f32.mrb[0].mxu0
      %v1251 = vadd.f32 %v946, %v1250
      %v1252 = vpop.f32.mrb[0].mxu0
      %1253 = vmatprep.mubr.bf16.mxu0 0
      %1254 = vmatmul.mubr.bf16.gmra.mrb[0].mxu0 %v1092
      %v1255 = vpop.f32.mrb[0].mxu0
      %v1256 = vadd.f32 %v951, %v1255
      %v1257 = vpop.f32.mrb[0].mxu0
      %v1258 = vpop.f32.mrb[0].mxu0
      %v1259 = vadd.f32 %v954, %v1258
      %v1260 = vpop.f32.mrb[0].mxu0
      %1261 = vmatprep.mubr.bf16.mxu0 0
      %1262 = vmatmul.mubr.bf16.gmra.mrb[0].mxu0 %v1093
      %v1263 = vpop.f32.mrb[0].mxu0
      %v1264 = vadd.f32 %v959, %v1263
      %v1265 = vpop.f32.mrb[0].mxu0
      %v1266 = vpop.f32.mrb[0].mxu0
      %v1267 = vadd.f32 %v962, %v1266
      %v1268 = vpop.f32.mrb[0].mxu0
      %1269 = vmatprep.mubr.bf16.mxu0 0
      %1270 = vmatmul.mubr.bf16.gmra.mrb[0].mxu0 %v1094
      %v1271 = vpop.f32.mrb[0].mxu0
      %v1272 = vadd.f32 %v967, %v1271
      %v1273 = vpop.f32.mrb[0].mxu0
      %v1274 = vpop.f32.mrb[0].mxu0
      %v1275 = vadd.f32 %v970, %v1274
      %v1276 = vpop.f32.mrb[0].mxu0
      %1277 = vmatprep.mubr.bf16.mxu0 0
      %1278 = vmatmul.mubr.bf16.gmra.mrb[0].mxu0 %v1095
      %v1279 = vpop.f32.mrb[0].mxu0
      %v1280 = vadd.f32 %v975, %v1279
      %v1281 = vpop.f32.mrb[0].mxu0
      %v1282 = vpop.f32.mrb[0].mxu0
      %v1283 = vadd.f32 %v978, %v1282
      %v1284 = vpop.f32.mrb[0].mxu0
      %1285 = vmatprep.mubr.bf16.mxu0 0
      %1286 = vmatmul.mubr.bf16.gmra.mrb[0].mxu0 %v1096
      %v1287 = vpop.f32.mrb[0].mxu0
      %v1288 = vadd.f32 %v983, %v1287
      %v1289 = vpop.f32.mrb[0].mxu0
      %v1290 = vpop.f32.mrb[0].mxu0
      %v1291 = vadd.f32 %v986, %v1290
      %v1292 = vpop.f32.mrb[0].mxu0
      %1293 = vmatprep.mubr.bf16.mxu0 0
      %1294 = vmatmul.mubr.bf16.gmra.mrb[0].mxu0 %v1097
      %v1295 = vpop.f32.mrb[0].mxu0
      %v1296 = vadd.f32 %v991, %v1295
      %v1297 = vpop.f32.mrb[0].mxu0
      %v1298 = vpop.f32.mrb[0].mxu0
      %v1299 = vadd.f32 %v994, %v1298
      %v1300 = vpop.f32.mrb[0].mxu0
      %1301 = vmatprep.mubr.bf16.mxu0 0
      %1302 = vmatmul.mubr.bf16.gmra.mrb[0].mxu0 %v1098
      %v1303 = vpop.f32.mrb[0].mxu0
      %v1304 = vadd.f32 %v999, %v1303
      %v1305 = vpop.f32.mrb[0].mxu0
      %v1306 = vpop.f32.mrb[0].mxu0
      %v1307 = vadd.f32 %v1002, %v1306
      %v1308 = vpop.f32.mrb[0].mxu0
      %1309 = vmatprep.mubr.bf16.mxu0 0
      %1310 = vmatmul.mubr.bf16.gmra.mrb[0].mxu0 %v1099
      %v1311 = vpop.f32.mrb[0].mxu0
      %v1312 = vadd.f32 %v1007, %v1311
      %v1313 = vpop.f32.mrb[0].mxu0
      %v1314 = vpop.f32.mrb[0].mxu0
      %v1315 = vadd.f32 %v1010, %v1314
      %v1316 = vpop.f32.mrb[0].mxu0
      %1317 = vmatprep.mubr.bf16.mxu0 0
      %1318 = vmatmul.mubr.bf16.gmra.mrb[0].mxu0 %v1100
      %v1319 = vpop.f32.mrb[0].mxu0
      %v1320 = vadd.f32 %v1015, %v1319
      %v1321 = vpop.f32.mrb[0].mxu0
      %v1322 = vpop.f32.mrb[0].mxu0
      %v1323 = vadd.f32 %v1018, %v1322
      %v1324 = vpop.f32.mrb[0].mxu0
      %1325 = vdwg.mxu0
      %v1326 = vld [vmem:[%s273] sm:$0xe]
      %v1327 = vld [vmem:[%s273 + $0xc] sm:$0xe]
      %v1328 = vld [vmem:[%s273 + $0x18] sm:$0xe]
      %v1329 = vld [vmem:[%s273 + $0x24] sm:$0xe]
      %v1330 = vld [vmem:[%s273 + $0x30] sm:$0xe]
      %v1331 = vld [vmem:[%s273 + $0x3c] sm:$0xe]
      %v1332 = vld [vmem:[%s273 + $0x48] sm:$0xe]
      %v1333 = vld [vmem:[%s273 + $0x54] sm:$0xe]
      %v1334 = vld [vmem:[%s273 + $0x60] sm:$0xe]
      %v1335 = vld [vmem:[%s273 + $0x6c] sm:$0xe]
      %v1336 = vld [vmem:[%s273 + $0x78] sm:$0xe]
      %v1337 = vld [vmem:[%s273 + $0x84] sm:$0xe]
      %v1338 = vld [vmem:[%s273 + $0x90] sm:$0xe]
      %v1339 = vld [vmem:[%s273 + $0x9c] sm:$0xe]
      %v1340 = vld [vmem:[%s273 + $0xa8] sm:$0xe]
      %v1341 = vld [vmem:[%s273 + $0xb4] sm:$0xe]
      %vm1374 = vcmask 1042432
      %vm1375 = vcmask 1046532
      %vm1376 = vmor %vm1374, %vm1375
      %v1377 = vrot.slane %v1326, 5
      %v1378 = vrot.slane %v1377, 4
      %v1379 = vrot.slane %v281, 5
      %v1380 = vsel %vm1376, %v1378, %v1379
      %v1381 = vrot.slane %v1379, 4
      %v1382 = vrot.slane %v328, 5
      %v1383 = vsel %vm1376, %v1381, %v1382
      %v1384 = vrot.slane %v1327, 5
      %v1385 = vrot.slane %v1384, 4
      %v1386 = vrot.slane %v283, 5
      %v1387 = vsel %vm1376, %v1385, %v1386
      %v1388 = vrot.slane %v1386, 4
      %v1389 = vrot.slane %v329, 5
      %v1390 = vsel %vm1376, %v1388, %v1389
      %v1391 = vrot.slane %v1328, 5
      %v1392 = vrot.slane %v1391, 4
      %v1393 = vrot.slane %v285, 5
      %v1394 = vsel %vm1376, %v1392, %v1393
      %v1395 = vrot.slane %v1393, 4
      %v1396 = vrot.slane %v330, 5
      %v1397 = vsel %vm1376, %v1395, %v1396
      %v1398 = vrot.slane %v1329, 5
      %v1399 = vrot.slane %v1398, 4
      %v1400 = vrot.slane %v287, 5
      %v1401 = vsel %vm1376, %v1399, %v1400
      %v1402 = vrot.slane %v1400, 4
      %v1403 = vrot.slane %v331, 5
      %v1404 = vsel %vm1376, %v1402, %v1403
      %v1405 = vrot.slane %v1330, 5
      %v1406 = vrot.slane %v1405, 4
      %v1407 = vrot.slane %v289, 5
      %v1408 = vsel %vm1376, %v1406, %v1407
      %v1409 = vrot.slane %v1407, 4
      %v1410 = vrot.slane %v332, 5
      %v1411 = vsel %vm1376, %v1409, %v1410
      %v1412 = vrot.slane %v1331, 5
      %v1413 = vrot.slane %v1412, 4
      %v1414 = vrot.slane %v291, 5
      %v1415 = vsel %vm1376, %v1413, %v1414
      %v1416 = vrot.slane %v1414, 4
      %v1417 = vrot.slane %v333, 5
      %v1418 = vsel %vm1376, %v1416, %v1417
      %v1419 = vrot.slane %v1332, 5
      %v1420 = vrot.slane %v1419, 4
      %v1421 = vrot.slane %v293, 5
      %v1422 = vsel %vm1376, %v1420, %v1421
      %v1423 = vrot.slane %v1421, 4
      %v1424 = vrot.slane %v334, 5
      %v1425 = vsel %vm1376, %v1423, %v1424
      %v1426 = vrot.slane %v1333, 5
      %v1427 = vrot.slane %v1426, 4
      %v1428 = vrot.slane %v295, 5
      %v1429 = vsel %vm1376, %v1427, %v1428
      %v1430 = vrot.slane %v1428, 4
      %v1431 = vrot.slane %v335, 5
      %v1432 = vsel %vm1376, %v1430, %v1431
      %v1433 = vrot.slane %v1334, 5
      %v1434 = vrot.slane %v1433, 4
      %v1435 = vrot.slane %v297, 5
      %v1436 = vsel %vm1376, %v1434, %v1435
      %v1437 = vrot.slane %v1435, 4
      %v1438 = vrot.slane %v336, 5
      %v1439 = vsel %vm1376, %v1437, %v1438
      %v1440 = vrot.slane %v1335, 5
      %v1441 = vrot.slane %v1440, 4
      %v1442 = vrot.slane %v299, 5
      %v1443 = vsel %vm1376, %v1441, %v1442
      %v1444 = vrot.slane %v1442, 4
      %v1445 = vrot.slane %v337, 5
      %v1446 = vsel %vm1376, %v1444, %v1445
      %v1447 = vrot.slane %v1336, 5
      %v1448 = vrot.slane %v1447, 4
      %v1449 = vrot.slane %v301, 5
      %v1450 = vsel %vm1376, %v1448, %v1449
      %v1451 = vrot.slane %v1449, 4
      %v1452 = vrot.slane %v338, 5
      %v1453 = vsel %vm1376, %v1451, %v1452
      %v1454 = vrot.slane %v1337, 5
      %v1455 = vrot.slane %v1454, 4
      %v1456 = vrot.slane %v303, 5
      %v1457 = vsel %vm1376, %v1455, %v1456
      %v1458 = vrot.slane %v1456, 4
      %v1459 = vrot.slane %v339, 5
      %v1460 = vsel %vm1376, %v1458, %v1459
      %v1461 = vrot.slane %v1338, 5
      %v1462 = vrot.slane %v1461, 4
      %v1463 = vrot.slane %v305, 5
      %v1464 = vsel %vm1376, %v1462, %v1463
      %v1465 = vrot.slane %v1463, 4
      %v1466 = vrot.slane %v340, 5
      %v1467 = vsel %vm1376, %v1465, %v1466
      %v1468 = vrot.slane %v1339, 5
      %v1469 = vrot.slane %v1468, 4
      %v1470 = vrot.slane %v307, 5
      %v1471 = vsel %vm1376, %v1469, %v1470
      %v1472 = vrot.slane %v1470, 4
      %v1473 = vrot.slane %v341, 5
      %v1474 = vsel %vm1376, %v1472, %v1473
      %v1475 = vrot.slane %v1340, 5
      %v1476 = vrot.slane %v1475, 4
      %v1477 = vrot.slane %v309, 5
      %v1478 = vsel %vm1376, %v1476, %v1477
      %v1479 = vrot.slane %v1477, 4
      %v1480 = vrot.slane %v342, 5
      %v1481 = vsel %vm1376, %v1479, %v1480
      %v1482 = vrot.slane %v1341, 5
      %v1483 = vrot.slane %v1482, 4
      %v1484 = vrot.slane %v311, 5
      %v1485 = vsel %vm1376, %v1483, %v1484
      %v1486 = vrot.slane %v1484, 4
      %v1487 = vrot.slane %v343, 5
      %v1488 = vsel %vm1376, %v1486, %v1487
      %s1489 = scalar_lea.vmem %s1, 128
      %v1490 = vld [vmem:[%s1489] sm:$0xf]
      %v1491 = vld [vmem:[%s1489 + $0x4] sm:$0xf]
      %v1492 = vld [vmem:[%s1489 + $0x8] sm:$0xf]
      %v1493 = vld [vmem:[%s1489 + $0xc] sm:$0xf]
      %v1494 = vld [vmem:[%s1489 + $0x10] sm:$0xf]
      %v1495 = vld [vmem:[%s1489 + $0x14] sm:$0xf]
      %v1496 = vld [vmem:[%s1489 + $0x18] sm:$0xf]
      %v1497 = vld [vmem:[%s1489 + $0x1c] sm:$0xf]
      %v1498 = vld [vmem:[%s1489 + $0x20] sm:$0xf]
      %v1499 = vld [vmem:[%s1489 + $0x24] sm:$0xf]
      %v1500 = vld [vmem:[%s1489 + $0x28] sm:$0xf]
      %v1501 = vld [vmem:[%s1489 + $0x2c] sm:$0xf]
      %v1502 = vld [vmem:[%s1489 + $0x30] sm:$0xf]
      %v1503 = vld [vmem:[%s1489 + $0x34] sm:$0xf]
      %v1504 = vld [vmem:[%s1489 + $0x38] sm:$0xf]
      %v1505 = vld [vmem:[%s1489 + $0x3c] sm:$0xf]
      %v1506 = vunpack.c.l.b16 %v1380
      %v1507 = vunpack.c.l.b16 %v1383
      %v1508 = vunpack.c.l.b16 %v1387
      %v1509 = vunpack.c.l.b16 %v1390
      %v1510 = vunpack.c.l.b16 %v1394
      %v1511 = vunpack.c.l.b16 %v1397
      %v1512 = vunpack.c.l.b16 %v1401
      %v1513 = vunpack.c.l.b16 %v1404
      %v1514 = vunpack.c.l.b16 %v1408
      %v1515 = vunpack.c.l.b16 %v1411
      %v1516 = vunpack.c.l.b16 %v1415
      %v1517 = vunpack.c.l.b16 %v1418
      %v1518 = vunpack.c.l.b16 %v1422
      %v1519 = vunpack.c.l.b16 %v1425
      %v1520 = vunpack.c.l.b16 %v1429
      %v1521 = vunpack.c.l.b16 %v1432
      %v1522 = vunpack.c.l.b16 %v1436
      %v1523 = vunpack.c.l.b16 %v1439
      %v1524 = vunpack.c.l.b16 %v1443
      %v1525 = vunpack.c.l.b16 %v1446
      %v1526 = vunpack.c.l.b16 %v1450
      %v1527 = vunpack.c.l.b16 %v1453
      %v1528 = vunpack.c.l.b16 %v1457
      %v1529 = vunpack.c.l.b16 %v1460
      %v1530 = vunpack.c.l.b16 %v1464
      %v1531 = vunpack.c.l.b16 %v1467
      %v1532 = vunpack.c.l.b16 %v1471
      %v1533 = vunpack.c.l.b16 %v1474
      %v1534 = vunpack.c.l.b16 %v1478
      %v1535 = vunpack.c.l.b16 %v1481
      %v1536 = vunpack.c.l.b16 %v1485
      %v1537 = vunpack.c.l.b16 %v1488
      %v1538 = vpack.c.b16 %v1507, %v1506
      %v1539 = vpack.c.b16 %v1509, %v1508
      %v1540 = vpack.c.b16 %v1511, %v1510
      %v1541 = vpack.c.b16 %v1513, %v1512
      %v1542 = vpack.c.b16 %v1515, %v1514
      %v1543 = vpack.c.b16 %v1517, %v1516
      %v1544 = vpack.c.b16 %v1519, %v1518
      %v1545 = vpack.c.b16 %v1521, %v1520
      %v1546 = vpack.c.b16 %v1523, %v1522
      %v1547 = vpack.c.b16 %v1525, %v1524
      %v1548 = vpack.c.b16 %v1527, %v1526
      %v1549 = vpack.c.b16 %v1529, %v1528
      %v1550 = vpack.c.b16 %v1531, %v1530
      %v1551 = vpack.c.b16 %v1533, %v1532
      %v1552 = vpack.c.b16 %v1535, %v1534
      %v1553 = vpack.c.b16 %v1537, %v1536
      %v1586 = vunpack.c.l.b16 %v1490
      %v1587 = vunpack.c.l.b16 %v1491
      %v1588 = vunpack.c.l.b16 %v1492
      %v1589 = vunpack.c.l.b16 %v1493
      %v1590 = vunpack.c.l.b16 %v1494
      %v1591 = vunpack.c.l.b16 %v1495
      %v1592 = vunpack.c.l.b16 %v1496
      %v1593 = vunpack.c.l.b16 %v1497
      %v1594 = vunpack.c.l.b16 %v1498
      %v1595 = vunpack.c.l.b16 %v1499
      %v1596 = vunpack.c.l.b16 %v1500
      %v1597 = vunpack.c.l.b16 %v1501
      %v1598 = vunpack.c.l.b16 %v1502
      %v1599 = vunpack.c.l.b16 %v1503
      %v1600 = vunpack.c.l.b16 %v1504
      %v1601 = vunpack.c.l.b16 %v1505
      %v1602 = vpack.c.b16 %v1587, %v1586
      %v1603 = vpack.c.b16 %v1589, %v1588
      %v1604 = vpack.c.b16 %v1591, %v1590
      %v1605 = vpack.c.b16 %v1593, %v1592
      %v1606 = vpack.c.b16 %v1595, %v1594
      %v1607 = vpack.c.b16 %v1597, %v1596
      %v1608 = vpack.c.b16 %v1599, %v1598
      %v1609 = vpack.c.b16 %v1601, %v1600
      %1618 = vmatprep.subr.bf16.mxu0 0
      %1619 = vmatpush1.bf16.msra.mxu0 %v1602
      %1620 = vmatprep.subr.bf16.mxu0 0
      %1621 = vmatpush1.bf16.msra.mxu0 %v1603
      %1622 = vmatprep.subr.bf16.mxu0 0
      %1623 = vmatpush1.bf16.msra.mxu0 %v1604
      %1624 = vmatprep.subr.bf16.mxu0 0
      %1625 = vmatpush1.bf16.msra.mxu0 %v1605
      %1626 = vmatprep.subr.bf16.mxu0 0
      %1627 = vmatpush1.bf16.msra.mxu0 %v1606
      %1628 = vmatprep.subr.bf16.mxu0 0
      %1629 = vmatpush1.bf16.msra.mxu0 %v1607
      %1630 = vmatprep.subr.bf16.mxu0 0
      %1631 = vmatpush1.bf16.msra.mxu0 %v1608
      %1632 = vmatprep.subr.bf16.mxu0 0
      %1633 = vmatpush1.bf16.msra.mxu0 %v1609
      %1634 = vmatprep.subr.bf16.mxu0 0
      %1635 = vmatpush1.bf16.msra.mxu0 0
      %1636 = vmatprep.subr.bf16.mxu0 0
      %1637 = vmatpush1.bf16.msra.mxu0 0
      %1638 = vmatprep.subr.bf16.mxu0 0
      %1639 = vmatpush1.bf16.msra.mxu0 0
      %1640 = vmatprep.subr.bf16.mxu0 0
      %1641 = vmatpush1.bf16.msra.mxu0 0
      %1642 = vmatprep.subr.bf16.mxu0 0
      %1643 = vmatpush1.bf16.msra.mxu0 0
      %1644 = vmatprep.subr.bf16.mxu0 0
      %1645 = vmatpush1.bf16.msra.mxu0 0
      %1646 = vmatprep.subr.bf16.mxu0 0
      %1647 = vmatpush1.bf16.msra.mxu0 0
      %1648 = vmatprep.subr.bf16.mxu0 0
      %1649 = vmatpush1.bf16.msra.mxu0 0
      %1650 = vmatprep.mubr.bf16.mxu0 0
      %1651 = vmatmul.mubr.bf16.gmra.mrb[0].mxu0 %v1538
      %v1652 = vpop.f32.mrb[0].mxu0
      %v1653 = vadd.f32 0.0, %v1652
      %v1654 = vpop.f32.mrb[0].mxu0
      %v1655 = vpop.f32.mrb[0].mxu0
      %v1656 = vadd.f32 0.0, %v1655
      %v1657 = vpop.f32.mrb[0].mxu0
      %1658 = vmatprep.mubr.bf16.mxu0 0
      %1659 = vmatmul.mubr.bf16.gmra.mrb[0].mxu0 %v1539
      %v1660 = vpop.f32.mrb[0].mxu0
      %v1661 = vadd.f32 0.0, %v1660
      %v1662 = vpop.f32.mrb[0].mxu0
      %v1663 = vpop.f32.mrb[0].mxu0
      %v1664 = vadd.f32 0.0, %v1663
      %v1665 = vpop.f32.mrb[0].mxu0
      %1666 = vmatprep.mubr.bf16.mxu0 0
      %1667 = vmatmul.mubr.bf16.gmra.mrb[0].mxu0 %v1540
      %v1668 = vpop.f32.mrb[0].mxu0
      %v1669 = vadd.f32 0.0, %v1668
      %v1670 = vpop.f32.mrb[0].mxu0
      %v1671 = vpop.f32.mrb[0].mxu0
      %v1672 = vadd.f32 0.0, %v1671
      %v1673 = vpop.f32.mrb[0].mxu0
      %1674 = vmatprep.mubr.bf16.mxu0 0
      %1675 = vmatmul.mubr.bf16.gmra.mrb[0].mxu0 %v1541
      %v1676 = vpop.f32.mrb[0].mxu0
      %v1677 = vadd.f32 0.0, %v1676
      %v1678 = vpop.f32.mrb[0].mxu0
      %v1679 = vpop.f32.mrb[0].mxu0
      %v1680 = vadd.f32 0.0, %v1679
      %v1681 = vpop.f32.mrb[0].mxu0
      %1682 = vmatprep.mubr.bf16.mxu0 0
      %1683 = vmatmul.mubr.bf16.gmra.mrb[0].mxu0 %v1542
      %v1684 = vpop.f32.mrb[0].mxu0
      %v1685 = vadd.f32 0.0, %v1684
      %v1686 = vpop.f32.mrb[0].mxu0
      %v1687 = vpop.f32.mrb[0].mxu0
      %v1688 = vadd.f32 0.0, %v1687
      %v1689 = vpop.f32.mrb[0].mxu0
      %1690 = vmatprep.mubr.bf16.mxu0 0
      %1691 = vmatmul.mubr.bf16.gmra.mrb[0].mxu0 %v1543
      %v1692 = vpop.f32.mrb[0].mxu0
      %v1693 = vadd.f32 0.0, %v1692
      %v1694 = vpop.f32.mrb[0].mxu0
      %v1695 = vpop.f32.mrb[0].mxu0
      %v1696 = vadd.f32 0.0, %v1695
      %v1697 = vpop.f32.mrb[0].mxu0
      %1698 = vmatprep.mubr.bf16.mxu0 0
      %1699 = vmatmul.mubr.bf16.gmra.mrb[0].mxu0 %v1544
      %v1700 = vpop.f32.mrb[0].mxu0
      %v1701 = vadd.f32 0.0, %v1700
      %v1702 = vpop.f32.mrb[0].mxu0
      %v1703 = vpop.f32.mrb[0].mxu0
      %v1704 = vadd.f32 0.0, %v1703
      %v1705 = vpop.f32.mrb[0].mxu0
      %1706 = vmatprep.mubr.bf16.mxu0 0
      %1707 = vmatmul.mubr.bf16.gmra.mrb[0].mxu0 %v1545
      %v1708 = vpop.f32.mrb[0].mxu0
      %v1709 = vadd.f32 0.0, %v1708
      %v1710 = vpop.f32.mrb[0].mxu0
      %v1711 = vpop.f32.mrb[0].mxu0
      %v1712 = vadd.f32 0.0, %v1711
      %v1713 = vpop.f32.mrb[0].mxu0
      %1714 = vmatprep.mubr.bf16.mxu0 0
      %1715 = vmatmul.mubr.bf16.gmra.mrb[0].mxu0 %v1546
      %v1716 = vpop.f32.mrb[0].mxu0
      %v1717 = vadd.f32 0.0, %v1716
      %v1718 = vpop.f32.mrb[0].mxu0
      %v1719 = vpop.f32.mrb[0].mxu0
      %v1720 = vadd.f32 0.0, %v1719
      %v1721 = vpop.f32.mrb[0].mxu0
      %1722 = vmatprep.mubr.bf16.mxu0 0
      %1723 = vmatmul.mubr.bf16.gmra.mrb[0].mxu0 %v1547
      %v1724 = vpop.f32.mrb[0].mxu0
      %v1725 = vadd.f32 0.0, %v1724
      %v1726 = vpop.f32.mrb[0].mxu0
      %v1727 = vpop.f32.mrb[0].mxu0
      %v1728 = vadd.f32 0.0, %v1727
      %v1729 = vpop.f32.mrb[0].mxu0
      %1730 = vmatprep.mubr.bf16.mxu0 0
      %1731 = vmatmul.mubr.bf16.gmra.mrb[0].mxu0 %v1548
      %v1732 = vpop.f32.mrb[0].mxu0
      %v1733 = vadd.f32 0.0, %v1732
      %v1734 = vpop.f32.mrb[0].mxu0
      %v1735 = vpop.f32.mrb[0].mxu0
      %v1736 = vadd.f32 0.0, %v1735
      %v1737 = vpop.f32.mrb[0].mxu0
      %1738 = vmatprep.mubr.bf16.mxu0 0
      %1739 = vmatmul.mubr.bf16.gmra.mrb[0].mxu0 %v1549
      %v1740 = vpop.f32.mrb[0].mxu0
      %v1741 = vadd.f32 0.0, %v1740
      %v1742 = vpop.f32.mrb[0].mxu0
      %v1743 = vpop.f32.mrb[0].mxu0
      %v1744 = vadd.f32 0.0, %v1743
      %v1745 = vpop.f32.mrb[0].mxu0
      %1746 = vmatprep.mubr.bf16.mxu0 0
      %1747 = vmatmul.mubr.bf16.gmra.mrb[0].mxu0 %v1550
      %v1748 = vpop.f32.mrb[0].mxu0
      %v1749 = vadd.f32 0.0, %v1748
      %v1750 = vpop.f32.mrb[0].mxu0
      %v1751 = vpop.f32.mrb[0].mxu0
      %v1752 = vadd.f32 0.0, %v1751
      %v1753 = vpop.f32.mrb[0].mxu0
      %1754 = vmatprep.mubr.bf16.mxu0 0
      %1755 = vmatmul.mubr.bf16.gmra.mrb[0].mxu0 %v1551
      %v1756 = vpop.f32.mrb[0].mxu0
      %v1757 = vadd.f32 0.0, %v1756
      %v1758 = vpop.f32.mrb[0].mxu0
      %v1759 = vpop.f32.mrb[0].mxu0
      %v1760 = vadd.f32 0.0, %v1759
      %v1761 = vpop.f32.mrb[0].mxu0
      %1762 = vmatprep.mubr.bf16.mxu0 0
      %1763 = vmatmul.mubr.bf16.gmra.mrb[0].mxu0 %v1552
      %v1764 = vpop.f32.mrb[0].mxu0
      %v1765 = vadd.f32 0.0, %v1764
      %v1766 = vpop.f32.mrb[0].mxu0
      %v1767 = vpop.f32.mrb[0].mxu0
      %v1768 = vadd.f32 0.0, %v1767
      %v1769 = vpop.f32.mrb[0].mxu0
      %1770 = vmatprep.mubr.bf16.mxu0 0
      %1771 = vmatmul.mubr.bf16.gmra.mrb[0].mxu0 %v1553
      %v1772 = vpop.f32.mrb[0].mxu0
      %v1773 = vadd.f32 0.0, %v1772
      %v1774 = vpop.f32.mrb[0].mxu0
      %v1775 = vpop.f32.mrb[0].mxu0
      %v1776 = vadd.f32 0.0, %v1775
      %v1777 = vpop.f32.mrb[0].mxu0
      %1778 = vdwg.mxu0
      %v1779 = vadd.f32 %v1200, %v1653
      %v1780 = vadd.f32 %v1203, %v1656
      %v1781 = vadd.f32 %v1208, %v1661
      %v1782 = vadd.f32 %v1211, %v1664
      %v1783 = vadd.f32 %v1216, %v1669
      %v1784 = vadd.f32 %v1219, %v1672
      %v1785 = vadd.f32 %v1224, %v1677
      %v1786 = vadd.f32 %v1227, %v1680
      %v1787 = vadd.f32 %v1232, %v1685
      %v1788 = vadd.f32 %v1235, %v1688
      %v1789 = vadd.f32 %v1240, %v1693
      %v1790 = vadd.f32 %v1243, %v1696
      %v1791 = vadd.f32 %v1248, %v1701
      %v1792 = vadd.f32 %v1251, %v1704
      %v1793 = vadd.f32 %v1256, %v1709
      %v1794 = vadd.f32 %v1259, %v1712
      %v1795 = vadd.f32 %v1264, %v1717
      %v1796 = vadd.f32 %v1267, %v1720
      %v1797 = vadd.f32 %v1272, %v1725
      %v1798 = vadd.f32 %v1275, %v1728
      %v1799 = vadd.f32 %v1280, %v1733
      %v1800 = vadd.f32 %v1283, %v1736
      %v1801 = vadd.f32 %v1288, %v1741
      %v1802 = vadd.f32 %v1291, %v1744
      %v1803 = vadd.f32 %v1296, %v1749
      %v1804 = vadd.f32 %v1299, %v1752
      %v1805 = vadd.f32 %v1304, %v1757
      %v1806 = vadd.f32 %v1307, %v1760
      %v1807 = vadd.f32 %v1312, %v1765
      %v1808 = vadd.f32 %v1315, %v1768
      %v1809 = vadd.f32 %v1320, %v1773
      %v1810 = vadd.f32 %v1323, %v1776
      %s1811 = scalar_lea.vmem %s273, 12
      %v1812 = vld [vmem:[%s1811] sm:$0xf]
      %v1813 = vld [vmem:[%s1811 + $0x4] sm:$0xf]
      %v1814 = vld [vmem:[%s1811 + $0xc] sm:$0xf]
      %v1815 = vld [vmem:[%s1811 + $0x10] sm:$0xf]
      %v1816 = vld [vmem:[%s1811 + $0x18] sm:$0xf]
      %v1817 = vld [vmem:[%s1811 + $0x1c] sm:$0xf]
      %v1818 = vld [vmem:[%s1811 + $0x24] sm:$0xf]
      %v1819 = vld [vmem:[%s1811 + $0x28] sm:$0xf]
      %v1820 = vld [vmem:[%s1811 + $0x30] sm:$0xf]
      %v1821 = vld [vmem:[%s1811 + $0x34] sm:$0xf]
      %v1822 = vld [vmem:[%s1811 + $0x3c] sm:$0xf]
      %v1823 = vld [vmem:[%s1811 + $0x40] sm:$0xf]
      %v1824 = vld [vmem:[%s1811 + $0x48] sm:$0xf]
      %v1825 = vld [vmem:[%s1811 + $0x4c] sm:$0xf]
      %v1826 = vld [vmem:[%s1811 + $0x54] sm:$0xf]
      %v1827 = vld [vmem:[%s1811 + $0x58] sm:$0xf]
      %v1828 = vld [vmem:[%s1811 + $0x60] sm:$0xf]
      %v1829 = vld [vmem:[%s1811 + $0x64] sm:$0xf]
      %v1830 = vld [vmem:[%s1811 + $0x6c] sm:$0xf]
      %v1831 = vld [vmem:[%s1811 + $0x70] sm:$0xf]
      %v1832 = vld [vmem:[%s1811 + $0x78] sm:$0xf]
      %v1833 = vld [vmem:[%s1811 + $0x7c] sm:$0xf]
      %v1834 = vld [vmem:[%s1811 + $0x84] sm:$0xf]
      %v1835 = vld [vmem:[%s1811 + $0x88] sm:$0xf]
      %v1836 = vld [vmem:[%s1811 + $0x90] sm:$0xf]
      %v1837 = vld [vmem:[%s1811 + $0x94] sm:$0xf]
      %v1838 = vld [vmem:[%s1811 + $0x9c] sm:$0xf]
      %v1839 = vld [vmem:[%s1811 + $0xa0] sm:$0xf]
      %v1840 = vld [vmem:[%s1811 + $0xa8] sm:$0xf]
      %v1841 = vld [vmem:[%s1811 + $0xac] sm:$0xf]
      %v1842 = vld [vmem:[%s1811 + $0xb4] sm:$0xf]
      %v1843 = vld [vmem:[%s1811 + $0xb8] sm:$0xf]
      %s1844 = scalar_lea.vmem %s1, 192
      %v1845 = vld [vmem:[%s1844] sm:$0xf]
      %v1846 = vld [vmem:[%s1844 + $0x4] sm:$0xf]
      %v1847 = vld [vmem:[%s1844 + $0x8] sm:$0xf]
      %v1848 = vld [vmem:[%s1844 + $0xc] sm:$0xf]
      %v1849 = vld [vmem:[%s1844 + $0x10] sm:$0xf]
      %v1850 = vld [vmem:[%s1844 + $0x14] sm:$0xf]
      %v1851 = vld [vmem:[%s1844 + $0x18] sm:$0xf]
      %v1852 = vld [vmem:[%s1844 + $0x1c] sm:$0xf]
      %v1853 = vld [vmem:[%s1844 + $0x20] sm:$0xf]
      %v1854 = vld [vmem:[%s1844 + $0x24] sm:$0xf]
      %v1855 = vld [vmem:[%s1844 + $0x28] sm:$0xf]
      %v1856 = vld [vmem:[%s1844 + $0x2c] sm:$0xf]
      %v1857 = vld [vmem:[%s1844 + $0x30] sm:$0xf]
      %v1858 = vld [vmem:[%s1844 + $0x34] sm:$0xf]
      %v1859 = vld [vmem:[%s1844 + $0x38] sm:$0xf]
      %v1860 = vld [vmem:[%s1844 + $0x3c] sm:$0xf]
      %v1893 = vunpack.c.l.b16 %v1812
      %v1894 = vunpack.c.l.b16 %v1813
      %v1895 = vunpack.c.l.b16 %v1814
      %v1896 = vunpack.c.l.b16 %v1815
      %v1897 = vunpack.c.l.b16 %v1816
      %v1898 = vunpack.c.l.b16 %v1817
      %v1899 = vunpack.c.l.b16 %v1818
      %v1900 = vunpack.c.l.b16 %v1819
      %v1901 = vunpack.c.l.b16 %v1820
      %v1902 = vunpack.c.l.b16 %v1821
      %v1903 = vunpack.c.l.b16 %v1822
      %v1904 = vunpack.c.l.b16 %v1823
      %v1905 = vunpack.c.l.b16 %v1824
      %v1906 = vunpack.c.l.b16 %v1825
      %v1907 = vunpack.c.l.b16 %v1826
      %v1908 = vunpack.c.l.b16 %v1827
      %v1909 = vunpack.c.l.b16 %v1828
      %v1910 = vunpack.c.l.b16 %v1829
      %v1911 = vunpack.c.l.b16 %v1830
      %v1912 = vunpack.c.l.b16 %v1831
      %v1913 = vunpack.c.l.b16 %v1832
      %v1914 = vunpack.c.l.b16 %v1833
      %v1915 = vunpack.c.l.b16 %v1834
      %v1916 = vunpack.c.l.b16 %v1835
      %v1917 = vunpack.c.l.b16 %v1836
      %v1918 = vunpack.c.l.b16 %v1837
      %v1919 = vunpack.c.l.b16 %v1838
      %v1920 = vunpack.c.l.b16 %v1839
      %v1921 = vunpack.c.l.b16 %v1840
      %v1922 = vunpack.c.l.b16 %v1841
      %v1923 = vunpack.c.l.b16 %v1842
      %v1924 = vunpack.c.l.b16 %v1843
      %v1925 = vpack.c.b16 %v1894, %v1893
      %v1926 = vpack.c.b16 %v1896, %v1895
      %v1927 = vpack.c.b16 %v1898, %v1897
      %v1928 = vpack.c.b16 %v1900, %v1899
      %v1929 = vpack.c.b16 %v1902, %v1901
      %v1930 = vpack.c.b16 %v1904, %v1903
      %v1931 = vpack.c.b16 %v1906, %v1905
      %v1932 = vpack.c.b16 %v1908, %v1907
      %v1933 = vpack.c.b16 %v1910, %v1909
      %v1934 = vpack.c.b16 %v1912, %v1911
      %v1935 = vpack.c.b16 %v1914, %v1913
      %v1936 = vpack.c.b16 %v1916, %v1915
      %v1937 = vpack.c.b16 %v1918, %v1917
      %v1938 = vpack.c.b16 %v1920, %v1919
      %v1939 = vpack.c.b16 %v1922, %v1921
      %v1940 = vpack.c.b16 %v1924, %v1923
      %v1973 = vunpack.c.l.b16 %v1845
      %v1974 = vunpack.c.l.b16 %v1846
      %v1975 = vunpack.c.l.b16 %v1847
      %v1976 = vunpack.c.l.b16 %v1848
      %v1977 = vunpack.c.l.b16 %v1849
      %v1978 = vunpack.c.l.b16 %v1850
      %v1979 = vunpack.c.l.b16 %v1851
      %v1980 = vunpack.c.l.b16 %v1852
      %v1981 = vunpack.c.l.b16 %v1853
      %v1982 = vunpack.c.l.b16 %v1854
      %v1983 = vunpack.c.l.b16 %v1855
      %v1984 = vunpack.c.l.b16 %v1856
      %v1985 = vunpack.c.l.b16 %v1857
      %v1986 = vunpack.c.l.b16 %v1858
      %v1987 = vunpack.c.l.b16 %v1859
      %v1988 = vunpack.c.l.b16 %v1860
      %v1989 = vpack.c.b16 %v1974, %v1973
      %v1990 = vpack.c.b16 %v1976, %v1975
      %v1991 = vpack.c.b16 %v1978, %v1977
      %v1992 = vpack.c.b16 %v1980, %v1979
      %v1993 = vpack.c.b16 %v1982, %v1981
      %v1994 = vpack.c.b16 %v1984, %v1983
      %v1995 = vpack.c.b16 %v1986, %v1985
      %v1996 = vpack.c.b16 %v1988, %v1987
      %2005 = vmatprep.subr.bf16.mxu0 0
      %2006 = vmatpush1.bf16.msra.mxu0 %v1989
      %2007 = vmatprep.subr.bf16.mxu0 0
      %2008 = vmatpush1.bf16.msra.mxu0 %v1990
      %2009 = vmatprep.subr.bf16.mxu0 0
      %2010 = vmatpush1.bf16.msra.mxu0 %v1991
      %2011 = vmatprep.subr.bf16.mxu0 0
      %2012 = vmatpush1.bf16.msra.mxu0 %v1992
      %2013 = vmatprep.subr.bf16.mxu0 0
      %2014 = vmatpush1.bf16.msra.mxu0 %v1993
      %2015 = vmatprep.subr.bf16.mxu0 0
      %2016 = vmatpush1.bf16.msra.mxu0 %v1994
      %2017 = vmatprep.subr.bf16.mxu0 0
      %2018 = vmatpush1.bf16.msra.mxu0 %v1995
      %2019 = vmatprep.subr.bf16.mxu0 0
      %2020 = vmatpush1.bf16.msra.mxu0 %v1996
      %2021 = vmatprep.subr.bf16.mxu0 0
      %2022 = vmatpush1.bf16.msra.mxu0 0
      %2023 = vmatprep.subr.bf16.mxu0 0
      %2024 = vmatpush1.bf16.msra.mxu0 0
      %2025 = vmatprep.subr.bf16.mxu0 0
      %2026 = vmatpush1.bf16.msra.mxu0 0
      %2027 = vmatprep.subr.bf16.mxu0 0
      %2028 = vmatpush1.bf16.msra.mxu0 0
      %2029 = vmatprep.subr.bf16.mxu0 0
      %2030 = vmatpush1.bf16.msra.mxu0 0
      %2031 = vmatprep.subr.bf16.mxu0 0
      %2032 = vmatpush1.bf16.msra.mxu0 0
      %2033 = vmatprep.subr.bf16.mxu0 0
      %2034 = vmatpush1.bf16.msra.mxu0 0
      %2035 = vmatprep.subr.bf16.mxu0 0
      %2036 = vmatpush1.bf16.msra.mxu0 0
      %2037 = vmatprep.mubr.bf16.mxu0 0
      %2038 = vmatmul.mubr.bf16.gmra.mrb[0].mxu0 %v1925
      %v2039 = vpop.f32.mrb[0].mxu0
      %v2040 = vadd.f32 0.0, %v2039
      %v2041 = vpop.f32.mrb[0].mxu0
      %v2042 = vpop.f32.mrb[0].mxu0
      %v2043 = vadd.f32 0.0, %v2042
      %v2044 = vpop.f32.mrb[0].mxu0
      %2045 = vmatprep.mubr.bf16.mxu0 0
      %2046 = vmatmul.mubr.bf16.gmra.mrb[0].mxu0 %v1926
      %v2047 = vpop.f32.mrb[0].mxu0
      %v2048 = vadd.f32 0.0, %v2047
      %v2049 = vpop.f32.mrb[0].mxu0
      %v2050 = vpop.f32.mrb[0].mxu0
      %v2051 = vadd.f32 0.0, %v2050
      %v2052 = vpop.f32.mrb[0].mxu0
      %2053 = vmatprep.mubr.bf16.mxu0 0
      %2054 = vmatmul.mubr.bf16.gmra.mrb[0].mxu0 %v1927
      %v2055 = vpop.f32.mrb[0].mxu0
      %v2056 = vadd.f32 0.0, %v2055
      %v2057 = vpop.f32.mrb[0].mxu0
      %v2058 = vpop.f32.mrb[0].mxu0
      %v2059 = vadd.f32 0.0, %v2058
      %v2060 = vpop.f32.mrb[0].mxu0
      %2061 = vmatprep.mubr.bf16.mxu0 0
      %2062 = vmatmul.mubr.bf16.gmra.mrb[0].mxu0 %v1928
      %v2063 = vpop.f32.mrb[0].mxu0
      %v2064 = vadd.f32 0.0, %v2063
      %v2065 = vpop.f32.mrb[0].mxu0
      %v2066 = vpop.f32.mrb[0].mxu0
      %v2067 = vadd.f32 0.0, %v2066
      %v2068 = vpop.f32.mrb[0].mxu0
      %2069 = vmatprep.mubr.bf16.mxu0 0
      %2070 = vmatmul.mubr.bf16.gmra.mrb[0].mxu0 %v1929
      %v2071 = vpop.f32.mrb[0].mxu0
      %v2072 = vadd.f32 0.0, %v2071
      %v2073 = vpop.f32.mrb[0].mxu0
      %v2074 = vpop.f32.mrb[0].mxu0
      %v2075 = vadd.f32 0.0, %v2074
      %v2076 = vpop.f32.mrb[0].mxu0
      %2077 = vmatprep.mubr.bf16.mxu0 0
      %2078 = vmatmul.mubr.bf16.gmra.mrb[0].mxu0 %v1930
      %v2079 = vpop.f32.mrb[0].mxu0
      %v2080 = vadd.f32 0.0, %v2079
      %v2081 = vpop.f32.mrb[0].mxu0
      %v2082 = vpop.f32.mrb[0].mxu0
      %v2083 = vadd.f32 0.0, %v2082
      %v2084 = vpop.f32.mrb[0].mxu0
      %2085 = vmatprep.mubr.bf16.mxu0 0
      %2086 = vmatmul.mubr.bf16.gmra.mrb[0].mxu0 %v1931
      %v2087 = vpop.f32.mrb[0].mxu0
      %v2088 = vadd.f32 0.0, %v2087
      %v2089 = vpop.f32.mrb[0].mxu0
      %v2090 = vpop.f32.mrb[0].mxu0
      %v2091 = vadd.f32 0.0, %v2090
      %v2092 = vpop.f32.mrb[0].mxu0
      %2093 = vmatprep.mubr.bf16.mxu0 0
      %2094 = vmatmul.mubr.bf16.gmra.mrb[0].mxu0 %v1932
      %v2095 = vpop.f32.mrb[0].mxu0
      %v2096 = vadd.f32 0.0, %v2095
      %v2097 = vpop.f32.mrb[0].mxu0
      %v2098 = vpop.f32.mrb[0].mxu0
      %v2099 = vadd.f32 0.0, %v2098
      %v2100 = vpop.f32.mrb[0].mxu0
      %2101 = vmatprep.mubr.bf16.mxu0 0
      %2102 = vmatmul.mubr.bf16.gmra.mrb[0].mxu0 %v1933
      %v2103 = vpop.f32.mrb[0].mxu0
      %v2104 = vadd.f32 0.0, %v2103
      %v2105 = vpop.f32.mrb[0].mxu0
      %v2106 = vpop.f32.mrb[0].mxu0
      %v2107 = vadd.f32 0.0, %v2106
      %v2108 = vpop.f32.mrb[0].mxu0
      %2109 = vmatprep.mubr.bf16.mxu0 0
      %2110 = vmatmul.mubr.bf16.gmra.mrb[0].mxu0 %v1934
      %v2111 = vpop.f32.mrb[0].mxu0
      %v2112 = vadd.f32 0.0, %v2111
      %v2113 = vpop.f32.mrb[0].mxu0
      %v2114 = vpop.f32.mrb[0].mxu0
      %v2115 = vadd.f32 0.0, %v2114
      %v2116 = vpop.f32.mrb[0].mxu0
      %2117 = vmatprep.mubr.bf16.mxu0 0
      %2118 = vmatmul.mubr.bf16.gmra.mrb[0].mxu0 %v1935
      %v2119 = vpop.f32.mrb[0].mxu0
      %v2120 = vadd.f32 0.0, %v2119
      %v2121 = vpop.f32.mrb[0].mxu0
      %v2122 = vpop.f32.mrb[0].mxu0
      %v2123 = vadd.f32 0.0, %v2122
      %v2124 = vpop.f32.mrb[0].mxu0
      %2125 = vmatprep.mubr.bf16.mxu0 0
      %2126 = vmatmul.mubr.bf16.gmra.mrb[0].mxu0 %v1936
      %v2127 = vpop.f32.mrb[0].mxu0
      %v2128 = vadd.f32 0.0, %v2127
      %v2129 = vpop.f32.mrb[0].mxu0
      %v2130 = vpop.f32.mrb[0].mxu0
      %v2131 = vadd.f32 0.0, %v2130
      %v2132 = vpop.f32.mrb[0].mxu0
      %2133 = vmatprep.mubr.bf16.mxu0 0
      %2134 = vmatmul.mubr.bf16.gmra.mrb[0].mxu0 %v1937
      %v2135 = vpop.f32.mrb[0].mxu0
      %v2136 = vadd.f32 0.0, %v2135
      %v2137 = vpop.f32.mrb[0].mxu0
      %v2138 = vpop.f32.mrb[0].mxu0
      %v2139 = vadd.f32 0.0, %v2138
      %v2140 = vpop.f32.mrb[0].mxu0
      %2141 = vmatprep.mubr.bf16.mxu0 0
      %2142 = vmatmul.mubr.bf16.gmra.mrb[0].mxu0 %v1938
      %v2143 = vpop.f32.mrb[0].mxu0
      %v2144 = vadd.f32 0.0, %v2143
      %v2145 = vpop.f32.mrb[0].mxu0
      %v2146 = vpop.f32.mrb[0].mxu0
      %v2147 = vadd.f32 0.0, %v2146
      %v2148 = vpop.f32.mrb[0].mxu0
      %2149 = vmatprep.mubr.bf16.mxu0 0
      %2150 = vmatmul.mubr.bf16.gmra.mrb[0].mxu0 %v1939
      %v2151 = vpop.f32.mrb[0].mxu0
      %v2152 = vadd.f32 0.0, %v2151
      %v2153 = vpop.f32.mrb[0].mxu0
      %v2154 = vpop.f32.mrb[0].mxu0
      %v2155 = vadd.f32 0.0, %v2154
      %v2156 = vpop.f32.mrb[0].mxu0
      %2157 = vmatprep.mubr.bf16.mxu0 0
      %2158 = vmatmul.mubr.bf16.gmra.mrb[0].mxu0 %v1940
      %v2159 = vpop.f32.mrb[0].mxu0
      %v2160 = vadd.f32 0.0, %v2159
      %v2161 = vpop.f32.mrb[0].mxu0
      %v2162 = vpop.f32.mrb[0].mxu0
      %v2163 = vadd.f32 0.0, %v2162
      %v2164 = vpop.f32.mrb[0].mxu0
      %2165 = vdwg.mxu0
      %v2166 = vadd.f32 %v1779, %v2040
      %v2167 = vadd.f32 %v1780, %v2043
      %v2168 = vadd.f32 %v1781, %v2048
      %v2169 = vadd.f32 %v1782, %v2051
      %v2170 = vadd.f32 %v1783, %v2056
      %v2171 = vadd.f32 %v1784, %v2059
      %v2172 = vadd.f32 %v1785, %v2064
      %v2173 = vadd.f32 %v1786, %v2067
      %v2174 = vadd.f32 %v1787, %v2072
      %v2175 = vadd.f32 %v1788, %v2075
      %v2176 = vadd.f32 %v1789, %v2080
      %v2177 = vadd.f32 %v1790, %v2083
      %v2178 = vadd.f32 %v1791, %v2088
      %v2179 = vadd.f32 %v1792, %v2091
      %v2180 = vadd.f32 %v1793, %v2096
      %v2181 = vadd.f32 %v1794, %v2099
      %v2182 = vadd.f32 %v1795, %v2104
      %v2183 = vadd.f32 %v1796, %v2107
      %v2184 = vadd.f32 %v1797, %v2112
      %v2185 = vadd.f32 %v1798, %v2115
      %v2186 = vadd.f32 %v1799, %v2120
      %v2187 = vadd.f32 %v1800, %v2123
      %v2188 = vadd.f32 %v1801, %v2128
      %v2189 = vadd.f32 %v1802, %v2131
      %v2190 = vadd.f32 %v1803, %v2136
      %v2191 = vadd.f32 %v1804, %v2139
      %v2192 = vadd.f32 %v1805, %v2144
      %v2193 = vadd.f32 %v1806, %v2147
      %v2194 = vadd.f32 %v1807, %v2152
      %v2195 = vadd.f32 %v1808, %v2155
      %v2196 = vadd.f32 %v1809, %v2160
      %v2197 = vadd.f32 %v1810, %v2163
      %v2198 = vld [vmem:[%s1811] sm:$0xf]
      %v2199 = vld [vmem:[%s1811 + $0x4] sm:$0xf]
      %v2200 = vld [vmem:[%s1811 + $0x8] sm:$0x1]
      %v2201 = vld [vmem:[%s1811 + $0xc] sm:$0xf]
      %v2202 = vld [vmem:[%s1811 + $0x10] sm:$0xf]
      %v2203 = vld [vmem:[%s1811 + $0x14] sm:$0x1]
      %v2204 = vld [vmem:[%s1811 + $0x18] sm:$0xf]
      %v2205 = vld [vmem:[%s1811 + $0x1c] sm:$0xf]
      %v2206 = vld [vmem:[%s1811 + $0x20] sm:$0x1]
      %v2207 = vld [vmem:[%s1811 + $0x24] sm:$0xf]
      %v2208 = vld [vmem:[%s1811 + $0x28] sm:$0xf]
      %v2209 = vld [vmem:[%s1811 + $0x2c] sm:$0x1]
      %v2210 = vld [vmem:[%s1811 + $0x30] sm:$0xf]
      %v2211 = vld [vmem:[%s1811 + $0x34] sm:$0xf]
      %v2212 = vld [vmem:[%s1811 + $0x38] sm:$0x1]
      %v2213 = vld [vmem:[%s1811 + $0x3c] sm:$0xf]
      %v2214 = vld [vmem:[%s1811 + $0x40] sm:$0xf]
      %v2215 = vld [vmem:[%s1811 + $0x44] sm:$0x1]
      %v2216 = vld [vmem:[%s1811 + $0x48] sm:$0xf]
      %v2217 = vld [vmem:[%s1811 + $0x4c] sm:$0xf]
      %v2218 = vld [vmem:[%s1811 + $0x50] sm:$0x1]
      %v2219 = vld [vmem:[%s1811 + $0x54] sm:$0xf]
      %v2220 = vld [vmem:[%s1811 + $0x58] sm:$0xf]
      %v2221 = vld [vmem:[%s1811 + $0x5c] sm:$0x1]
      %v2222 = vld [vmem:[%s1811 + $0x60] sm:$0xf]
      %v2223 = vld [vmem:[%s1811 + $0x64] sm:$0xf]
      %v2224 = vld [vmem:[%s1811 + $0x68] sm:$0x1]
      %v2225 = vld [vmem:[%s1811 + $0x6c] sm:$0xf]
      %v2226 = vld [vmem:[%s1811 + $0x70] sm:$0xf]
      %v2227 = vld [vmem:[%s1811 + $0x74] sm:$0x1]
      %v2228 = vld [vmem:[%s1811 + $0x78] sm:$0xf]
      %v2229 = vld [vmem:[%s1811 + $0x7c] sm:$0xf]
      %v2230 = vld [vmem:[%s1811 + $0x80] sm:$0x1]
      %v2231 = vld [vmem:[%s1811 + $0x84] sm:$0xf]
      %v2232 = vld [vmem:[%s1811 + $0x88] sm:$0xf]
      %v2233 = vld [vmem:[%s1811 + $0x8c] sm:$0x1]
      %v2234 = vld [vmem:[%s1811 + $0x90] sm:$0xf]
      %v2235 = vld [vmem:[%s1811 + $0x94] sm:$0xf]
      %v2236 = vld [vmem:[%s1811 + $0x98] sm:$0x1]
      %v2237 = vld [vmem:[%s1811 + $0x9c] sm:$0xf]
      %v2238 = vld [vmem:[%s1811 + $0xa0] sm:$0xf]
      %v2239 = vld [vmem:[%s1811 + $0xa4] sm:$0x1]
      %v2240 = vld [vmem:[%s1811 + $0xa8] sm:$0xf]
      %v2241 = vld [vmem:[%s1811 + $0xac] sm:$0xf]
      %v2242 = vld [vmem:[%s1811 + $0xb0] sm:$0x1]
      %v2243 = vld [vmem:[%s1811 + $0xb4] sm:$0xf]
      %v2244 = vld [vmem:[%s1811 + $0xb8] sm:$0xf]
      %v2245 = vld [vmem:[%s1811 + $0xbc] sm:$0x1]
      %v2247 = vshrl.u32 %v2198, 16
      %v2249 = vrot.slane %v2247, 4
      %v2250 = vshll.u32 %v2198, 16
      %v2252 = vrot.slane %v2250, 5
      %v2253 = vor.u32 %v2249, %v2252
      %v2254 = vrot.slane %v2253, 4
      %v2256 = vshll.u32 %v2199, 16
      %v2258 = vrot.slane %v2256, 5
      %v2259 = vsel %vm346, %v2254, %v2258
      %v2260 = vshrl.u32 %v2199, 16
      %v2262 = vrot.slane %v2260, 4
      %v2263 = vor.u32 %v2262, %v2258
      %v2264 = vrot.slane %v2263, 4
      %v2266 = vshll.u32 %v2200, 16
      %v2268 = vrot.slane %v2266, 5
      %v2269 = vsel %vm346, %v2264, %v2268
      %v2271 = vshrl.u32 %v2201, 16
      %v2273 = vrot.slane %v2271, 4
      %v2274 = vshll.u32 %v2201, 16
      %v2276 = vrot.slane %v2274, 5
      %v2277 = vor.u32 %v2273, %v2276
      %v2278 = vrot.slane %v2277, 4
      %v2280 = vshll.u32 %v2202, 16
      %v2282 = vrot.slane %v2280, 5
      %v2283 = vsel %vm346, %v2278, %v2282
      %v2284 = vshrl.u32 %v2202, 16
      %v2286 = vrot.slane %v2284, 4
      %v2287 = vor.u32 %v2286, %v2282
      %v2288 = vrot.slane %v2287, 4
      %v2290 = vshll.u32 %v2203, 16
      %v2292 = vrot.slane %v2290, 5
      %v2293 = vsel %vm346, %v2288, %v2292
      %v2295 = vshrl.u32 %v2204, 16
      %v2297 = vrot.slane %v2295, 4
      %v2298 = vshll.u32 %v2204, 16
      %v2300 = vrot.slane %v2298, 5
      %v2301 = vor.u32 %v2297, %v2300
      %v2302 = vrot.slane %v2301, 4
      %v2304 = vshll.u32 %v2205, 16
      %v2306 = vrot.slane %v2304, 5
      %v2307 = vsel %vm346, %v2302, %v2306
      %v2308 = vshrl.u32 %v2205, 16
      %v2310 = vrot.slane %v2308, 4
      %v2311 = vor.u32 %v2310, %v2306
      %v2312 = vrot.slane %v2311, 4
      %v2314 = vshll.u32 %v2206, 16
      %v2316 = vrot.slane %v2314, 5
      %v2317 = vsel %vm346, %v2312, %v2316
      %v2319 = vshrl.u32 %v2207, 16
      %v2321 = vrot.slane %v2319, 4
      %v2322 = vshll.u32 %v2207, 16
      %v2324 = vrot.slane %v2322, 5
      %v2325 = vor.u32 %v2321, %v2324
      %v2326 = vrot.slane %v2325, 4
      %v2328 = vshll.u32 %v2208, 16
      %v2330 = vrot.slane %v2328, 5
      %v2331 = vsel %vm346, %v2326, %v2330
      %v2332 = vshrl.u32 %v2208, 16
      %v2334 = vrot.slane %v2332, 4
      %v2335 = vor.u32 %v2334, %v2330
      %v2336 = vrot.slane %v2335, 4
      %v2338 = vshll.u32 %v2209, 16
      %v2340 = vrot.slane %v2338, 5
      %v2341 = vsel %vm346, %v2336, %v2340
      %v2343 = vshrl.u32 %v2210, 16
      %v2345 = vrot.slane %v2343, 4
      %v2346 = vshll.u32 %v2210, 16
      %v2348 = vrot.slane %v2346, 5
      %v2349 = vor.u32 %v2345, %v2348
      %v2350 = vrot.slane %v2349, 4
      %v2352 = vshll.u32 %v2211, 16
      %v2354 = vrot.slane %v2352, 5
      %v2355 = vsel %vm346, %v2350, %v2354
      %v2356 = vshrl.u32 %v2211, 16
      %v2358 = vrot.slane %v2356, 4
      %v2359 = vor.u32 %v2358, %v2354
      %v2360 = vrot.slane %v2359, 4
      %v2362 = vshll.u32 %v2212, 16
      %v2364 = vrot.slane %v2362, 5
      %v2365 = vsel %vm346, %v2360, %v2364
      %v2367 = vshrl.u32 %v2213, 16
      %v2369 = vrot.slane %v2367, 4
      %v2370 = vshll.u32 %v2213, 16
      %v2372 = vrot.slane %v2370, 5
      %v2373 = vor.u32 %v2369, %v2372
      %v2374 = vrot.slane %v2373, 4
      %v2376 = vshll.u32 %v2214, 16
      %v2378 = vrot.slane %v2376, 5
      %v2379 = vsel %vm346, %v2374, %v2378
      %v2380 = vshrl.u32 %v2214, 16
      %v2382 = vrot.slane %v2380, 4
      %v2383 = vor.u32 %v2382, %v2378
      %v2384 = vrot.slane %v2383, 4
      %v2386 = vshll.u32 %v2215, 16
      %v2388 = vrot.slane %v2386, 5
      %v2389 = vsel %vm346, %v2384, %v2388
      %v2391 = vshrl.u32 %v2216, 16
      %v2393 = vrot.slane %v2391, 4
      %v2394 = vshll.u32 %v2216, 16
      %v2396 = vrot.slane %v2394, 5
      %v2397 = vor.u32 %v2393, %v2396
      %v2398 = vrot.slane %v2397, 4
      %v2400 = vshll.u32 %v2217, 16
      %v2402 = vrot.slane %v2400, 5
      %v2403 = vsel %vm346, %v2398, %v2402
      %v2404 = vshrl.u32 %v2217, 16
      %v2406 = vrot.slane %v2404, 4
      %v2407 = vor.u32 %v2406, %v2402
      %v2408 = vrot.slane %v2407, 4
      %v2410 = vshll.u32 %v2218, 16
      %v2412 = vrot.slane %v2410, 5
      %v2413 = vsel %vm346, %v2408, %v2412
      %v2415 = vshrl.u32 %v2219, 16
      %v2417 = vrot.slane %v2415, 4
      %v2418 = vshll.u32 %v2219, 16
      %v2420 = vrot.slane %v2418, 5
      %v2421 = vor.u32 %v2417, %v2420
      %v2422 = vrot.slane %v2421, 4
      %v2424 = vshll.u32 %v2220, 16
      %v2426 = vrot.slane %v2424, 5
      %v2427 = vsel %vm346, %v2422, %v2426
      %v2428 = vshrl.u32 %v2220, 16
      %v2430 = vrot.slane %v2428, 4
      %v2431 = vor.u32 %v2430, %v2426
      %v2432 = vrot.slane %v2431, 4
      %v2434 = vshll.u32 %v2221, 16
      %v2436 = vrot.slane %v2434, 5
      %v2437 = vsel %vm346, %v2432, %v2436
      %v2439 = vshrl.u32 %v2222, 16
      %v2441 = vrot.slane %v2439, 4
      %v2442 = vshll.u32 %v2222, 16
      %v2444 = vrot.slane %v2442, 5
      %v2445 = vor.u32 %v2441, %v2444
      %v2446 = vrot.slane %v2445, 4
      %v2448 = vshll.u32 %v2223, 16
      %v2450 = vrot.slane %v2448, 5
      %v2451 = vsel %vm346, %v2446, %v2450
      %v2452 = vshrl.u32 %v2223, 16
      %v2454 = vrot.slane %v2452, 4
      %v2455 = vor.u32 %v2454, %v2450
      %v2456 = vrot.slane %v2455, 4
      %v2458 = vshll.u32 %v2224, 16
      %v2460 = vrot.slane %v2458, 5
      %v2461 = vsel %vm346, %v2456, %v2460
      %v2463 = vshrl.u32 %v2225, 16
      %v2465 = vrot.slane %v2463, 4
      %v2466 = vshll.u32 %v2225, 16
      %v2468 = vrot.slane %v2466, 5
      %v2469 = vor.u32 %v2465, %v2468
      %v2470 = vrot.slane %v2469, 4
      %v2472 = vshll.u32 %v2226, 16
      %v2474 = vrot.slane %v2472, 5
      %v2475 = vsel %vm346, %v2470, %v2474
      %v2476 = vshrl.u32 %v2226, 16
      %v2478 = vrot.slane %v2476, 4
      %v2479 = vor.u32 %v2478, %v2474
      %v2480 = vrot.slane %v2479, 4
      %v2482 = vshll.u32 %v2227, 16
      %v2484 = vrot.slane %v2482, 5
      %v2485 = vsel %vm346, %v2480, %v2484
      %v2487 = vshrl.u32 %v2228, 16
      %v2489 = vrot.slane %v2487, 4
      %v2490 = vshll.u32 %v2228, 16
      %v2492 = vrot.slane %v2490, 5
      %v2493 = vor.u32 %v2489, %v2492
      %v2494 = vrot.slane %v2493, 4
      %v2496 = vshll.u32 %v2229, 16
      %v2498 = vrot.slane %v2496, 5
      %v2499 = vsel %vm346, %v2494, %v2498
      %v2500 = vshrl.u32 %v2229, 16
      %v2502 = vrot.slane %v2500, 4
      %v2503 = vor.u32 %v2502, %v2498
      %v2504 = vrot.slane %v2503, 4
      %v2506 = vshll.u32 %v2230, 16
      %v2508 = vrot.slane %v2506, 5
      %v2509 = vsel %vm346, %v2504, %v2508
      %v2511 = vshrl.u32 %v2231, 16
      %v2513 = vrot.slane %v2511, 4
      %v2514 = vshll.u32 %v2231, 16
      %v2516 = vrot.slane %v2514, 5
      %v2517 = vor.u32 %v2513, %v2516
      %v2518 = vrot.slane %v2517, 4
      %v2520 = vshll.u32 %v2232, 16
      %v2522 = vrot.slane %v2520, 5
      %v2523 = vsel %vm346, %v2518, %v2522
      %v2524 = vshrl.u32 %v2232, 16
      %v2526 = vrot.slane %v2524, 4
      %v2527 = vor.u32 %v2526, %v2522
      %v2528 = vrot.slane %v2527, 4
      %v2530 = vshll.u32 %v2233, 16
      %v2532 = vrot.slane %v2530, 5
      %v2533 = vsel %vm346, %v2528, %v2532
      %v2535 = vshrl.u32 %v2234, 16
      %v2537 = vrot.slane %v2535, 4
      %v2538 = vshll.u32 %v2234, 16
      %v2540 = vrot.slane %v2538, 5
      %v2541 = vor.u32 %v2537, %v2540
      %v2542 = vrot.slane %v2541, 4
      %v2544 = vshll.u32 %v2235, 16
      %v2546 = vrot.slane %v2544, 5
      %v2547 = vsel %vm346, %v2542, %v2546
      %v2548 = vshrl.u32 %v2235, 16
      %v2550 = vrot.slane %v2548, 4
      %v2551 = vor.u32 %v2550, %v2546
      %v2552 = vrot.slane %v2551, 4
      %v2554 = vshll.u32 %v2236, 16
      %v2556 = vrot.slane %v2554, 5
      %v2557 = vsel %vm346, %v2552, %v2556
      %v2559 = vshrl.u32 %v2237, 16
      %v2561 = vrot.slane %v2559, 4
      %v2562 = vshll.u32 %v2237, 16
      %v2564 = vrot.slane %v2562, 5
      %v2565 = vor.u32 %v2561, %v2564
      %v2566 = vrot.slane %v2565, 4
      %v2568 = vshll.u32 %v2238, 16
      %v2570 = vrot.slane %v2568, 5
      %v2571 = vsel %vm346, %v2566, %v2570
      %v2572 = vshrl.u32 %v2238, 16
      %v2574 = vrot.slane %v2572, 4
      %v2575 = vor.u32 %v2574, %v2570
      %v2576 = vrot.slane %v2575, 4
      %v2578 = vshll.u32 %v2239, 16
      %v2580 = vrot.slane %v2578, 5
      %v2581 = vsel %vm346, %v2576, %v2580
      %v2583 = vshrl.u32 %v2240, 16
      %v2585 = vrot.slane %v2583, 4
      %v2586 = vshll.u32 %v2240, 16
      %v2588 = vrot.slane %v2586, 5
      %v2589 = vor.u32 %v2585, %v2588
      %v2590 = vrot.slane %v2589, 4
      %v2592 = vshll.u32 %v2241, 16
      %v2594 = vrot.slane %v2592, 5
      %v2595 = vsel %vm346, %v2590, %v2594
      %v2596 = vshrl.u32 %v2241, 16
      %v2598 = vrot.slane %v2596, 4
      %v2599 = vor.u32 %v2598, %v2594
      %v2600 = vrot.slane %v2599, 4
      %v2602 = vshll.u32 %v2242, 16
      %v2604 = vrot.slane %v2602, 5
      %v2605 = vsel %vm346, %v2600, %v2604
      %v2607 = vshrl.u32 %v2243, 16
      %v2609 = vrot.slane %v2607, 4
      %v2610 = vshll.u32 %v2243, 16
      %v2612 = vrot.slane %v2610, 5
      %v2613 = vor.u32 %v2609, %v2612
      %v2614 = vrot.slane %v2613, 4
      %v2616 = vshll.u32 %v2244, 16
      %v2618 = vrot.slane %v2616, 5
      %v2619 = vsel %vm346, %v2614, %v2618
      %v2620 = vshrl.u32 %v2244, 16
      %v2622 = vrot.slane %v2620, 4
      %v2623 = vor.u32 %v2622, %v2618
      %v2624 = vrot.slane %v2623, 4
      %v2626 = vshll.u32 %v2245, 16
      %v2628 = vrot.slane %v2626, 5
      %v2629 = vsel %vm346, %v2624, %v2628
      %s2630 = scalar_lea.vmem %s1, 256
      %v2631 = vld [vmem:[%s2630] sm:$0xf]
      %v2632 = vld [vmem:[%s2630 + $0x4] sm:$0xf]
      %v2633 = vld [vmem:[%s2630 + $0x8] sm:$0xf]
      %v2634 = vld [vmem:[%s2630 + $0xc] sm:$0xf]
      %v2635 = vld [vmem:[%s2630 + $0x10] sm:$0xf]
      %v2636 = vld [vmem:[%s2630 + $0x14] sm:$0xf]
      %v2637 = vld [vmem:[%s2630 + $0x18] sm:$0xf]
      %v2638 = vld [vmem:[%s2630 + $0x1c] sm:$0xf]
      %v2639 = vld [vmem:[%s2630 + $0x20] sm:$0xf]
      %v2640 = vld [vmem:[%s2630 + $0x24] sm:$0xf]
      %v2641 = vld [vmem:[%s2630 + $0x28] sm:$0xf]
      %v2642 = vld [vmem:[%s2630 + $0x2c] sm:$0xf]
      %v2643 = vld [vmem:[%s2630 + $0x30] sm:$0xf]
      %v2644 = vld [vmem:[%s2630 + $0x34] sm:$0xf]
      %v2645 = vld [vmem:[%s2630 + $0x38] sm:$0xf]
      %v2646 = vld [vmem:[%s2630 + $0x3c] sm:$0xf]
      %v2647 = vunpack.c.l.b16 %v2259
      %v2648 = vunpack.c.l.b16 %v2269
      %v2649 = vunpack.c.l.b16 %v2283
      %v2650 = vunpack.c.l.b16 %v2293
      %v2651 = vunpack.c.l.b16 %v2307
      %v2652 = vunpack.c.l.b16 %v2317
      %v2653 = vunpack.c.l.b16 %v2331
      %v2654 = vunpack.c.l.b16 %v2341
      %v2655 = vunpack.c.l.b16 %v2355
      %v2656 = vunpack.c.l.b16 %v2365
      %v2657 = vunpack.c.l.b16 %v2379
      %v2658 = vunpack.c.l.b16 %v2389
      %v2659 = vunpack.c.l.b16 %v2403
      %v2660 = vunpack.c.l.b16 %v2413
      %v2661 = vunpack.c.l.b16 %v2427
      %v2662 = vunpack.c.l.b16 %v2437
      %v2663 = vunpack.c.l.b16 %v2451
      %v2664 = vunpack.c.l.b16 %v2461
      %v2665 = vunpack.c.l.b16 %v2475
      %v2666 = vunpack.c.l.b16 %v2485
      %v2667 = vunpack.c.l.b16 %v2499
      %v2668 = vunpack.c.l.b16 %v2509
      %v2669 = vunpack.c.l.b16 %v2523
      %v2670 = vunpack.c.l.b16 %v2533
      %v2671 = vunpack.c.l.b16 %v2547
      %v2672 = vunpack.c.l.b16 %v2557
      %v2673 = vunpack.c.l.b16 %v2571
      %v2674 = vunpack.c.l.b16 %v2581
      %v2675 = vunpack.c.l.b16 %v2595
      %v2676 = vunpack.c.l.b16 %v2605
      %v2677 = vunpack.c.l.b16 %v2619
      %v2678 = vunpack.c.l.b16 %v2629
      %v2679 = vpack.c.b16 %v2648, %v2647
      %v2680 = vpack.c.b16 %v2650, %v2649
      %v2681 = vpack.c.b16 %v2652, %v2651
      %v2682 = vpack.c.b16 %v2654, %v2653
      %v2683 = vpack.c.b16 %v2656, %v2655
      %v2684 = vpack.c.b16 %v2658, %v2657
      %v2685 = vpack.c.b16 %v2660, %v2659
      %v2686 = vpack.c.b16 %v2662, %v2661
      %v2687 = vpack.c.b16 %v2664, %v2663
      %v2688 = vpack.c.b16 %v2666, %v2665
      %v2689 = vpack.c.b16 %v2668, %v2667
      %v2690 = vpack.c.b16 %v2670, %v2669
      %v2691 = vpack.c.b16 %v2672, %v2671
      %v2692 = vpack.c.b16 %v2674, %v2673
      %v2693 = vpack.c.b16 %v2676, %v2675
      %v2694 = vpack.c.b16 %v2678, %v2677
      %v2727 = vunpack.c.l.b16 %v2631
      %v2728 = vunpack.c.l.b16 %v2632
      %v2729 = vunpack.c.l.b16 %v2633
      %v2730 = vunpack.c.l.b16 %v2634
      %v2731 = vunpack.c.l.b16 %v2635
      %v2732 = vunpack.c.l.b16 %v2636
      %v2733 = vunpack.c.l.b16 %v2637
      %v2734 = vunpack.c.l.b16 %v2638
      %v2735 = vunpack.c.l.b16 %v2639
      %v2736 = vunpack.c.l.b16 %v2640
      %v2737 = vunpack.c.l.b16 %v2641
      %v2738 = vunpack.c.l.b16 %v2642
      %v2739 = vunpack.c.l.b16 %v2643
      %v2740 = vunpack.c.l.b16 %v2644
      %v2741 = vunpack.c.l.b16 %v2645
      %v2742 = vunpack.c.l.b16 %v2646
      %v2743 = vpack.c.b16 %v2728, %v2727
      %v2744 = vpack.c.b16 %v2730, %v2729
      %v2745 = vpack.c.b16 %v2732, %v2731
      %v2746 = vpack.c.b16 %v2734, %v2733
      %v2747 = vpack.c.b16 %v2736, %v2735
      %v2748 = vpack.c.b16 %v2738, %v2737
      %v2749 = vpack.c.b16 %v2740, %v2739
      %v2750 = vpack.c.b16 %v2742, %v2741
      %2759 = vmatprep.subr.bf16.mxu0 0
      %2760 = vmatpush1.bf16.msra.mxu0 %v2743
      %2761 = vmatprep.subr.bf16.mxu0 0
      %2762 = vmatpush1.bf16.msra.mxu0 %v2744
      %2763 = vmatprep.subr.bf16.mxu0 0
      %2764 = vmatpush1.bf16.msra.mxu0 %v2745
      %2765 = vmatprep.subr.bf16.mxu0 0
      %2766 = vmatpush1.bf16.msra.mxu0 %v2746
      %2767 = vmatprep.subr.bf16.mxu0 0
      %2768 = vmatpush1.bf16.msra.mxu0 %v2747
      %2769 = vmatprep.subr.bf16.mxu0 0
      %2770 = vmatpush1.bf16.msra.mxu0 %v2748
      %2771 = vmatprep.subr.bf16.mxu0 0
      %2772 = vmatpush1.bf16.msra.mxu0 %v2749
      %2773 = vmatprep.subr.bf16.mxu0 0
      %2774 = vmatpush1.bf16.msra.mxu0 %v2750
      %2775 = vmatprep.subr.bf16.mxu0 0
      %2776 = vmatpush1.bf16.msra.mxu0 0
      %2777 = vmatprep.subr.bf16.mxu0 0
      %2778 = vmatpush1.bf16.msra.mxu0 0
      %2779 = vmatprep.subr.bf16.mxu0 0
      %2780 = vmatpush1.bf16.msra.mxu0 0
      %2781 = vmatprep.subr.bf16.mxu0 0
      %2782 = vmatpush1.bf16.msra.mxu0 0
      %2783 = vmatprep.subr.bf16.mxu0 0
      %2784 = vmatpush1.bf16.msra.mxu0 0
      %2785 = vmatprep.subr.bf16.mxu0 0
      %2786 = vmatpush1.bf16.msra.mxu0 0
      %2787 = vmatprep.subr.bf16.mxu0 0
      %2788 = vmatpush1.bf16.msra.mxu0 0
      %2789 = vmatprep.subr.bf16.mxu0 0
      %2790 = vmatpush1.bf16.msra.mxu0 0
      %2791 = vmatprep.mubr.bf16.mxu0 0
      %2792 = vmatmul.mubr.bf16.gmra.mrb[0].mxu0 %v2679
      %v2793 = vpop.f32.mrb[0].mxu0
      %v2794 = vadd.f32 0.0, %v2793
      %v2795 = vpop.f32.mrb[0].mxu0
      %v2796 = vpop.f32.mrb[0].mxu0
      %v2797 = vadd.f32 0.0, %v2796
      %v2798 = vpop.f32.mrb[0].mxu0
      %2799 = vmatprep.mubr.bf16.mxu0 0
      %2800 = vmatmul.mubr.bf16.gmra.mrb[0].mxu0 %v2680
      %v2801 = vpop.f32.mrb[0].mxu0
      %v2802 = vadd.f32 0.0, %v2801
      %v2803 = vpop.f32.mrb[0].mxu0
      %v2804 = vpop.f32.mrb[0].mxu0
      %v2805 = vadd.f32 0.0, %v2804
      %v2806 = vpop.f32.mrb[0].mxu0
      %2807 = vmatprep.mubr.bf16.mxu0 0
      %2808 = vmatmul.mubr.bf16.gmra.mrb[0].mxu0 %v2681
      %v2809 = vpop.f32.mrb[0].mxu0
      %v2810 = vadd.f32 0.0, %v2809
      %v2811 = vpop.f32.mrb[0].mxu0
      %v2812 = vpop.f32.mrb[0].mxu0
      %v2813 = vadd.f32 0.0, %v2812
      %v2814 = vpop.f32.mrb[0].mxu0
      %2815 = vmatprep.mubr.bf16.mxu0 0
      %2816 = vmatmul.mubr.bf16.gmra.mrb[0].mxu0 %v2682
      %v2817 = vpop.f32.mrb[0].mxu0
      %v2818 = vadd.f32 0.0, %v2817
      %v2819 = vpop.f32.mrb[0].mxu0
      %v2820 = vpop.f32.mrb[0].mxu0
      %v2821 = vadd.f32 0.0, %v2820
      %v2822 = vpop.f32.mrb[0].mxu0
      %2823 = vmatprep.mubr.bf16.mxu0 0
      %2824 = vmatmul.mubr.bf16.gmra.mrb[0].mxu0 %v2683
      %v2825 = vpop.f32.mrb[0].mxu0
      %v2826 = vadd.f32 0.0, %v2825
      %v2827 = vpop.f32.mrb[0].mxu0
      %v2828 = vpop.f32.mrb[0].mxu0
      %v2829 = vadd.f32 0.0, %v2828
      %v2830 = vpop.f32.mrb[0].mxu0
      %2831 = vmatprep.mubr.bf16.mxu0 0
      %2832 = vmatmul.mubr.bf16.gmra.mrb[0].mxu0 %v2684
      %v2833 = vpop.f32.mrb[0].mxu0
      %v2834 = vadd.f32 0.0, %v2833
      %v2835 = vpop.f32.mrb[0].mxu0
      %v2836 = vpop.f32.mrb[0].mxu0
      %v2837 = vadd.f32 0.0, %v2836
      %v2838 = vpop.f32.mrb[0].mxu0
      %2839 = vmatprep.mubr.bf16.mxu0 0
      %2840 = vmatmul.mubr.bf16.gmra.mrb[0].mxu0 %v2685
      %v2841 = vpop.f32.mrb[0].mxu0
      %v2842 = vadd.f32 0.0, %v2841
      %v2843 = vpop.f32.mrb[0].mxu0
      %v2844 = vpop.f32.mrb[0].mxu0
      %v2845 = vadd.f32 0.0, %v2844
      %v2846 = vpop.f32.mrb[0].mxu0
      %2847 = vmatprep.mubr.bf16.mxu0 0
      %2848 = vmatmul.mubr.bf16.gmra.mrb[0].mxu0 %v2686
      %v2849 = vpop.f32.mrb[0].mxu0
      %v2850 = vadd.f32 0.0, %v2849
      %v2851 = vpop.f32.mrb[0].mxu0
      %v2852 = vpop.f32.mrb[0].mxu0
      %v2853 = vadd.f32 0.0, %v2852
      %v2854 = vpop.f32.mrb[0].mxu0
      %2855 = vmatprep.mubr.bf16.mxu0 0
      %2856 = vmatmul.mubr.bf16.gmra.mrb[0].mxu0 %v2687
      %v2857 = vpop.f32.mrb[0].mxu0
      %v2858 = vadd.f32 0.0, %v2857
      %v2859 = vpop.f32.mrb[0].mxu0
      %v2860 = vpop.f32.mrb[0].mxu0
      %v2861 = vadd.f32 0.0, %v2860
      %v2862 = vpop.f32.mrb[0].mxu0
      %2863 = vmatprep.mubr.bf16.mxu0 0
      %2864 = vmatmul.mubr.bf16.gmra.mrb[0].mxu0 %v2688
      %v2865 = vpop.f32.mrb[0].mxu0
      %v2866 = vadd.f32 0.0, %v2865
      %v2867 = vpop.f32.mrb[0].mxu0
      %v2868 = vpop.f32.mrb[0].mxu0
      %v2869 = vadd.f32 0.0, %v2868
      %v2870 = vpop.f32.mrb[0].mxu0
      %2871 = vmatprep.mubr.bf16.mxu0 0
      %2872 = vmatmul.mubr.bf16.gmra.mrb[0].mxu0 %v2689
      %v2873 = vpop.f32.mrb[0].mxu0
      %v2874 = vadd.f32 0.0, %v2873
      %v2875 = vpop.f32.mrb[0].mxu0
      %v2876 = vpop.f32.mrb[0].mxu0
      %v2877 = vadd.f32 0.0, %v2876
      %v2878 = vpop.f32.mrb[0].mxu0
      %2879 = vmatprep.mubr.bf16.mxu0 0
      %2880 = vmatmul.mubr.bf16.gmra.mrb[0].mxu0 %v2690
      %v2881 = vpop.f32.mrb[0].mxu0
      %v2882 = vadd.f32 0.0, %v2881
      %v2883 = vpop.f32.mrb[0].mxu0
      %v2884 = vpop.f32.mrb[0].mxu0
      %v2885 = vadd.f32 0.0, %v2884
      %v2886 = vpop.f32.mrb[0].mxu0
      %2887 = vmatprep.mubr.bf16.mxu0 0
      %2888 = vmatmul.mubr.bf16.gmra.mrb[0].mxu0 %v2691
      %v2889 = vpop.f32.mrb[0].mxu0
      %v2890 = vadd.f32 0.0, %v2889
      %v2891 = vpop.f32.mrb[0].mxu0
      %v2892 = vpop.f32.mrb[0].mxu0
      %v2893 = vadd.f32 0.0, %v2892
      %v2894 = vpop.f32.mrb[0].mxu0
      %2895 = vmatprep.mubr.bf16.mxu0 0
      %2896 = vmatmul.mubr.bf16.gmra.mrb[0].mxu0 %v2692
      %v2897 = vpop.f32.mrb[0].mxu0
      %v2898 = vadd.f32 0.0, %v2897
      %v2899 = vpop.f32.mrb[0].mxu0
      %v2900 = vpop.f32.mrb[0].mxu0
      %v2901 = vadd.f32 0.0, %v2900
      %v2902 = vpop.f32.mrb[0].mxu0
      %2903 = vmatprep.mubr.bf16.mxu0 0
      %2904 = vmatmul.mubr.bf16.gmra.mrb[0].mxu0 %v2693
      %v2905 = vpop.f32.mrb[0].mxu0
      %v2906 = vadd.f32 0.0, %v2905
      %v2907 = vpop.f32.mrb[0].mxu0
      %v2908 = vpop.f32.mrb[0].mxu0
      %v2909 = vadd.f32 0.0, %v2908
      %v2910 = vpop.f32.mrb[0].mxu0
      %2911 = vmatprep.mubr.bf16.mxu0 0
      %2912 = vmatmul.mubr.bf16.gmra.mrb[0].mxu0 %v2694
      %v2913 = vpop.f32.mrb[0].mxu0
      %v2914 = vadd.f32 0.0, %v2913
      %v2915 = vpop.f32.mrb[0].mxu0
      %v2916 = vpop.f32.mrb[0].mxu0
      %v2917 = vadd.f32 0.0, %v2916
      %v2918 = vpop.f32.mrb[0].mxu0
      %2919 = vdwg.mxu0
      %v2920 = vadd.f32 %v2166, %v2794
      %v2921 = vadd.f32 %v2167, %v2797
      %v2922 = vadd.f32 %v2168, %v2802
      %v2923 = vadd.f32 %v2169, %v2805
      %v2924 = vadd.f32 %v2170, %v2810
      %v2925 = vadd.f32 %v2171, %v2813
      %v2926 = vadd.f32 %v2172, %v2818
      %v2927 = vadd.f32 %v2173, %v2821
      %v2928 = vadd.f32 %v2174, %v2826
      %v2929 = vadd.f32 %v2175, %v2829
      %v2930 = vadd.f32 %v2176, %v2834
      %v2931 = vadd.f32 %v2177, %v2837
      %v2932 = vadd.f32 %v2178, %v2842
      %v2933 = vadd.f32 %v2179, %v2845
      %v2934 = vadd.f32 %v2180, %v2850
      %v2935 = vadd.f32 %v2181, %v2853
      %v2936 = vadd.f32 %v2182, %v2858
      %v2937 = vadd.f32 %v2183, %v2861
      %v2938 = vadd.f32 %v2184, %v2866
      %v2939 = vadd.f32 %v2185, %v2869
      %v2940 = vadd.f32 %v2186, %v2874
      %v2941 = vadd.f32 %v2187, %v2877
      %v2942 = vadd.f32 %v2188, %v2882
      %v2943 = vadd.f32 %v2189, %v2885
      %v2944 = vadd.f32 %v2190, %v2890
      %v2945 = vadd.f32 %v2191, %v2893
      %v2946 = vadd.f32 %v2192, %v2898
      %v2947 = vadd.f32 %v2193, %v2901
      %v2948 = vadd.f32 %v2194, %v2906
      %v2949 = vadd.f32 %v2195, %v2909
      %v2950 = vadd.f32 %v2196, %v2914
      %v2951 = vadd.f32 %v2197, %v2917
      %v2952 = vld [vmem:[%s1811] sm:$0xe]
      %v2953 = vld [vmem:[%s1811 + $0xc] sm:$0xe]
      %v2954 = vld [vmem:[%s1811 + $0x18] sm:$0xe]
      %v2955 = vld [vmem:[%s1811 + $0x24] sm:$0xe]
      %v2956 = vld [vmem:[%s1811 + $0x30] sm:$0xe]
      %v2957 = vld [vmem:[%s1811 + $0x3c] sm:$0xe]
      %v2958 = vld [vmem:[%s1811 + $0x48] sm:$0xe]
      %v2959 = vld [vmem:[%s1811 + $0x54] sm:$0xe]
      %v2960 = vld [vmem:[%s1811 + $0x60] sm:$0xe]
      %v2961 = vld [vmem:[%s1811 + $0x6c] sm:$0xe]
      %v2962 = vld [vmem:[%s1811 + $0x78] sm:$0xe]
      %v2963 = vld [vmem:[%s1811 + $0x84] sm:$0xe]
      %v2964 = vld [vmem:[%s1811 + $0x90] sm:$0xe]
      %v2965 = vld [vmem:[%s1811 + $0x9c] sm:$0xe]
      %v2966 = vld [vmem:[%s1811 + $0xa8] sm:$0xe]
      %v2967 = vld [vmem:[%s1811 + $0xb4] sm:$0xe]
      %v3016 = vrot.slane %v2952, 5
      %v3017 = vrot.slane %v3016, 4
      %v3018 = vrot.slane %v2199, 5
      %v3019 = vsel %vm1376, %v3017, %v3018
      %v3020 = vrot.slane %v3018, 4
      %v3021 = vrot.slane %v2200, 5
      %v3022 = vsel %vm1376, %v3020, %v3021
      %v3023 = vrot.slane %v2953, 5
      %v3024 = vrot.slane %v3023, 4
      %v3025 = vrot.slane %v2202, 5
      %v3026 = vsel %vm1376, %v3024, %v3025
      %v3027 = vrot.slane %v3025, 4
      %v3028 = vrot.slane %v2203, 5
      %v3029 = vsel %vm1376, %v3027, %v3028
      %v3030 = vrot.slane %v2954, 5
      %v3031 = vrot.slane %v3030, 4
      %v3032 = vrot.slane %v2205, 5
      %v3033 = vsel %vm1376, %v3031, %v3032
      %v3034 = vrot.slane %v3032, 4
      %v3035 = vrot.slane %v2206, 5
      %v3036 = vsel %vm1376, %v3034, %v3035
      %v3037 = vrot.slane %v2955, 5
      %v3038 = vrot.slane %v3037, 4
      %v3039 = vrot.slane %v2208, 5
      %v3040 = vsel %vm1376, %v3038, %v3039
      %v3041 = vrot.slane %v3039, 4
      %v3042 = vrot.slane %v2209, 5
      %v3043 = vsel %vm1376, %v3041, %v3042
      %v3044 = vrot.slane %v2956, 5
      %v3045 = vrot.slane %v3044, 4
      %v3046 = vrot.slane %v2211, 5
      %v3047 = vsel %vm1376, %v3045, %v3046
      %v3048 = vrot.slane %v3046, 4
      %v3049 = vrot.slane %v2212, 5
      %v3050 = vsel %vm1376, %v3048, %v3049
      %v3051 = vrot.slane %v2957, 5
      %v3052 = vrot.slane %v3051, 4
      %v3053 = vrot.slane %v2214, 5
      %v3054 = vsel %vm1376, %v3052, %v3053
      %v3055 = vrot.slane %v3053, 4
      %v3056 = vrot.slane %v2215, 5
      %v3057 = vsel %vm1376, %v3055, %v3056
      %v3058 = vrot.slane %v2958, 5
      %v3059 = vrot.slane %v3058, 4
      %v3060 = vrot.slane %v2217, 5
      %v3061 = vsel %vm1376, %v3059, %v3060
      %v3062 = vrot.slane %v3060, 4
      %v3063 = vrot.slane %v2218, 5
      %v3064 = vsel %vm1376, %v3062, %v3063
      %v3065 = vrot.slane %v2959, 5
      %v3066 = vrot.slane %v3065, 4
      %v3067 = vrot.slane %v2220, 5
      %v3068 = vsel %vm1376, %v3066, %v3067
      %v3069 = vrot.slane %v3067, 4
      %v3070 = vrot.slane %v2221, 5
      %v3071 = vsel %vm1376, %v3069, %v3070
      %v3072 = vrot.slane %v2960, 5
      %v3073 = vrot.slane %v3072, 4
      %v3074 = vrot.slane %v2223, 5
      %v3075 = vsel %vm1376, %v3073, %v3074
      %v3076 = vrot.slane %v3074, 4
      %v3077 = vrot.slane %v2224, 5
      %v3078 = vsel %vm1376, %v3076, %v3077
      %v3079 = vrot.slane %v2961, 5
      %v3080 = vrot.slane %v3079, 4
      %v3081 = vrot.slane %v2226, 5
      %v3082 = vsel %vm1376, %v3080, %v3081
      %v3083 = vrot.slane %v3081, 4
      %v3084 = vrot.slane %v2227, 5
      %v3085 = vsel %vm1376, %v3083, %v3084
      %v3086 = vrot.slane %v2962, 5
      %v3087 = vrot.slane %v3086, 4
      %v3088 = vrot.slane %v2229, 5
      %v3089 = vsel %vm1376, %v3087, %v3088
      %v3090 = vrot.slane %v3088, 4
      %v3091 = vrot.slane %v2230, 5
      %v3092 = vsel %vm1376, %v3090, %v3091
      %v3093 = vrot.slane %v2963, 5
      %v3094 = vrot.slane %v3093, 4
      %v3095 = vrot.slane %v2232, 5
      %v3096 = vsel %vm1376, %v3094, %v3095
      %v3097 = vrot.slane %v3095, 4
      %v3098 = vrot.slane %v2233, 5
      %v3099 = vsel %vm1376, %v3097, %v3098
      %v3100 = vrot.slane %v2964, 5
      %v3101 = vrot.slane %v3100, 4
      %v3102 = vrot.slane %v2235, 5
      %v3103 = vsel %vm1376, %v3101, %v3102
      %v3104 = vrot.slane %v3102, 4
      %v3105 = vrot.slane %v2236, 5
      %v3106 = vsel %vm1376, %v3104, %v3105
      %v3107 = vrot.slane %v2965, 5
      %v3108 = vrot.slane %v3107, 4
      %v3109 = vrot.slane %v2238, 5
      %v3110 = vsel %vm1376, %v3108, %v3109
      %v3111 = vrot.slane %v3109, 4
      %v3112 = vrot.slane %v2239, 5
      %v3113 = vsel %vm1376, %v3111, %v3112
      %v3114 = vrot.slane %v2966, 5
      %v3115 = vrot.slane %v3114, 4
      %v3116 = vrot.slane %v2241, 5
      %v3117 = vsel %vm1376, %v3115, %v3116
      %v3118 = vrot.slane %v3116, 4
      %v3119 = vrot.slane %v2242, 5
      %v3120 = vsel %vm1376, %v3118, %v3119
      %v3121 = vrot.slane %v2967, 5
      %v3122 = vrot.slane %v3121, 4
      %v3123 = vrot.slane %v2244, 5
      %v3124 = vsel %vm1376, %v3122, %v3123
      %v3125 = vrot.slane %v3123, 4
      %v3126 = vrot.slane %v2245, 5
      %v3127 = vsel %vm1376, %v3125, %v3126
      %s3128 = scalar_lea.vmem %s1, 320
      %v3129 = vld [vmem:[%s3128] sm:$0xf]
      %v3130 = vld [vmem:[%s3128 + $0x4] sm:$0xf]
      %v3131 = vld [vmem:[%s3128 + $0x8] sm:$0xf]
      %v3132 = vld [vmem:[%s3128 + $0xc] sm:$0xf]
      %v3133 = vld [vmem:[%s3128 + $0x10] sm:$0xf]
      %v3134 = vld [vmem:[%s3128 + $0x14] sm:$0xf]
      %v3135 = vld [vmem:[%s3128 + $0x18] sm:$0xf]
      %v3136 = vld [vmem:[%s3128 + $0x1c] sm:$0xf]
      %v3137 = vld [vmem:[%s3128 + $0x20] sm:$0xf]
      %v3138 = vld [vmem:[%s3128 + $0x24] sm:$0xf]
      %v3139 = vld [vmem:[%s3128 + $0x28] sm:$0xf]
      %v3140 = vld [vmem:[%s3128 + $0x2c] sm:$0xf]
      %v3141 = vld [vmem:[%s3128 + $0x30] sm:$0xf]
      %v3142 = vld [vmem:[%s3128 + $0x34] sm:$0xf]
      %v3143 = vld [vmem:[%s3128 + $0x38] sm:$0xf]
      %v3144 = vld [vmem:[%s3128 + $0x3c] sm:$0xf]
      %v3145 = vunpack.c.l.b16 %v3019
      %v3146 = vunpack.c.l.b16 %v3022
      %v3147 = vunpack.c.l.b16 %v3026
      %v3148 = vunpack.c.l.b16 %v3029
      %v3149 = vunpack.c.l.b16 %v3033
      %v3150 = vunpack.c.l.b16 %v3036
      %v3151 = vunpack.c.l.b16 %v3040
      %v3152 = vunpack.c.l.b16 %v3043
      %v3153 = vunpack.c.l.b16 %v3047
      %v3154 = vunpack.c.l.b16 %v3050
      %v3155 = vunpack.c.l.b16 %v3054
      %v3156 = vunpack.c.l.b16 %v3057
      %v3157 = vunpack.c.l.b16 %v3061
      %v3158 = vunpack.c.l.b16 %v3064
      %v3159 = vunpack.c.l.b16 %v3068
      %v3160 = vunpack.c.l.b16 %v3071
      %v3161 = vunpack.c.l.b16 %v3075
      %v3162 = vunpack.c.l.b16 %v3078
      %v3163 = vunpack.c.l.b16 %v3082
      %v3164 = vunpack.c.l.b16 %v3085
      %v3165 = vunpack.c.l.b16 %v3089
      %v3166 = vunpack.c.l.b16 %v3092
      %v3167 = vunpack.c.l.b16 %v3096
      %v3168 = vunpack.c.l.b16 %v3099
      %v3169 = vunpack.c.l.b16 %v3103
      %v3170 = vunpack.c.l.b16 %v3106
      %v3171 = vunpack.c.l.b16 %v3110
      %v3172 = vunpack.c.l.b16 %v3113
      %v3173 = vunpack.c.l.b16 %v3117
      %v3174 = vunpack.c.l.b16 %v3120
      %v3175 = vunpack.c.l.b16 %v3124
      %v3176 = vunpack.c.l.b16 %v3127
      %v3177 = vpack.c.b16 %v3146, %v3145
      %v3178 = vpack.c.b16 %v3148, %v3147
      %v3179 = vpack.c.b16 %v3150, %v3149
      %v3180 = vpack.c.b16 %v3152, %v3151
      %v3181 = vpack.c.b16 %v3154, %v3153
      %v3182 = vpack.c.b16 %v3156, %v3155
      %v3183 = vpack.c.b16 %v3158, %v3157
      %v3184 = vpack.c.b16 %v3160, %v3159
      %v3185 = vpack.c.b16 %v3162, %v3161
      %v3186 = vpack.c.b16 %v3164, %v3163
      %v3187 = vpack.c.b16 %v3166, %v3165
      %v3188 = vpack.c.b16 %v3168, %v3167
      %v3189 = vpack.c.b16 %v3170, %v3169
      %v3190 = vpack.c.b16 %v3172, %v3171
      %v3191 = vpack.c.b16 %v3174, %v3173
      %v3192 = vpack.c.b16 %v3176, %v3175
      %v3225 = vunpack.c.l.b16 %v3129
      %v3226 = vunpack.c.l.b16 %v3130
      %v3227 = vunpack.c.l.b16 %v3131
      %v3228 = vunpack.c.l.b16 %v3132
      %v3229 = vunpack.c.l.b16 %v3133
      %v3230 = vunpack.c.l.b16 %v3134
      %v3231 = vunpack.c.l.b16 %v3135
      %v3232 = vunpack.c.l.b16 %v3136
      %v3233 = vunpack.c.l.b16 %v3137
      %v3234 = vunpack.c.l.b16 %v3138
      %v3235 = vunpack.c.l.b16 %v3139
      %v3236 = vunpack.c.l.b16 %v3140
      %v3237 = vunpack.c.l.b16 %v3141
      %v3238 = vunpack.c.l.b16 %v3142
      %v3239 = vunpack.c.l.b16 %v3143
      %v3240 = vunpack.c.l.b16 %v3144
      %v3241 = vpack.c.b16 %v3226, %v3225
      %v3242 = vpack.c.b16 %v3228, %v3227
      %v3243 = vpack.c.b16 %v3230, %v3229
      %v3244 = vpack.c.b16 %v3232, %v3231
      %v3245 = vpack.c.b16 %v3234, %v3233
      %v3246 = vpack.c.b16 %v3236, %v3235
      %v3247 = vpack.c.b16 %v3238, %v3237
      %v3248 = vpack.c.b16 %v3240, %v3239
      %3257 = vmatprep.subr.bf16.mxu0 0
      %3258 = vmatpush1.bf16.msra.mxu0 %v3241
      %3259 = vmatprep.subr.bf16.mxu0 0
      %3260 = vmatpush1.bf16.msra.mxu0 %v3242
      %3261 = vmatprep.subr.bf16.mxu0 0
      %3262 = vmatpush1.bf16.msra.mxu0 %v3243
      %3263 = vmatprep.subr.bf16.mxu0 0
      %3264 = vmatpush1.bf16.msra.mxu0 %v3244
      %3265 = vmatprep.subr.bf16.mxu0 0
      %3266 = vmatpush1.bf16.msra.mxu0 %v3245
      %3267 = vmatprep.subr.bf16.mxu0 0
      %3268 = vmatpush1.bf16.msra.mxu0 %v3246
      %3269 = vmatprep.subr.bf16.mxu0 0
      %3270 = vmatpush1.bf16.msra.mxu0 %v3247
      %3271 = vmatprep.subr.bf16.mxu0 0
      %3272 = vmatpush1.bf16.msra.mxu0 %v3248
      %3273 = vmatprep.subr.bf16.mxu0 0
      %3274 = vmatpush1.bf16.msra.mxu0 0
      %3275 = vmatprep.subr.bf16.mxu0 0
      %3276 = vmatpush1.bf16.msra.mxu0 0
      %3277 = vmatprep.subr.bf16.mxu0 0
      %3278 = vmatpush1.bf16.msra.mxu0 0
      %3279 = vmatprep.subr.bf16.mxu0 0
      %3280 = vmatpush1.bf16.msra.mxu0 0
      %3281 = vmatprep.subr.bf16.mxu0 0
      %3282 = vmatpush1.bf16.msra.mxu0 0
      %3283 = vmatprep.subr.bf16.mxu0 0
      %3284 = vmatpush1.bf16.msra.mxu0 0
      %3285 = vmatprep.subr.bf16.mxu0 0
      %3286 = vmatpush1.bf16.msra.mxu0 0
      %3287 = vmatprep.subr.bf16.mxu0 0
      %3288 = vmatpush1.bf16.msra.mxu0 0
      %3289 = vmatprep.mubr.bf16.mxu0 0
      %3290 = vmatmul.mubr.bf16.gmra.mrb[0].mxu0 %v3177
      %v3291 = vpop.f32.mrb[0].mxu0
      %v3292 = vadd.f32 0.0, %v3291
      %v3293 = vpop.f32.mrb[0].mxu0
      %v3294 = vpop.f32.mrb[0].mxu0
      %v3295 = vadd.f32 0.0, %v3294
      %v3296 = vpop.f32.mrb[0].mxu0
      %3297 = vmatprep.mubr.bf16.mxu0 0
      %3298 = vmatmul.mubr.bf16.gmra.mrb[0].mxu0 %v3178
      %v3299 = vpop.f32.mrb[0].mxu0
      %v3300 = vadd.f32 0.0, %v3299
      %v3301 = vpop.f32.mrb[0].mxu0
      %v3302 = vpop.f32.mrb[0].mxu0
      %v3303 = vadd.f32 0.0, %v3302
      %v3304 = vpop.f32.mrb[0].mxu0
      %3305 = vmatprep.mubr.bf16.mxu0 0
      %3306 = vmatmul.mubr.bf16.gmra.mrb[0].mxu0 %v3179
      %v3307 = vpop.f32.mrb[0].mxu0
      %v3308 = vadd.f32 0.0, %v3307
      %v3309 = vpop.f32.mrb[0].mxu0
      %v3310 = vpop.f32.mrb[0].mxu0
      %v3311 = vadd.f32 0.0, %v3310
      %v3312 = vpop.f32.mrb[0].mxu0
      %3313 = vmatprep.mubr.bf16.mxu0 0
      %3314 = vmatmul.mubr.bf16.gmra.mrb[0].mxu0 %v3180
      %v3315 = vpop.f32.mrb[0].mxu0
      %v3316 = vadd.f32 0.0, %v3315
      %v3317 = vpop.f32.mrb[0].mxu0
      %v3318 = vpop.f32.mrb[0].mxu0
      %v3319 = vadd.f32 0.0, %v3318
      %v3320 = vpop.f32.mrb[0].mxu0
      %3321 = vmatprep.mubr.bf16.mxu0 0
      %3322 = vmatmul.mubr.bf16.gmra.mrb[0].mxu0 %v3181
      %v3323 = vpop.f32.mrb[0].mxu0
      %v3324 = vadd.f32 0.0, %v3323
      %v3325 = vpop.f32.mrb[0].mxu0
      %v3326 = vpop.f32.mrb[0].mxu0
      %v3327 = vadd.f32 0.0, %v3326
      %v3328 = vpop.f32.mrb[0].mxu0
      %3329 = vmatprep.mubr.bf16.mxu0 0
      %3330 = vmatmul.mubr.bf16.gmra.mrb[0].mxu0 %v3182
      %v3331 = vpop.f32.mrb[0].mxu0
      %v3332 = vadd.f32 0.0, %v3331
      %v3333 = vpop.f32.mrb[0].mxu0
      %v3334 = vpop.f32.mrb[0].mxu0
      %v3335 = vadd.f32 0.0, %v3334
      %v3336 = vpop.f32.mrb[0].mxu0
      %3337 = vmatprep.mubr.bf16.mxu0 0
      %3338 = vmatmul.mubr.bf16.gmra.mrb[0].mxu0 %v3183
      %v3339 = vpop.f32.mrb[0].mxu0
      %v3340 = vadd.f32 0.0, %v3339
      %v3341 = vpop.f32.mrb[0].mxu0
      %v3342 = vpop.f32.mrb[0].mxu0
      %v3343 = vadd.f32 0.0, %v3342
      %v3344 = vpop.f32.mrb[0].mxu0
      %3345 = vmatprep.mubr.bf16.mxu0 0
      %3346 = vmatmul.mubr.bf16.gmra.mrb[0].mxu0 %v3184
      %v3347 = vpop.f32.mrb[0].mxu0
      %v3348 = vadd.f32 0.0, %v3347
      %v3349 = vpop.f32.mrb[0].mxu0
      %v3350 = vpop.f32.mrb[0].mxu0
      %v3351 = vadd.f32 0.0, %v3350
      %v3352 = vpop.f32.mrb[0].mxu0
      %3353 = vmatprep.mubr.bf16.mxu0 0
      %3354 = vmatmul.mubr.bf16.gmra.mrb[0].mxu0 %v3185
      %v3355 = vpop.f32.mrb[0].mxu0
      %v3356 = vadd.f32 0.0, %v3355
      %v3357 = vpop.f32.mrb[0].mxu0
      %v3358 = vpop.f32.mrb[0].mxu0
      %v3359 = vadd.f32 0.0, %v3358
      %v3360 = vpop.f32.mrb[0].mxu0
      %3361 = vmatprep.mubr.bf16.mxu0 0
      %3362 = vmatmul.mubr.bf16.gmra.mrb[0].mxu0 %v3186
      %v3363 = vpop.f32.mrb[0].mxu0
      %v3364 = vadd.f32 0.0, %v3363
      %v3365 = vpop.f32.mrb[0].mxu0
      %v3366 = vpop.f32.mrb[0].mxu0
      %v3367 = vadd.f32 0.0, %v3366
      %v3368 = vpop.f32.mrb[0].mxu0
      %3369 = vmatprep.mubr.bf16.mxu0 0
      %3370 = vmatmul.mubr.bf16.gmra.mrb[0].mxu0 %v3187
      %v3371 = vpop.f32.mrb[0].mxu0
      %v3372 = vadd.f32 0.0, %v3371
      %v3373 = vpop.f32.mrb[0].mxu0
      %v3374 = vpop.f32.mrb[0].mxu0
      %v3375 = vadd.f32 0.0, %v3374
      %v3376 = vpop.f32.mrb[0].mxu0
      %3377 = vmatprep.mubr.bf16.mxu0 0
      %3378 = vmatmul.mubr.bf16.gmra.mrb[0].mxu0 %v3188
      %v3379 = vpop.f32.mrb[0].mxu0
      %v3380 = vadd.f32 0.0, %v3379
      %v3381 = vpop.f32.mrb[0].mxu0
      %v3382 = vpop.f32.mrb[0].mxu0
      %v3383 = vadd.f32 0.0, %v3382
      %v3384 = vpop.f32.mrb[0].mxu0
      %3385 = vmatprep.mubr.bf16.mxu0 0
      %3386 = vmatmul.mubr.bf16.gmra.mrb[0].mxu0 %v3189
      %v3387 = vpop.f32.mrb[0].mxu0
      %v3388 = vadd.f32 0.0, %v3387
      %v3389 = vpop.f32.mrb[0].mxu0
      %v3390 = vpop.f32.mrb[0].mxu0
      %v3391 = vadd.f32 0.0, %v3390
      %v3392 = vpop.f32.mrb[0].mxu0
      %3393 = vmatprep.mubr.bf16.mxu0 0
      %3394 = vmatmul.mubr.bf16.gmra.mrb[0].mxu0 %v3190
      %v3395 = vpop.f32.mrb[0].mxu0
      %v3396 = vadd.f32 0.0, %v3395
      %v3397 = vpop.f32.mrb[0].mxu0
      %v3398 = vpop.f32.mrb[0].mxu0
      %v3399 = vadd.f32 0.0, %v3398
      %v3400 = vpop.f32.mrb[0].mxu0
      %3401 = vmatprep.mubr.bf16.mxu0 0
      %3402 = vmatmul.mubr.bf16.gmra.mrb[0].mxu0 %v3191
      %v3403 = vpop.f32.mrb[0].mxu0
      %v3404 = vadd.f32 0.0, %v3403
      %v3405 = vpop.f32.mrb[0].mxu0
      %v3406 = vpop.f32.mrb[0].mxu0
      %v3407 = vadd.f32 0.0, %v3406
      %v3408 = vpop.f32.mrb[0].mxu0
      %3409 = vmatprep.mubr.bf16.mxu0 0
      %3410 = vmatmul.mubr.bf16.gmra.mrb[0].mxu0 %v3192
      %v3411 = vpop.f32.mrb[0].mxu0
      %v3412 = vadd.f32 0.0, %v3411
      %v3413 = vpop.f32.mrb[0].mxu0
      %v3414 = vpop.f32.mrb[0].mxu0
      %v3415 = vadd.f32 0.0, %v3414
      %v3416 = vpop.f32.mrb[0].mxu0
      %3417 = vdwg.mxu0
      %v3418 = vadd.f32 %v2920, %v3292
      %v3419 = vadd.f32 %v2921, %v3295
      %v3420 = vadd.f32 %v2922, %v3300
      %v3421 = vadd.f32 %v2923, %v3303
      %v3422 = vadd.f32 %v2924, %v3308
      %v3423 = vadd.f32 %v2925, %v3311
      %v3424 = vadd.f32 %v2926, %v3316
      %v3425 = vadd.f32 %v2927, %v3319
      %v3426 = vadd.f32 %v2928, %v3324
      %v3427 = vadd.f32 %v2929, %v3327
      %v3428 = vadd.f32 %v2930, %v3332
      %v3429 = vadd.f32 %v2931, %v3335
      %v3430 = vadd.f32 %v2932, %v3340
      %v3431 = vadd.f32 %v2933, %v3343
      %v3432 = vadd.f32 %v2934, %v3348
      %v3433 = vadd.f32 %v2935, %v3351
      %v3434 = vadd.f32 %v2936, %v3356
      %v3435 = vadd.f32 %v2937, %v3359
      %v3436 = vadd.f32 %v2938, %v3364
      %v3437 = vadd.f32 %v2939, %v3367
      %v3438 = vadd.f32 %v2940, %v3372
      %v3439 = vadd.f32 %v2941, %v3375
      %v3440 = vadd.f32 %v2942, %v3380
      %v3441 = vadd.f32 %v2943, %v3383
      %v3442 = vadd.f32 %v2944, %v3388
      %v3443 = vadd.f32 %v2945, %v3391
      %v3444 = vadd.f32 %v2946, %v3396
      %v3445 = vadd.f32 %v2947, %v3399
      %v3446 = vadd.f32 %v2948, %v3404
      %v3447 = vadd.f32 %v2949, %v3407
      %v3448 = vadd.f32 %v2950, %v3412
      %v3449 = vadd.f32 %v2951, %v3415
      %s3450 = scalar_lea.vmem %s273, 24
      %v3451 = vld [vmem:[%s3450] sm:$0xf]
      %v3452 = vld [vmem:[%s3450 + $0x4] sm:$0xf]
      %v3453 = vld [vmem:[%s3450 + $0xc] sm:$0xf]
      %v3454 = vld [vmem:[%s3450 + $0x10] sm:$0xf]
      %v3455 = vld [vmem:[%s3450 + $0x18] sm:$0xf]
      %v3456 = vld [vmem:[%s3450 + $0x1c] sm:$0xf]
      %v3457 = vld [vmem:[%s3450 + $0x24] sm:$0xf]
      %v3458 = vld [vmem:[%s3450 + $0x28] sm:$0xf]
      %v3459 = vld [vmem:[%s3450 + $0x30] sm:$0xf]
      %v3460 = vld [vmem:[%s3450 + $0x34] sm:$0xf]
      %v3461 = vld [vmem:[%s3450 + $0x3c] sm:$0xf]
      %v3462 = vld [vmem:[%s3450 + $0x40] sm:$0xf]
      %v3463 = vld [vmem:[%s3450 + $0x48] sm:$0xf]
      %v3464 = vld [vmem:[%s3450 + $0x4c] sm:$0xf]
      %v3465 = vld [vmem:[%s3450 + $0x54] sm:$0xf]
      %v3466 = vld [vmem:[%s3450 + $0x58] sm:$0xf]
      %v3467 = vld [vmem:[%s3450 + $0x60] sm:$0xf]
      %v3468 = vld [vmem:[%s3450 + $0x64] sm:$0xf]
      %v3469 = vld [vmem:[%s3450 + $0x6c] sm:$0xf]
      %v3470 = vld [vmem:[%s3450 + $0x70] sm:$0xf]
      %v3471 = vld [vmem:[%s3450 + $0x78] sm:$0xf]
      %v3472 = vld [vmem:[%s3450 + $0x7c] sm:$0xf]
      %v3473 = vld [vmem:[%s3450 + $0x84] sm:$0xf]
      %v3474 = vld [vmem:[%s3450 + $0x88] sm:$0xf]
      %v3475 = vld [vmem:[%s3450 + $0x90] sm:$0xf]
      %v3476 = vld [vmem:[%s3450 + $0x94] sm:$0xf]
      %v3477 = vld [vmem:[%s3450 + $0x9c] sm:$0xf]
      %v3478 = vld [vmem:[%s3450 + $0xa0] sm:$0xf]
      %v3479 = vld [vmem:[%s3450 + $0xa8] sm:$0xf]
      %v3480 = vld [vmem:[%s3450 + $0xac] sm:$0xf]
      %v3481 = vld [vmem:[%s3450 + $0xb4] sm:$0xf]
      %v3482 = vld [vmem:[%s3450 + $0xb8] sm:$0xf]
      %s3483 = scalar_lea.vmem %s1, 384
      %v3484 = vld [vmem:[%s3483] sm:$0xf]
      %v3485 = vld [vmem:[%s3483 + $0x4] sm:$0xf]
      %v3486 = vld [vmem:[%s3483 + $0x8] sm:$0xf]
      %v3487 = vld [vmem:[%s3483 + $0xc] sm:$0xf]
      %v3488 = vld [vmem:[%s3483 + $0x10] sm:$0xf]
      %v3489 = vld [vmem:[%s3483 + $0x14] sm:$0xf]
      %v3490 = vld [vmem:[%s3483 + $0x18] sm:$0xf]
      %v3491 = vld [vmem:[%s3483 + $0x1c] sm:$0xf]
      %v3492 = vld [vmem:[%s3483 + $0x20] sm:$0xf]
      %v3493 = vld [vmem:[%s3483 + $0x24] sm:$0xf]
      %v3494 = vld [vmem:[%s3483 + $0x28] sm:$0xf]
      %v3495 = vld [vmem:[%s3483 + $0x2c] sm:$0xf]
      %v3496 = vld [vmem:[%s3483 + $0x30] sm:$0xf]
      %v3497 = vld [vmem:[%s3483 + $0x34] sm:$0xf]
      %v3498 = vld [vmem:[%s3483 + $0x38] sm:$0xf]
      %v3499 = vld [vmem:[%s3483 + $0x3c] sm:$0xf]
      %v3532 = vunpack.c.l.b16 %v3451
      %v3533 = vunpack.c.l.b16 %v3452
      %v3534 = vunpack.c.l.b16 %v3453
      %v3535 = vunpack.c.l.b16 %v3454
      %v3536 = vunpack.c.l.b16 %v3455
      %v3537 = vunpack.c.l.b16 %v3456
      %v3538 = vunpack.c.l.b16 %v3457
      %v3539 = vunpack.c.l.b16 %v3458
      %v3540 = vunpack.c.l.b16 %v3459
      %v3541 = vunpack.c.l.b16 %v3460
      %v3542 = vunpack.c.l.b16 %v3461
      %v3543 = vunpack.c.l.b16 %v3462
      %v3544 = vunpack.c.l.b16 %v3463
      %v3545 = vunpack.c.l.b16 %v3464
      %v3546 = vunpack.c.l.b16 %v3465
      %v3547 = vunpack.c.l.b16 %v3466
      %v3548 = vunpack.c.l.b16 %v3467
      %v3549 = vunpack.c.l.b16 %v3468
      %v3550 = vunpack.c.l.b16 %v3469
      %v3551 = vunpack.c.l.b16 %v3470
      %v3552 = vunpack.c.l.b16 %v3471
      %v3553 = vunpack.c.l.b16 %v3472
      %v3554 = vunpack.c.l.b16 %v3473
      %v3555 = vunpack.c.l.b16 %v3474
      %v3556 = vunpack.c.l.b16 %v3475
      %v3557 = vunpack.c.l.b16 %v3476
      %v3558 = vunpack.c.l.b16 %v3477
      %v3559 = vunpack.c.l.b16 %v3478
      %v3560 = vunpack.c.l.b16 %v3479
      %v3561 = vunpack.c.l.b16 %v3480
      %v3562 = vunpack.c.l.b16 %v3481
      %v3563 = vunpack.c.l.b16 %v3482
      %v3564 = vpack.c.b16 %v3533, %v3532
      %v3565 = vpack.c.b16 %v3535, %v3534
      %v3566 = vpack.c.b16 %v3537, %v3536
      %v3567 = vpack.c.b16 %v3539, %v3538
      %v3568 = vpack.c.b16 %v3541, %v3540
      %v3569 = vpack.c.b16 %v3543, %v3542
      %v3570 = vpack.c.b16 %v3545, %v3544
      %v3571 = vpack.c.b16 %v3547, %v3546
      %v3572 = vpack.c.b16 %v3549, %v3548
      %v3573 = vpack.c.b16 %v3551, %v3550
      %v3574 = vpack.c.b16 %v3553, %v3552
      %v3575 = vpack.c.b16 %v3555, %v3554
      %v3576 = vpack.c.b16 %v3557, %v3556
      %v3577 = vpack.c.b16 %v3559, %v3558
      %v3578 = vpack.c.b16 %v3561, %v3560
      %v3579 = vpack.c.b16 %v3563, %v3562
      %v3612 = vunpack.c.l.b16 %v3484
      %v3613 = vunpack.c.l.b16 %v3485
      %v3614 = vunpack.c.l.b16 %v3486
      %v3615 = vunpack.c.l.b16 %v3487
      %v3616 = vunpack.c.l.b16 %v3488
      %v3617 = vunpack.c.l.b16 %v3489
      %v3618 = vunpack.c.l.b16 %v3490
      %v3619 = vunpack.c.l.b16 %v3491
      %v3620 = vunpack.c.l.b16 %v3492
      %v3621 = vunpack.c.l.b16 %v3493
      %v3622 = vunpack.c.l.b16 %v3494
      %v3623 = vunpack.c.l.b16 %v3495
      %v3624 = vunpack.c.l.b16 %v3496
      %v3625 = vunpack.c.l.b16 %v3497
      %v3626 = vunpack.c.l.b16 %v3498
      %v3627 = vunpack.c.l.b16 %v3499
      %v3628 = vpack.c.b16 %v3613, %v3612
      %v3629 = vpack.c.b16 %v3615, %v3614
      %v3630 = vpack.c.b16 %v3617, %v3616
      %v3631 = vpack.c.b16 %v3619, %v3618
      %v3632 = vpack.c.b16 %v3621, %v3620
      %v3633 = vpack.c.b16 %v3623, %v3622
      %v3634 = vpack.c.b16 %v3625, %v3624
      %v3635 = vpack.c.b16 %v3627, %v3626
      %3644 = vmatprep.subr.bf16.mxu0 0
      %3645 = vmatpush1.bf16.msra.mxu0 %v3628
      %3646 = vmatprep.subr.bf16.mxu0 0
      %3647 = vmatpush1.bf16.msra.mxu0 %v3629
      %3648 = vmatprep.subr.bf16.mxu0 0
      %3649 = vmatpush1.bf16.msra.mxu0 %v3630
      %3650 = vmatprep.subr.bf16.mxu0 0
      %3651 = vmatpush1.bf16.msra.mxu0 %v3631
      %3652 = vmatprep.subr.bf16.mxu0 0
      %3653 = vmatpush1.bf16.msra.mxu0 %v3632
      %3654 = vmatprep.subr.bf16.mxu0 0
      %3655 = vmatpush1.bf16.msra.mxu0 %v3633
      %3656 = vmatprep.subr.bf16.mxu0 0
      %3657 = vmatpush1.bf16.msra.mxu0 %v3634
      %3658 = vmatprep.subr.bf16.mxu0 0
      %3659 = vmatpush1.bf16.msra.mxu0 %v3635
      %3660 = vmatprep.subr.bf16.mxu0 0
      %3661 = vmatpush1.bf16.msra.mxu0 0
      %3662 = vmatprep.subr.bf16.mxu0 0
      %3663 = vmatpush1.bf16.msra.mxu0 0
      %3664 = vmatprep.subr.bf16.mxu0 0
      %3665 = vmatpush1.bf16.msra.mxu0 0
      %3666 = vmatprep.subr.bf16.mxu0 0
      %3667 = vmatpush1.bf16.msra.mxu0 0
      %3668 = vmatprep.subr.bf16.mxu0 0
      %3669 = vmatpush1.bf16.msra.mxu0 0
      %3670 = vmatprep.subr.bf16.mxu0 0
      %3671 = vmatpush1.bf16.msra.mxu0 0
      %3672 = vmatprep.subr.bf16.mxu0 0
      %3673 = vmatpush1.bf16.msra.mxu0 0
      %3674 = vmatprep.subr.bf16.mxu0 0
      %3675 = vmatpush1.bf16.msra.mxu0 0
      %3676 = vmatprep.mubr.bf16.mxu0 0
      %3677 = vmatmul.mubr.bf16.gmra.mrb[0].mxu0 %v3564
      %v3678 = vpop.f32.mrb[0].mxu0
      %v3679 = vadd.f32 0.0, %v3678
      %v3680 = vpop.f32.mrb[0].mxu0
      %v3681 = vpop.f32.mrb[0].mxu0
      %v3682 = vadd.f32 0.0, %v3681
      %v3683 = vpop.f32.mrb[0].mxu0
      %3684 = vmatprep.mubr.bf16.mxu0 0
      %3685 = vmatmul.mubr.bf16.gmra.mrb[0].mxu0 %v3565
      %v3686 = vpop.f32.mrb[0].mxu0
      %v3687 = vadd.f32 0.0, %v3686
      %v3688 = vpop.f32.mrb[0].mxu0
      %v3689 = vpop.f32.mrb[0].mxu0
      %v3690 = vadd.f32 0.0, %v3689
      %v3691 = vpop.f32.mrb[0].mxu0
      %3692 = vmatprep.mubr.bf16.mxu0 0
      %3693 = vmatmul.mubr.bf16.gmra.mrb[0].mxu0 %v3566
      %v3694 = vpop.f32.mrb[0].mxu0
      %v3695 = vadd.f32 0.0, %v3694
      %v3696 = vpop.f32.mrb[0].mxu0
      %v3697 = vpop.f32.mrb[0].mxu0
      %v3698 = vadd.f32 0.0, %v3697
      %v3699 = vpop.f32.mrb[0].mxu0
      %3700 = vmatprep.mubr.bf16.mxu0 0
      %3701 = vmatmul.mubr.bf16.gmra.mrb[0].mxu0 %v3567
      %v3702 = vpop.f32.mrb[0].mxu0
      %v3703 = vadd.f32 0.0, %v3702
      %v3704 = vpop.f32.mrb[0].mxu0
      %v3705 = vpop.f32.mrb[0].mxu0
      %v3706 = vadd.f32 0.0, %v3705
      %v3707 = vpop.f32.mrb[0].mxu0
      %3708 = vmatprep.mubr.bf16.mxu0 0
      %3709 = vmatmul.mubr.bf16.gmra.mrb[0].mxu0 %v3568
      %v3710 = vpop.f32.mrb[0].mxu0
      %v3711 = vadd.f32 0.0, %v3710
      %v3712 = vpop.f32.mrb[0].mxu0
      %v3713 = vpop.f32.mrb[0].mxu0
      %v3714 = vadd.f32 0.0, %v3713
      %v3715 = vpop.f32.mrb[0].mxu0
      %3716 = vmatprep.mubr.bf16.mxu0 0
      %3717 = vmatmul.mubr.bf16.gmra.mrb[0].mxu0 %v3569
      %v3718 = vpop.f32.mrb[0].mxu0
      %v3719 = vadd.f32 0.0, %v3718
      %v3720 = vpop.f32.mrb[0].mxu0
      %v3721 = vpop.f32.mrb[0].mxu0
      %v3722 = vadd.f32 0.0, %v3721
      %v3723 = vpop.f32.mrb[0].mxu0
      %3724 = vmatprep.mubr.bf16.mxu0 0
      %3725 = vmatmul.mubr.bf16.gmra.mrb[0].mxu0 %v3570
      %v3726 = vpop.f32.mrb[0].mxu0
      %v3727 = vadd.f32 0.0, %v3726
      %v3728 = vpop.f32.mrb[0].mxu0
      %v3729 = vpop.f32.mrb[0].mxu0
      %v3730 = vadd.f32 0.0, %v3729
      %v3731 = vpop.f32.mrb[0].mxu0
      %3732 = vmatprep.mubr.bf16.mxu0 0
      %3733 = vmatmul.mubr.bf16.gmra.mrb[0].mxu0 %v3571
      %v3734 = vpop.f32.mrb[0].mxu0
      %v3735 = vadd.f32 0.0, %v3734
      %v3736 = vpop.f32.mrb[0].mxu0
      %v3737 = vpop.f32.mrb[0].mxu0
      %v3738 = vadd.f32 0.0, %v3737
      %v3739 = vpop.f32.mrb[0].mxu0
      %3740 = vmatprep.mubr.bf16.mxu0 0
      %3741 = vmatmul.mubr.bf16.gmra.mrb[0].mxu0 %v3572
      %v3742 = vpop.f32.mrb[0].mxu0
      %v3743 = vadd.f32 0.0, %v3742
      %v3744 = vpop.f32.mrb[0].mxu0
      %v3745 = vpop.f32.mrb[0].mxu0
      %v3746 = vadd.f32 0.0, %v3745
      %v3747 = vpop.f32.mrb[0].mxu0
      %3748 = vmatprep.mubr.bf16.mxu0 0
      %3749 = vmatmul.mubr.bf16.gmra.mrb[0].mxu0 %v3573
      %v3750 = vpop.f32.mrb[0].mxu0
      %v3751 = vadd.f32 0.0, %v3750
      %v3752 = vpop.f32.mrb[0].mxu0
      %v3753 = vpop.f32.mrb[0].mxu0
      %v3754 = vadd.f32 0.0, %v3753
      %v3755 = vpop.f32.mrb[0].mxu0
      %3756 = vmatprep.mubr.bf16.mxu0 0
      %3757 = vmatmul.mubr.bf16.gmra.mrb[0].mxu0 %v3574
      %v3758 = vpop.f32.mrb[0].mxu0
      %v3759 = vadd.f32 0.0, %v3758
      %v3760 = vpop.f32.mrb[0].mxu0
      %v3761 = vpop.f32.mrb[0].mxu0
      %v3762 = vadd.f32 0.0, %v3761
      %v3763 = vpop.f32.mrb[0].mxu0
      %3764 = vmatprep.mubr.bf16.mxu0 0
      %3765 = vmatmul.mubr.bf16.gmra.mrb[0].mxu0 %v3575
      %v3766 = vpop.f32.mrb[0].mxu0
      %v3767 = vadd.f32 0.0, %v3766
      %v3768 = vpop.f32.mrb[0].mxu0
      %v3769 = vpop.f32.mrb[0].mxu0
      %v3770 = vadd.f32 0.0, %v3769
      %v3771 = vpop.f32.mrb[0].mxu0
      %3772 = vmatprep.mubr.bf16.mxu0 0
      %3773 = vmatmul.mubr.bf16.gmra.mrb[0].mxu0 %v3576
      %v3774 = vpop.f32.mrb[0].mxu0
      %v3775 = vadd.f32 0.0, %v3774
      %v3776 = vpop.f32.mrb[0].mxu0
      %v3777 = vpop.f32.mrb[0].mxu0
      %v3778 = vadd.f32 0.0, %v3777
      %v3779 = vpop.f32.mrb[0].mxu0
      %3780 = vmatprep.mubr.bf16.mxu0 0
      %3781 = vmatmul.mubr.bf16.gmra.mrb[0].mxu0 %v3577
      %v3782 = vpop.f32.mrb[0].mxu0
      %v3783 = vadd.f32 0.0, %v3782
      %v3784 = vpop.f32.mrb[0].mxu0
      %v3785 = vpop.f32.mrb[0].mxu0
      %v3786 = vadd.f32 0.0, %v3785
      %v3787 = vpop.f32.mrb[0].mxu0
      %3788 = vmatprep.mubr.bf16.mxu0 0
      %3789 = vmatmul.mubr.bf16.gmra.mrb[0].mxu0 %v3578
      %v3790 = vpop.f32.mrb[0].mxu0
      %v3791 = vadd.f32 0.0, %v3790
      %v3792 = vpop.f32.mrb[0].mxu0
      %v3793 = vpop.f32.mrb[0].mxu0
      %v3794 = vadd.f32 0.0, %v3793
      %v3795 = vpop.f32.mrb[0].mxu0
      %3796 = vmatprep.mubr.bf16.mxu0 0
      %3797 = vmatmul.mubr.bf16.gmra.mrb[0].mxu0 %v3579
      %v3798 = vpop.f32.mrb[0].mxu0
      %v3799 = vadd.f32 0.0, %v3798
      %v3800 = vpop.f32.mrb[0].mxu0
      %v3801 = vpop.f32.mrb[0].mxu0
      %v3802 = vadd.f32 0.0, %v3801
      %v3803 = vpop.f32.mrb[0].mxu0
      %3804 = vdwg.mxu0
      %v3805 = vadd.f32 %v3418, %v3679
      %v3806 = vadd.f32 %v3419, %v3682
      %v3807 = vadd.f32 %v3420, %v3687
      %v3808 = vadd.f32 %v3421, %v3690
      %v3809 = vadd.f32 %v3422, %v3695
      %v3810 = vadd.f32 %v3423, %v3698
      %v3811 = vadd.f32 %v3424, %v3703
      %v3812 = vadd.f32 %v3425, %v3706
      %v3813 = vadd.f32 %v3426, %v3711
      %v3814 = vadd.f32 %v3427, %v3714
      %v3815 = vadd.f32 %v3428, %v3719
      %v3816 = vadd.f32 %v3429, %v3722
      %v3817 = vadd.f32 %v3430, %v3727
      %v3818 = vadd.f32 %v3431, %v3730
      %v3819 = vadd.f32 %v3432, %v3735
      %v3820 = vadd.f32 %v3433, %v3738
      %v3821 = vadd.f32 %v3434, %v3743
      %v3822 = vadd.f32 %v3435, %v3746
      %v3823 = vadd.f32 %v3436, %v3751
      %v3824 = vadd.f32 %v3437, %v3754
      %v3825 = vadd.f32 %v3438, %v3759
      %v3826 = vadd.f32 %v3439, %v3762
      %v3827 = vadd.f32 %v3440, %v3767
      %v3828 = vadd.f32 %v3441, %v3770
      %v3829 = vadd.f32 %v3442, %v3775
      %v3830 = vadd.f32 %v3443, %v3778
      %v3831 = vadd.f32 %v3444, %v3783
      %v3832 = vadd.f32 %v3445, %v3786
      %v3833 = vadd.f32 %v3446, %v3791
      %v3834 = vadd.f32 %v3447, %v3794
      %v3835 = vadd.f32 %v3448, %v3799
      %v3836 = vadd.f32 %v3449, %v3802
      %v3837 = vld [vmem:[%s3450] sm:$0xf]
      %v3838 = vld [vmem:[%s3450 + $0x4] sm:$0xf]
      %v3839 = vld [vmem:[%s3450 + $0x8] sm:$0x1]
      %v3840 = vld [vmem:[%s3450 + $0xc] sm:$0xf]
      %v3841 = vld [vmem:[%s3450 + $0x10] sm:$0xf]
      %v3842 = vld [vmem:[%s3450 + $0x14] sm:$0x1]
      %v3843 = vld [vmem:[%s3450 + $0x18] sm:$0xf]
      %v3844 = vld [vmem:[%s3450 + $0x1c] sm:$0xf]
      %v3845 = vld [vmem:[%s3450 + $0x20] sm:$0x1]
      %v3846 = vld [vmem:[%s3450 + $0x24] sm:$0xf]
      %v3847 = vld [vmem:[%s3450 + $0x28] sm:$0xf]
      %v3848 = vld [vmem:[%s3450 + $0x2c] sm:$0x1]
      %v3849 = vld [vmem:[%s3450 + $0x30] sm:$0xf]
      %v3850 = vld [vmem:[%s3450 + $0x34] sm:$0xf]
      %v3851 = vld [vmem:[%s3450 + $0x38] sm:$0x1]
      %v3852 = vld [vmem:[%s3450 + $0x3c] sm:$0xf]
      %v3853 = vld [vmem:[%s3450 + $0x40] sm:$0xf]
      %v3854 = vld [vmem:[%s3450 + $0x44] sm:$0x1]
      %v3855 = vld [vmem:[%s3450 + $0x48] sm:$0xf]
      %v3856 = vld [vmem:[%s3450 + $0x4c] sm:$0xf]
      %v3857 = vld [vmem:[%s3450 + $0x50] sm:$0x1]
      %v3858 = vld [vmem:[%s3450 + $0x54] sm:$0xf]
      %v3859 = vld [vmem:[%s3450 + $0x58] sm:$0xf]
      %v3860 = vld [vmem:[%s3450 + $0x5c] sm:$0x1]
      %v3861 = vld [vmem:[%s3450 + $0x60] sm:$0xf]
      %v3862 = vld [vmem:[%s3450 + $0x64] sm:$0xf]
      %v3863 = vld [vmem:[%s3450 + $0x68] sm:$0x1]
      %v3864 = vld [vmem:[%s3450 + $0x6c] sm:$0xf]
      %v3865 = vld [vmem:[%s3450 + $0x70] sm:$0xf]
      %v3866 = vld [vmem:[%s3450 + $0x74] sm:$0x1]
      %v3867 = vld [vmem:[%s3450 + $0x78] sm:$0xf]
      %v3868 = vld [vmem:[%s3450 + $0x7c] sm:$0xf]
      %v3869 = vld [vmem:[%s3450 + $0x80] sm:$0x1]
      %v3870 = vld [vmem:[%s3450 + $0x84] sm:$0xf]
      %v3871 = vld [vmem:[%s3450 + $0x88] sm:$0xf]
      %v3872 = vld [vmem:[%s3450 + $0x8c] sm:$0x1]
      %v3873 = vld [vmem:[%s3450 + $0x90] sm:$0xf]
      %v3874 = vld [vmem:[%s3450 + $0x94] sm:$0xf]
      %v3875 = vld [vmem:[%s3450 + $0x98] sm:$0x1]
      %v3876 = vld [vmem:[%s3450 + $0x9c] sm:$0xf]
      %v3877 = vld [vmem:[%s3450 + $0xa0] sm:$0xf]
      %v3878 = vld [vmem:[%s3450 + $0xa4] sm:$0x1]
      %v3879 = vld [vmem:[%s3450 + $0xa8] sm:$0xf]
      %v3880 = vld [vmem:[%s3450 + $0xac] sm:$0xf]
      %v3881 = vld [vmem:[%s3450 + $0xb0] sm:$0x1]
      %v3882 = vld [vmem:[%s3450 + $0xb4] sm:$0xf]
      %v3883 = vld [vmem:[%s3450 + $0xb8] sm:$0xf]
      %v3884 = vld [vmem:[%s3450 + $0xbc] sm:$0x1]
      %v3886 = vshrl.u32 %v3837, 16
      %v3888 = vrot.slane %v3886, 4
      %v3889 = vshll.u32 %v3837, 16
      %v3891 = vrot.slane %v3889, 5
      %v3892 = vor.u32 %v3888, %v3891
      %v3893 = vrot.slane %v3892, 4
      %v3895 = vshll.u32 %v3838, 16
      %v3897 = vrot.slane %v3895, 5
      %v3898 = vsel %vm346, %v3893, %v3897
      %v3899 = vshrl.u32 %v3838, 16
      %v3901 = vrot.slane %v3899, 4
      %v3902 = vor.u32 %v3901, %v3897
      %v3903 = vrot.slane %v3902, 4
      %v3905 = vshll.u32 %v3839, 16
      %v3907 = vrot.slane %v3905, 5
      %v3908 = vsel %vm346, %v3903, %v3907
      %v3910 = vshrl.u32 %v3840, 16
      %v3912 = vrot.slane %v3910, 4
      %v3913 = vshll.u32 %v3840, 16
      %v3915 = vrot.slane %v3913, 5
      %v3916 = vor.u32 %v3912, %v3915
      %v3917 = vrot.slane %v3916, 4
      %v3919 = vshll.u32 %v3841, 16
      %v3921 = vrot.slane %v3919, 5
      %v3922 = vsel %vm346, %v3917, %v3921
      %v3923 = vshrl.u32 %v3841, 16
      %v3925 = vrot.slane %v3923, 4
      %v3926 = vor.u32 %v3925, %v3921
      %v3927 = vrot.slane %v3926, 4
      %v3929 = vshll.u32 %v3842, 16
      %v3931 = vrot.slane %v3929, 5
      %v3932 = vsel %vm346, %v3927, %v3931
      %v3934 = vshrl.u32 %v3843, 16
      %v3936 = vrot.slane %v3934, 4
      %v3937 = vshll.u32 %v3843, 16
      %v3939 = vrot.slane %v3937, 5
      %v3940 = vor.u32 %v3936, %v3939
      %v3941 = vrot.slane %v3940, 4
      %v3943 = vshll.u32 %v3844, 16
      %v3945 = vrot.slane %v3943, 5
      %v3946 = vsel %vm346, %v3941, %v3945
      %v3947 = vshrl.u32 %v3844, 16
      %v3949 = vrot.slane %v3947, 4
      %v3950 = vor.u32 %v3949, %v3945
      %v3951 = vrot.slane %v3950, 4
      %v3953 = vshll.u32 %v3845, 16
      %v3955 = vrot.slane %v3953, 5
      %v3956 = vsel %vm346, %v3951, %v3955
      %v3958 = vshrl.u32 %v3846, 16
      %v3960 = vrot.slane %v3958, 4
      %v3961 = vshll.u32 %v3846, 16
      %v3963 = vrot.slane %v3961, 5
      %v3964 = vor.u32 %v3960, %v3963
      %v3965 = vrot.slane %v3964, 4
      %v3967 = vshll.u32 %v3847, 16
      %v3969 = vrot.slane %v3967, 5
      %v3970 = vsel %vm346, %v3965, %v3969
      %v3971 = vshrl.u32 %v3847, 16
      %v3973 = vrot.slane %v3971, 4
      %v3974 = vor.u32 %v3973, %v3969
      %v3975 = vrot.slane %v3974, 4
      %v3977 = vshll.u32 %v3848, 16
      %v3979 = vrot.slane %v3977, 5
      %v3980 = vsel %vm346, %v3975, %v3979
      %v3982 = vshrl.u32 %v3849, 16
      %v3984 = vrot.slane %v3982, 4
      %v3985 = vshll.u32 %v3849, 16
      %v3987 = vrot.slane %v3985, 5
      %v3988 = vor.u32 %v3984, %v3987
      %v3989 = vrot.slane %v3988, 4
      %v3991 = vshll.u32 %v3850, 16
      %v3993 = vrot.slane %v3991, 5
      %v3994 = vsel %vm346, %v3989, %v3993
      %v3995 = vshrl.u32 %v3850, 16
      %v3997 = vrot.slane %v3995, 4
      %v3998 = vor.u32 %v3997, %v3993
      %v3999 = vrot.slane %v3998, 4
      %v4001 = vshll.u32 %v3851, 16
      %v4003 = vrot.slane %v4001, 5
      %v4004 = vsel %vm346, %v3999, %v4003
      %v4006 = vshrl.u32 %v3852, 16
      %v4008 = vrot.slane %v4006, 4
      %v4009 = vshll.u32 %v3852, 16
      %v4011 = vrot.slane %v4009, 5
      %v4012 = vor.u32 %v4008, %v4011
      %v4013 = vrot.slane %v4012, 4
      %v4015 = vshll.u32 %v3853, 16
      %v4017 = vrot.slane %v4015, 5
      %v4018 = vsel %vm346, %v4013, %v4017
      %v4019 = vshrl.u32 %v3853, 16
      %v4021 = vrot.slane %v4019, 4
      %v4022 = vor.u32 %v4021, %v4017
      %v4023 = vrot.slane %v4022, 4
      %v4025 = vshll.u32 %v3854, 16
      %v4027 = vrot.slane %v4025, 5
      %v4028 = vsel %vm346, %v4023, %v4027
      %v4030 = vshrl.u32 %v3855, 16
      %v4032 = vrot.slane %v4030, 4
      %v4033 = vshll.u32 %v3855, 16
      %v4035 = vrot.slane %v4033, 5
      %v4036 = vor.u32 %v4032, %v4035
      %v4037 = vrot.slane %v4036, 4
      %v4039 = vshll.u32 %v3856, 16
      %v4041 = vrot.slane %v4039, 5
      %v4042 = vsel %vm346, %v4037, %v4041
      %v4043 = vshrl.u32 %v3856, 16
      %v4045 = vrot.slane %v4043, 4
      %v4046 = vor.u32 %v4045, %v4041
      %v4047 = vrot.slane %v4046, 4
      %v4049 = vshll.u32 %v3857, 16
      %v4051 = vrot.slane %v4049, 5
      %v4052 = vsel %vm346, %v4047, %v4051
      %v4054 = vshrl.u32 %v3858, 16
      %v4056 = vrot.slane %v4054, 4
      %v4057 = vshll.u32 %v3858, 16
      %v4059 = vrot.slane %v4057, 5
      %v4060 = vor.u32 %v4056, %v4059
      %v4061 = vrot.slane %v4060, 4
      %v4063 = vshll.u32 %v3859, 16
      %v4065 = vrot.slane %v4063, 5
      %v4066 = vsel %vm346, %v4061, %v4065
      %v4067 = vshrl.u32 %v3859, 16
      %v4069 = vrot.slane %v4067, 4
      %v4070 = vor.u32 %v4069, %v4065
      %v4071 = vrot.slane %v4070, 4
      %v4073 = vshll.u32 %v3860, 16
      %v4075 = vrot.slane %v4073, 5
      %v4076 = vsel %vm346, %v4071, %v4075
      %v4078 = vshrl.u32 %v3861, 16
      %v4080 = vrot.slane %v4078, 4
      %v4081 = vshll.u32 %v3861, 16
      %v4083 = vrot.slane %v4081, 5
      %v4084 = vor.u32 %v4080, %v4083
      %v4085 = vrot.slane %v4084, 4
      %v4087 = vshll.u32 %v3862, 16
      %v4089 = vrot.slane %v4087, 5
      %v4090 = vsel %vm346, %v4085, %v4089
      %v4091 = vshrl.u32 %v3862, 16
      %v4093 = vrot.slane %v4091, 4
      %v4094 = vor.u32 %v4093, %v4089
      %v4095 = vrot.slane %v4094, 4
      %v4097 = vshll.u32 %v3863, 16
      %v4099 = vrot.slane %v4097, 5
      %v4100 = vsel %vm346, %v4095, %v4099
      %v4102 = vshrl.u32 %v3864, 16
      %v4104 = vrot.slane %v4102, 4
      %v4105 = vshll.u32 %v3864, 16
      %v4107 = vrot.slane %v4105, 5
      %v4108 = vor.u32 %v4104, %v4107
      %v4109 = vrot.slane %v4108, 4
      %v4111 = vshll.u32 %v3865, 16
      %v4113 = vrot.slane %v4111, 5
      %v4114 = vsel %vm346, %v4109, %v4113
      %v4115 = vshrl.u32 %v3865, 16
      %v4117 = vrot.slane %v4115, 4
      %v4118 = vor.u32 %v4117, %v4113
      %v4119 = vrot.slane %v4118, 4
      %v4121 = vshll.u32 %v3866, 16
      %v4123 = vrot.slane %v4121, 5
      %v4124 = vsel %vm346, %v4119, %v4123
      %v4126 = vshrl.u32 %v3867, 16
      %v4128 = vrot.slane %v4126, 4
      %v4129 = vshll.u32 %v3867, 16
      %v4131 = vrot.slane %v4129, 5
      %v4132 = vor.u32 %v4128, %v4131
      %v4133 = vrot.slane %v4132, 4
      %v4135 = vshll.u32 %v3868, 16
      %v4137 = vrot.slane %v4135, 5
      %v4138 = vsel %vm346, %v4133, %v4137
      %v4139 = vshrl.u32 %v3868, 16
      %v4141 = vrot.slane %v4139, 4
      %v4142 = vor.u32 %v4141, %v4137
      %v4143 = vrot.slane %v4142, 4
      %v4145 = vshll.u32 %v3869, 16
      %v4147 = vrot.slane %v4145, 5
      %v4148 = vsel %vm346, %v4143, %v4147
      %v4150 = vshrl.u32 %v3870, 16
      %v4152 = vrot.slane %v4150, 4
      %v4153 = vshll.u32 %v3870, 16
      %v4155 = vrot.slane %v4153, 5
      %v4156 = vor.u32 %v4152, %v4155
      %v4157 = vrot.slane %v4156, 4
      %v4159 = vshll.u32 %v3871, 16
      %v4161 = vrot.slane %v4159, 5
      %v4162 = vsel %vm346, %v4157, %v4161
      %v4163 = vshrl.u32 %v3871, 16
      %v4165 = vrot.slane %v4163, 4
      %v4166 = vor.u32 %v4165, %v4161
      %v4167 = vrot.slane %v4166, 4
      %v4169 = vshll.u32 %v3872, 16
      %v4171 = vrot.slane %v4169, 5
      %v4172 = vsel %vm346, %v4167, %v4171
      %v4174 = vshrl.u32 %v3873, 16
      %v4176 = vrot.slane %v4174, 4
      %v4177 = vshll.u32 %v3873, 16
      %v4179 = vrot.slane %v4177, 5
      %v4180 = vor.u32 %v4176, %v4179
      %v4181 = vrot.slane %v4180, 4
      %v4183 = vshll.u32 %v3874, 16
      %v4185 = vrot.slane %v4183, 5
      %v4186 = vsel %vm346, %v4181, %v4185
      %v4187 = vshrl.u32 %v3874, 16
      %v4189 = vrot.slane %v4187, 4
      %v4190 = vor.u32 %v4189, %v4185
      %v4191 = vrot.slane %v4190, 4
      %v4193 = vshll.u32 %v3875, 16
      %v4195 = vrot.slane %v4193, 5
      %v4196 = vsel %vm346, %v4191, %v4195
      %v4198 = vshrl.u32 %v3876, 16
      %v4200 = vrot.slane %v4198, 4
      %v4201 = vshll.u32 %v3876, 16
      %v4203 = vrot.slane %v4201, 5
      %v4204 = vor.u32 %v4200, %v4203
      %v4205 = vrot.slane %v4204, 4
      %v4207 = vshll.u32 %v3877, 16
      %v4209 = vrot.slane %v4207, 5
      %v4210 = vsel %vm346, %v4205, %v4209
      %v4211 = vshrl.u32 %v3877, 16
      %v4213 = vrot.slane %v4211, 4
      %v4214 = vor.u32 %v4213, %v4209
      %v4215 = vrot.slane %v4214, 4
      %v4217 = vshll.u32 %v3878, 16
      %v4219 = vrot.slane %v4217, 5
      %v4220 = vsel %vm346, %v4215, %v4219
      %v4222 = vshrl.u32 %v3879, 16
      %v4224 = vrot.slane %v4222, 4
      %v4225 = vshll.u32 %v3879, 16
      %v4227 = vrot.slane %v4225, 5
      %v4228 = vor.u32 %v4224, %v4227
      %v4229 = vrot.slane %v4228, 4
      %v4231 = vshll.u32 %v3880, 16
      %v4233 = vrot.slane %v4231, 5
      %v4234 = vsel %vm346, %v4229, %v4233
      %v4235 = vshrl.u32 %v3880, 16
      %v4237 = vrot.slane %v4235, 4
      %v4238 = vor.u32 %v4237, %v4233
      %v4239 = vrot.slane %v4238, 4
      %v4241 = vshll.u32 %v3881, 16
      %v4243 = vrot.slane %v4241, 5
      %v4244 = vsel %vm346, %v4239, %v4243
      %v4246 = vshrl.u32 %v3882, 16
      %v4248 = vrot.slane %v4246, 4
      %v4249 = vshll.u32 %v3882, 16
      %v4251 = vrot.slane %v4249, 5
      %v4252 = vor.u32 %v4248, %v4251
      %v4253 = vrot.slane %v4252, 4
      %v4255 = vshll.u32 %v3883, 16
      %v4257 = vrot.slane %v4255, 5
      %v4258 = vsel %vm346, %v4253, %v4257
      %v4259 = vshrl.u32 %v3883, 16
      %v4261 = vrot.slane %v4259, 4
      %v4262 = vor.u32 %v4261, %v4257
      %v4263 = vrot.slane %v4262, 4
      %v4265 = vshll.u32 %v3884, 16
      %v4267 = vrot.slane %v4265, 5
      %v4268 = vsel %vm346, %v4263, %v4267
      %s4269 = scalar_lea.vmem %s1, 448
      %v4270 = vld [vmem:[%s4269] sm:$0xf]
      %v4271 = vld [vmem:[%s4269 + $0x4] sm:$0xf]
      %v4272 = vld [vmem:[%s4269 + $0x8] sm:$0xf]
      %v4273 = vld [vmem:[%s4269 + $0xc] sm:$0xf]
      %v4274 = vld [vmem:[%s4269 + $0x10] sm:$0xf]
      %v4275 = vld [vmem:[%s4269 + $0x14] sm:$0xf]
      %v4276 = vld [vmem:[%s4269 + $0x18] sm:$0xf]
      %v4277 = vld [vmem:[%s4269 + $0x1c] sm:$0xf]
      %v4278 = vld [vmem:[%s4269 + $0x20] sm:$0xf]
      %v4279 = vld [vmem:[%s4269 + $0x24] sm:$0xf]
      %v4280 = vld [vmem:[%s4269 + $0x28] sm:$0xf]
      %v4281 = vld [vmem:[%s4269 + $0x2c] sm:$0xf]
      %v4282 = vld [vmem:[%s4269 + $0x30] sm:$0xf]
      %v4283 = vld [vmem:[%s4269 + $0x34] sm:$0xf]
      %v4284 = vld [vmem:[%s4269 + $0x38] sm:$0xf]
      %v4285 = vld [vmem:[%s4269 + $0x3c] sm:$0xf]
      %v4286 = vunpack.c.l.b16 %v3898
      %v4287 = vunpack.c.l.b16 %v3908
      %v4288 = vunpack.c.l.b16 %v3922
      %v4289 = vunpack.c.l.b16 %v3932
      %v4290 = vunpack.c.l.b16 %v3946
      %v4291 = vunpack.c.l.b16 %v3956
      %v4292 = vunpack.c.l.b16 %v3970
      %v4293 = vunpack.c.l.b16 %v3980
      %v4294 = vunpack.c.l.b16 %v3994
      %v4295 = vunpack.c.l.b16 %v4004
      %v4296 = vunpack.c.l.b16 %v4018
      %v4297 = vunpack.c.l.b16 %v4028
      %v4298 = vunpack.c.l.b16 %v4042
      %v4299 = vunpack.c.l.b16 %v4052
      %v4300 = vunpack.c.l.b16 %v4066
      %v4301 = vunpack.c.l.b16 %v4076
      %v4302 = vunpack.c.l.b16 %v4090
      %v4303 = vunpack.c.l.b16 %v4100
      %v4304 = vunpack.c.l.b16 %v4114
      %v4305 = vunpack.c.l.b16 %v4124
      %v4306 = vunpack.c.l.b16 %v4138
      %v4307 = vunpack.c.l.b16 %v4148
      %v4308 = vunpack.c.l.b16 %v4162
      %v4309 = vunpack.c.l.b16 %v4172
      %v4310 = vunpack.c.l.b16 %v4186
      %v4311 = vunpack.c.l.b16 %v4196
      %v4312 = vunpack.c.l.b16 %v4210
      %v4313 = vunpack.c.l.b16 %v4220
      %v4314 = vunpack.c.l.b16 %v4234
      %v4315 = vunpack.c.l.b16 %v4244
      %v4316 = vunpack.c.l.b16 %v4258
      %v4317 = vunpack.c.l.b16 %v4268
      %v4318 = vpack.c.b16 %v4287, %v4286
      %v4319 = vpack.c.b16 %v4289, %v4288
      %v4320 = vpack.c.b16 %v4291, %v4290
      %v4321 = vpack.c.b16 %v4293, %v4292
      %v4322 = vpack.c.b16 %v4295, %v4294
      %v4323 = vpack.c.b16 %v4297, %v4296
      %v4324 = vpack.c.b16 %v4299, %v4298
      %v4325 = vpack.c.b16 %v4301, %v4300
      %v4326 = vpack.c.b16 %v4303, %v4302
      %v4327 = vpack.c.b16 %v4305, %v4304
      %v4328 = vpack.c.b16 %v4307, %v4306
      %v4329 = vpack.c.b16 %v4309, %v4308
      %v4330 = vpack.c.b16 %v4311, %v4310
      %v4331 = vpack.c.b16 %v4313, %v4312
      %v4332 = vpack.c.b16 %v4315, %v4314
      %v4333 = vpack.c.b16 %v4317, %v4316
      %v4366 = vunpack.c.l.b16 %v4270
      %v4367 = vunpack.c.l.b16 %v4271
      %v4368 = vunpack.c.l.b16 %v4272
      %v4369 = vunpack.c.l.b16 %v4273
      %v4370 = vunpack.c.l.b16 %v4274
      %v4371 = vunpack.c.l.b16 %v4275
      %v4372 = vunpack.c.l.b16 %v4276
      %v4373 = vunpack.c.l.b16 %v4277
      %v4374 = vunpack.c.l.b16 %v4278
      %v4375 = vunpack.c.l.b16 %v4279
      %v4376 = vunpack.c.l.b16 %v4280
      %v4377 = vunpack.c.l.b16 %v4281
      %v4378 = vunpack.c.l.b16 %v4282
      %v4379 = vunpack.c.l.b16 %v4283
      %v4380 = vunpack.c.l.b16 %v4284
      %v4381 = vunpack.c.l.b16 %v4285
      %v4382 = vpack.c.b16 %v4367, %v4366
      %v4383 = vpack.c.b16 %v4369, %v4368
      %v4384 = vpack.c.b16 %v4371, %v4370
      %v4385 = vpack.c.b16 %v4373, %v4372
      %v4386 = vpack.c.b16 %v4375, %v4374
      %v4387 = vpack.c.b16 %v4377, %v4376
      %v4388 = vpack.c.b16 %v4379, %v4378
      %v4389 = vpack.c.b16 %v4381, %v4380
      %4398 = vmatprep.subr.bf16.mxu0 0
      %4399 = vmatpush1.bf16.msra.mxu0 %v4382
      %4400 = vmatprep.subr.bf16.mxu0 0
      %4401 = vmatpush1.bf16.msra.mxu0 %v4383
      %4402 = vmatprep.subr.bf16.mxu0 0
      %4403 = vmatpush1.bf16.msra.mxu0 %v4384
      %4404 = vmatprep.subr.bf16.mxu0 0
      %4405 = vmatpush1.bf16.msra.mxu0 %v4385
      %4406 = vmatprep.subr.bf16.mxu0 0
      %4407 = vmatpush1.bf16.msra.mxu0 %v4386
      %4408 = vmatprep.subr.bf16.mxu0 0
      %4409 = vmatpush1.bf16.msra.mxu0 %v4387
      %4410 = vmatprep.subr.bf16.mxu0 0
      %4411 = vmatpush1.bf16.msra.mxu0 %v4388
      %4412 = vmatprep.subr.bf16.mxu0 0
      %4413 = vmatpush1.bf16.msra.mxu0 %v4389
      %4414 = vmatprep.subr.bf16.mxu0 0
      %4415 = vmatpush1.bf16.msra.mxu0 0
      %4416 = vmatprep.subr.bf16.mxu0 0
      %4417 = vmatpush1.bf16.msra.mxu0 0
      %4418 = vmatprep.subr.bf16.mxu0 0
      %4419 = vmatpush1.bf16.msra.mxu0 0
      %4420 = vmatprep.subr.bf16.mxu0 0
      %4421 = vmatpush1.bf16.msra.mxu0 0
      %4422 = vmatprep.subr.bf16.mxu0 0
      %4423 = vmatpush1.bf16.msra.mxu0 0
      %4424 = vmatprep.subr.bf16.mxu0 0
      %4425 = vmatpush1.bf16.msra.mxu0 0
      %4426 = vmatprep.subr.bf16.mxu0 0
      %4427 = vmatpush1.bf16.msra.mxu0 0
      %4428 = vmatprep.subr.bf16.mxu0 0
      %4429 = vmatpush1.bf16.msra.mxu0 0
      %4430 = vmatprep.mubr.bf16.mxu0 0
      %4431 = vmatmul.mubr.bf16.gmra.mrb[0].mxu0 %v4318
      %v4432 = vpop.f32.mrb[0].mxu0
      %v4433 = vadd.f32 0.0, %v4432
      %v4434 = vpop.f32.mrb[0].mxu0
      %v4435 = vpop.f32.mrb[0].mxu0
      %v4436 = vadd.f32 0.0, %v4435
      %v4437 = vpop.f32.mrb[0].mxu0
      %4438 = vmatprep.mubr.bf16.mxu0 0
      %4439 = vmatmul.mubr.bf16.gmra.mrb[0].mxu0 %v4319
      %v4440 = vpop.f32.mrb[0].mxu0
      %v4441 = vadd.f32 0.0, %v4440
      %v4442 = vpop.f32.mrb[0].mxu0
      %v4443 = vpop.f32.mrb[0].mxu0
      %v4444 = vadd.f32 0.0, %v4443
      %v4445 = vpop.f32.mrb[0].mxu0
      %4446 = vmatprep.mubr.bf16.mxu0 0
      %4447 = vmatmul.mubr.bf16.gmra.mrb[0].mxu0 %v4320
      %v4448 = vpop.f32.mrb[0].mxu0
      %v4449 = vadd.f32 0.0, %v4448
      %v4450 = vpop.f32.mrb[0].mxu0
      %v4451 = vpop.f32.mrb[0].mxu0
      %v4452 = vadd.f32 0.0, %v4451
      %v4453 = vpop.f32.mrb[0].mxu0
      %4454 = vmatprep.mubr.bf16.mxu0 0
      %4455 = vmatmul.mubr.bf16.gmra.mrb[0].mxu0 %v4321
      %v4456 = vpop.f32.mrb[0].mxu0
      %v4457 = vadd.f32 0.0, %v4456
      %v4458 = vpop.f32.mrb[0].mxu0
      %v4459 = vpop.f32.mrb[0].mxu0
      %v4460 = vadd.f32 0.0, %v4459
      %v4461 = vpop.f32.mrb[0].mxu0
      %4462 = vmatprep.mubr.bf16.mxu0 0
      %4463 = vmatmul.mubr.bf16.gmra.mrb[0].mxu0 %v4322
      %v4464 = vpop.f32.mrb[0].mxu0
      %v4465 = vadd.f32 0.0, %v4464
      %v4466 = vpop.f32.mrb[0].mxu0
      %v4467 = vpop.f32.mrb[0].mxu0
      %v4468 = vadd.f32 0.0, %v4467
      %v4469 = vpop.f32.mrb[0].mxu0
      %4470 = vmatprep.mubr.bf16.mxu0 0
      %4471 = vmatmul.mubr.bf16.gmra.mrb[0].mxu0 %v4323
      %v4472 = vpop.f32.mrb[0].mxu0
      %v4473 = vadd.f32 0.0, %v4472
      %v4474 = vpop.f32.mrb[0].mxu0
      %v4475 = vpop.f32.mrb[0].mxu0
      %v4476 = vadd.f32 0.0, %v4475
      %v4477 = vpop.f32.mrb[0].mxu0
      %4478 = vmatprep.mubr.bf16.mxu0 0
      %4479 = vmatmul.mubr.bf16.gmra.mrb[0].mxu0 %v4324
      %v4480 = vpop.f32.mrb[0].mxu0
      %v4481 = vadd.f32 0.0, %v4480
      %v4482 = vpop.f32.mrb[0].mxu0
      %v4483 = vpop.f32.mrb[0].mxu0
      %v4484 = vadd.f32 0.0, %v4483
      %v4485 = vpop.f32.mrb[0].mxu0
      %4486 = vmatprep.mubr.bf16.mxu0 0
      %4487 = vmatmul.mubr.bf16.gmra.mrb[0].mxu0 %v4325
      %v4488 = vpop.f32.mrb[0].mxu0
      %v4489 = vadd.f32 0.0, %v4488
      %v4490 = vpop.f32.mrb[0].mxu0
      %v4491 = vpop.f32.mrb[0].mxu0
      %v4492 = vadd.f32 0.0, %v4491
      %v4493 = vpop.f32.mrb[0].mxu0
      %4494 = vmatprep.mubr.bf16.mxu0 0
      %4495 = vmatmul.mubr.bf16.gmra.mrb[0].mxu0 %v4326
      %v4496 = vpop.f32.mrb[0].mxu0
      %v4497 = vadd.f32 0.0, %v4496
      %v4498 = vpop.f32.mrb[0].mxu0
      %v4499 = vpop.f32.mrb[0].mxu0
      %v4500 = vadd.f32 0.0, %v4499
      %v4501 = vpop.f32.mrb[0].mxu0
      %4502 = vmatprep.mubr.bf16.mxu0 0
      %4503 = vmatmul.mubr.bf16.gmra.mrb[0].mxu0 %v4327
      %v4504 = vpop.f32.mrb[0].mxu0
      %v4505 = vadd.f32 0.0, %v4504
      %v4506 = vpop.f32.mrb[0].mxu0
      %v4507 = vpop.f32.mrb[0].mxu0
      %v4508 = vadd.f32 0.0, %v4507
      %v4509 = vpop.f32.mrb[0].mxu0
      %4510 = vmatprep.mubr.bf16.mxu0 0
      %4511 = vmatmul.mubr.bf16.gmra.mrb[0].mxu0 %v4328
      %v4512 = vpop.f32.mrb[0].mxu0
      %v4513 = vadd.f32 0.0, %v4512
      %v4514 = vpop.f32.mrb[0].mxu0
      %v4515 = vpop.f32.mrb[0].mxu0
      %v4516 = vadd.f32 0.0, %v4515
      %v4517 = vpop.f32.mrb[0].mxu0
      %4518 = vmatprep.mubr.bf16.mxu0 0
      %4519 = vmatmul.mubr.bf16.gmra.mrb[0].mxu0 %v4329
      %v4520 = vpop.f32.mrb[0].mxu0
      %v4521 = vadd.f32 0.0, %v4520
      %v4522 = vpop.f32.mrb[0].mxu0
      %v4523 = vpop.f32.mrb[0].mxu0
      %v4524 = vadd.f32 0.0, %v4523
      %v4525 = vpop.f32.mrb[0].mxu0
      %4526 = vmatprep.mubr.bf16.mxu0 0
      %4527 = vmatmul.mubr.bf16.gmra.mrb[0].mxu0 %v4330
      %v4528 = vpop.f32.mrb[0].mxu0
      %v4529 = vadd.f32 0.0, %v4528
      %v4530 = vpop.f32.mrb[0].mxu0
      %v4531 = vpop.f32.mrb[0].mxu0
      %v4532 = vadd.f32 0.0, %v4531
      %v4533 = vpop.f32.mrb[0].mxu0
      %4534 = vmatprep.mubr.bf16.mxu0 0
      %4535 = vmatmul.mubr.bf16.gmra.mrb[0].mxu0 %v4331
      %v4536 = vpop.f32.mrb[0].mxu0
      %v4537 = vadd.f32 0.0, %v4536
      %v4538 = vpop.f32.mrb[0].mxu0
      %v4539 = vpop.f32.mrb[0].mxu0
      %v4540 = vadd.f32 0.0, %v4539
      %v4541 = vpop.f32.mrb[0].mxu0
      %4542 = vmatprep.mubr.bf16.mxu0 0
      %4543 = vmatmul.mubr.bf16.gmra.mrb[0].mxu0 %v4332
      %v4544 = vpop.f32.mrb[0].mxu0
      %v4545 = vadd.f32 0.0, %v4544
      %v4546 = vpop.f32.mrb[0].mxu0
      %v4547 = vpop.f32.mrb[0].mxu0
      %v4548 = vadd.f32 0.0, %v4547
      %v4549 = vpop.f32.mrb[0].mxu0
      %4550 = vmatprep.mubr.bf16.mxu0 0
      %4551 = vmatmul.mubr.bf16.gmra.mrb[0].mxu0 %v4333
      %v4552 = vpop.f32.mrb[0].mxu0
      %v4553 = vadd.f32 0.0, %v4552
      %v4554 = vpop.f32.mrb[0].mxu0
      %v4555 = vpop.f32.mrb[0].mxu0
      %v4556 = vadd.f32 0.0, %v4555
      %v4557 = vpop.f32.mrb[0].mxu0
      %4558 = vdwg.mxu0
      %v4559 = vadd.f32 %v3805, %v4433
      %v4560 = vadd.f32 %v3806, %v4436
      %v4561 = vadd.f32 %v3807, %v4441
      %v4562 = vadd.f32 %v3808, %v4444
      %v4563 = vadd.f32 %v3809, %v4449
      %v4564 = vadd.f32 %v3810, %v4452
      %v4565 = vadd.f32 %v3811, %v4457
      %v4566 = vadd.f32 %v3812, %v4460
      %v4567 = vadd.f32 %v3813, %v4465
      %v4568 = vadd.f32 %v3814, %v4468
      %v4569 = vadd.f32 %v3815, %v4473
      %v4570 = vadd.f32 %v3816, %v4476
      %v4571 = vadd.f32 %v3817, %v4481
      %v4572 = vadd.f32 %v3818, %v4484
      %v4573 = vadd.f32 %v3819, %v4489
      %v4574 = vadd.f32 %v3820, %v4492
      %v4575 = vadd.f32 %v3821, %v4497
      %v4576 = vadd.f32 %v3822, %v4500
      %v4577 = vadd.f32 %v3823, %v4505
      %v4578 = vadd.f32 %v3824, %v4508
      %v4579 = vadd.f32 %v3825, %v4513
      %v4580 = vadd.f32 %v3826, %v4516
      %v4581 = vadd.f32 %v3827, %v4521
      %v4582 = vadd.f32 %v3828, %v4524
      %v4583 = vadd.f32 %v3829, %v4529
      %v4584 = vadd.f32 %v3830, %v4532
      %v4585 = vadd.f32 %v3831, %v4537
      %v4586 = vadd.f32 %v3832, %v4540
      %v4587 = vadd.f32 %v3833, %v4545
      %v4588 = vadd.f32 %v3834, %v4548
      %v4589 = vadd.f32 %v3835, %v4553
      %v4590 = vadd.f32 %v3836, %v4556
      %v4591 = vld [vmem:[%s3450] sm:$0xe]
      %v4592 = vld [vmem:[%s3450 + $0xc] sm:$0xe]
      %v4593 = vld [vmem:[%s3450 + $0x18] sm:$0xe]
      %v4594 = vld [vmem:[%s3450 + $0x24] sm:$0xe]
      %v4595 = vld [vmem:[%s3450 + $0x30] sm:$0xe]
      %v4596 = vld [vmem:[%s3450 + $0x3c] sm:$0xe]
      %v4597 = vld [vmem:[%s3450 + $0x48] sm:$0xe]
      %v4598 = vld [vmem:[%s3450 + $0x54] sm:$0xe]
      %v4599 = vld [vmem:[%s3450 + $0x60] sm:$0xe]
      %v4600 = vld [vmem:[%s3450 + $0x6c] sm:$0xe]
      %v4601 = vld [vmem:[%s3450 + $0x78] sm:$0xe]
      %v4602 = vld [vmem:[%s3450 + $0x84] sm:$0xe]
      %v4603 = vld [vmem:[%s3450 + $0x90] sm:$0xe]
      %v4604 = vld [vmem:[%s3450 + $0x9c] sm:$0xe]
      %v4605 = vld [vmem:[%s3450 + $0xa8] sm:$0xe]
      %v4606 = vld [vmem:[%s3450 + $0xb4] sm:$0xe]
      %v4655 = vrot.slane %v4591, 5
      %v4656 = vrot.slane %v4655, 4
      %v4657 = vrot.slane %v3838, 5
      %v4658 = vsel %vm1376, %v4656, %v4657
      %v4659 = vrot.slane %v4657, 4
      %v4660 = vrot.slane %v3839, 5
      %v4661 = vsel %vm1376, %v4659, %v4660
      %v4662 = vrot.slane %v4592, 5
      %v4663 = vrot.slane %v4662, 4
      %v4664 = vrot.slane %v3841, 5
      %v4665 = vsel %vm1376, %v4663, %v4664
      %v4666 = vrot.slane %v4664, 4
      %v4667 = vrot.slane %v3842, 5
      %v4668 = vsel %vm1376, %v4666, %v4667
      %v4669 = vrot.slane %v4593, 5
      %v4670 = vrot.slane %v4669, 4
      %v4671 = vrot.slane %v3844, 5
      %v4672 = vsel %vm1376, %v4670, %v4671
      %v4673 = vrot.slane %v4671, 4
      %v4674 = vrot.slane %v3845, 5
      %v4675 = vsel %vm1376, %v4673, %v4674
      %v4676 = vrot.slane %v4594, 5
      %v4677 = vrot.slane %v4676, 4
      %v4678 = vrot.slane %v3847, 5
      %v4679 = vsel %vm1376, %v4677, %v4678
      %v4680 = vrot.slane %v4678, 4
      %v4681 = vrot.slane %v3848, 5
      %v4682 = vsel %vm1376, %v4680, %v4681
      %v4683 = vrot.slane %v4595, 5
      %v4684 = vrot.slane %v4683, 4
      %v4685 = vrot.slane %v3850, 5
      %v4686 = vsel %vm1376, %v4684, %v4685
      %v4687 = vrot.slane %v4685, 4
      %v4688 = vrot.slane %v3851, 5
      %v4689 = vsel %vm1376, %v4687, %v4688
      %v4690 = vrot.slane %v4596, 5
      %v4691 = vrot.slane %v4690, 4
      %v4692 = vrot.slane %v3853, 5
      %v4693 = vsel %vm1376, %v4691, %v4692
      %v4694 = vrot.slane %v4692, 4
      %v4695 = vrot.slane %v3854, 5
      %v4696 = vsel %vm1376, %v4694, %v4695
      %v4697 = vrot.slane %v4597, 5
      %v4698 = vrot.slane %v4697, 4
      %v4699 = vrot.slane %v3856, 5
      %v4700 = vsel %vm1376, %v4698, %v4699
      %v4701 = vrot.slane %v4699, 4
      %v4702 = vrot.slane %v3857, 5
      %v4703 = vsel %vm1376, %v4701, %v4702
      %v4704 = vrot.slane %v4598, 5
      %v4705 = vrot.slane %v4704, 4
      %v4706 = vrot.slane %v3859, 5
      %v4707 = vsel %vm1376, %v4705, %v4706
      %v4708 = vrot.slane %v4706, 4
      %v4709 = vrot.slane %v3860, 5
      %v4710 = vsel %vm1376, %v4708, %v4709
      %v4711 = vrot.slane %v4599, 5
      %v4712 = vrot.slane %v4711, 4
      %v4713 = vrot.slane %v3862, 5
      %v4714 = vsel %vm1376, %v4712, %v4713
      %v4715 = vrot.slane %v4713, 4
      %v4716 = vrot.slane %v3863, 5
      %v4717 = vsel %vm1376, %v4715, %v4716
      %v4718 = vrot.slane %v4600, 5
      %v4719 = vrot.slane %v4718, 4
      %v4720 = vrot.slane %v3865, 5
      %v4721 = vsel %vm1376, %v4719, %v4720
      %v4722 = vrot.slane %v4720, 4
      %v4723 = vrot.slane %v3866, 5
      %v4724 = vsel %vm1376, %v4722, %v4723
      %v4725 = vrot.slane %v4601, 5
      %v4726 = vrot.slane %v4725, 4
      %v4727 = vrot.slane %v3868, 5
      %v4728 = vsel %vm1376, %v4726, %v4727
      %v4729 = vrot.slane %v4727, 4
      %v4730 = vrot.slane %v3869, 5
      %v4731 = vsel %vm1376, %v4729, %v4730
      %v4732 = vrot.slane %v4602, 5
      %v4733 = vrot.slane %v4732, 4
      %v4734 = vrot.slane %v3871, 5
      %v4735 = vsel %vm1376, %v4733, %v4734
      %v4736 = vrot.slane %v4734, 4
      %v4737 = vrot.slane %v3872, 5
      %v4738 = vsel %vm1376, %v4736, %v4737
      %v4739 = vrot.slane %v4603, 5
      %v4740 = vrot.slane %v4739, 4
      %v4741 = vrot.slane %v3874, 5
      %v4742 = vsel %vm1376, %v4740, %v4741
      %v4743 = vrot.slane %v4741, 4
      %v4744 = vrot.slane %v3875, 5
      %v4745 = vsel %vm1376, %v4743, %v4744
      %v4746 = vrot.slane %v4604, 5
      %v4747 = vrot.slane %v4746, 4
      %v4748 = vrot.slane %v3877, 5
      %v4749 = vsel %vm1376, %v4747, %v4748
      %v4750 = vrot.slane %v4748, 4
      %v4751 = vrot.slane %v3878, 5
      %v4752 = vsel %vm1376, %v4750, %v4751
      %v4753 = vrot.slane %v4605, 5
      %v4754 = vrot.slane %v4753, 4
      %v4755 = vrot.slane %v3880, 5
      %v4756 = vsel %vm1376, %v4754, %v4755
      %v4757 = vrot.slane %v4755, 4
      %v4758 = vrot.slane %v3881, 5
      %v4759 = vsel %vm1376, %v4757, %v4758
      %v4760 = vrot.slane %v4606, 5
      %v4761 = vrot.slane %v4760, 4
      %v4762 = vrot.slane %v3883, 5
      %v4763 = vsel %vm1376, %v4761, %v4762
      %v4764 = vrot.slane %v4762, 4
      %v4765 = vrot.slane %v3884, 5
      %v4766 = vsel %vm1376, %v4764, %v4765
      %s4767 = scalar_lea.vmem %s1, 512
      %v4768 = vld [vmem:[%s4767] sm:$0xf]
      %v4769 = vld [vmem:[%s4767 + $0x4] sm:$0xf]
      %v4770 = vld [vmem:[%s4767 + $0x8] sm:$0xf]
      %v4771 = vld [vmem:[%s4767 + $0xc] sm:$0xf]
      %v4772 = vld [vmem:[%s4767 + $0x10] sm:$0xf]
      %v4773 = vld [vmem:[%s4767 + $0x14] sm:$0xf]
      %v4774 = vld [vmem:[%s4767 + $0x18] sm:$0xf]
      %v4775 = vld [vmem:[%s4767 + $0x1c] sm:$0xf]
      %v4776 = vld [vmem:[%s4767 + $0x20] sm:$0xf]
      %v4777 = vld [vmem:[%s4767 + $0x24] sm:$0xf]
      %v4778 = vld [vmem:[%s4767 + $0x28] sm:$0xf]
      %v4779 = vld [vmem:[%s4767 + $0x2c] sm:$0xf]
      %v4780 = vld [vmem:[%s4767 + $0x30] sm:$0xf]
      %v4781 = vld [vmem:[%s4767 + $0x34] sm:$0xf]
      %v4782 = vld [vmem:[%s4767 + $0x38] sm:$0xf]
      %v4783 = vld [vmem:[%s4767 + $0x3c] sm:$0xf]
      %v4784 = vunpack.c.l.b16 %v4658
      %v4785 = vunpack.c.l.b16 %v4661
      %v4786 = vunpack.c.l.b16 %v4665
      %v4787 = vunpack.c.l.b16 %v4668
      %v4788 = vunpack.c.l.b16 %v4672
      %v4789 = vunpack.c.l.b16 %v4675
      %v4790 = vunpack.c.l.b16 %v4679
      %v4791 = vunpack.c.l.b16 %v4682
      %v4792 = vunpack.c.l.b16 %v4686
      %v4793 = vunpack.c.l.b16 %v4689
      %v4794 = vunpack.c.l.b16 %v4693
      %v4795 = vunpack.c.l.b16 %v4696
      %v4796 = vunpack.c.l.b16 %v4700
      %v4797 = vunpack.c.l.b16 %v4703
      %v4798 = vunpack.c.l.b16 %v4707
      %v4799 = vunpack.c.l.b16 %v4710
      %v4800 = vunpack.c.l.b16 %v4714
      %v4801 = vunpack.c.l.b16 %v4717
      %v4802 = vunpack.c.l.b16 %v4721
      %v4803 = vunpack.c.l.b16 %v4724
      %v4804 = vunpack.c.l.b16 %v4728
      %v4805 = vunpack.c.l.b16 %v4731
      %v4806 = vunpack.c.l.b16 %v4735
      %v4807 = vunpack.c.l.b16 %v4738
      %v4808 = vunpack.c.l.b16 %v4742
      %v4809 = vunpack.c.l.b16 %v4745
      %v4810 = vunpack.c.l.b16 %v4749
      %v4811 = vunpack.c.l.b16 %v4752
      %v4812 = vunpack.c.l.b16 %v4756
      %v4813 = vunpack.c.l.b16 %v4759
      %v4814 = vunpack.c.l.b16 %v4763
      %v4815 = vunpack.c.l.b16 %v4766
      %v4816 = vpack.c.b16 %v4785, %v4784
      %v4817 = vpack.c.b16 %v4787, %v4786
      %v4818 = vpack.c.b16 %v4789, %v4788
      %v4819 = vpack.c.b16 %v4791, %v4790
      %v4820 = vpack.c.b16 %v4793, %v4792
      %v4821 = vpack.c.b16 %v4795, %v4794
      %v4822 = vpack.c.b16 %v4797, %v4796
      %v4823 = vpack.c.b16 %v4799, %v4798
      %v4824 = vpack.c.b16 %v4801, %v4800
      %v4825 = vpack.c.b16 %v4803, %v4802
      %v4826 = vpack.c.b16 %v4805, %v4804
      %v4827 = vpack.c.b16 %v4807, %v4806
      %v4828 = vpack.c.b16 %v4809, %v4808
      %v4829 = vpack.c.b16 %v4811, %v4810
      %v4830 = vpack.c.b16 %v4813, %v4812
      %v4831 = vpack.c.b16 %v4815, %v4814
      %v4864 = vunpack.c.l.b16 %v4768
      %v4865 = vunpack.c.l.b16 %v4769
      %v4866 = vunpack.c.l.b16 %v4770
      %v4867 = vunpack.c.l.b16 %v4771
      %v4868 = vunpack.c.l.b16 %v4772
      %v4869 = vunpack.c.l.b16 %v4773
      %v4870 = vunpack.c.l.b16 %v4774
      %v4871 = vunpack.c.l.b16 %v4775
      %v4872 = vunpack.c.l.b16 %v4776
      %v4873 = vunpack.c.l.b16 %v4777
      %v4874 = vunpack.c.l.b16 %v4778
      %v4875 = vunpack.c.l.b16 %v4779
      %v4876 = vunpack.c.l.b16 %v4780
      %v4877 = vunpack.c.l.b16 %v4781
      %v4878 = vunpack.c.l.b16 %v4782
      %v4879 = vunpack.c.l.b16 %v4783
      %v4880 = vpack.c.b16 %v4865, %v4864
      %v4881 = vpack.c.b16 %v4867, %v4866
      %v4882 = vpack.c.b16 %v4869, %v4868
      %v4883 = vpack.c.b16 %v4871, %v4870
      %v4884 = vpack.c.b16 %v4873, %v4872
      %v4885 = vpack.c.b16 %v4875, %v4874
      %v4886 = vpack.c.b16 %v4877, %v4876
      %v4887 = vpack.c.b16 %v4879, %v4878
      %4896 = vmatprep.subr.bf16.mxu0 0
      %4897 = vmatpush1.bf16.msra.mxu0 %v4880
      %4898 = vmatprep.subr.bf16.mxu0 0
      %4899 = vmatpush1.bf16.msra.mxu0 %v4881
      %4900 = vmatprep.subr.bf16.mxu0 0
      %4901 = vmatpush1.bf16.msra.mxu0 %v4882
      %4902 = vmatprep.subr.bf16.mxu0 0
      %4903 = vmatpush1.bf16.msra.mxu0 %v4883
      %4904 = vmatprep.subr.bf16.mxu0 0
      %4905 = vmatpush1.bf16.msra.mxu0 %v4884
      %4906 = vmatprep.subr.bf16.mxu0 0
      %4907 = vmatpush1.bf16.msra.mxu0 %v4885
      %4908 = vmatprep.subr.bf16.mxu0 0
      %4909 = vmatpush1.bf16.msra.mxu0 %v4886
      %4910 = vmatprep.subr.bf16.mxu0 0
      %4911 = vmatpush1.bf16.msra.mxu0 %v4887
      %4912 = vmatprep.subr.bf16.mxu0 0
      %4913 = vmatpush1.bf16.msra.mxu0 0
      %4914 = vmatprep.subr.bf16.mxu0 0
      %4915 = vmatpush1.bf16.msra.mxu0 0
      %4916 = vmatprep.subr.bf16.mxu0 0
      %4917 = vmatpush1.bf16.msra.mxu0 0
      %4918 = vmatprep.subr.bf16.mxu0 0
      %4919 = vmatpush1.bf16.msra.mxu0 0
      %4920 = vmatprep.subr.bf16.mxu0 0
      %4921 = vmatpush1.bf16.msra.mxu0 0
      %4922 = vmatprep.subr.bf16.mxu0 0
      %4923 = vmatpush1.bf16.msra.mxu0 0
      %4924 = vmatprep.subr.bf16.mxu0 0
      %4925 = vmatpush1.bf16.msra.mxu0 0
      %4926 = vmatprep.subr.bf16.mxu0 0
      %4927 = vmatpush1.bf16.msra.mxu0 0
      %4928 = vmatprep.mubr.bf16.mxu0 0
      %4929 = vmatmul.mubr.bf16.gmra.mrb[0].mxu0 %v4816
      %v4930 = vpop.f32.mrb[0].mxu0
      %v4931 = vadd.f32 0.0, %v4930
      %v4932 = vpop.f32.mrb[0].mxu0
      %v4933 = vpop.f32.mrb[0].mxu0
      %v4934 = vadd.f32 0.0, %v4933
      %v4935 = vpop.f32.mrb[0].mxu0
      %4936 = vmatprep.mubr.bf16.mxu0 0
      %4937 = vmatmul.mubr.bf16.gmra.mrb[0].mxu0 %v4817
      %v4938 = vpop.f32.mrb[0].mxu0
      %v4939 = vadd.f32 0.0, %v4938
      %v4940 = vpop.f32.mrb[0].mxu0
      %v4941 = vpop.f32.mrb[0].mxu0
      %v4942 = vadd.f32 0.0, %v4941
      %v4943 = vpop.f32.mrb[0].mxu0
      %4944 = vmatprep.mubr.bf16.mxu0 0
      %4945 = vmatmul.mubr.bf16.gmra.mrb[0].mxu0 %v4818
      %v4946 = vpop.f32.mrb[0].mxu0
      %v4947 = vadd.f32 0.0, %v4946
      %v4948 = vpop.f32.mrb[0].mxu0
      %v4949 = vpop.f32.mrb[0].mxu0
      %v4950 = vadd.f32 0.0, %v4949
      %v4951 = vpop.f32.mrb[0].mxu0
      %4952 = vmatprep.mubr.bf16.mxu0 0
      %4953 = vmatmul.mubr.bf16.gmra.mrb[0].mxu0 %v4819
      %v4954 = vpop.f32.mrb[0].mxu0
      %v4955 = vadd.f32 0.0, %v4954
      %v4956 = vpop.f32.mrb[0].mxu0
      %v4957 = vpop.f32.mrb[0].mxu0
      %v4958 = vadd.f32 0.0, %v4957
      %v4959 = vpop.f32.mrb[0].mxu0
      %4960 = vmatprep.mubr.bf16.mxu0 0
      %4961 = vmatmul.mubr.bf16.gmra.mrb[0].mxu0 %v4820
      %v4962 = vpop.f32.mrb[0].mxu0
      %v4963 = vadd.f32 0.0, %v4962
      %v4964 = vpop.f32.mrb[0].mxu0
      %v4965 = vpop.f32.mrb[0].mxu0
      %v4966 = vadd.f32 0.0, %v4965
      %v4967 = vpop.f32.mrb[0].mxu0
      %4968 = vmatprep.mubr.bf16.mxu0 0
      %4969 = vmatmul.mubr.bf16.gmra.mrb[0].mxu0 %v4821
      %v4970 = vpop.f32.mrb[0].mxu0
      %v4971 = vadd.f32 0.0, %v4970
      %v4972 = vpop.f32.mrb[0].mxu0
      %v4973 = vpop.f32.mrb[0].mxu0
      %v4974 = vadd.f32 0.0, %v4973
      %v4975 = vpop.f32.mrb[0].mxu0
      %4976 = vmatprep.mubr.bf16.mxu0 0
      %4977 = vmatmul.mubr.bf16.gmra.mrb[0].mxu0 %v4822
      %v4978 = vpop.f32.mrb[0].mxu0
      %v4979 = vadd.f32 0.0, %v4978
      %v4980 = vpop.f32.mrb[0].mxu0
      %v4981 = vpop.f32.mrb[0].mxu0
      %v4982 = vadd.f32 0.0, %v4981
      %v4983 = vpop.f32.mrb[0].mxu0
      %4984 = vmatprep.mubr.bf16.mxu0 0
      %4985 = vmatmul.mubr.bf16.gmra.mrb[0].mxu0 %v4823
      %v4986 = vpop.f32.mrb[0].mxu0
      %v4987 = vadd.f32 0.0, %v4986
      %v4988 = vpop.f32.mrb[0].mxu0
      %v4989 = vpop.f32.mrb[0].mxu0
      %v4990 = vadd.f32 0.0, %v4989
      %v4991 = vpop.f32.mrb[0].mxu0
      %4992 = vmatprep.mubr.bf16.mxu0 0
      %4993 = vmatmul.mubr.bf16.gmra.mrb[0].mxu0 %v4824
      %v4994 = vpop.f32.mrb[0].mxu0
      %v4995 = vadd.f32 0.0, %v4994
      %v4996 = vpop.f32.mrb[0].mxu0
      %v4997 = vpop.f32.mrb[0].mxu0
      %v4998 = vadd.f32 0.0, %v4997
      %v4999 = vpop.f32.mrb[0].mxu0
      %5000 = vmatprep.mubr.bf16.mxu0 0
      %5001 = vmatmul.mubr.bf16.gmra.mrb[0].mxu0 %v4825
      %v5002 = vpop.f32.mrb[0].mxu0
      %v5003 = vadd.f32 0.0, %v5002
      %v5004 = vpop.f32.mrb[0].mxu0
      %v5005 = vpop.f32.mrb[0].mxu0
      %v5006 = vadd.f32 0.0, %v5005
      %v5007 = vpop.f32.mrb[0].mxu0
      %5008 = vmatprep.mubr.bf16.mxu0 0
      %5009 = vmatmul.mubr.bf16.gmra.mrb[0].mxu0 %v4826
      %v5010 = vpop.f32.mrb[0].mxu0
      %v5011 = vadd.f32 0.0, %v5010
      %v5012 = vpop.f32.mrb[0].mxu0
      %v5013 = vpop.f32.mrb[0].mxu0
      %v5014 = vadd.f32 0.0, %v5013
      %v5015 = vpop.f32.mrb[0].mxu0
      %5016 = vmatprep.mubr.bf16.mxu0 0
      %5017 = vmatmul.mubr.bf16.gmra.mrb[0].mxu0 %v4827
      %v5018 = vpop.f32.mrb[0].mxu0
      %v5019 = vadd.f32 0.0, %v5018
      %v5020 = vpop.f32.mrb[0].mxu0
      %v5021 = vpop.f32.mrb[0].mxu0
      %v5022 = vadd.f32 0.0, %v5021
      %v5023 = vpop.f32.mrb[0].mxu0
      %5024 = vmatprep.mubr.bf16.mxu0 0
      %5025 = vmatmul.mubr.bf16.gmra.mrb[0].mxu0 %v4828
      %v5026 = vpop.f32.mrb[0].mxu0
      %v5027 = vadd.f32 0.0, %v5026
      %v5028 = vpop.f32.mrb[0].mxu0
      %v5029 = vpop.f32.mrb[0].mxu0
      %v5030 = vadd.f32 0.0, %v5029
      %v5031 = vpop.f32.mrb[0].mxu0
      %5032 = vmatprep.mubr.bf16.mxu0 0
      %5033 = vmatmul.mubr.bf16.gmra.mrb[0].mxu0 %v4829
      %v5034 = vpop.f32.mrb[0].mxu0
      %v5035 = vadd.f32 0.0, %v5034
      %v5036 = vpop.f32.mrb[0].mxu0
      %v5037 = vpop.f32.mrb[0].mxu0
      %v5038 = vadd.f32 0.0, %v5037
      %v5039 = vpop.f32.mrb[0].mxu0
      %5040 = vmatprep.mubr.bf16.mxu0 0
      %5041 = vmatmul.mubr.bf16.gmra.mrb[0].mxu0 %v4830
      %v5042 = vpop.f32.mrb[0].mxu0
      %v5043 = vadd.f32 0.0, %v5042
      %v5044 = vpop.f32.mrb[0].mxu0
      %v5045 = vpop.f32.mrb[0].mxu0
      %v5046 = vadd.f32 0.0, %v5045
      %v5047 = vpop.f32.mrb[0].mxu0
      %5048 = vmatprep.mubr.bf16.mxu0 0
      %5049 = vmatmul.mubr.bf16.gmra.mrb[0].mxu0 %v4831
      %v5050 = vpop.f32.mrb[0].mxu0
      %v5051 = vadd.f32 0.0, %v5050
      %v5052 = vpop.f32.mrb[0].mxu0
      %v5053 = vpop.f32.mrb[0].mxu0
      %v5054 = vadd.f32 0.0, %v5053
      %v5055 = vpop.f32.mrb[0].mxu0
      %5056 = vdwg.mxu0
      %v5057 = vadd.f32 %v4559, %v4931
      %v5058 = vadd.f32 %v4560, %v4934
      %v5059 = vadd.f32 %v4561, %v4939
      %v5060 = vadd.f32 %v4562, %v4942
      %v5061 = vadd.f32 %v4563, %v4947
      %v5062 = vadd.f32 %v4564, %v4950
      %v5063 = vadd.f32 %v4565, %v4955
      %v5064 = vadd.f32 %v4566, %v4958
      %v5065 = vadd.f32 %v4567, %v4963
      %v5066 = vadd.f32 %v4568, %v4966
      %v5067 = vadd.f32 %v4569, %v4971
      %v5068 = vadd.f32 %v4570, %v4974
      %v5069 = vadd.f32 %v4571, %v4979
      %v5070 = vadd.f32 %v4572, %v4982
      %v5071 = vadd.f32 %v4573, %v4987
      %v5072 = vadd.f32 %v4574, %v4990
      %v5073 = vadd.f32 %v4575, %v4995
      %v5074 = vadd.f32 %v4576, %v4998
      %v5075 = vadd.f32 %v4577, %v5003
      %v5076 = vadd.f32 %v4578, %v5006
      %v5077 = vadd.f32 %v4579, %v5011
      %v5078 = vadd.f32 %v4580, %v5014
      %v5079 = vadd.f32 %v4581, %v5019
      %v5080 = vadd.f32 %v4582, %v5022
      %v5081 = vadd.f32 %v4583, %v5027
      %v5082 = vadd.f32 %v4584, %v5030
      %v5083 = vadd.f32 %v4585, %v5035
      %v5084 = vadd.f32 %v4586, %v5038
      %v5085 = vadd.f32 %v4587, %v5043
      %v5086 = vadd.f32 %v4588, %v5046
      %v5087 = vadd.f32 %v4589, %v5051
      %v5088 = vadd.f32 %v4590, %v5054
      %v5089 = vld [vmem:[%s2] sm:$0x1]
      %v5091 = vlaneseq
      %v5092 = vshrl.u32 %v5091, 7
      %v5093 = vsub.s32 0, %v5092
      %v5094 = vrot.slane %v5089, %v5093
      %v5096 = vadd.f32 %v5057, %v5094
      %v5097 = vadd.f32 %v5058, %v5094
      %v5098 = vadd.f32 %v5059, %v5094
      %v5099 = vadd.f32 %v5060, %v5094
      %v5100 = vadd.f32 %v5061, %v5094
      %v5101 = vadd.f32 %v5062, %v5094
      %v5102 = vadd.f32 %v5063, %v5094
      %v5103 = vadd.f32 %v5064, %v5094
      %v5104 = vadd.f32 %v5065, %v5094
      %v5105 = vadd.f32 %v5066, %v5094
      %v5106 = vadd.f32 %v5067, %v5094
      %v5107 = vadd.f32 %v5068, %v5094
      %v5108 = vadd.f32 %v5069, %v5094
      %v5109 = vadd.f32 %v5070, %v5094
      %v5110 = vadd.f32 %v5071, %v5094
      %v5111 = vadd.f32 %v5072, %v5094
      %v5112 = vadd.f32 %v5073, %v5094
      %v5113 = vadd.f32 %v5074, %v5094
      %v5114 = vadd.f32 %v5075, %v5094
      %v5115 = vadd.f32 %v5076, %v5094
      %v5116 = vadd.f32 %v5077, %v5094
      %v5117 = vadd.f32 %v5078, %v5094
      %v5118 = vadd.f32 %v5079, %v5094
      %v5119 = vadd.f32 %v5080, %v5094
      %v5120 = vadd.f32 %v5081, %v5094
      %v5121 = vadd.f32 %v5082, %v5094
      %v5122 = vadd.f32 %v5083, %v5094
      %v5123 = vadd.f32 %v5084, %v5094
      %v5124 = vadd.f32 %v5085, %v5094
      %v5125 = vadd.f32 %v5086, %v5094
      %v5126 = vadd.f32 %v5087, %v5094
      %v5127 = vadd.f32 %v5088, %v5094
      %vm5128 = vcmp.gt.f32.partialorder %v5096, 0.0
      %vm5129 = vcmp.gt.f32.partialorder %v5097, 0.0
      %vm5130 = vcmp.gt.f32.partialorder %v5098, 0.0
      %vm5131 = vcmp.gt.f32.partialorder %v5099, 0.0
      %vm5132 = vcmp.gt.f32.partialorder %v5100, 0.0
      %vm5133 = vcmp.gt.f32.partialorder %v5101, 0.0
      %vm5134 = vcmp.gt.f32.partialorder %v5102, 0.0
      %vm5135 = vcmp.gt.f32.partialorder %v5103, 0.0
      %vm5136 = vcmp.gt.f32.partialorder %v5104, 0.0
      %vm5137 = vcmp.gt.f32.partialorder %v5105, 0.0
      %vm5138 = vcmp.gt.f32.partialorder %v5106, 0.0
      %vm5139 = vcmp.gt.f32.partialorder %v5107, 0.0
      %vm5140 = vcmp.gt.f32.partialorder %v5108, 0.0
      %vm5141 = vcmp.gt.f32.partialorder %v5109, 0.0
      %vm5142 = vcmp.gt.f32.partialorder %v5110, 0.0
      %vm5143 = vcmp.gt.f32.partialorder %v5111, 0.0
      %vm5144 = vcmp.gt.f32.partialorder %v5112, 0.0
      %vm5145 = vcmp.gt.f32.partialorder %v5113, 0.0
      %vm5146 = vcmp.gt.f32.partialorder %v5114, 0.0
      %vm5147 = vcmp.gt.f32.partialorder %v5115, 0.0
      %vm5148 = vcmp.gt.f32.partialorder %v5116, 0.0
      %vm5149 = vcmp.gt.f32.partialorder %v5117, 0.0
      %vm5150 = vcmp.gt.f32.partialorder %v5118, 0.0
      %vm5151 = vcmp.gt.f32.partialorder %v5119, 0.0
      %vm5152 = vcmp.gt.f32.partialorder %v5120, 0.0
      %vm5153 = vcmp.gt.f32.partialorder %v5121, 0.0
      %vm5154 = vcmp.gt.f32.partialorder %v5122, 0.0
      %vm5155 = vcmp.gt.f32.partialorder %v5123, 0.0
      %vm5156 = vcmp.gt.f32.partialorder %v5124, 0.0
      %vm5157 = vcmp.gt.f32.partialorder %v5125, 0.0
      %vm5158 = vcmp.gt.f32.partialorder %v5126, 0.0
      %vm5159 = vcmp.gt.f32.partialorder %v5127, 0.0
      %v5160 = vmul.f32 %v5096, 0.01
      %v5161 = vmul.f32 %v5097, 0.01
      %v5162 = vmul.f32 %v5098, 0.01
      %v5163 = vmul.f32 %v5099, 0.01
      %v5164 = vmul.f32 %v5100, 0.01
      %v5165 = vmul.f32 %v5101, 0.01
      %v5166 = vmul.f32 %v5102, 0.01
      %v5167 = vmul.f32 %v5103, 0.01
      %v5168 = vmul.f32 %v5104, 0.01
      %v5169 = vmul.f32 %v5105, 0.01
      %v5170 = vmul.f32 %v5106, 0.01
      %v5171 = vmul.f32 %v5107, 0.01
      %v5172 = vmul.f32 %v5108, 0.01
      %v5173 = vmul.f32 %v5109, 0.01
      %v5174 = vmul.f32 %v5110, 0.01
      %v5175 = vmul.f32 %v5111, 0.01
      %v5176 = vmul.f32 %v5112, 0.01
      %v5177 = vmul.f32 %v5113, 0.01
      %v5178 = vmul.f32 %v5114, 0.01
      %v5179 = vmul.f32 %v5115, 0.01
      %v5180 = vmul.f32 %v5116, 0.01
      %v5181 = vmul.f32 %v5117, 0.01
      %v5182 = vmul.f32 %v5118, 0.01
      %v5183 = vmul.f32 %v5119, 0.01
      %v5184 = vmul.f32 %v5120, 0.01
      %v5185 = vmul.f32 %v5121, 0.01
      %v5186 = vmul.f32 %v5122, 0.01
      %v5187 = vmul.f32 %v5123, 0.01
      %v5188 = vmul.f32 %v5124, 0.01
      %v5189 = vmul.f32 %v5125, 0.01
      %v5190 = vmul.f32 %v5126, 0.01
      %v5191 = vmul.f32 %v5127, 0.01
      %v5192 = vsel %vm5128, %v5096, %v5160
      %v5193 = vsel %vm5129, %v5097, %v5161
      %v5194 = vsel %vm5130, %v5098, %v5162
      %v5195 = vsel %vm5131, %v5099, %v5163
      %v5196 = vsel %vm5132, %v5100, %v5164
      %v5197 = vsel %vm5133, %v5101, %v5165
      %v5198 = vsel %vm5134, %v5102, %v5166
      %v5199 = vsel %vm5135, %v5103, %v5167
      %v5200 = vsel %vm5136, %v5104, %v5168
      %v5201 = vsel %vm5137, %v5105, %v5169
      %v5202 = vsel %vm5138, %v5106, %v5170
      %v5203 = vsel %vm5139, %v5107, %v5171
      %v5204 = vsel %vm5140, %v5108, %v5172
      %v5205 = vsel %vm5141, %v5109, %v5173
      %v5206 = vsel %vm5142, %v5110, %v5174
      %v5207 = vsel %vm5143, %v5111, %v5175
      %v5208 = vsel %vm5144, %v5112, %v5176
      %v5209 = vsel %vm5145, %v5113, %v5177
      %v5210 = vsel %vm5146, %v5114, %v5178
      %v5211 = vsel %vm5147, %v5115, %v5179
      %v5212 = vsel %vm5148, %v5116, %v5180
      %v5213 = vsel %vm5149, %v5117, %v5181
      %v5214 = vsel %vm5150, %v5118, %v5182
      %v5215 = vsel %vm5151, %v5119, %v5183
      %v5216 = vsel %vm5152, %v5120, %v5184
      %v5217 = vsel %vm5153, %v5121, %v5185
      %v5218 = vsel %vm5154, %v5122, %v5186
      %v5219 = vsel %vm5155, %v5123, %v5187
      %v5220 = vsel %vm5156, %v5124, %v5188
      %v5221 = vsel %vm5157, %v5125, %v5189
      %v5222 = vsel %vm5158, %v5126, %v5190
      %v5223 = vsel %vm5159, %v5127, %v5191
      %5224 = vst [vmem:[#allocation2] sm:$0xf] 0
      %5225 = vst [vmem:[#allocation2 + $0x4] sm:$0xf] 0
      %5226 = vst [vmem:[#allocation2 + $0x8] sm:$0x1] 0
      %5227 = vst [vmem:[#allocation2 + $0xc] sm:$0xf] 0
      %5228 = vst [vmem:[#allocation2 + $0x10] sm:$0xf] 0
      %5229 = vst [vmem:[#allocation2 + $0x14] sm:$0x1] 0
      %5230 = vst [vmem:[#allocation2 + $0x18] sm:$0xf] 0
      %5231 = vst [vmem:[#allocation2 + $0x1c] sm:$0xf] 0
      %5232 = vst [vmem:[#allocation2 + $0x20] sm:$0x1] 0
      %5233 = vst [vmem:[#allocation2 + $0x24] sm:$0xf] 0
      %5234 = vst [vmem:[#allocation2 + $0x28] sm:$0xf] 0
      %5235 = vst [vmem:[#allocation2 + $0x2c] sm:$0x1] 0
      %5236 = vst [vmem:[#allocation2 + $0x30] sm:$0xf] 0
      %5237 = vst [vmem:[#allocation2 + $0x34] sm:$0xf] 0
      %5238 = vst [vmem:[#allocation2 + $0x38] sm:$0x1] 0
      %5239 = vst [vmem:[#allocation2 + $0x3c] sm:$0xf] 0
      %5240 = vst [vmem:[#allocation2 + $0x40] sm:$0xf] 0
      %5241 = vst [vmem:[#allocation2 + $0x44] sm:$0x1] 0
      %5242 = vst [vmem:[#allocation2 + $0x48] sm:$0xf] 0
      %5243 = vst [vmem:[#allocation2 + $0x4c] sm:$0xf] 0
      %5244 = vst [vmem:[#allocation2 + $0x50] sm:$0x1] 0
      %5245 = vst [vmem:[#allocation2 + $0x54] sm:$0xf] 0
      %5246 = vst [vmem:[#allocation2 + $0x58] sm:$0xf] 0
      %5247 = vst [vmem:[#allocation2 + $0x5c] sm:$0x1] 0
      %5248 = vst [vmem:[#allocation2 + $0x60] sm:$0xf] 0
      %5249 = vst [vmem:[#allocation2 + $0x64] sm:$0xf] 0
      %5250 = vst [vmem:[#allocation2 + $0x68] sm:$0x1] 0
      %5251 = vst [vmem:[#allocation2 + $0x6c] sm:$0xf] 0
      %5252 = vst [vmem:[#allocation2 + $0x70] sm:$0xf] 0
      %5253 = vst [vmem:[#allocation2 + $0x74] sm:$0x1] 0
      %5254 = vst [vmem:[#allocation2 + $0x78] sm:$0xf] 0
      %5255 = vst [vmem:[#allocation2 + $0x7c] sm:$0xf] 0
      %5256 = vst [vmem:[#allocation2 + $0x80] sm:$0x1] 0
      %5257 = vst [vmem:[#allocation2 + $0x84] sm:$0xf] 0
      %5258 = vst [vmem:[#allocation2 + $0x88] sm:$0xf] 0
      %5259 = vst [vmem:[#allocation2 + $0x8c] sm:$0x1] 0
      %5260 = vst [vmem:[#allocation2 + $0x90] sm:$0xf] 0
      %5261 = vst [vmem:[#allocation2 + $0x94] sm:$0xf] 0
      %5262 = vst [vmem:[#allocation2 + $0x98] sm:$0x1] 0
      %5263 = vst [vmem:[#allocation2 + $0x9c] sm:$0xf] 0
      %5264 = vst [vmem:[#allocation2 + $0xa0] sm:$0xf] 0
      %5265 = vst [vmem:[#allocation2 + $0xa4] sm:$0x1] 0
      %5266 = vst [vmem:[#allocation2 + $0xa8] sm:$0xf] 0
      %5267 = vst [vmem:[#allocation2 + $0xac] sm:$0xf] 0
      %5268 = vst [vmem:[#allocation2 + $0xb0] sm:$0x1] 0
      %5269 = vst [vmem:[#allocation2 + $0xb4] sm:$0xf] 0
      %5270 = vst [vmem:[#allocation2 + $0xb8] sm:$0xf] 0
      %5271 = vst [vmem:[#allocation2 + $0xbc] sm:$0x1] 0
      %5272 = vst [vmem:[#allocation2 + $0xc0] sm:$0xf] 0
      %5273 = vst [vmem:[#allocation2 + $0xc4] sm:$0xf] 0
      %5274 = vst [vmem:[#allocation2 + $0xc8] sm:$0x1] 0
      %5275 = vst [vmem:[#allocation2 + $0xcc] sm:$0xf] 0
      %5276 = vst [vmem:[#allocation2 + $0xd0] sm:$0xf] 0
      %5277 = vst [vmem:[#allocation2 + $0xd4] sm:$0x1] 0
      %v5278 = vpack.c.bf16 %v5193, %v5192
      %v5279 = vpack.c.bf16 %v5195, %v5194
      %v5280 = vpack.c.bf16 %v5197, %v5196
      %v5281 = vpack.c.bf16 %v5199, %v5198
      %v5282 = vpack.c.bf16 %v5201, %v5200
      %v5283 = vpack.c.bf16 %v5203, %v5202
      %v5284 = vpack.c.bf16 %v5205, %v5204
      %v5285 = vpack.c.bf16 %v5207, %v5206
      %v5286 = vpack.c.bf16 %v5209, %v5208
      %v5287 = vpack.c.bf16 %v5211, %v5210
      %v5288 = vpack.c.bf16 %v5213, %v5212
      %v5289 = vpack.c.bf16 %v5215, %v5214
      %v5290 = vpack.c.bf16 %v5217, %v5216
      %v5291 = vpack.c.bf16 %v5219, %v5218
      %v5292 = vpack.c.bf16 %v5221, %v5220
      %v5293 = vpack.c.bf16 %v5223, %v5222
      %v5310 = vunpack.c.l.b16 %v5278
      %v5311 = vunpack.c.h.b16 %v5278
      %v5312 = vunpack.c.l.b16 %v5279
      %v5313 = vunpack.c.h.b16 %v5279
      %v5314 = vunpack.c.l.b16 %v5280
      %v5315 = vunpack.c.h.b16 %v5280
      %v5316 = vunpack.c.l.b16 %v5281
      %v5317 = vunpack.c.h.b16 %v5281
      %v5318 = vunpack.c.l.b16 %v5282
      %v5319 = vunpack.c.h.b16 %v5282
      %v5320 = vunpack.c.l.b16 %v5283
      %v5321 = vunpack.c.h.b16 %v5283
      %v5322 = vunpack.c.l.b16 %v5284
      %v5323 = vunpack.c.h.b16 %v5284
      %v5324 = vunpack.c.l.b16 %v5285
      %v5325 = vunpack.c.h.b16 %v5285
      %v5326 = vunpack.c.l.b16 %v5286
      %v5327 = vunpack.c.h.b16 %v5286
      %v5328 = vunpack.c.l.b16 %v5287
      %v5329 = vunpack.c.h.b16 %v5287
      %v5330 = vunpack.c.l.b16 %v5288
      %v5331 = vunpack.c.h.b16 %v5288
      %v5332 = vunpack.c.l.b16 %v5289
      %v5333 = vunpack.c.h.b16 %v5289
      %v5334 = vunpack.c.l.b16 %v5290
      %v5335 = vunpack.c.h.b16 %v5290
      %v5336 = vunpack.c.l.b16 %v5291
      %v5337 = vunpack.c.h.b16 %v5291
      %v5338 = vunpack.c.l.b16 %v5292
      %v5339 = vunpack.c.h.b16 %v5292
      %v5340 = vunpack.c.l.b16 %v5293
      %v5341 = vunpack.c.h.b16 %v5293
      %v5342 = vpack.c.b16 %v5310, %v5310
      %v5343 = vpack.c.b16 %v5311, %v5311
      %v5344 = vpack.c.b16 %v5312, %v5312
      %v5345 = vpack.c.b16 %v5313, %v5313
      %v5346 = vpack.c.b16 %v5314, %v5314
      %v5347 = vpack.c.b16 %v5315, %v5315
      %v5348 = vpack.c.b16 %v5316, %v5316
      %v5349 = vpack.c.b16 %v5317, %v5317
      %v5350 = vpack.c.b16 %v5318, %v5318
      %v5351 = vpack.c.b16 %v5319, %v5319
      %v5352 = vpack.c.b16 %v5320, %v5320
      %v5353 = vpack.c.b16 %v5321, %v5321
      %v5354 = vpack.c.b16 %v5322, %v5322
      %v5355 = vpack.c.b16 %v5323, %v5323
      %v5356 = vpack.c.b16 %v5324, %v5324
      %v5357 = vpack.c.b16 %v5325, %v5325
      %v5358 = vpack.c.b16 %v5326, %v5326
      %v5359 = vpack.c.b16 %v5327, %v5327
      %v5360 = vpack.c.b16 %v5328, %v5328
      %v5361 = vpack.c.b16 %v5329, %v5329
      %v5362 = vpack.c.b16 %v5330, %v5330
      %v5363 = vpack.c.b16 %v5331, %v5331
      %v5364 = vpack.c.b16 %v5332, %v5332
      %v5365 = vpack.c.b16 %v5333, %v5333
      %v5366 = vpack.c.b16 %v5334, %v5334
      %v5367 = vpack.c.b16 %v5335, %v5335
      %v5368 = vpack.c.b16 %v5336, %v5336
      %v5369 = vpack.c.b16 %v5337, %v5337
      %v5370 = vpack.c.b16 %v5338, %v5338
      %v5371 = vpack.c.b16 %v5339, %v5339
      %v5372 = vpack.c.b16 %v5340, %v5340
      %v5373 = vpack.c.b16 %v5341, %v5341
      %vm5374 = vsmask.f32 256
      %vm5375 = vsmask.f32 4368
      %vm5376 = vmor %vm5374, %vm5375
      %v5378 = vshrl.u32 %v5342, 16
      %v5380 = vrot.slane %v5378, 7
      %v5381 = vshll.u32 %v5342, 16
      %v5383 = vor.u32 %v5380, %v5381
      %v5384 = vrot.slane %v5380, 4
      %v5386 = vshrl.u32 %v5343, 16
      %v5388 = vrot.slane %v5386, 7
      %v5389 = vshll.u32 %v5343, 16
      %v5391 = vor.u32 %v5388, %v5389
      %v5392 = vsel %vm5376, %v5384, %v5391
      %v5393 = vrot.slane %v5388, 4
      %v5395 = vshrl.u32 %v5344, 16
      %v5397 = vrot.slane %v5395, 7
      %v5398 = vshll.u32 %v5344, 16
      %v5400 = vor.u32 %v5397, %v5398
      %v5401 = vrot.slane %v5397, 4
      %v5403 = vshrl.u32 %v5345, 16
      %v5405 = vrot.slane %v5403, 7
      %v5406 = vshll.u32 %v5345, 16
      %v5408 = vor.u32 %v5405, %v5406
      %v5409 = vsel %vm5376, %v5401, %v5408
      %v5410 = vrot.slane %v5405, 4
      %v5412 = vshrl.u32 %v5346, 16
      %v5414 = vrot.slane %v5412, 7
      %v5415 = vshll.u32 %v5346, 16
      %v5417 = vor.u32 %v5414, %v5415
      %v5418 = vrot.slane %v5414, 4
      %v5420 = vshrl.u32 %v5347, 16
      %v5422 = vrot.slane %v5420, 7
      %v5423 = vshll.u32 %v5347, 16
      %v5425 = vor.u32 %v5422, %v5423
      %v5426 = vsel %vm5376, %v5418, %v5425
      %v5427 = vrot.slane %v5422, 4
      %v5429 = vshrl.u32 %v5348, 16
      %v5431 = vrot.slane %v5429, 7
      %v5432 = vshll.u32 %v5348, 16
      %v5434 = vor.u32 %v5431, %v5432
      %v5435 = vrot.slane %v5431, 4
      %v5437 = vshrl.u32 %v5349, 16
      %v5439 = vrot.slane %v5437, 7
      %v5440 = vshll.u32 %v5349, 16
      %v5442 = vor.u32 %v5439, %v5440
      %v5443 = vsel %vm5376, %v5435, %v5442
      %v5444 = vrot.slane %v5439, 4
      %v5446 = vshrl.u32 %v5350, 16
      %v5448 = vrot.slane %v5446, 7
      %v5449 = vshll.u32 %v5350, 16
      %v5451 = vor.u32 %v5448, %v5449
      %v5452 = vrot.slane %v5448, 4
      %v5454 = vshrl.u32 %v5351, 16
      %v5456 = vrot.slane %v5454, 7
      %v5457 = vshll.u32 %v5351, 16
      %v5459 = vor.u32 %v5456, %v5457
      %v5460 = vsel %vm5376, %v5452, %v5459
      %v5461 = vrot.slane %v5456, 4
      %v5463 = vshrl.u32 %v5352, 16
      %v5465 = vrot.slane %v5463, 7
      %v5466 = vshll.u32 %v5352, 16
      %v5468 = vor.u32 %v5465, %v5466
      %v5469 = vrot.slane %v5465, 4
      %v5471 = vshrl.u32 %v5353, 16
      %v5473 = vrot.slane %v5471, 7
      %v5474 = vshll.u32 %v5353, 16
      %v5476 = vor.u32 %v5473, %v5474
      %v5477 = vsel %vm5376, %v5469, %v5476
      %v5478 = vrot.slane %v5473, 4
      %v5480 = vshrl.u32 %v5354, 16
      %v5482 = vrot.slane %v5480, 7
      %v5483 = vshll.u32 %v5354, 16
      %v5485 = vor.u32 %v5482, %v5483
      %v5486 = vrot.slane %v5482, 4
      %v5488 = vshrl.u32 %v5355, 16
      %v5490 = vrot.slane %v5488, 7
      %v5491 = vshll.u32 %v5355, 16
      %v5493 = vor.u32 %v5490, %v5491
      %v5494 = vsel %vm5376, %v5486, %v5493
      %v5495 = vrot.slane %v5490, 4
      %v5497 = vshrl.u32 %v5356, 16
      %v5499 = vrot.slane %v5497, 7
      %v5500 = vshll.u32 %v5356, 16
      %v5502 = vor.u32 %v5499, %v5500
      %v5503 = vrot.slane %v5499, 4
      %v5505 = vshrl.u32 %v5357, 16
      %v5507 = vrot.slane %v5505, 7
      %v5508 = vshll.u32 %v5357, 16
      %v5510 = vor.u32 %v5507, %v5508
      %v5511 = vsel %vm5376, %v5503, %v5510
      %v5512 = vrot.slane %v5507, 4
      %v5514 = vshrl.u32 %v5358, 16
      %v5516 = vrot.slane %v5514, 7
      %v5517 = vshll.u32 %v5358, 16
      %v5519 = vor.u32 %v5516, %v5517
      %v5520 = vrot.slane %v5516, 4
      %v5522 = vshrl.u32 %v5359, 16
      %v5524 = vrot.slane %v5522, 7
      %v5525 = vshll.u32 %v5359, 16
      %v5527 = vor.u32 %v5524, %v5525
      %v5528 = vsel %vm5376, %v5520, %v5527
      %v5529 = vrot.slane %v5524, 4
      %v5531 = vshrl.u32 %v5360, 16
      %v5533 = vrot.slane %v5531, 7
      %v5534 = vshll.u32 %v5360, 16
      %v5536 = vor.u32 %v5533, %v5534
      %v5537 = vrot.slane %v5533, 4
      %v5539 = vshrl.u32 %v5361, 16
      %v5541 = vrot.slane %v5539, 7
      %v5542 = vshll.u32 %v5361, 16
      %v5544 = vor.u32 %v5541, %v5542
      %v5545 = vsel %vm5376, %v5537, %v5544
      %v5546 = vrot.slane %v5541, 4
      %v5548 = vshrl.u32 %v5362, 16
      %v5550 = vrot.slane %v5548, 7
      %v5551 = vshll.u32 %v5362, 16
      %v5553 = vor.u32 %v5550, %v5551
      %v5554 = vrot.slane %v5550, 4
      %v5556 = vshrl.u32 %v5363, 16
      %v5558 = vrot.slane %v5556, 7
      %v5559 = vshll.u32 %v5363, 16
      %v5561 = vor.u32 %v5558, %v5559
      %v5562 = vsel %vm5376, %v5554, %v5561
      %v5563 = vrot.slane %v5558, 4
      %v5565 = vshrl.u32 %v5364, 16
      %v5567 = vrot.slane %v5565, 7
      %v5568 = vshll.u32 %v5364, 16
      %v5570 = vor.u32 %v5567, %v5568
      %v5571 = vrot.slane %v5567, 4
      %v5573 = vshrl.u32 %v5365, 16
      %v5575 = vrot.slane %v5573, 7
      %v5576 = vshll.u32 %v5365, 16
      %v5578 = vor.u32 %v5575, %v5576
      %v5579 = vsel %vm5376, %v5571, %v5578
      %v5580 = vrot.slane %v5575, 4
      %v5582 = vshrl.u32 %v5366, 16
      %v5584 = vrot.slane %v5582, 7
      %v5585 = vshll.u32 %v5366, 16
      %v5587 = vor.u32 %v5584, %v5585
      %v5588 = vrot.slane %v5584, 4
      %v5590 = vshrl.u32 %v5367, 16
      %v5592 = vrot.slane %v5590, 7
      %v5593 = vshll.u32 %v5367, 16
      %v5595 = vor.u32 %v5592, %v5593
      %v5596 = vsel %vm5376, %v5588, %v5595
      %v5597 = vrot.slane %v5592, 4
      %v5599 = vshrl.u32 %v5368, 16
      %v5601 = vrot.slane %v5599, 7
      %v5602 = vshll.u32 %v5368, 16
      %v5604 = vor.u32 %v5601, %v5602
      %v5605 = vrot.slane %v5601, 4
      %v5607 = vshrl.u32 %v5369, 16
      %v5609 = vrot.slane %v5607, 7
      %v5610 = vshll.u32 %v5369, 16
      %v5612 = vor.u32 %v5609, %v5610
      %v5613 = vsel %vm5376, %v5605, %v5612
      %v5614 = vrot.slane %v5609, 4
      %v5616 = vshrl.u32 %v5370, 16
      %v5618 = vrot.slane %v5616, 7
      %v5619 = vshll.u32 %v5370, 16
      %v5621 = vor.u32 %v5618, %v5619
      %v5622 = vrot.slane %v5618, 4
      %v5624 = vshrl.u32 %v5371, 16
      %v5626 = vrot.slane %v5624, 7
      %v5627 = vshll.u32 %v5371, 16
      %v5629 = vor.u32 %v5626, %v5627
      %v5630 = vsel %vm5376, %v5622, %v5629
      %v5631 = vrot.slane %v5626, 4
      %v5633 = vshrl.u32 %v5372, 16
      %v5635 = vrot.slane %v5633, 7
      %v5636 = vshll.u32 %v5372, 16
      %v5638 = vor.u32 %v5635, %v5636
      %v5639 = vrot.slane %v5635, 4
      %v5641 = vshrl.u32 %v5373, 16
      %v5643 = vrot.slane %v5641, 7
      %v5644 = vshll.u32 %v5373, 16
      %v5646 = vor.u32 %v5643, %v5644
      %v5647 = vsel %vm5376, %v5639, %v5646
      %v5648 = vrot.slane %v5643, 4
      %s5697 = scalar_lea.vmem [#allocation2], 12
      %vm5698 = vcmask 1043456
      %vm5699 = vsmask.f32 7938
      %vm5700 = vmand %vm5698, %vm5699
      %v5701 = vld [vmem:[%s5697] sm:$0xf]
      %v5702 = vsel %vm5700, %v5383, %v5701
      %5703 = vst [vmem:[%s5697] sm:$0xf] %v5702
      %5704 = vst [vmem:[%s5697 + $0x4] sm:$0xf] %v5392
      %vm5705 = vcmask 1040384
      %vm5706 = vmand %vm5705, %vm5374
      %v5707 = vld [vmem:[%s5697 + $0x8] sm:$0x1]
      %v5708 = vsel %vm5706, %v5393, %v5707
      %5709 = vst [vmem:[%s5697 + $0x8] sm:$0x1] %v5708
      %v5710 = vld [vmem:[%s5697 + $0xc] sm:$0xf]
      %v5711 = vsel %vm5700, %v5400, %v5710
      %5712 = vst [vmem:[%s5697 + $0xc] sm:$0xf] %v5711
      %5713 = vst [vmem:[%s5697 + $0x10] sm:$0xf] %v5409
      %v5714 = vld [vmem:[%s5697 + $0x14] sm:$0x1]
      %v5715 = vsel %vm5706, %v5410, %v5714
      %5716 = vst [vmem:[%s5697 + $0x14] sm:$0x1] %v5715
      %v5717 = vld [vmem:[%s5697 + $0x18] sm:$0xf]
      %v5718 = vsel %vm5700, %v5417, %v5717
      %5719 = vst [vmem:[%s5697 + $0x18] sm:$0xf] %v5718
      %5720 = vst [vmem:[%s5697 + $0x1c] sm:$0xf] %v5426
      %v5721 = vld [vmem:[%s5697 + $0x20] sm:$0x1]
      %v5722 = vsel %vm5706, %v5427, %v5721
      %5723 = vst [vmem:[%s5697 + $0x20] sm:$0x1] %v5722
      %v5724 = vld [vmem:[%s5697 + $0x24] sm:$0xf]
      %v5725 = vsel %vm5700, %v5434, %v5724
      %5726 = vst [vmem:[%s5697 + $0x24] sm:$0xf] %v5725
      %5727 = vst [vmem:[%s5697 + $0x28] sm:$0xf] %v5443
      %v5728 = vld [vmem:[%s5697 + $0x2c] sm:$0x1]
      %v5729 = vsel %vm5706, %v5444, %v5728
      %5730 = vst [vmem:[%s5697 + $0x2c] sm:$0x1] %v5729
      %v5731 = vld [vmem:[%s5697 + $0x30] sm:$0xf]
      %v5732 = vsel %vm5700, %v5451, %v5731
      %5733 = vst [vmem:[%s5697 + $0x30] sm:$0xf] %v5732
      %5734 = vst [vmem:[%s5697 + $0x34] sm:$0xf] %v5460
      %v5735 = vld [vmem:[%s5697 + $0x38] sm:$0x1]
      %v5736 = vsel %vm5706, %v5461, %v5735
      %5737 = vst [vmem:[%s5697 + $0x38] sm:$0x1] %v5736
      %v5738 = vld [vmem:[%s5697 + $0x3c] sm:$0xf]
      %v5739 = vsel %vm5700, %v5468, %v5738
      %5740 = vst [vmem:[%s5697 + $0x3c] sm:$0xf] %v5739
      %5741 = vst [vmem:[%s5697 + $0x40] sm:$0xf] %v5477
      %v5742 = vld [vmem:[%s5697 + $0x44] sm:$0x1]
      %v5743 = vsel %vm5706, %v5478, %v5742
      %5744 = vst [vmem:[%s5697 + $0x44] sm:$0x1] %v5743
      %v5745 = vld [vmem:[%s5697 + $0x48] sm:$0xf]
      %v5746 = vsel %vm5700, %v5485, %v5745
      %5747 = vst [vmem:[%s5697 + $0x48] sm:$0xf] %v5746
      %5748 = vst [vmem:[%s5697 + $0x4c] sm:$0xf] %v5494
      %v5749 = vld [vmem:[%s5697 + $0x50] sm:$0x1]
      %v5750 = vsel %vm5706, %v5495, %v5749
      %5751 = vst [vmem:[%s5697 + $0x50] sm:$0x1] %v5750
      %v5752 = vld [vmem:[%s5697 + $0x54] sm:$0xf]
      %v5753 = vsel %vm5700, %v5502, %v5752
      %5754 = vst [vmem:[%s5697 + $0x54] sm:$0xf] %v5753
      %5755 = vst [vmem:[%s5697 + $0x58] sm:$0xf] %v5511
      %v5756 = vld [vmem:[%s5697 + $0x5c] sm:$0x1]
      %v5757 = vsel %vm5706, %v5512, %v5756
      %5758 = vst [vmem:[%s5697 + $0x5c] sm:$0x1] %v5757
      %v5759 = vld [vmem:[%s5697 + $0x60] sm:$0xf]
      %v5760 = vsel %vm5700, %v5519, %v5759
      %5761 = vst [vmem:[%s5697 + $0x60] sm:$0xf] %v5760
      %5762 = vst [vmem:[%s5697 + $0x64] sm:$0xf] %v5528
      %v5763 = vld [vmem:[%s5697 + $0x68] sm:$0x1]
      %v5764 = vsel %vm5706, %v5529, %v5763
      %5765 = vst [vmem:[%s5697 + $0x68] sm:$0x1] %v5764
      %v5766 = vld [vmem:[%s5697 + $0x6c] sm:$0xf]
      %v5767 = vsel %vm5700, %v5536, %v5766
      %5768 = vst [vmem:[%s5697 + $0x6c] sm:$0xf] %v5767
      %5769 = vst [vmem:[%s5697 + $0x70] sm:$0xf] %v5545
      %v5770 = vld [vmem:[%s5697 + $0x74] sm:$0x1]
      %v5771 = vsel %vm5706, %v5546, %v5770
      %5772 = vst [vmem:[%s5697 + $0x74] sm:$0x1] %v5771
      %v5773 = vld [vmem:[%s5697 + $0x78] sm:$0xf]
      %v5774 = vsel %vm5700, %v5553, %v5773
      %5775 = vst [vmem:[%s5697 + $0x78] sm:$0xf] %v5774
      %5776 = vst [vmem:[%s5697 + $0x7c] sm:$0xf] %v5562
      %v5777 = vld [vmem:[%s5697 + $0x80] sm:$0x1]
      %v5778 = vsel %vm5706, %v5563, %v5777
      %5779 = vst [vmem:[%s5697 + $0x80] sm:$0x1] %v5778
      %v5780 = vld [vmem:[%s5697 + $0x84] sm:$0xf]
      %v5781 = vsel %vm5700, %v5570, %v5780
      %5782 = vst [vmem:[%s5697 + $0x84] sm:$0xf] %v5781
      %5783 = vst [vmem:[%s5697 + $0x88] sm:$0xf] %v5579
      %v5784 = vld [vmem:[%s5697 + $0x8c] sm:$0x1]
      %v5785 = vsel %vm5706, %v5580, %v5784
      %5786 = vst [vmem:[%s5697 + $0x8c] sm:$0x1] %v5785
      %v5787 = vld [vmem:[%s5697 + $0x90] sm:$0xf]
      %v5788 = vsel %vm5700, %v5587, %v5787
      %5789 = vst [vmem:[%s5697 + $0x90] sm:$0xf] %v5788
      %5790 = vst [vmem:[%s5697 + $0x94] sm:$0xf] %v5596
      %v5791 = vld [vmem:[%s5697 + $0x98] sm:$0x1]
      %v5792 = vsel %vm5706, %v5597, %v5791
      %5793 = vst [vmem:[%s5697 + $0x98] sm:$0x1] %v5792
      %v5794 = vld [vmem:[%s5697 + $0x9c] sm:$0xf]
      %v5795 = vsel %vm5700, %v5604, %v5794
      %5796 = vst [vmem:[%s5697 + $0x9c] sm:$0xf] %v5795
      %5797 = vst [vmem:[%s5697 + $0xa0] sm:$0xf] %v5613
      %v5798 = vld [vmem:[%s5697 + $0xa4] sm:$0x1]
      %v5799 = vsel %vm5706, %v5614, %v5798
      %5800 = vst [vmem:[%s5697 + $0xa4] sm:$0x1] %v5799
      %v5801 = vld [vmem:[%s5697 + $0xa8] sm:$0xf]
      %v5802 = vsel %vm5700, %v5621, %v5801
      %5803 = vst [vmem:[%s5697 + $0xa8] sm:$0xf] %v5802
      %5804 = vst [vmem:[%s5697 + $0xac] sm:$0xf] %v5630
      %v5805 = vld [vmem:[%s5697 + $0xb0] sm:$0x1]
      %v5806 = vsel %vm5706, %v5631, %v5805
      %5807 = vst [vmem:[%s5697 + $0xb0] sm:$0x1] %v5806
      %v5808 = vld [vmem:[%s5697 + $0xb4] sm:$0xf]
      %v5809 = vsel %vm5700, %v5638, %v5808
      %5810 = vst [vmem:[%s5697 + $0xb4] sm:$0xf] %v5809
      %5811 = vst [vmem:[%s5697 + $0xb8] sm:$0xf] %v5647
      %v5812 = vld [vmem:[%s5697 + $0xbc] sm:$0x1]
      %v5813 = vsel %vm5706, %v5648, %v5812
      %5814 = vst [vmem:[%s5697 + $0xbc] sm:$0x1] %v5813
      %v5815 = vld [vmem:[#allocation2] sm:$0xf]
      %v5816 = vld [vmem:[#allocation2 + $0x4] sm:$0xf]
      %v5817 = vld [vmem:[#allocation2 + $0xc] sm:$0xf]
      %v5818 = vld [vmem:[#allocation2 + $0x10] sm:$0xf]
      %v5819 = vld [vmem:[#allocation2 + $0x18] sm:$0xf]
      %v5820 = vld [vmem:[#allocation2 + $0x1c] sm:$0xf]
      %v5821 = vld [vmem:[#allocation2 + $0x24] sm:$0xf]
      %v5822 = vld [vmem:[#allocation2 + $0x28] sm:$0xf]
      %v5823 = vld [vmem:[#allocation2 + $0x30] sm:$0xf]
      %v5824 = vld [vmem:[#allocation2 + $0x34] sm:$0xf]
      %v5825 = vld [vmem:[#allocation2 + $0x3c] sm:$0xf]
      %v5826 = vld [vmem:[#allocation2 + $0x40] sm:$0xf]
      %v5827 = vld [vmem:[#allocation2 + $0x48] sm:$0xf]
      %v5828 = vld [vmem:[#allocation2 + $0x4c] sm:$0xf]
      %v5829 = vld [vmem:[#allocation2 + $0x54] sm:$0xf]
      %v5830 = vld [vmem:[#allocation2 + $0x58] sm:$0xf]
      %v5831 = vld [vmem:[#allocation2 + $0x60] sm:$0xf]
      %v5832 = vld [vmem:[#allocation2 + $0x64] sm:$0xf]
      %v5833 = vld [vmem:[#allocation2 + $0x6c] sm:$0xf]
      %v5834 = vld [vmem:[#allocation2 + $0x70] sm:$0xf]
      %v5835 = vld [vmem:[#allocation2 + $0x78] sm:$0xf]
      %v5836 = vld [vmem:[#allocation2 + $0x7c] sm:$0xf]
      %v5837 = vld [vmem:[#allocation2 + $0x84] sm:$0xf]
      %v5838 = vld [vmem:[#allocation2 + $0x88] sm:$0xf]
      %v5839 = vld [vmem:[#allocation2 + $0x90] sm:$0xf]
      %v5840 = vld [vmem:[#allocation2 + $0x94] sm:$0xf]
      %v5841 = vld [vmem:[#allocation2 + $0x9c] sm:$0xf]
      %v5842 = vld [vmem:[#allocation2 + $0xa0] sm:$0xf]
      %v5843 = vld [vmem:[#allocation2 + $0xa8] sm:$0xf]
      %v5844 = vld [vmem:[#allocation2 + $0xac] sm:$0xf]
      %v5845 = vld [vmem:[#allocation2 + $0xb4] sm:$0xf]
      %v5846 = vld [vmem:[#allocation2 + $0xb8] sm:$0xf]
      %v5847 = vld [vmem:[%s3] sm:$0xf]
      %v5848 = vld [vmem:[%s3 + $0x4] sm:$0xf]
      %v5849 = vld [vmem:[%s3 + $0x8] sm:$0xf]
      %v5850 = vld [vmem:[%s3 + $0xc] sm:$0xf]
      %v5851 = vld [vmem:[%s3 + $0x10] sm:$0xf]
      %v5852 = vld [vmem:[%s3 + $0x14] sm:$0xf]
      %v5853 = vld [vmem:[%s3 + $0x18] sm:$0xf]
      %v5854 = vld [vmem:[%s3 + $0x1c] sm:$0xf]
      %v5855 = vld [vmem:[%s3 + $0x20] sm:$0xf]
      %v5856 = vld [vmem:[%s3 + $0x24] sm:$0xf]
      %v5857 = vld [vmem:[%s3 + $0x28] sm:$0xf]
      %v5858 = vld [vmem:[%s3 + $0x2c] sm:$0xf]
      %v5859 = vld [vmem:[%s3 + $0x30] sm:$0xf]
      %v5860 = vld [vmem:[%s3 + $0x34] sm:$0xf]
      %v5861 = vld [vmem:[%s3 + $0x38] sm:$0xf]
      %v5862 = vld [vmem:[%s3 + $0x3c] sm:$0xf]
      %v5863 = vld [vmem:[#allocation2 + $0x8] sm:$0x1]
      %v5864 = vld [vmem:[#allocation2 + $0x14] sm:$0x1]
      %v5865 = vld [vmem:[#allocation2 + $0x20] sm:$0x1]
      %v5866 = vld [vmem:[#allocation2 + $0x2c] sm:$0x1]
      %v5867 = vld [vmem:[#allocation2 + $0x38] sm:$0x1]
      %v5868 = vld [vmem:[#allocation2 + $0x44] sm:$0x1]
      %v5869 = vld [vmem:[#allocation2 + $0x50] sm:$0x1]
      %v5870 = vld [vmem:[#allocation2 + $0x5c] sm:$0x1]
      %v5871 = vld [vmem:[#allocation2 + $0x68] sm:$0x1]
      %v5872 = vld [vmem:[#allocation2 + $0x74] sm:$0x1]
      %v5873 = vld [vmem:[#allocation2 + $0x80] sm:$0x1]
      %v5874 = vld [vmem:[#allocation2 + $0x8c] sm:$0x1]
      %v5875 = vld [vmem:[#allocation2 + $0x98] sm:$0x1]
      %v5876 = vld [vmem:[#allocation2 + $0xa4] sm:$0x1]
      %v5877 = vld [vmem:[#allocation2 + $0xb0] sm:$0x1]
      %v5878 = vld [vmem:[#allocation2 + $0xbc] sm:$0x1]
      %v5880 = vshrl.u32 %v5815, 16
      %v5882 = vrot.slane %v5880, 4
      %v5883 = vshll.u32 %v5815, 16
      %v5885 = vrot.slane %v5883, 5
      %v5886 = vor.u32 %v5882, %v5885
      %v5887 = vrot.slane %v5886, 4
      %v5889 = vshll.u32 %v5816, 16
      %v5891 = vrot.slane %v5889, 5
      %v5892 = vsel %vm346, %v5887, %v5891
      %v5893 = vshrl.u32 %v5816, 16
      %v5895 = vrot.slane %v5893, 4
      %v5896 = vor.u32 %v5895, %v5891
      %v5897 = vrot.slane %v5896, 4
      %v5899 = vshll.u32 %v5863, 16
      %v5901 = vrot.slane %v5899, 5
      %v5902 = vsel %vm346, %v5897, %v5901
      %v5904 = vshrl.u32 %v5817, 16
      %v5906 = vrot.slane %v5904, 4
      %v5907 = vshll.u32 %v5817, 16
      %v5909 = vrot.slane %v5907, 5
      %v5910 = vor.u32 %v5906, %v5909
      %v5911 = vrot.slane %v5910, 4
      %v5913 = vshll.u32 %v5818, 16
      %v5915 = vrot.slane %v5913, 5
      %v5916 = vsel %vm346, %v5911, %v5915
      %v5917 = vshrl.u32 %v5818, 16
      %v5919 = vrot.slane %v5917, 4
      %v5920 = vor.u32 %v5919, %v5915
      %v5921 = vrot.slane %v5920, 4
      %v5923 = vshll.u32 %v5864, 16
      %v5925 = vrot.slane %v5923, 5
      %v5926 = vsel %vm346, %v5921, %v5925
      %v5928 = vshrl.u32 %v5819, 16
      %v5930 = vrot.slane %v5928, 4
      %v5931 = vshll.u32 %v5819, 16
      %v5933 = vrot.slane %v5931, 5
      %v5934 = vor.u32 %v5930, %v5933
      %v5935 = vrot.slane %v5934, 4
      %v5937 = vshll.u32 %v5820, 16
      %v5939 = vrot.slane %v5937, 5
      %v5940 = vsel %vm346, %v5935, %v5939
      %v5941 = vshrl.u32 %v5820, 16
      %v5943 = vrot.slane %v5941, 4
      %v5944 = vor.u32 %v5943, %v5939
      %v5945 = vrot.slane %v5944, 4
      %v5947 = vshll.u32 %v5865, 16
      %v5949 = vrot.slane %v5947, 5
      %v5950 = vsel %vm346, %v5945, %v5949
      %v5952 = vshrl.u32 %v5821, 16
      %v5954 = vrot.slane %v5952, 4
      %v5955 = vshll.u32 %v5821, 16
      %v5957 = vrot.slane %v5955, 5
      %v5958 = vor.u32 %v5954, %v5957
      %v5959 = vrot.slane %v5958, 4
      %v5961 = vshll.u32 %v5822, 16
      %v5963 = vrot.slane %v5961, 5
      %v5964 = vsel %vm346, %v5959, %v5963
      %v5965 = vshrl.u32 %v5822, 16
      %v5967 = vrot.slane %v5965, 4
      %v5968 = vor.u32 %v5967, %v5963
      %v5969 = vrot.slane %v5968, 4
      %v5971 = vshll.u32 %v5866, 16
      %v5973 = vrot.slane %v5971, 5
      %v5974 = vsel %vm346, %v5969, %v5973
      %v5976 = vshrl.u32 %v5823, 16
      %v5978 = vrot.slane %v5976, 4
      %v5979 = vshll.u32 %v5823, 16
      %v5981 = vrot.slane %v5979, 5
      %v5982 = vor.u32 %v5978, %v5981
      %v5983 = vrot.slane %v5982, 4
      %v5985 = vshll.u32 %v5824, 16
      %v5987 = vrot.slane %v5985, 5
      %v5988 = vsel %vm346, %v5983, %v5987
      %v5989 = vshrl.u32 %v5824, 16
      %v5991 = vrot.slane %v5989, 4
      %v5992 = vor.u32 %v5991, %v5987
      %v5993 = vrot.slane %v5992, 4
      %v5995 = vshll.u32 %v5867, 16
      %v5997 = vrot.slane %v5995, 5
      %v5998 = vsel %vm346, %v5993, %v5997
      %v6000 = vshrl.u32 %v5825, 16
      %v6002 = vrot.slane %v6000, 4
      %v6003 = vshll.u32 %v5825, 16
      %v6005 = vrot.slane %v6003, 5
      %v6006 = vor.u32 %v6002, %v6005
      %v6007 = vrot.slane %v6006, 4
      %v6009 = vshll.u32 %v5826, 16
      %v6011 = vrot.slane %v6009, 5
      %v6012 = vsel %vm346, %v6007, %v6011
      %v6013 = vshrl.u32 %v5826, 16
      %v6015 = vrot.slane %v6013, 4
      %v6016 = vor.u32 %v6015, %v6011
      %v6017 = vrot.slane %v6016, 4
      %v6019 = vshll.u32 %v5868, 16
      %v6021 = vrot.slane %v6019, 5
      %v6022 = vsel %vm346, %v6017, %v6021
      %v6024 = vshrl.u32 %v5827, 16
      %v6026 = vrot.slane %v6024, 4
      %v6027 = vshll.u32 %v5827, 16
      %v6029 = vrot.slane %v6027, 5
      %v6030 = vor.u32 %v6026, %v6029
      %v6031 = vrot.slane %v6030, 4
      %v6033 = vshll.u32 %v5828, 16
      %v6035 = vrot.slane %v6033, 5
      %v6036 = vsel %vm346, %v6031, %v6035
      %v6037 = vshrl.u32 %v5828, 16
      %v6039 = vrot.slane %v6037, 4
      %v6040 = vor.u32 %v6039, %v6035
      %v6041 = vrot.slane %v6040, 4
      %v6043 = vshll.u32 %v5869, 16
      %v6045 = vrot.slane %v6043, 5
      %v6046 = vsel %vm346, %v6041, %v6045
      %v6048 = vshrl.u32 %v5829, 16
      %v6050 = vrot.slane %v6048, 4
      %v6051 = vshll.u32 %v5829, 16
      %v6053 = vrot.slane %v6051, 5
      %v6054 = vor.u32 %v6050, %v6053
      %v6055 = vrot.slane %v6054, 4
      %v6057 = vshll.u32 %v5830, 16
      %v6059 = vrot.slane %v6057, 5
      %v6060 = vsel %vm346, %v6055, %v6059
      %v6061 = vshrl.u32 %v5830, 16
      %v6063 = vrot.slane %v6061, 4
      %v6064 = vor.u32 %v6063, %v6059
      %v6065 = vrot.slane %v6064, 4
      %v6067 = vshll.u32 %v5870, 16
      %v6069 = vrot.slane %v6067, 5
      %v6070 = vsel %vm346, %v6065, %v6069
      %v6072 = vshrl.u32 %v5831, 16
      %v6074 = vrot.slane %v6072, 4
      %v6075 = vshll.u32 %v5831, 16
      %v6077 = vrot.slane %v6075, 5
      %v6078 = vor.u32 %v6074, %v6077
      %v6079 = vrot.slane %v6078, 4
      %v6081 = vshll.u32 %v5832, 16
      %v6083 = vrot.slane %v6081, 5
      %v6084 = vsel %vm346, %v6079, %v6083
      %v6085 = vshrl.u32 %v5832, 16
      %v6087 = vrot.slane %v6085, 4
      %v6088 = vor.u32 %v6087, %v6083
      %v6089 = vrot.slane %v6088, 4
      %v6091 = vshll.u32 %v5871, 16
      %v6093 = vrot.slane %v6091, 5
      %v6094 = vsel %vm346, %v6089, %v6093
      %v6096 = vshrl.u32 %v5833, 16
      %v6098 = vrot.slane %v6096, 4
      %v6099 = vshll.u32 %v5833, 16
      %v6101 = vrot.slane %v6099, 5
      %v6102 = vor.u32 %v6098, %v6101
      %v6103 = vrot.slane %v6102, 4
      %v6105 = vshll.u32 %v5834, 16
      %v6107 = vrot.slane %v6105, 5
      %v6108 = vsel %vm346, %v6103, %v6107
      %v6109 = vshrl.u32 %v5834, 16
      %v6111 = vrot.slane %v6109, 4
      %v6112 = vor.u32 %v6111, %v6107
      %v6113 = vrot.slane %v6112, 4
      %v6115 = vshll.u32 %v5872, 16
      %v6117 = vrot.slane %v6115, 5
      %v6118 = vsel %vm346, %v6113, %v6117
      %v6120 = vshrl.u32 %v5835, 16
      %v6122 = vrot.slane %v6120, 4
      %v6123 = vshll.u32 %v5835, 16
      %v6125 = vrot.slane %v6123, 5
      %v6126 = vor.u32 %v6122, %v6125
      %v6127 = vrot.slane %v6126, 4
      %v6129 = vshll.u32 %v5836, 16
      %v6131 = vrot.slane %v6129, 5
      %v6132 = vsel %vm346, %v6127, %v6131
      %v6133 = vshrl.u32 %v5836, 16
      %v6135 = vrot.slane %v6133, 4
      %v6136 = vor.u32 %v6135, %v6131
      %v6137 = vrot.slane %v6136, 4
      %v6139 = vshll.u32 %v5873, 16
      %v6141 = vrot.slane %v6139, 5
      %v6142 = vsel %vm346, %v6137, %v6141
      %v6144 = vshrl.u32 %v5837, 16
      %v6146 = vrot.slane %v6144, 4
      %v6147 = vshll.u32 %v5837, 16
      %v6149 = vrot.slane %v6147, 5
      %v6150 = vor.u32 %v6146, %v6149
      %v6151 = vrot.slane %v6150, 4
      %v6153 = vshll.u32 %v5838, 16
      %v6155 = vrot.slane %v6153, 5
      %v6156 = vsel %vm346, %v6151, %v6155
      %v6157 = vshrl.u32 %v5838, 16
      %v6159 = vrot.slane %v6157, 4
      %v6160 = vor.u32 %v6159, %v6155
      %v6161 = vrot.slane %v6160, 4
      %v6163 = vshll.u32 %v5874, 16
      %v6165 = vrot.slane %v6163, 5
      %v6166 = vsel %vm346, %v6161, %v6165
      %v6168 = vshrl.u32 %v5839, 16
      %v6170 = vrot.slane %v6168, 4
      %v6171 = vshll.u32 %v5839, 16
      %v6173 = vrot.slane %v6171, 5
      %v6174 = vor.u32 %v6170, %v6173
      %v6175 = vrot.slane %v6174, 4
      %v6177 = vshll.u32 %v5840, 16
      %v6179 = vrot.slane %v6177, 5
      %v6180 = vsel %vm346, %v6175, %v6179
      %v6181 = vshrl.u32 %v5840, 16
      %v6183 = vrot.slane %v6181, 4
      %v6184 = vor.u32 %v6183, %v6179
      %v6185 = vrot.slane %v6184, 4
      %v6187 = vshll.u32 %v5875, 16
      %v6189 = vrot.slane %v6187, 5
      %v6190 = vsel %vm346, %v6185, %v6189
      %v6192 = vshrl.u32 %v5841, 16
      %v6194 = vrot.slane %v6192, 4
      %v6195 = vshll.u32 %v5841, 16
      %v6197 = vrot.slane %v6195, 5
      %v6198 = vor.u32 %v6194, %v6197
      %v6199 = vrot.slane %v6198, 4
      %v6201 = vshll.u32 %v5842, 16
      %v6203 = vrot.slane %v6201, 5
      %v6204 = vsel %vm346, %v6199, %v6203
      %v6205 = vshrl.u32 %v5842, 16
      %v6207 = vrot.slane %v6205, 4
      %v6208 = vor.u32 %v6207, %v6203
      %v6209 = vrot.slane %v6208, 4
      %v6211 = vshll.u32 %v5876, 16
      %v6213 = vrot.slane %v6211, 5
      %v6214 = vsel %vm346, %v6209, %v6213
      %v6216 = vshrl.u32 %v5843, 16
      %v6218 = vrot.slane %v6216, 4
      %v6219 = vshll.u32 %v5843, 16
      %v6221 = vrot.slane %v6219, 5
      %v6222 = vor.u32 %v6218, %v6221
      %v6223 = vrot.slane %v6222, 4
      %v6225 = vshll.u32 %v5844, 16
      %v6227 = vrot.slane %v6225, 5
      %v6228 = vsel %vm346, %v6223, %v6227
      %v6229 = vshrl.u32 %v5844, 16
      %v6231 = vrot.slane %v6229, 4
      %v6232 = vor.u32 %v6231, %v6227
      %v6233 = vrot.slane %v6232, 4
      %v6235 = vshll.u32 %v5877, 16
      %v6237 = vrot.slane %v6235, 5
      %v6238 = vsel %vm346, %v6233, %v6237
      %v6240 = vshrl.u32 %v5845, 16
      %v6242 = vrot.slane %v6240, 4
      %v6243 = vshll.u32 %v5845, 16
      %v6245 = vrot.slane %v6243, 5
      %v6246 = vor.u32 %v6242, %v6245
      %v6247 = vrot.slane %v6246, 4
      %v6249 = vshll.u32 %v5846, 16
      %v6251 = vrot.slane %v6249, 5
      %v6252 = vsel %vm346, %v6247, %v6251
      %v6253 = vshrl.u32 %v5846, 16
      %v6255 = vrot.slane %v6253, 4
      %v6256 = vor.u32 %v6255, %v6251
      %v6257 = vrot.slane %v6256, 4
      %v6259 = vshll.u32 %v5878, 16
      %v6261 = vrot.slane %v6259, 5
      %v6262 = vsel %vm346, %v6257, %v6261
      %s6263 = scalar_lea.vmem %s3, 64
      %v6264 = vld [vmem:[%s6263] sm:$0xf]
      %v6265 = vld [vmem:[%s6263 + $0x4] sm:$0xf]
      %v6266 = vld [vmem:[%s6263 + $0x8] sm:$0xf]
      %v6267 = vld [vmem:[%s6263 + $0xc] sm:$0xf]
      %v6268 = vld [vmem:[%s6263 + $0x10] sm:$0xf]
      %v6269 = vld [vmem:[%s6263 + $0x14] sm:$0xf]
      %v6270 = vld [vmem:[%s6263 + $0x18] sm:$0xf]
      %v6271 = vld [vmem:[%s6263 + $0x1c] sm:$0xf]
      %v6272 = vld [vmem:[%s6263 + $0x20] sm:$0xf]
      %v6273 = vld [vmem:[%s6263 + $0x24] sm:$0xf]
      %v6274 = vld [vmem:[%s6263 + $0x28] sm:$0xf]
      %v6275 = vld [vmem:[%s6263 + $0x2c] sm:$0xf]
      %v6276 = vld [vmem:[%s6263 + $0x30] sm:$0xf]
      %v6277 = vld [vmem:[%s6263 + $0x34] sm:$0xf]
      %v6278 = vld [vmem:[%s6263 + $0x38] sm:$0xf]
      %v6279 = vld [vmem:[%s6263 + $0x3c] sm:$0xf]
      %v6280 = vunpack.c.l.b16 %v5892
      %v6281 = vunpack.c.l.b16 %v5902
      %v6282 = vunpack.c.l.b16 %v5916
      %v6283 = vunpack.c.l.b16 %v5926
      %v6284 = vunpack.c.l.b16 %v5940
      %v6285 = vunpack.c.l.b16 %v5950
      %v6286 = vunpack.c.l.b16 %v5964
      %v6287 = vunpack.c.l.b16 %v5974
      %v6288 = vunpack.c.l.b16 %v5988
      %v6289 = vunpack.c.l.b16 %v5998
      %v6290 = vunpack.c.l.b16 %v6012
      %v6291 = vunpack.c.l.b16 %v6022
      %v6292 = vunpack.c.l.b16 %v6036
      %v6293 = vunpack.c.l.b16 %v6046
      %v6294 = vunpack.c.l.b16 %v6060
      %v6295 = vunpack.c.l.b16 %v6070
      %v6296 = vunpack.c.l.b16 %v6084
      %v6297 = vunpack.c.l.b16 %v6094
      %v6298 = vunpack.c.l.b16 %v6108
      %v6299 = vunpack.c.l.b16 %v6118
      %v6300 = vunpack.c.l.b16 %v6132
      %v6301 = vunpack.c.l.b16 %v6142
      %v6302 = vunpack.c.l.b16 %v6156
      %v6303 = vunpack.c.l.b16 %v6166
      %v6304 = vunpack.c.l.b16 %v6180
      %v6305 = vunpack.c.l.b16 %v6190
      %v6306 = vunpack.c.l.b16 %v6204
      %v6307 = vunpack.c.l.b16 %v6214
      %v6308 = vunpack.c.l.b16 %v6228
      %v6309 = vunpack.c.l.b16 %v6238
      %v6310 = vunpack.c.l.b16 %v6252
      %v6311 = vunpack.c.l.b16 %v6262
      %v6312 = vpack.c.b16 %v6281, %v6280
      %v6313 = vpack.c.b16 %v6283, %v6282
      %v6314 = vpack.c.b16 %v6285, %v6284
      %v6315 = vpack.c.b16 %v6287, %v6286
      %v6316 = vpack.c.b16 %v6289, %v6288
      %v6317 = vpack.c.b16 %v6291, %v6290
      %v6318 = vpack.c.b16 %v6293, %v6292
      %v6319 = vpack.c.b16 %v6295, %v6294
      %v6320 = vpack.c.b16 %v6297, %v6296
      %v6321 = vpack.c.b16 %v6299, %v6298
      %v6322 = vpack.c.b16 %v6301, %v6300
      %v6323 = vpack.c.b16 %v6303, %v6302
      %v6324 = vpack.c.b16 %v6305, %v6304
      %v6325 = vpack.c.b16 %v6307, %v6306
      %v6326 = vpack.c.b16 %v6309, %v6308
      %v6327 = vpack.c.b16 %v6311, %v6310
      %v6360 = vunpack.c.l.b16 %v6264
      %v6361 = vunpack.c.l.b16 %v6265
      %v6362 = vunpack.c.l.b16 %v6266
      %v6363 = vunpack.c.l.b16 %v6267
      %v6364 = vunpack.c.l.b16 %v6268
      %v6365 = vunpack.c.l.b16 %v6269
      %v6366 = vunpack.c.l.b16 %v6270
      %v6367 = vunpack.c.l.b16 %v6271
      %v6368 = vunpack.c.l.b16 %v6272
      %v6369 = vunpack.c.l.b16 %v6273
      %v6370 = vunpack.c.l.b16 %v6274
      %v6371 = vunpack.c.l.b16 %v6275
      %v6372 = vunpack.c.l.b16 %v6276
      %v6373 = vunpack.c.l.b16 %v6277
      %v6374 = vunpack.c.l.b16 %v6278
      %v6375 = vunpack.c.l.b16 %v6279
      %v6376 = vpack.c.b16 %v6361, %v6360
      %v6377 = vpack.c.b16 %v6363, %v6362
      %v6378 = vpack.c.b16 %v6365, %v6364
      %v6379 = vpack.c.b16 %v6367, %v6366
      %v6380 = vpack.c.b16 %v6369, %v6368
      %v6381 = vpack.c.b16 %v6371, %v6370
      %v6382 = vpack.c.b16 %v6373, %v6372
      %v6383 = vpack.c.b16 %v6375, %v6374
      %6392 = vmatprep.subr.bf16.mxu0 0
      %6393 = vmatpush1.bf16.msra.mxu0 %v6376
      %6394 = vmatprep.subr.bf16.mxu0 0
      %6395 = vmatpush1.bf16.msra.mxu0 %v6377
      %6396 = vmatprep.subr.bf16.mxu0 0
      %6397 = vmatpush1.bf16.msra.mxu0 %v6378
      %6398 = vmatprep.subr.bf16.mxu0 0
      %6399 = vmatpush1.bf16.msra.mxu0 %v6379
      %6400 = vmatprep.subr.bf16.mxu0 0
      %6401 = vmatpush1.bf16.msra.mxu0 %v6380
      %6402 = vmatprep.subr.bf16.mxu0 0
      %6403 = vmatpush1.bf16.msra.mxu0 %v6381
      %6404 = vmatprep.subr.bf16.mxu0 0
      %6405 = vmatpush1.bf16.msra.mxu0 %v6382
      %6406 = vmatprep.subr.bf16.mxu0 0
      %6407 = vmatpush1.bf16.msra.mxu0 %v6383
      %6408 = vmatprep.subr.bf16.mxu0 0
      %6409 = vmatpush1.bf16.msra.mxu0 0
      %6410 = vmatprep.subr.bf16.mxu0 0
      %6411 = vmatpush1.bf16.msra.mxu0 0
      %6412 = vmatprep.subr.bf16.mxu0 0
      %6413 = vmatpush1.bf16.msra.mxu0 0
      %6414 = vmatprep.subr.bf16.mxu0 0
      %6415 = vmatpush1.bf16.msra.mxu0 0
      %6416 = vmatprep.subr.bf16.mxu0 0
      %6417 = vmatpush1.bf16.msra.mxu0 0
      %6418 = vmatprep.subr.bf16.mxu0 0
      %6419 = vmatpush1.bf16.msra.mxu0 0
      %6420 = vmatprep.subr.bf16.mxu0 0
      %6421 = vmatpush1.bf16.msra.mxu0 0
      %6422 = vmatprep.subr.bf16.mxu0 0
      %6423 = vmatpush1.bf16.msra.mxu0 0
      %6424 = vmatprep.mubr.bf16.mxu0 0
      %6425 = vmatmul.mubr.bf16.gmra.mrb[0].mxu0 %v6312
      %v6426 = vpop.f32.mrb[0].mxu0
      %v6427 = vadd.f32 0.0, %v6426
      %v6428 = vpop.f32.mrb[0].mxu0
      %v6429 = vpop.f32.mrb[0].mxu0
      %v6430 = vadd.f32 0.0, %v6429
      %v6431 = vpop.f32.mrb[0].mxu0
      %6432 = vmatprep.mubr.bf16.mxu0 0
      %6433 = vmatmul.mubr.bf16.gmra.mrb[0].mxu0 %v6313
      %v6434 = vpop.f32.mrb[0].mxu0
      %v6435 = vadd.f32 0.0, %v6434
      %v6436 = vpop.f32.mrb[0].mxu0
      %v6437 = vpop.f32.mrb[0].mxu0
      %v6438 = vadd.f32 0.0, %v6437
      %v6439 = vpop.f32.mrb[0].mxu0
      %6440 = vmatprep.mubr.bf16.mxu0 0
      %6441 = vmatmul.mubr.bf16.gmra.mrb[0].mxu0 %v6314
      %v6442 = vpop.f32.mrb[0].mxu0
      %v6443 = vadd.f32 0.0, %v6442
      %v6444 = vpop.f32.mrb[0].mxu0
      %v6445 = vpop.f32.mrb[0].mxu0
      %v6446 = vadd.f32 0.0, %v6445
      %v6447 = vpop.f32.mrb[0].mxu0
      %6448 = vmatprep.mubr.bf16.mxu0 0
      %6449 = vmatmul.mubr.bf16.gmra.mrb[0].mxu0 %v6315
      %v6450 = vpop.f32.mrb[0].mxu0
      %v6451 = vadd.f32 0.0, %v6450
      %v6452 = vpop.f32.mrb[0].mxu0
      %v6453 = vpop.f32.mrb[0].mxu0
      %v6454 = vadd.f32 0.0, %v6453
      %v6455 = vpop.f32.mrb[0].mxu0
      %6456 = vmatprep.mubr.bf16.mxu0 0
      %6457 = vmatmul.mubr.bf16.gmra.mrb[0].mxu0 %v6316
      %v6458 = vpop.f32.mrb[0].mxu0
      %v6459 = vadd.f32 0.0, %v6458
      %v6460 = vpop.f32.mrb[0].mxu0
      %v6461 = vpop.f32.mrb[0].mxu0
      %v6462 = vadd.f32 0.0, %v6461
      %v6463 = vpop.f32.mrb[0].mxu0
      %6464 = vmatprep.mubr.bf16.mxu0 0
      %6465 = vmatmul.mubr.bf16.gmra.mrb[0].mxu0 %v6317
      %v6466 = vpop.f32.mrb[0].mxu0
      %v6467 = vadd.f32 0.0, %v6466
      %v6468 = vpop.f32.mrb[0].mxu0
      %v6469 = vpop.f32.mrb[0].mxu0
      %v6470 = vadd.f32 0.0, %v6469
      %v6471 = vpop.f32.mrb[0].mxu0
      %6472 = vmatprep.mubr.bf16.mxu0 0
      %6473 = vmatmul.mubr.bf16.gmra.mrb[0].mxu0 %v6318
      %v6474 = vpop.f32.mrb[0].mxu0
      %v6475 = vadd.f32 0.0, %v6474
      %v6476 = vpop.f32.mrb[0].mxu0
      %v6477 = vpop.f32.mrb[0].mxu0
      %v6478 = vadd.f32 0.0, %v6477
      %v6479 = vpop.f32.mrb[0].mxu0
      %6480 = vmatprep.mubr.bf16.mxu0 0
      %6481 = vmatmul.mubr.bf16.gmra.mrb[0].mxu0 %v6319
      %v6482 = vpop.f32.mrb[0].mxu0
      %v6483 = vadd.f32 0.0, %v6482
      %v6484 = vpop.f32.mrb[0].mxu0
      %v6485 = vpop.f32.mrb[0].mxu0
      %v6486 = vadd.f32 0.0, %v6485
      %v6487 = vpop.f32.mrb[0].mxu0
      %6488 = vmatprep.mubr.bf16.mxu0 0
      %6489 = vmatmul.mubr.bf16.gmra.mrb[0].mxu0 %v6320
      %v6490 = vpop.f32.mrb[0].mxu0
      %v6491 = vadd.f32 0.0, %v6490
      %v6492 = vpop.f32.mrb[0].mxu0
      %v6493 = vpop.f32.mrb[0].mxu0
      %v6494 = vadd.f32 0.0, %v6493
      %v6495 = vpop.f32.mrb[0].mxu0
      %6496 = vmatprep.mubr.bf16.mxu0 0
      %6497 = vmatmul.mubr.bf16.gmra.mrb[0].mxu0 %v6321
      %v6498 = vpop.f32.mrb[0].mxu0
      %v6499 = vadd.f32 0.0, %v6498
      %v6500 = vpop.f32.mrb[0].mxu0
      %v6501 = vpop.f32.mrb[0].mxu0
      %v6502 = vadd.f32 0.0, %v6501
      %v6503 = vpop.f32.mrb[0].mxu0
      %6504 = vmatprep.mubr.bf16.mxu0 0
      %6505 = vmatmul.mubr.bf16.gmra.mrb[0].mxu0 %v6322
      %v6506 = vpop.f32.mrb[0].mxu0
      %v6507 = vadd.f32 0.0, %v6506
      %v6508 = vpop.f32.mrb[0].mxu0
      %v6509 = vpop.f32.mrb[0].mxu0
      %v6510 = vadd.f32 0.0, %v6509
      %v6511 = vpop.f32.mrb[0].mxu0
      %6512 = vmatprep.mubr.bf16.mxu0 0
      %6513 = vmatmul.mubr.bf16.gmra.mrb[0].mxu0 %v6323
      %v6514 = vpop.f32.mrb[0].mxu0
      %v6515 = vadd.f32 0.0, %v6514
      %v6516 = vpop.f32.mrb[0].mxu0
      %v6517 = vpop.f32.mrb[0].mxu0
      %v6518 = vadd.f32 0.0, %v6517
      %v6519 = vpop.f32.mrb[0].mxu0
      %6520 = vmatprep.mubr.bf16.mxu0 0
      %6521 = vmatmul.mubr.bf16.gmra.mrb[0].mxu0 %v6324
      %v6522 = vpop.f32.mrb[0].mxu0
      %v6523 = vadd.f32 0.0, %v6522
      %v6524 = vpop.f32.mrb[0].mxu0
      %v6525 = vpop.f32.mrb[0].mxu0
      %v6526 = vadd.f32 0.0, %v6525
      %v6527 = vpop.f32.mrb[0].mxu0
      %6528 = vmatprep.mubr.bf16.mxu0 0
      %6529 = vmatmul.mubr.bf16.gmra.mrb[0].mxu0 %v6325
      %v6530 = vpop.f32.mrb[0].mxu0
      %v6531 = vadd.f32 0.0, %v6530
      %v6532 = vpop.f32.mrb[0].mxu0
      %v6533 = vpop.f32.mrb[0].mxu0
      %v6534 = vadd.f32 0.0, %v6533
      %v6535 = vpop.f32.mrb[0].mxu0
      %6536 = vmatprep.mubr.bf16.mxu0 0
      %6537 = vmatmul.mubr.bf16.gmra.mrb[0].mxu0 %v6326
      %v6538 = vpop.f32.mrb[0].mxu0
      %v6539 = vadd.f32 0.0, %v6538
      %v6540 = vpop.f32.mrb[0].mxu0
      %v6541 = vpop.f32.mrb[0].mxu0
      %v6542 = vadd.f32 0.0, %v6541
      %v6543 = vpop.f32.mrb[0].mxu0
      %6544 = vmatprep.mubr.bf16.mxu0 0
      %6545 = vmatmul.mubr.bf16.gmra.mrb[0].mxu0 %v6327
      %v6546 = vpop.f32.mrb[0].mxu0
      %v6547 = vadd.f32 0.0, %v6546
      %v6548 = vpop.f32.mrb[0].mxu0
      %v6549 = vpop.f32.mrb[0].mxu0
      %v6550 = vadd.f32 0.0, %v6549
      %v6551 = vpop.f32.mrb[0].mxu0
      %6552 = vdwg.mxu0
      %v6585 = vunpack.c.l.b16 %v5815
      %v6586 = vunpack.c.l.b16 %v5816
      %v6587 = vunpack.c.l.b16 %v5817
      %v6588 = vunpack.c.l.b16 %v5818
      %v6589 = vunpack.c.l.b16 %v5819
      %v6590 = vunpack.c.l.b16 %v5820
      %v6591 = vunpack.c.l.b16 %v5821
      %v6592 = vunpack.c.l.b16 %v5822
      %v6593 = vunpack.c.l.b16 %v5823
      %v6594 = vunpack.c.l.b16 %v5824
      %v6595 = vunpack.c.l.b16 %v5825
      %v6596 = vunpack.c.l.b16 %v5826
      %v6597 = vunpack.c.l.b16 %v5827
      %v6598 = vunpack.c.l.b16 %v5828
      %v6599 = vunpack.c.l.b16 %v5829
      %v6600 = vunpack.c.l.b16 %v5830
      %v6601 = vunpack.c.l.b16 %v5831
      %v6602 = vunpack.c.l.b16 %v5832
      %v6603 = vunpack.c.l.b16 %v5833
      %v6604 = vunpack.c.l.b16 %v5834
      %v6605 = vunpack.c.l.b16 %v5835
      %v6606 = vunpack.c.l.b16 %v5836
      %v6607 = vunpack.c.l.b16 %v5837
      %v6608 = vunpack.c.l.b16 %v5838
      %v6609 = vunpack.c.l.b16 %v5839
      %v6610 = vunpack.c.l.b16 %v5840
      %v6611 = vunpack.c.l.b16 %v5841
      %v6612 = vunpack.c.l.b16 %v5842
      %v6613 = vunpack.c.l.b16 %v5843
      %v6614 = vunpack.c.l.b16 %v5844
      %v6615 = vunpack.c.l.b16 %v5845
      %v6616 = vunpack.c.l.b16 %v5846
      %v6617 = vpack.c.b16 %v6586, %v6585
      %v6618 = vpack.c.b16 %v6588, %v6587
      %v6619 = vpack.c.b16 %v6590, %v6589
      %v6620 = vpack.c.b16 %v6592, %v6591
      %v6621 = vpack.c.b16 %v6594, %v6593
      %v6622 = vpack.c.b16 %v6596, %v6595
      %v6623 = vpack.c.b16 %v6598, %v6597
      %v6624 = vpack.c.b16 %v6600, %v6599
      %v6625 = vpack.c.b16 %v6602, %v6601
      %v6626 = vpack.c.b16 %v6604, %v6603
      %v6627 = vpack.c.b16 %v6606, %v6605
      %v6628 = vpack.c.b16 %v6608, %v6607
      %v6629 = vpack.c.b16 %v6610, %v6609
      %v6630 = vpack.c.b16 %v6612, %v6611
      %v6631 = vpack.c.b16 %v6614, %v6613
      %v6632 = vpack.c.b16 %v6616, %v6615
      %v6665 = vunpack.c.l.b16 %v5847
      %v6666 = vunpack.c.l.b16 %v5848
      %v6667 = vunpack.c.l.b16 %v5849
      %v6668 = vunpack.c.l.b16 %v5850
      %v6669 = vunpack.c.l.b16 %v5851
      %v6670 = vunpack.c.l.b16 %v5852
      %v6671 = vunpack.c.l.b16 %v5853
      %v6672 = vunpack.c.l.b16 %v5854
      %v6673 = vunpack.c.l.b16 %v5855
      %v6674 = vunpack.c.l.b16 %v5856
      %v6675 = vunpack.c.l.b16 %v5857
      %v6676 = vunpack.c.l.b16 %v5858
      %v6677 = vunpack.c.l.b16 %v5859
      %v6678 = vunpack.c.l.b16 %v5860
      %v6679 = vunpack.c.l.b16 %v5861
      %v6680 = vunpack.c.l.b16 %v5862
      %v6681 = vpack.c.b16 %v6666, %v6665
      %v6682 = vpack.c.b16 %v6668, %v6667
      %v6683 = vpack.c.b16 %v6670, %v6669
      %v6684 = vpack.c.b16 %v6672, %v6671
      %v6685 = vpack.c.b16 %v6674, %v6673
      %v6686 = vpack.c.b16 %v6676, %v6675
      %v6687 = vpack.c.b16 %v6678, %v6677
      %v6688 = vpack.c.b16 %v6680, %v6679
      %6697 = vmatprep.subr.bf16.mxu0 0
      %6698 = vmatpush1.bf16.msra.mxu0 %v6681
      %6699 = vmatprep.subr.bf16.mxu0 0
      %6700 = vmatpush1.bf16.msra.mxu0 %v6682
      %6701 = vmatprep.subr.bf16.mxu0 0
      %6702 = vmatpush1.bf16.msra.mxu0 %v6683
      %6703 = vmatprep.subr.bf16.mxu0 0
      %6704 = vmatpush1.bf16.msra.mxu0 %v6684
      %6705 = vmatprep.subr.bf16.mxu0 0
      %6706 = vmatpush1.bf16.msra.mxu0 %v6685
      %6707 = vmatprep.subr.bf16.mxu0 0
      %6708 = vmatpush1.bf16.msra.mxu0 %v6686
      %6709 = vmatprep.subr.bf16.mxu0 0
      %6710 = vmatpush1.bf16.msra.mxu0 %v6687
      %6711 = vmatprep.subr.bf16.mxu0 0
      %6712 = vmatpush1.bf16.msra.mxu0 %v6688
      %6713 = vmatprep.subr.bf16.mxu0 0
      %6714 = vmatpush1.bf16.msra.mxu0 0
      %6715 = vmatprep.subr.bf16.mxu0 0
      %6716 = vmatpush1.bf16.msra.mxu0 0
      %6717 = vmatprep.subr.bf16.mxu0 0
      %6718 = vmatpush1.bf16.msra.mxu0 0
      %6719 = vmatprep.subr.bf16.mxu0 0
      %6720 = vmatpush1.bf16.msra.mxu0 0
      %6721 = vmatprep.subr.bf16.mxu0 0
      %6722 = vmatpush1.bf16.msra.mxu0 0
      %6723 = vmatprep.subr.bf16.mxu0 0
      %6724 = vmatpush1.bf16.msra.mxu0 0
      %6725 = vmatprep.subr.bf16.mxu0 0
      %6726 = vmatpush1.bf16.msra.mxu0 0
      %6727 = vmatprep.subr.bf16.mxu0 0
      %6728 = vmatpush1.bf16.msra.mxu0 0
      %6729 = vmatprep.mubr.bf16.mxu0 0
      %6730 = vmatmul.mubr.bf16.gmra.mrb[0].mxu0 %v6617
      %v6731 = vpop.f32.mrb[0].mxu0
      %v6732 = vadd.f32 %v6427, %v6731
      %v6733 = vpop.f32.mrb[0].mxu0
      %v6734 = vpop.f32.mrb[0].mxu0
      %v6735 = vadd.f32 %v6430, %v6734
      %v6736 = vpop.f32.mrb[0].mxu0
      %6737 = vmatprep.mubr.bf16.mxu0 0
      %6738 = vmatmul.mubr.bf16.gmra.mrb[0].mxu0 %v6618
      %v6739 = vpop.f32.mrb[0].mxu0
      %v6740 = vadd.f32 %v6435, %v6739
      %v6741 = vpop.f32.mrb[0].mxu0
      %v6742 = vpop.f32.mrb[0].mxu0
      %v6743 = vadd.f32 %v6438, %v6742
      %v6744 = vpop.f32.mrb[0].mxu0
      %6745 = vmatprep.mubr.bf16.mxu0 0
      %6746 = vmatmul.mubr.bf16.gmra.mrb[0].mxu0 %v6619
      %v6747 = vpop.f32.mrb[0].mxu0
      %v6748 = vadd.f32 %v6443, %v6747
      %v6749 = vpop.f32.mrb[0].mxu0
      %v6750 = vpop.f32.mrb[0].mxu0
      %v6751 = vadd.f32 %v6446, %v6750
      %v6752 = vpop.f32.mrb[0].mxu0
      %6753 = vmatprep.mubr.bf16.mxu0 0
      %6754 = vmatmul.mubr.bf16.gmra.mrb[0].mxu0 %v6620
      %v6755 = vpop.f32.mrb[0].mxu0
      %v6756 = vadd.f32 %v6451, %v6755
      %v6757 = vpop.f32.mrb[0].mxu0
      %v6758 = vpop.f32.mrb[0].mxu0
      %v6759 = vadd.f32 %v6454, %v6758
      %v6760 = vpop.f32.mrb[0].mxu0
      %6761 = vmatprep.mubr.bf16.mxu0 0
      %6762 = vmatmul.mubr.bf16.gmra.mrb[0].mxu0 %v6621
      %v6763 = vpop.f32.mrb[0].mxu0
      %v6764 = vadd.f32 %v6459, %v6763
      %v6765 = vpop.f32.mrb[0].mxu0
      %v6766 = vpop.f32.mrb[0].mxu0
      %v6767 = vadd.f32 %v6462, %v6766
      %v6768 = vpop.f32.mrb[0].mxu0
      %6769 = vmatprep.mubr.bf16.mxu0 0
      %6770 = vmatmul.mubr.bf16.gmra.mrb[0].mxu0 %v6622
      %v6771 = vpop.f32.mrb[0].mxu0
      %v6772 = vadd.f32 %v6467, %v6771
      %v6773 = vpop.f32.mrb[0].mxu0
      %v6774 = vpop.f32.mrb[0].mxu0
      %v6775 = vadd.f32 %v6470, %v6774
      %v6776 = vpop.f32.mrb[0].mxu0
      %6777 = vmatprep.mubr.bf16.mxu0 0
      %6778 = vmatmul.mubr.bf16.gmra.mrb[0].mxu0 %v6623
      %v6779 = vpop.f32.mrb[0].mxu0
      %v6780 = vadd.f32 %v6475, %v6779
      %v6781 = vpop.f32.mrb[0].mxu0
      %v6782 = vpop.f32.mrb[0].mxu0
      %v6783 = vadd.f32 %v6478, %v6782
      %v6784 = vpop.f32.mrb[0].mxu0
      %6785 = vmatprep.mubr.bf16.mxu0 0
      %6786 = vmatmul.mubr.bf16.gmra.mrb[0].mxu0 %v6624
      %v6787 = vpop.f32.mrb[0].mxu0
      %v6788 = vadd.f32 %v6483, %v6787
      %v6789 = vpop.f32.mrb[0].mxu0
      %v6790 = vpop.f32.mrb[0].mxu0
      %v6791 = vadd.f32 %v6486, %v6790
      %v6792 = vpop.f32.mrb[0].mxu0
      %6793 = vmatprep.mubr.bf16.mxu0 0
      %6794 = vmatmul.mubr.bf16.gmra.mrb[0].mxu0 %v6625
      %v6795 = vpop.f32.mrb[0].mxu0
      %v6796 = vadd.f32 %v6491, %v6795
      %v6797 = vpop.f32.mrb[0].mxu0
      %v6798 = vpop.f32.mrb[0].mxu0
      %v6799 = vadd.f32 %v6494, %v6798
      %v6800 = vpop.f32.mrb[0].mxu0
      %6801 = vmatprep.mubr.bf16.mxu0 0
      %6802 = vmatmul.mubr.bf16.gmra.mrb[0].mxu0 %v6626
      %v6803 = vpop.f32.mrb[0].mxu0
      %v6804 = vadd.f32 %v6499, %v6803
      %v6805 = vpop.f32.mrb[0].mxu0
      %v6806 = vpop.f32.mrb[0].mxu0
      %v6807 = vadd.f32 %v6502, %v6806
      %v6808 = vpop.f32.mrb[0].mxu0
      %6809 = vmatprep.mubr.bf16.mxu0 0
      %6810 = vmatmul.mubr.bf16.gmra.mrb[0].mxu0 %v6627
      %v6811 = vpop.f32.mrb[0].mxu0
      %v6812 = vadd.f32 %v6507, %v6811
      %v6813 = vpop.f32.mrb[0].mxu0
      %v6814 = vpop.f32.mrb[0].mxu0
      %v6815 = vadd.f32 %v6510, %v6814
      %v6816 = vpop.f32.mrb[0].mxu0
      %6817 = vmatprep.mubr.bf16.mxu0 0
      %6818 = vmatmul.mubr.bf16.gmra.mrb[0].mxu0 %v6628
      %v6819 = vpop.f32.mrb[0].mxu0
      %v6820 = vadd.f32 %v6515, %v6819
      %v6821 = vpop.f32.mrb[0].mxu0
      %v6822 = vpop.f32.mrb[0].mxu0
      %v6823 = vadd.f32 %v6518, %v6822
      %v6824 = vpop.f32.mrb[0].mxu0
      %6825 = vmatprep.mubr.bf16.mxu0 0
      %6826 = vmatmul.mubr.bf16.gmra.mrb[0].mxu0 %v6629
      %v6827 = vpop.f32.mrb[0].mxu0
      %v6828 = vadd.f32 %v6523, %v6827
      %v6829 = vpop.f32.mrb[0].mxu0
      %v6830 = vpop.f32.mrb[0].mxu0
      %v6831 = vadd.f32 %v6526, %v6830
      %v6832 = vpop.f32.mrb[0].mxu0
      %6833 = vmatprep.mubr.bf16.mxu0 0
      %6834 = vmatmul.mubr.bf16.gmra.mrb[0].mxu0 %v6630
      %v6835 = vpop.f32.mrb[0].mxu0
      %v6836 = vadd.f32 %v6531, %v6835
      %v6837 = vpop.f32.mrb[0].mxu0
      %v6838 = vpop.f32.mrb[0].mxu0
      %v6839 = vadd.f32 %v6534, %v6838
      %v6840 = vpop.f32.mrb[0].mxu0
      %6841 = vmatprep.mubr.bf16.mxu0 0
      %6842 = vmatmul.mubr.bf16.gmra.mrb[0].mxu0 %v6631
      %v6843 = vpop.f32.mrb[0].mxu0
      %v6844 = vadd.f32 %v6539, %v6843
      %v6845 = vpop.f32.mrb[0].mxu0
      %v6846 = vpop.f32.mrb[0].mxu0
      %v6847 = vadd.f32 %v6542, %v6846
      %v6848 = vpop.f32.mrb[0].mxu0
      %6849 = vmatprep.mubr.bf16.mxu0 0
      %6850 = vmatmul.mubr.bf16.gmra.mrb[0].mxu0 %v6632
      %v6851 = vpop.f32.mrb[0].mxu0
      %v6852 = vadd.f32 %v6547, %v6851
      %v6853 = vpop.f32.mrb[0].mxu0
      %v6854 = vpop.f32.mrb[0].mxu0
      %v6855 = vadd.f32 %v6550, %v6854
      %v6856 = vpop.f32.mrb[0].mxu0
      %6857 = vdwg.mxu0
      %v6858 = vld [vmem:[#allocation2] sm:$0xe]
      %v6859 = vld [vmem:[#allocation2 + $0xc] sm:$0xe]
      %v6860 = vld [vmem:[#allocation2 + $0x18] sm:$0xe]
      %v6861 = vld [vmem:[#allocation2 + $0x24] sm:$0xe]
      %v6862 = vld [vmem:[#allocation2 + $0x30] sm:$0xe]
      %v6863 = vld [vmem:[#allocation2 + $0x3c] sm:$0xe]
      %v6864 = vld [vmem:[#allocation2 + $0x48] sm:$0xe]
      %v6865 = vld [vmem:[#allocation2 + $0x54] sm:$0xe]
      %v6866 = vld [vmem:[#allocation2 + $0x60] sm:$0xe]
      %v6867 = vld [vmem:[#allocation2 + $0x6c] sm:$0xe]
      %v6868 = vld [vmem:[#allocation2 + $0x78] sm:$0xe]
      %v6869 = vld [vmem:[#allocation2 + $0x84] sm:$0xe]
      %v6870 = vld [vmem:[#allocation2 + $0x90] sm:$0xe]
      %v6871 = vld [vmem:[#allocation2 + $0x9c] sm:$0xe]
      %v6872 = vld [vmem:[#allocation2 + $0xa8] sm:$0xe]
      %v6873 = vld [vmem:[#allocation2 + $0xb4] sm:$0xe]
      %v6906 = vrot.slane %v6858, 5
      %v6907 = vrot.slane %v6906, 4
      %v6908 = vrot.slane %v5816, 5
      %v6909 = vsel %vm1376, %v6907, %v6908
      %v6910 = vrot.slane %v6908, 4
      %v6911 = vrot.slane %v5863, 5
      %v6912 = vsel %vm1376, %v6910, %v6911
      %v6913 = vrot.slane %v6859, 5
      %v6914 = vrot.slane %v6913, 4
      %v6915 = vrot.slane %v5818, 5
      %v6916 = vsel %vm1376, %v6914, %v6915
      %v6917 = vrot.slane %v6915, 4
      %v6918 = vrot.slane %v5864, 5
      %v6919 = vsel %vm1376, %v6917, %v6918
      %v6920 = vrot.slane %v6860, 5
      %v6921 = vrot.slane %v6920, 4
      %v6922 = vrot.slane %v5820, 5
      %v6923 = vsel %vm1376, %v6921, %v6922
      %v6924 = vrot.slane %v6922, 4
      %v6925 = vrot.slane %v5865, 5
      %v6926 = vsel %vm1376, %v6924, %v6925
      %v6927 = vrot.slane %v6861, 5
      %v6928 = vrot.slane %v6927, 4
      %v6929 = vrot.slane %v5822, 5
      %v6930 = vsel %vm1376, %v6928, %v6929
      %v6931 = vrot.slane %v6929, 4
      %v6932 = vrot.slane %v5866, 5
      %v6933 = vsel %vm1376, %v6931, %v6932
      %v6934 = vrot.slane %v6862, 5
      %v6935 = vrot.slane %v6934, 4
      %v6936 = vrot.slane %v5824, 5
      %v6937 = vsel %vm1376, %v6935, %v6936
      %v6938 = vrot.slane %v6936, 4
      %v6939 = vrot.slane %v5867, 5
      %v6940 = vsel %vm1376, %v6938, %v6939
      %v6941 = vrot.slane %v6863, 5
      %v6942 = vrot.slane %v6941, 4
      %v6943 = vrot.slane %v5826, 5
      %v6944 = vsel %vm1376, %v6942, %v6943
      %v6945 = vrot.slane %v6943, 4
      %v6946 = vrot.slane %v5868, 5
      %v6947 = vsel %vm1376, %v6945, %v6946
      %v6948 = vrot.slane %v6864, 5
      %v6949 = vrot.slane %v6948, 4
      %v6950 = vrot.slane %v5828, 5
      %v6951 = vsel %vm1376, %v6949, %v6950
      %v6952 = vrot.slane %v6950, 4
      %v6953 = vrot.slane %v5869, 5
      %v6954 = vsel %vm1376, %v6952, %v6953
      %v6955 = vrot.slane %v6865, 5
      %v6956 = vrot.slane %v6955, 4
      %v6957 = vrot.slane %v5830, 5
      %v6958 = vsel %vm1376, %v6956, %v6957
      %v6959 = vrot.slane %v6957, 4
      %v6960 = vrot.slane %v5870, 5
      %v6961 = vsel %vm1376, %v6959, %v6960
      %v6962 = vrot.slane %v6866, 5
      %v6963 = vrot.slane %v6962, 4
      %v6964 = vrot.slane %v5832, 5
      %v6965 = vsel %vm1376, %v6963, %v6964
      %v6966 = vrot.slane %v6964, 4
      %v6967 = vrot.slane %v5871, 5
      %v6968 = vsel %vm1376, %v6966, %v6967
      %v6969 = vrot.slane %v6867, 5
      %v6970 = vrot.slane %v6969, 4
      %v6971 = vrot.slane %v5834, 5
      %v6972 = vsel %vm1376, %v6970, %v6971
      %v6973 = vrot.slane %v6971, 4
      %v6974 = vrot.slane %v5872, 5
      %v6975 = vsel %vm1376, %v6973, %v6974
      %v6976 = vrot.slane %v6868, 5
      %v6977 = vrot.slane %v6976, 4
      %v6978 = vrot.slane %v5836, 5
      %v6979 = vsel %vm1376, %v6977, %v6978
      %v6980 = vrot.slane %v6978, 4
      %v6981 = vrot.slane %v5873, 5
      %v6982 = vsel %vm1376, %v6980, %v6981
      %v6983 = vrot.slane %v6869, 5
      %v6984 = vrot.slane %v6983, 4
      %v6985 = vrot.slane %v5838, 5
      %v6986 = vsel %vm1376, %v6984, %v6985
      %v6987 = vrot.slane %v6985, 4
      %v6988 = vrot.slane %v5874, 5
      %v6989 = vsel %vm1376, %v6987, %v6988
      %v6990 = vrot.slane %v6870, 5
      %v6991 = vrot.slane %v6990, 4
      %v6992 = vrot.slane %v5840, 5
      %v6993 = vsel %vm1376, %v6991, %v6992
      %v6994 = vrot.slane %v6992, 4
      %v6995 = vrot.slane %v5875, 5
      %v6996 = vsel %vm1376, %v6994, %v6995
      %v6997 = vrot.slane %v6871, 5
      %v6998 = vrot.slane %v6997, 4
      %v6999 = vrot.slane %v5842, 5
      %v7000 = vsel %vm1376, %v6998, %v6999
      %v7001 = vrot.slane %v6999, 4
      %v7002 = vrot.slane %v5876, 5
      %v7003 = vsel %vm1376, %v7001, %v7002
      %v7004 = vrot.slane %v6872, 5
      %v7005 = vrot.slane %v7004, 4
      %v7006 = vrot.slane %v5844, 5
      %v7007 = vsel %vm1376, %v7005, %v7006
      %v7008 = vrot.slane %v7006, 4
      %v7009 = vrot.slane %v5877, 5
      %v7010 = vsel %vm1376, %v7008, %v7009
      %v7011 = vrot.slane %v6873, 5
      %v7012 = vrot.slane %v7011, 4
      %v7013 = vrot.slane %v5846, 5
      %v7014 = vsel %vm1376, %v7012, %v7013
      %v7015 = vrot.slane %v7013, 4
      %v7016 = vrot.slane %v5878, 5
      %v7017 = vsel %vm1376, %v7015, %v7016
      %s7018 = scalar_lea.vmem %s3, 128
      %v7019 = vld [vmem:[%s7018] sm:$0xf]
      %v7020 = vld [vmem:[%s7018 + $0x4] sm:$0xf]
      %v7021 = vld [vmem:[%s7018 + $0x8] sm:$0xf]
      %v7022 = vld [vmem:[%s7018 + $0xc] sm:$0xf]
      %v7023 = vld [vmem:[%s7018 + $0x10] sm:$0xf]
      %v7024 = vld [vmem:[%s7018 + $0x14] sm:$0xf]
      %v7025 = vld [vmem:[%s7018 + $0x18] sm:$0xf]
      %v7026 = vld [vmem:[%s7018 + $0x1c] sm:$0xf]
      %v7027 = vld [vmem:[%s7018 + $0x20] sm:$0xf]
      %v7028 = vld [vmem:[%s7018 + $0x24] sm:$0xf]
      %v7029 = vld [vmem:[%s7018 + $0x28] sm:$0xf]
      %v7030 = vld [vmem:[%s7018 + $0x2c] sm:$0xf]
      %v7031 = vld [vmem:[%s7018 + $0x30] sm:$0xf]
      %v7032 = vld [vmem:[%s7018 + $0x34] sm:$0xf]
      %v7033 = vld [vmem:[%s7018 + $0x38] sm:$0xf]
      %v7034 = vld [vmem:[%s7018 + $0x3c] sm:$0xf]
      %v7035 = vunpack.c.l.b16 %v6909
      %v7036 = vunpack.c.l.b16 %v6912
      %v7037 = vunpack.c.l.b16 %v6916
      %v7038 = vunpack.c.l.b16 %v6919
      %v7039 = vunpack.c.l.b16 %v6923
      %v7040 = vunpack.c.l.b16 %v6926
      %v7041 = vunpack.c.l.b16 %v6930
      %v7042 = vunpack.c.l.b16 %v6933
      %v7043 = vunpack.c.l.b16 %v6937
      %v7044 = vunpack.c.l.b16 %v6940
      %v7045 = vunpack.c.l.b16 %v6944
      %v7046 = vunpack.c.l.b16 %v6947
      %v7047 = vunpack.c.l.b16 %v6951
      %v7048 = vunpack.c.l.b16 %v6954
      %v7049 = vunpack.c.l.b16 %v6958
      %v7050 = vunpack.c.l.b16 %v6961
      %v7051 = vunpack.c.l.b16 %v6965
      %v7052 = vunpack.c.l.b16 %v6968
      %v7053 = vunpack.c.l.b16 %v6972
      %v7054 = vunpack.c.l.b16 %v6975
      %v7055 = vunpack.c.l.b16 %v6979
      %v7056 = vunpack.c.l.b16 %v6982
      %v7057 = vunpack.c.l.b16 %v6986
      %v7058 = vunpack.c.l.b16 %v6989
      %v7059 = vunpack.c.l.b16 %v6993
      %v7060 = vunpack.c.l.b16 %v6996
      %v7061 = vunpack.c.l.b16 %v7000
      %v7062 = vunpack.c.l.b16 %v7003
      %v7063 = vunpack.c.l.b16 %v7007
      %v7064 = vunpack.c.l.b16 %v7010
      %v7065 = vunpack.c.l.b16 %v7014
      %v7066 = vunpack.c.l.b16 %v7017
      %v7067 = vpack.c.b16 %v7036, %v7035
      %v7068 = vpack.c.b16 %v7038, %v7037
      %v7069 = vpack.c.b16 %v7040, %v7039
      %v7070 = vpack.c.b16 %v7042, %v7041
      %v7071 = vpack.c.b16 %v7044, %v7043
      %v7072 = vpack.c.b16 %v7046, %v7045
      %v7073 = vpack.c.b16 %v7048, %v7047
      %v7074 = vpack.c.b16 %v7050, %v7049
      %v7075 = vpack.c.b16 %v7052, %v7051
      %v7076 = vpack.c.b16 %v7054, %v7053
      %v7077 = vpack.c.b16 %v7056, %v7055
      %v7078 = vpack.c.b16 %v7058, %v7057
      %v7079 = vpack.c.b16 %v7060, %v7059
      %v7080 = vpack.c.b16 %v7062, %v7061
      %v7081 = vpack.c.b16 %v7064, %v7063
      %v7082 = vpack.c.b16 %v7066, %v7065
      %v7115 = vunpack.c.l.b16 %v7019
      %v7116 = vunpack.c.l.b16 %v7020
      %v7117 = vunpack.c.l.b16 %v7021
      %v7118 = vunpack.c.l.b16 %v7022
      %v7119 = vunpack.c.l.b16 %v7023
      %v7120 = vunpack.c.l.b16 %v7024
      %v7121 = vunpack.c.l.b16 %v7025
      %v7122 = vunpack.c.l.b16 %v7026
      %v7123 = vunpack.c.l.b16 %v7027
      %v7124 = vunpack.c.l.b16 %v7028
      %v7125 = vunpack.c.l.b16 %v7029
      %v7126 = vunpack.c.l.b16 %v7030
      %v7127 = vunpack.c.l.b16 %v7031
      %v7128 = vunpack.c.l.b16 %v7032
      %v7129 = vunpack.c.l.b16 %v7033
      %v7130 = vunpack.c.l.b16 %v7034
      %v7131 = vpack.c.b16 %v7116, %v7115
      %v7132 = vpack.c.b16 %v7118, %v7117
      %v7133 = vpack.c.b16 %v7120, %v7119
      %v7134 = vpack.c.b16 %v7122, %v7121
      %v7135 = vpack.c.b16 %v7124, %v7123
      %v7136 = vpack.c.b16 %v7126, %v7125
      %v7137 = vpack.c.b16 %v7128, %v7127
      %v7138 = vpack.c.b16 %v7130, %v7129
      %7147 = vmatprep.subr.bf16.mxu0 0
      %7148 = vmatpush1.bf16.msra.mxu0 %v7131
      %7149 = vmatprep.subr.bf16.mxu0 0
      %7150 = vmatpush1.bf16.msra.mxu0 %v7132
      %7151 = vmatprep.subr.bf16.mxu0 0
      %7152 = vmatpush1.bf16.msra.mxu0 %v7133
      %7153 = vmatprep.subr.bf16.mxu0 0
      %7154 = vmatpush1.bf16.msra.mxu0 %v7134
      %7155 = vmatprep.subr.bf16.mxu0 0
      %7156 = vmatpush1.bf16.msra.mxu0 %v7135
      %7157 = vmatprep.subr.bf16.mxu0 0
      %7158 = vmatpush1.bf16.msra.mxu0 %v7136
      %7159 = vmatprep.subr.bf16.mxu0 0
      %7160 = vmatpush1.bf16.msra.mxu0 %v7137
      %7161 = vmatprep.subr.bf16.mxu0 0
      %7162 = vmatpush1.bf16.msra.mxu0 %v7138
      %7163 = vmatprep.subr.bf16.mxu0 0
      %7164 = vmatpush1.bf16.msra.mxu0 0
      %7165 = vmatprep.subr.bf16.mxu0 0
      %7166 = vmatpush1.bf16.msra.mxu0 0
      %7167 = vmatprep.subr.bf16.mxu0 0
      %7168 = vmatpush1.bf16.msra.mxu0 0
      %7169 = vmatprep.subr.bf16.mxu0 0
      %7170 = vmatpush1.bf16.msra.mxu0 0
      %7171 = vmatprep.subr.bf16.mxu0 0
      %7172 = vmatpush1.bf16.msra.mxu0 0
      %7173 = vmatprep.subr.bf16.mxu0 0
      %7174 = vmatpush1.bf16.msra.mxu0 0
      %7175 = vmatprep.subr.bf16.mxu0 0
      %7176 = vmatpush1.bf16.msra.mxu0 0
      %7177 = vmatprep.subr.bf16.mxu0 0
      %7178 = vmatpush1.bf16.msra.mxu0 0
      %7179 = vmatprep.mubr.bf16.mxu0 0
      %7180 = vmatmul.mubr.bf16.gmra.mrb[0].mxu0 %v7067
      %v7181 = vpop.f32.mrb[0].mxu0
      %v7182 = vadd.f32 0.0, %v7181
      %v7183 = vpop.f32.mrb[0].mxu0
      %v7184 = vpop.f32.mrb[0].mxu0
      %v7185 = vadd.f32 0.0, %v7184
      %v7186 = vpop.f32.mrb[0].mxu0
      %7187 = vmatprep.mubr.bf16.mxu0 0
      %7188 = vmatmul.mubr.bf16.gmra.mrb[0].mxu0 %v7068
      %v7189 = vpop.f32.mrb[0].mxu0
      %v7190 = vadd.f32 0.0, %v7189
      %v7191 = vpop.f32.mrb[0].mxu0
      %v7192 = vpop.f32.mrb[0].mxu0
      %v7193 = vadd.f32 0.0, %v7192
      %v7194 = vpop.f32.mrb[0].mxu0
      %7195 = vmatprep.mubr.bf16.mxu0 0
      %7196 = vmatmul.mubr.bf16.gmra.mrb[0].mxu0 %v7069
      %v7197 = vpop.f32.mrb[0].mxu0
      %v7198 = vadd.f32 0.0, %v7197
      %v7199 = vpop.f32.mrb[0].mxu0
      %v7200 = vpop.f32.mrb[0].mxu0
      %v7201 = vadd.f32 0.0, %v7200
      %v7202 = vpop.f32.mrb[0].mxu0
      %7203 = vmatprep.mubr.bf16.mxu0 0
      %7204 = vmatmul.mubr.bf16.gmra.mrb[0].mxu0 %v7070
      %v7205 = vpop.f32.mrb[0].mxu0
      %v7206 = vadd.f32 0.0, %v7205
      %v7207 = vpop.f32.mrb[0].mxu0
      %v7208 = vpop.f32.mrb[0].mxu0
      %v7209 = vadd.f32 0.0, %v7208
      %v7210 = vpop.f32.mrb[0].mxu0
      %7211 = vmatprep.mubr.bf16.mxu0 0
      %7212 = vmatmul.mubr.bf16.gmra.mrb[0].mxu0 %v7071
      %v7213 = vpop.f32.mrb[0].mxu0
      %v7214 = vadd.f32 0.0, %v7213
      %v7215 = vpop.f32.mrb[0].mxu0
      %v7216 = vpop.f32.mrb[0].mxu0
      %v7217 = vadd.f32 0.0, %v7216
      %v7218 = vpop.f32.mrb[0].mxu0
      %7219 = vmatprep.mubr.bf16.mxu0 0
      %7220 = vmatmul.mubr.bf16.gmra.mrb[0].mxu0 %v7072
      %v7221 = vpop.f32.mrb[0].mxu0
      %v7222 = vadd.f32 0.0, %v7221
      %v7223 = vpop.f32.mrb[0].mxu0
      %v7224 = vpop.f32.mrb[0].mxu0
      %v7225 = vadd.f32 0.0, %v7224
      %v7226 = vpop.f32.mrb[0].mxu0
      %7227 = vmatprep.mubr.bf16.mxu0 0
      %7228 = vmatmul.mubr.bf16.gmra.mrb[0].mxu0 %v7073
      %v7229 = vpop.f32.mrb[0].mxu0
      %v7230 = vadd.f32 0.0, %v7229
      %v7231 = vpop.f32.mrb[0].mxu0
      %v7232 = vpop.f32.mrb[0].mxu0
      %v7233 = vadd.f32 0.0, %v7232
      %v7234 = vpop.f32.mrb[0].mxu0
      %7235 = vmatprep.mubr.bf16.mxu0 0
      %7236 = vmatmul.mubr.bf16.gmra.mrb[0].mxu0 %v7074
      %v7237 = vpop.f32.mrb[0].mxu0
      %v7238 = vadd.f32 0.0, %v7237
      %v7239 = vpop.f32.mrb[0].mxu0
      %v7240 = vpop.f32.mrb[0].mxu0
      %v7241 = vadd.f32 0.0, %v7240
      %v7242 = vpop.f32.mrb[0].mxu0
      %7243 = vmatprep.mubr.bf16.mxu0 0
      %7244 = vmatmul.mubr.bf16.gmra.mrb[0].mxu0 %v7075
      %v7245 = vpop.f32.mrb[0].mxu0
      %v7246 = vadd.f32 0.0, %v7245
      %v7247 = vpop.f32.mrb[0].mxu0
      %v7248 = vpop.f32.mrb[0].mxu0
      %v7249 = vadd.f32 0.0, %v7248
      %v7250 = vpop.f32.mrb[0].mxu0
      %7251 = vmatprep.mubr.bf16.mxu0 0
      %7252 = vmatmul.mubr.bf16.gmra.mrb[0].mxu0 %v7076
      %v7253 = vpop.f32.mrb[0].mxu0
      %v7254 = vadd.f32 0.0, %v7253
      %v7255 = vpop.f32.mrb[0].mxu0
      %v7256 = vpop.f32.mrb[0].mxu0
      %v7257 = vadd.f32 0.0, %v7256
      %v7258 = vpop.f32.mrb[0].mxu0
      %7259 = vmatprep.mubr.bf16.mxu0 0
      %7260 = vmatmul.mubr.bf16.gmra.mrb[0].mxu0 %v7077
      %v7261 = vpop.f32.mrb[0].mxu0
      %v7262 = vadd.f32 0.0, %v7261
      %v7263 = vpop.f32.mrb[0].mxu0
      %v7264 = vpop.f32.mrb[0].mxu0
      %v7265 = vadd.f32 0.0, %v7264
      %v7266 = vpop.f32.mrb[0].mxu0
      %7267 = vmatprep.mubr.bf16.mxu0 0
      %7268 = vmatmul.mubr.bf16.gmra.mrb[0].mxu0 %v7078
      %v7269 = vpop.f32.mrb[0].mxu0
      %v7270 = vadd.f32 0.0, %v7269
      %v7271 = vpop.f32.mrb[0].mxu0
      %v7272 = vpop.f32.mrb[0].mxu0
      %v7273 = vadd.f32 0.0, %v7272
      %v7274 = vpop.f32.mrb[0].mxu0
      %7275 = vmatprep.mubr.bf16.mxu0 0
      %7276 = vmatmul.mubr.bf16.gmra.mrb[0].mxu0 %v7079
      %v7277 = vpop.f32.mrb[0].mxu0
      %v7278 = vadd.f32 0.0, %v7277
      %v7279 = vpop.f32.mrb[0].mxu0
      %v7280 = vpop.f32.mrb[0].mxu0
      %v7281 = vadd.f32 0.0, %v7280
      %v7282 = vpop.f32.mrb[0].mxu0
      %7283 = vmatprep.mubr.bf16.mxu0 0
      %7284 = vmatmul.mubr.bf16.gmra.mrb[0].mxu0 %v7080
      %v7285 = vpop.f32.mrb[0].mxu0
      %v7286 = vadd.f32 0.0, %v7285
      %v7287 = vpop.f32.mrb[0].mxu0
      %v7288 = vpop.f32.mrb[0].mxu0
      %v7289 = vadd.f32 0.0, %v7288
      %v7290 = vpop.f32.mrb[0].mxu0
      %7291 = vmatprep.mubr.bf16.mxu0 0
      %7292 = vmatmul.mubr.bf16.gmra.mrb[0].mxu0 %v7081
      %v7293 = vpop.f32.mrb[0].mxu0
      %v7294 = vadd.f32 0.0, %v7293
      %v7295 = vpop.f32.mrb[0].mxu0
      %v7296 = vpop.f32.mrb[0].mxu0
      %v7297 = vadd.f32 0.0, %v7296
      %v7298 = vpop.f32.mrb[0].mxu0
      %7299 = vmatprep.mubr.bf16.mxu0 0
      %7300 = vmatmul.mubr.bf16.gmra.mrb[0].mxu0 %v7082
      %v7301 = vpop.f32.mrb[0].mxu0
      %v7302 = vadd.f32 0.0, %v7301
      %v7303 = vpop.f32.mrb[0].mxu0
      %v7304 = vpop.f32.mrb[0].mxu0
      %v7305 = vadd.f32 0.0, %v7304
      %v7306 = vpop.f32.mrb[0].mxu0
      %7307 = vdwg.mxu0
      %v7308 = vadd.f32 %v6732, %v7182
      %v7309 = vadd.f32 %v6735, %v7185
      %v7310 = vadd.f32 %v6740, %v7190
      %v7311 = vadd.f32 %v6743, %v7193
      %v7312 = vadd.f32 %v6748, %v7198
      %v7313 = vadd.f32 %v6751, %v7201
      %v7314 = vadd.f32 %v6756, %v7206
      %v7315 = vadd.f32 %v6759, %v7209
      %v7316 = vadd.f32 %v6764, %v7214
      %v7317 = vadd.f32 %v6767, %v7217
      %v7318 = vadd.f32 %v6772, %v7222
      %v7319 = vadd.f32 %v6775, %v7225
      %v7320 = vadd.f32 %v6780, %v7230
      %v7321 = vadd.f32 %v6783, %v7233
      %v7322 = vadd.f32 %v6788, %v7238
      %v7323 = vadd.f32 %v6791, %v7241
      %v7324 = vadd.f32 %v6796, %v7246
      %v7325 = vadd.f32 %v6799, %v7249
      %v7326 = vadd.f32 %v6804, %v7254
      %v7327 = vadd.f32 %v6807, %v7257
      %v7328 = vadd.f32 %v6812, %v7262
      %v7329 = vadd.f32 %v6815, %v7265
      %v7330 = vadd.f32 %v6820, %v7270
      %v7331 = vadd.f32 %v6823, %v7273
      %v7332 = vadd.f32 %v6828, %v7278
      %v7333 = vadd.f32 %v6831, %v7281
      %v7334 = vadd.f32 %v6836, %v7286
      %v7335 = vadd.f32 %v6839, %v7289
      %v7336 = vadd.f32 %v6844, %v7294
      %v7337 = vadd.f32 %v6847, %v7297
      %v7338 = vadd.f32 %v6852, %v7302
      %v7339 = vadd.f32 %v6855, %v7305
      %v7340 = vld [vmem:[%s5697] sm:$0xf]
      %v7341 = vld [vmem:[%s5697 + $0x4] sm:$0xf]
      %v7342 = vld [vmem:[%s5697 + $0xc] sm:$0xf]
      %v7343 = vld [vmem:[%s5697 + $0x10] sm:$0xf]
      %v7344 = vld [vmem:[%s5697 + $0x18] sm:$0xf]
      %v7345 = vld [vmem:[%s5697 + $0x1c] sm:$0xf]
      %v7346 = vld [vmem:[%s5697 + $0x24] sm:$0xf]
      %v7347 = vld [vmem:[%s5697 + $0x28] sm:$0xf]
      %v7348 = vld [vmem:[%s5697 + $0x30] sm:$0xf]
      %v7349 = vld [vmem:[%s5697 + $0x34] sm:$0xf]
      %v7350 = vld [vmem:[%s5697 + $0x3c] sm:$0xf]
      %v7351 = vld [vmem:[%s5697 + $0x40] sm:$0xf]
      %v7352 = vld [vmem:[%s5697 + $0x48] sm:$0xf]
      %v7353 = vld [vmem:[%s5697 + $0x4c] sm:$0xf]
      %v7354 = vld [vmem:[%s5697 + $0x54] sm:$0xf]
      %v7355 = vld [vmem:[%s5697 + $0x58] sm:$0xf]
      %v7356 = vld [vmem:[%s5697 + $0x60] sm:$0xf]
      %v7357 = vld [vmem:[%s5697 + $0x64] sm:$0xf]
      %v7358 = vld [vmem:[%s5697 + $0x6c] sm:$0xf]
      %v7359 = vld [vmem:[%s5697 + $0x70] sm:$0xf]
      %v7360 = vld [vmem:[%s5697 + $0x78] sm:$0xf]
      %v7361 = vld [vmem:[%s5697 + $0x7c] sm:$0xf]
      %v7362 = vld [vmem:[%s5697 + $0x84] sm:$0xf]
      %v7363 = vld [vmem:[%s5697 + $0x88] sm:$0xf]
      %v7364 = vld [vmem:[%s5697 + $0x90] sm:$0xf]
      %v7365 = vld [vmem:[%s5697 + $0x94] sm:$0xf]
      %v7366 = vld [vmem:[%s5697 + $0x9c] sm:$0xf]
      %v7367 = vld [vmem:[%s5697 + $0xa0] sm:$0xf]
      %v7368 = vld [vmem:[%s5697 + $0xa8] sm:$0xf]
      %v7369 = vld [vmem:[%s5697 + $0xac] sm:$0xf]
      %v7370 = vld [vmem:[%s5697 + $0xb4] sm:$0xf]
      %v7371 = vld [vmem:[%s5697 + $0xb8] sm:$0xf]
      %s7372 = scalar_lea.vmem %s3, 192
      %v7373 = vld [vmem:[%s7372] sm:$0xf]
      %v7374 = vld [vmem:[%s7372 + $0x4] sm:$0xf]
      %v7375 = vld [vmem:[%s7372 + $0x8] sm:$0xf]
      %v7376 = vld [vmem:[%s7372 + $0xc] sm:$0xf]
      %v7377 = vld [vmem:[%s7372 + $0x10] sm:$0xf]
      %v7378 = vld [vmem:[%s7372 + $0x14] sm:$0xf]
      %v7379 = vld [vmem:[%s7372 + $0x18] sm:$0xf]
      %v7380 = vld [vmem:[%s7372 + $0x1c] sm:$0xf]
      %v7381 = vld [vmem:[%s7372 + $0x20] sm:$0xf]
      %v7382 = vld [vmem:[%s7372 + $0x24] sm:$0xf]
      %v7383 = vld [vmem:[%s7372 + $0x28] sm:$0xf]
      %v7384 = vld [vmem:[%s7372 + $0x2c] sm:$0xf]
      %v7385 = vld [vmem:[%s7372 + $0x30] sm:$0xf]
      %v7386 = vld [vmem:[%s7372 + $0x34] sm:$0xf]
      %v7387 = vld [vmem:[%s7372 + $0x38] sm:$0xf]
      %v7388 = vld [vmem:[%s7372 + $0x3c] sm:$0xf]
      %v7421 = vunpack.c.l.b16 %v7340
      %v7422 = vunpack.c.l.b16 %v7341
      %v7423 = vunpack.c.l.b16 %v7342
      %v7424 = vunpack.c.l.b16 %v7343
      %v7425 = vunpack.c.l.b16 %v7344
      %v7426 = vunpack.c.l.b16 %v7345
      %v7427 = vunpack.c.l.b16 %v7346
      %v7428 = vunpack.c.l.b16 %v7347
      %v7429 = vunpack.c.l.b16 %v7348
      %v7430 = vunpack.c.l.b16 %v7349
      %v7431 = vunpack.c.l.b16 %v7350
      %v7432 = vunpack.c.l.b16 %v7351
      %v7433 = vunpack.c.l.b16 %v7352
      %v7434 = vunpack.c.l.b16 %v7353
      %v7435 = vunpack.c.l.b16 %v7354
      %v7436 = vunpack.c.l.b16 %v7355
      %v7437 = vunpack.c.l.b16 %v7356
      %v7438 = vunpack.c.l.b16 %v7357
      %v7439 = vunpack.c.l.b16 %v7358
      %v7440 = vunpack.c.l.b16 %v7359
      %v7441 = vunpack.c.l.b16 %v7360
      %v7442 = vunpack.c.l.b16 %v7361
      %v7443 = vunpack.c.l.b16 %v7362
      %v7444 = vunpack.c.l.b16 %v7363
      %v7445 = vunpack.c.l.b16 %v7364
      %v7446 = vunpack.c.l.b16 %v7365
      %v7447 = vunpack.c.l.b16 %v7366
      %v7448 = vunpack.c.l.b16 %v7367
      %v7449 = vunpack.c.l.b16 %v7368
      %v7450 = vunpack.c.l.b16 %v7369
      %v7451 = vunpack.c.l.b16 %v7370
      %v7452 = vunpack.c.l.b16 %v7371
      %v7453 = vpack.c.b16 %v7422, %v7421
      %v7454 = vpack.c.b16 %v7424, %v7423
      %v7455 = vpack.c.b16 %v7426, %v7425
      %v7456 = vpack.c.b16 %v7428, %v7427
      %v7457 = vpack.c.b16 %v7430, %v7429
      %v7458 = vpack.c.b16 %v7432, %v7431
      %v7459 = vpack.c.b16 %v7434, %v7433
      %v7460 = vpack.c.b16 %v7436, %v7435
      %v7461 = vpack.c.b16 %v7438, %v7437
      %v7462 = vpack.c.b16 %v7440, %v7439
      %v7463 = vpack.c.b16 %v7442, %v7441
      %v7464 = vpack.c.b16 %v7444, %v7443
      %v7465 = vpack.c.b16 %v7446, %v7445
      %v7466 = vpack.c.b16 %v7448, %v7447
      %v7467 = vpack.c.b16 %v7450, %v7449
      %v7468 = vpack.c.b16 %v7452, %v7451
      %v7501 = vunpack.c.l.b16 %v7373
      %v7502 = vunpack.c.l.b16 %v7374
      %v7503 = vunpack.c.l.b16 %v7375
      %v7504 = vunpack.c.l.b16 %v7376
      %v7505 = vunpack.c.l.b16 %v7377
      %v7506 = vunpack.c.l.b16 %v7378
      %v7507 = vunpack.c.l.b16 %v7379
      %v7508 = vunpack.c.l.b16 %v7380
      %v7509 = vunpack.c.l.b16 %v7381
      %v7510 = vunpack.c.l.b16 %v7382
      %v7511 = vunpack.c.l.b16 %v7383
      %v7512 = vunpack.c.l.b16 %v7384
      %v7513 = vunpack.c.l.b16 %v7385
      %v7514 = vunpack.c.l.b16 %v7386
      %v7515 = vunpack.c.l.b16 %v7387
      %v7516 = vunpack.c.l.b16 %v7388
      %v7517 = vpack.c.b16 %v7502, %v7501
      %v7518 = vpack.c.b16 %v7504, %v7503
      %v7519 = vpack.c.b16 %v7506, %v7505
      %v7520 = vpack.c.b16 %v7508, %v7507
      %v7521 = vpack.c.b16 %v7510, %v7509
      %v7522 = vpack.c.b16 %v7512, %v7511
      %v7523 = vpack.c.b16 %v7514, %v7513
      %v7524 = vpack.c.b16 %v7516, %v7515
      %7533 = vmatprep.subr.bf16.mxu0 0
      %7534 = vmatpush1.bf16.msra.mxu0 %v7517
      %7535 = vmatprep.subr.bf16.mxu0 0
      %7536 = vmatpush1.bf16.msra.mxu0 %v7518
      %7537 = vmatprep.subr.bf16.mxu0 0
      %7538 = vmatpush1.bf16.msra.mxu0 %v7519
      %7539 = vmatprep.subr.bf16.mxu0 0
      %7540 = vmatpush1.bf16.msra.mxu0 %v7520
      %7541 = vmatprep.subr.bf16.mxu0 0
      %7542 = vmatpush1.bf16.msra.mxu0 %v7521
      %7543 = vmatprep.subr.bf16.mxu0 0
      %7544 = vmatpush1.bf16.msra.mxu0 %v7522
      %7545 = vmatprep.subr.bf16.mxu0 0
      %7546 = vmatpush1.bf16.msra.mxu0 %v7523
      %7547 = vmatprep.subr.bf16.mxu0 0
      %7548 = vmatpush1.bf16.msra.mxu0 %v7524
      %7549 = vmatprep.subr.bf16.mxu0 0
      %7550 = vmatpush1.bf16.msra.mxu0 0
      %7551 = vmatprep.subr.bf16.mxu0 0
      %7552 = vmatpush1.bf16.msra.mxu0 0
      %7553 = vmatprep.subr.bf16.mxu0 0
      %7554 = vmatpush1.bf16.msra.mxu0 0
      %7555 = vmatprep.subr.bf16.mxu0 0
      %7556 = vmatpush1.bf16.msra.mxu0 0
      %7557 = vmatprep.subr.bf16.mxu0 0
      %7558 = vmatpush1.bf16.msra.mxu0 0
      %7559 = vmatprep.subr.bf16.mxu0 0
      %7560 = vmatpush1.bf16.msra.mxu0 0
      %7561 = vmatprep.subr.bf16.mxu0 0
      %7562 = vmatpush1.bf16.msra.mxu0 0
      %7563 = vmatprep.subr.bf16.mxu0 0
      %7564 = vmatpush1.bf16.msra.mxu0 0
      %7565 = vmatprep.mubr.bf16.mxu0 0
      %7566 = vmatmul.mubr.bf16.gmra.mrb[0].mxu0 %v7453
      %v7567 = vpop.f32.mrb[0].mxu0
      %v7568 = vadd.f32 0.0, %v7567
      %v7569 = vpop.f32.mrb[0].mxu0
      %v7570 = vpop.f32.mrb[0].mxu0
      %v7571 = vadd.f32 0.0, %v7570
      %v7572 = vpop.f32.mrb[0].mxu0
      %7573 = vmatprep.mubr.bf16.mxu0 0
      %7574 = vmatmul.mubr.bf16.gmra.mrb[0].mxu0 %v7454
      %v7575 = vpop.f32.mrb[0].mxu0
      %v7576 = vadd.f32 0.0, %v7575
      %v7577 = vpop.f32.mrb[0].mxu0
      %v7578 = vpop.f32.mrb[0].mxu0
      %v7579 = vadd.f32 0.0, %v7578
      %v7580 = vpop.f32.mrb[0].mxu0
      %7581 = vmatprep.mubr.bf16.mxu0 0
      %7582 = vmatmul.mubr.bf16.gmra.mrb[0].mxu0 %v7455
      %v7583 = vpop.f32.mrb[0].mxu0
      %v7584 = vadd.f32 0.0, %v7583
      %v7585 = vpop.f32.mrb[0].mxu0
      %v7586 = vpop.f32.mrb[0].mxu0
      %v7587 = vadd.f32 0.0, %v7586
      %v7588 = vpop.f32.mrb[0].mxu0
      %7589 = vmatprep.mubr.bf16.mxu0 0
      %7590 = vmatmul.mubr.bf16.gmra.mrb[0].mxu0 %v7456
      %v7591 = vpop.f32.mrb[0].mxu0
      %v7592 = vadd.f32 0.0, %v7591
      %v7593 = vpop.f32.mrb[0].mxu0
      %v7594 = vpop.f32.mrb[0].mxu0
      %v7595 = vadd.f32 0.0, %v7594
      %v7596 = vpop.f32.mrb[0].mxu0
      %7597 = vmatprep.mubr.bf16.mxu0 0
      %7598 = vmatmul.mubr.bf16.gmra.mrb[0].mxu0 %v7457
      %v7599 = vpop.f32.mrb[0].mxu0
      %v7600 = vadd.f32 0.0, %v7599
      %v7601 = vpop.f32.mrb[0].mxu0
      %v7602 = vpop.f32.mrb[0].mxu0
      %v7603 = vadd.f32 0.0, %v7602
      %v7604 = vpop.f32.mrb[0].mxu0
      %7605 = vmatprep.mubr.bf16.mxu0 0
      %7606 = vmatmul.mubr.bf16.gmra.mrb[0].mxu0 %v7458
      %v7607 = vpop.f32.mrb[0].mxu0
      %v7608 = vadd.f32 0.0, %v7607
      %v7609 = vpop.f32.mrb[0].mxu0
      %v7610 = vpop.f32.mrb[0].mxu0
      %v7611 = vadd.f32 0.0, %v7610
      %v7612 = vpop.f32.mrb[0].mxu0
      %7613 = vmatprep.mubr.bf16.mxu0 0
      %7614 = vmatmul.mubr.bf16.gmra.mrb[0].mxu0 %v7459
      %v7615 = vpop.f32.mrb[0].mxu0
      %v7616 = vadd.f32 0.0, %v7615
      %v7617 = vpop.f32.mrb[0].mxu0
      %v7618 = vpop.f32.mrb[0].mxu0
      %v7619 = vadd.f32 0.0, %v7618
      %v7620 = vpop.f32.mrb[0].mxu0
      %7621 = vmatprep.mubr.bf16.mxu0 0
      %7622 = vmatmul.mubr.bf16.gmra.mrb[0].mxu0 %v7460
      %v7623 = vpop.f32.mrb[0].mxu0
      %v7624 = vadd.f32 0.0, %v7623
      %v7625 = vpop.f32.mrb[0].mxu0
      %v7626 = vpop.f32.mrb[0].mxu0
      %v7627 = vadd.f32 0.0, %v7626
      %v7628 = vpop.f32.mrb[0].mxu0
      %7629 = vmatprep.mubr.bf16.mxu0 0
      %7630 = vmatmul.mubr.bf16.gmra.mrb[0].mxu0 %v7461
      %v7631 = vpop.f32.mrb[0].mxu0
      %v7632 = vadd.f32 0.0, %v7631
      %v7633 = vpop.f32.mrb[0].mxu0
      %v7634 = vpop.f32.mrb[0].mxu0
      %v7635 = vadd.f32 0.0, %v7634
      %v7636 = vpop.f32.mrb[0].mxu0
      %7637 = vmatprep.mubr.bf16.mxu0 0
      %7638 = vmatmul.mubr.bf16.gmra.mrb[0].mxu0 %v7462
      %v7639 = vpop.f32.mrb[0].mxu0
      %v7640 = vadd.f32 0.0, %v7639
      %v7641 = vpop.f32.mrb[0].mxu0
      %v7642 = vpop.f32.mrb[0].mxu0
      %v7643 = vadd.f32 0.0, %v7642
      %v7644 = vpop.f32.mrb[0].mxu0
      %7645 = vmatprep.mubr.bf16.mxu0 0
      %7646 = vmatmul.mubr.bf16.gmra.mrb[0].mxu0 %v7463
      %v7647 = vpop.f32.mrb[0].mxu0
      %v7648 = vadd.f32 0.0, %v7647
      %v7649 = vpop.f32.mrb[0].mxu0
      %v7650 = vpop.f32.mrb[0].mxu0
      %v7651 = vadd.f32 0.0, %v7650
      %v7652 = vpop.f32.mrb[0].mxu0
      %7653 = vmatprep.mubr.bf16.mxu0 0
      %7654 = vmatmul.mubr.bf16.gmra.mrb[0].mxu0 %v7464
      %v7655 = vpop.f32.mrb[0].mxu0
      %v7656 = vadd.f32 0.0, %v7655
      %v7657 = vpop.f32.mrb[0].mxu0
      %v7658 = vpop.f32.mrb[0].mxu0
      %v7659 = vadd.f32 0.0, %v7658
      %v7660 = vpop.f32.mrb[0].mxu0
      %7661 = vmatprep.mubr.bf16.mxu0 0
      %7662 = vmatmul.mubr.bf16.gmra.mrb[0].mxu0 %v7465
      %v7663 = vpop.f32.mrb[0].mxu0
      %v7664 = vadd.f32 0.0, %v7663
      %v7665 = vpop.f32.mrb[0].mxu0
      %v7666 = vpop.f32.mrb[0].mxu0
      %v7667 = vadd.f32 0.0, %v7666
      %v7668 = vpop.f32.mrb[0].mxu0
      %7669 = vmatprep.mubr.bf16.mxu0 0
      %7670 = vmatmul.mubr.bf16.gmra.mrb[0].mxu0 %v7466
      %v7671 = vpop.f32.mrb[0].mxu0
      %v7672 = vadd.f32 0.0, %v7671
      %v7673 = vpop.f32.mrb[0].mxu0
      %v7674 = vpop.f32.mrb[0].mxu0
      %v7675 = vadd.f32 0.0, %v7674
      %v7676 = vpop.f32.mrb[0].mxu0
      %7677 = vmatprep.mubr.bf16.mxu0 0
      %7678 = vmatmul.mubr.bf16.gmra.mrb[0].mxu0 %v7467
      %v7679 = vpop.f32.mrb[0].mxu0
      %v7680 = vadd.f32 0.0, %v7679
      %v7681 = vpop.f32.mrb[0].mxu0
      %v7682 = vpop.f32.mrb[0].mxu0
      %v7683 = vadd.f32 0.0, %v7682
      %v7684 = vpop.f32.mrb[0].mxu0
      %7685 = vmatprep.mubr.bf16.mxu0 0
      %7686 = vmatmul.mubr.bf16.gmra.mrb[0].mxu0 %v7468
      %v7687 = vpop.f32.mrb[0].mxu0
      %v7688 = vadd.f32 0.0, %v7687
      %v7689 = vpop.f32.mrb[0].mxu0
      %v7690 = vpop.f32.mrb[0].mxu0
      %v7691 = vadd.f32 0.0, %v7690
      %v7692 = vpop.f32.mrb[0].mxu0
      %7693 = vdwg.mxu0
      %v7694 = vadd.f32 %v7308, %v7568
      %v7695 = vadd.f32 %v7309, %v7571
      %v7696 = vadd.f32 %v7310, %v7576
      %v7697 = vadd.f32 %v7311, %v7579
      %v7698 = vadd.f32 %v7312, %v7584
      %v7699 = vadd.f32 %v7313, %v7587
      %v7700 = vadd.f32 %v7314, %v7592
      %v7701 = vadd.f32 %v7315, %v7595
      %v7702 = vadd.f32 %v7316, %v7600
      %v7703 = vadd.f32 %v7317, %v7603
      %v7704 = vadd.f32 %v7318, %v7608
      %v7705 = vadd.f32 %v7319, %v7611
      %v7706 = vadd.f32 %v7320, %v7616
      %v7707 = vadd.f32 %v7321, %v7619
      %v7708 = vadd.f32 %v7322, %v7624
      %v7709 = vadd.f32 %v7323, %v7627
      %v7710 = vadd.f32 %v7324, %v7632
      %v7711 = vadd.f32 %v7325, %v7635
      %v7712 = vadd.f32 %v7326, %v7640
      %v7713 = vadd.f32 %v7327, %v7643
      %v7714 = vadd.f32 %v7328, %v7648
      %v7715 = vadd.f32 %v7329, %v7651
      %v7716 = vadd.f32 %v7330, %v7656
      %v7717 = vadd.f32 %v7331, %v7659
      %v7718 = vadd.f32 %v7332, %v7664
      %v7719 = vadd.f32 %v7333, %v7667
      %v7720 = vadd.f32 %v7334, %v7672
      %v7721 = vadd.f32 %v7335, %v7675
      %v7722 = vadd.f32 %v7336, %v7680
      %v7723 = vadd.f32 %v7337, %v7683
      %v7724 = vadd.f32 %v7338, %v7688
      %v7725 = vadd.f32 %v7339, %v7691
      %v7726 = vld [vmem:[%s5697] sm:$0xf]
      %v7727 = vld [vmem:[%s5697 + $0x4] sm:$0xf]
      %v7728 = vld [vmem:[%s5697 + $0x8] sm:$0x1]
      %v7729 = vld [vmem:[%s5697 + $0xc] sm:$0xf]
      %v7730 = vld [vmem:[%s5697 + $0x10] sm:$0xf]
      %v7731 = vld [vmem:[%s5697 + $0x14] sm:$0x1]
      %v7732 = vld [vmem:[%s5697 + $0x18] sm:$0xf]
      %v7733 = vld [vmem:[%s5697 + $0x1c] sm:$0xf]
      %v7734 = vld [vmem:[%s5697 + $0x20] sm:$0x1]
      %v7735 = vld [vmem:[%s5697 + $0x24] sm:$0xf]
      %v7736 = vld [vmem:[%s5697 + $0x28] sm:$0xf]
      %v7737 = vld [vmem:[%s5697 + $0x2c] sm:$0x1]
      %v7738 = vld [vmem:[%s5697 + $0x30] sm:$0xf]
      %v7739 = vld [vmem:[%s5697 + $0x34] sm:$0xf]
      %v7740 = vld [vmem:[%s5697 + $0x38] sm:$0x1]
      %v7741 = vld [vmem:[%s5697 + $0x3c] sm:$0xf]
      %v7742 = vld [vmem:[%s5697 + $0x40] sm:$0xf]
      %v7743 = vld [vmem:[%s5697 + $0x44] sm:$0x1]
      %v7744 = vld [vmem:[%s5697 + $0x48] sm:$0xf]
      %v7745 = vld [vmem:[%s5697 + $0x4c] sm:$0xf]
      %v7746 = vld [vmem:[%s5697 + $0x50] sm:$0x1]
      %v7747 = vld [vmem:[%s5697 + $0x54] sm:$0xf]
      %v7748 = vld [vmem:[%s5697 + $0x58] sm:$0xf]
      %v7749 = vld [vmem:[%s5697 + $0x5c] sm:$0x1]
      %v7750 = vld [vmem:[%s5697 + $0x60] sm:$0xf]
      %v7751 = vld [vmem:[%s5697 + $0x64] sm:$0xf]
      %v7752 = vld [vmem:[%s5697 + $0x68] sm:$0x1]
      %v7753 = vld [vmem:[%s5697 + $0x6c] sm:$0xf]
      %v7754 = vld [vmem:[%s5697 + $0x70] sm:$0xf]
      %v7755 = vld [vmem:[%s5697 + $0x74] sm:$0x1]
      %v7756 = vld [vmem:[%s5697 + $0x78] sm:$0xf]
      %v7757 = vld [vmem:[%s5697 + $0x7c] sm:$0xf]
      %v7758 = vld [vmem:[%s5697 + $0x80] sm:$0x1]
      %v7759 = vld [vmem:[%s5697 + $0x84] sm:$0xf]
      %v7760 = vld [vmem:[%s5697 + $0x88] sm:$0xf]
      %v7761 = vld [vmem:[%s5697 + $0x8c] sm:$0x1]
      %v7762 = vld [vmem:[%s5697 + $0x90] sm:$0xf]
      %v7763 = vld [vmem:[%s5697 + $0x94] sm:$0xf]
      %v7764 = vld [vmem:[%s5697 + $0x98] sm:$0x1]
      %v7765 = vld [vmem:[%s5697 + $0x9c] sm:$0xf]
      %v7766 = vld [vmem:[%s5697 + $0xa0] sm:$0xf]
      %v7767 = vld [vmem:[%s5697 + $0xa4] sm:$0x1]
      %v7768 = vld [vmem:[%s5697 + $0xa8] sm:$0xf]
      %v7769 = vld [vmem:[%s5697 + $0xac] sm:$0xf]
      %v7770 = vld [vmem:[%s5697 + $0xb0] sm:$0x1]
      %v7771 = vld [vmem:[%s5697 + $0xb4] sm:$0xf]
      %v7772 = vld [vmem:[%s5697 + $0xb8] sm:$0xf]
      %v7773 = vld [vmem:[%s5697 + $0xbc] sm:$0x1]
      %v7775 = vshrl.u32 %v7726, 16
      %v7777 = vrot.slane %v7775, 4
      %v7778 = vshll.u32 %v7726, 16
      %v7780 = vrot.slane %v7778, 5
      %v7781 = vor.u32 %v7777, %v7780
      %v7782 = vrot.slane %v7781, 4
      %v7784 = vshll.u32 %v7727, 16
      %v7786 = vrot.slane %v7784, 5
      %v7787 = vsel %vm346, %v7782, %v7786
      %v7788 = vshrl.u32 %v7727, 16
      %v7790 = vrot.slane %v7788, 4
      %v7791 = vor.u32 %v7790, %v7786
      %v7792 = vrot.slane %v7791, 4
      %v7794 = vshll.u32 %v7728, 16
      %v7796 = vrot.slane %v7794, 5
      %v7797 = vsel %vm346, %v7792, %v7796
      %v7799 = vshrl.u32 %v7729, 16
      %v7801 = vrot.slane %v7799, 4
      %v7802 = vshll.u32 %v7729, 16
      %v7804 = vrot.slane %v7802, 5
      %v7805 = vor.u32 %v7801, %v7804
      %v7806 = vrot.slane %v7805, 4
      %v7808 = vshll.u32 %v7730, 16
      %v7810 = vrot.slane %v7808, 5
      %v7811 = vsel %vm346, %v7806, %v7810
      %v7812 = vshrl.u32 %v7730, 16
      %v7814 = vrot.slane %v7812, 4
      %v7815 = vor.u32 %v7814, %v7810
      %v7816 = vrot.slane %v7815, 4
      %v7818 = vshll.u32 %v7731, 16
      %v7820 = vrot.slane %v7818, 5
      %v7821 = vsel %vm346, %v7816, %v7820
      %v7823 = vshrl.u32 %v7732, 16
      %v7825 = vrot.slane %v7823, 4
      %v7826 = vshll.u32 %v7732, 16
      %v7828 = vrot.slane %v7826, 5
      %v7829 = vor.u32 %v7825, %v7828
      %v7830 = vrot.slane %v7829, 4
      %v7832 = vshll.u32 %v7733, 16
      %v7834 = vrot.slane %v7832, 5
      %v7835 = vsel %vm346, %v7830, %v7834
      %v7836 = vshrl.u32 %v7733, 16
      %v7838 = vrot.slane %v7836, 4
      %v7839 = vor.u32 %v7838, %v7834
      %v7840 = vrot.slane %v7839, 4
      %v7842 = vshll.u32 %v7734, 16
      %v7844 = vrot.slane %v7842, 5
      %v7845 = vsel %vm346, %v7840, %v7844
      %v7847 = vshrl.u32 %v7735, 16
      %v7849 = vrot.slane %v7847, 4
      %v7850 = vshll.u32 %v7735, 16
      %v7852 = vrot.slane %v7850, 5
      %v7853 = vor.u32 %v7849, %v7852
      %v7854 = vrot.slane %v7853, 4
      %v7856 = vshll.u32 %v7736, 16
      %v7858 = vrot.slane %v7856, 5
      %v7859 = vsel %vm346, %v7854, %v7858
      %v7860 = vshrl.u32 %v7736, 16
      %v7862 = vrot.slane %v7860, 4
      %v7863 = vor.u32 %v7862, %v7858
      %v7864 = vrot.slane %v7863, 4
      %v7866 = vshll.u32 %v7737, 16
      %v7868 = vrot.slane %v7866, 5
      %v7869 = vsel %vm346, %v7864, %v7868
      %v7871 = vshrl.u32 %v7738, 16
      %v7873 = vrot.slane %v7871, 4
      %v7874 = vshll.u32 %v7738, 16
      %v7876 = vrot.slane %v7874, 5
      %v7877 = vor.u32 %v7873, %v7876
      %v7878 = vrot.slane %v7877, 4
      %v7880 = vshll.u32 %v7739, 16
      %v7882 = vrot.slane %v7880, 5
      %v7883 = vsel %vm346, %v7878, %v7882
      %v7884 = vshrl.u32 %v7739, 16
      %v7886 = vrot.slane %v7884, 4
      %v7887 = vor.u32 %v7886, %v7882
      %v7888 = vrot.slane %v7887, 4
      %v7890 = vshll.u32 %v7740, 16
      %v7892 = vrot.slane %v7890, 5
      %v7893 = vsel %vm346, %v7888, %v7892
      %v7895 = vshrl.u32 %v7741, 16
      %v7897 = vrot.slane %v7895, 4
      %v7898 = vshll.u32 %v7741, 16
      %v7900 = vrot.slane %v7898, 5
      %v7901 = vor.u32 %v7897, %v7900
      %v7902 = vrot.slane %v7901, 4
      %v7904 = vshll.u32 %v7742, 16
      %v7906 = vrot.slane %v7904, 5
      %v7907 = vsel %vm346, %v7902, %v7906
      %v7908 = vshrl.u32 %v7742, 16
      %v7910 = vrot.slane %v7908, 4
      %v7911 = vor.u32 %v7910, %v7906
      %v7912 = vrot.slane %v7911, 4
      %v7914 = vshll.u32 %v7743, 16
      %v7916 = vrot.slane %v7914, 5
      %v7917 = vsel %vm346, %v7912, %v7916
      %v7919 = vshrl.u32 %v7744, 16
      %v7921 = vrot.slane %v7919, 4
      %v7922 = vshll.u32 %v7744, 16
      %v7924 = vrot.slane %v7922, 5
      %v7925 = vor.u32 %v7921, %v7924
      %v7926 = vrot.slane %v7925, 4
      %v7928 = vshll.u32 %v7745, 16
      %v7930 = vrot.slane %v7928, 5
      %v7931 = vsel %vm346, %v7926, %v7930
      %v7932 = vshrl.u32 %v7745, 16
      %v7934 = vrot.slane %v7932, 4
      %v7935 = vor.u32 %v7934, %v7930
      %v7936 = vrot.slane %v7935, 4
      %v7938 = vshll.u32 %v7746, 16
      %v7940 = vrot.slane %v7938, 5
      %v7941 = vsel %vm346, %v7936, %v7940
      %v7943 = vshrl.u32 %v7747, 16
      %v7945 = vrot.slane %v7943, 4
      %v7946 = vshll.u32 %v7747, 16
      %v7948 = vrot.slane %v7946, 5
      %v7949 = vor.u32 %v7945, %v7948
      %v7950 = vrot.slane %v7949, 4
      %v7952 = vshll.u32 %v7748, 16
      %v7954 = vrot.slane %v7952, 5
      %v7955 = vsel %vm346, %v7950, %v7954
      %v7956 = vshrl.u32 %v7748, 16
      %v7958 = vrot.slane %v7956, 4
      %v7959 = vor.u32 %v7958, %v7954
      %v7960 = vrot.slane %v7959, 4
      %v7962 = vshll.u32 %v7749, 16
      %v7964 = vrot.slane %v7962, 5
      %v7965 = vsel %vm346, %v7960, %v7964
      %v7967 = vshrl.u32 %v7750, 16
      %v7969 = vrot.slane %v7967, 4
      %v7970 = vshll.u32 %v7750, 16
      %v7972 = vrot.slane %v7970, 5
      %v7973 = vor.u32 %v7969, %v7972
      %v7974 = vrot.slane %v7973, 4
      %v7976 = vshll.u32 %v7751, 16
      %v7978 = vrot.slane %v7976, 5
      %v7979 = vsel %vm346, %v7974, %v7978
      %v7980 = vshrl.u32 %v7751, 16
      %v7982 = vrot.slane %v7980, 4
      %v7983 = vor.u32 %v7982, %v7978
      %v7984 = vrot.slane %v7983, 4
      %v7986 = vshll.u32 %v7752, 16
      %v7988 = vrot.slane %v7986, 5
      %v7989 = vsel %vm346, %v7984, %v7988
      %v7991 = vshrl.u32 %v7753, 16
      %v7993 = vrot.slane %v7991, 4
      %v7994 = vshll.u32 %v7753, 16
      %v7996 = vrot.slane %v7994, 5
      %v7997 = vor.u32 %v7993, %v7996
      %v7998 = vrot.slane %v7997, 4
      %v8000 = vshll.u32 %v7754, 16
      %v8002 = vrot.slane %v8000, 5
      %v8003 = vsel %vm346, %v7998, %v8002
      %v8004 = vshrl.u32 %v7754, 16
      %v8006 = vrot.slane %v8004, 4
      %v8007 = vor.u32 %v8006, %v8002
      %v8008 = vrot.slane %v8007, 4
      %v8010 = vshll.u32 %v7755, 16
      %v8012 = vrot.slane %v8010, 5
      %v8013 = vsel %vm346, %v8008, %v8012
      %v8015 = vshrl.u32 %v7756, 16
      %v8017 = vrot.slane %v8015, 4
      %v8018 = vshll.u32 %v7756, 16
      %v8020 = vrot.slane %v8018, 5
      %v8021 = vor.u32 %v8017, %v8020
      %v8022 = vrot.slane %v8021, 4
      %v8024 = vshll.u32 %v7757, 16
      %v8026 = vrot.slane %v8024, 5
      %v8027 = vsel %vm346, %v8022, %v8026
      %v8028 = vshrl.u32 %v7757, 16
      %v8030 = vrot.slane %v8028, 4
      %v8031 = vor.u32 %v8030, %v8026
      %v8032 = vrot.slane %v8031, 4
      %v8034 = vshll.u32 %v7758, 16
      %v8036 = vrot.slane %v8034, 5
      %v8037 = vsel %vm346, %v8032, %v8036
      %v8039 = vshrl.u32 %v7759, 16
      %v8041 = vrot.slane %v8039, 4
      %v8042 = vshll.u32 %v7759, 16
      %v8044 = vrot.slane %v8042, 5
      %v8045 = vor.u32 %v8041, %v8044
      %v8046 = vrot.slane %v8045, 4
      %v8048 = vshll.u32 %v7760, 16
      %v8050 = vrot.slane %v8048, 5
      %v8051 = vsel %vm346, %v8046, %v8050
      %v8052 = vshrl.u32 %v7760, 16
      %v8054 = vrot.slane %v8052, 4
      %v8055 = vor.u32 %v8054, %v8050
      %v8056 = vrot.slane %v8055, 4
      %v8058 = vshll.u32 %v7761, 16
      %v8060 = vrot.slane %v8058, 5
      %v8061 = vsel %vm346, %v8056, %v8060
      %v8063 = vshrl.u32 %v7762, 16
      %v8065 = vrot.slane %v8063, 4
      %v8066 = vshll.u32 %v7762, 16
      %v8068 = vrot.slane %v8066, 5
      %v8069 = vor.u32 %v8065, %v8068
      %v8070 = vrot.slane %v8069, 4
      %v8072 = vshll.u32 %v7763, 16
      %v8074 = vrot.slane %v8072, 5
      %v8075 = vsel %vm346, %v8070, %v8074
      %v8076 = vshrl.u32 %v7763, 16
      %v8078 = vrot.slane %v8076, 4
      %v8079 = vor.u32 %v8078, %v8074
      %v8080 = vrot.slane %v8079, 4
      %v8082 = vshll.u32 %v7764, 16
      %v8084 = vrot.slane %v8082, 5
      %v8085 = vsel %vm346, %v8080, %v8084
      %v8087 = vshrl.u32 %v7765, 16
      %v8089 = vrot.slane %v8087, 4
      %v8090 = vshll.u32 %v7765, 16
      %v8092 = vrot.slane %v8090, 5
      %v8093 = vor.u32 %v8089, %v8092
      %v8094 = vrot.slane %v8093, 4
      %v8096 = vshll.u32 %v7766, 16
      %v8098 = vrot.slane %v8096, 5
      %v8099 = vsel %vm346, %v8094, %v8098
      %v8100 = vshrl.u32 %v7766, 16
      %v8102 = vrot.slane %v8100, 4
      %v8103 = vor.u32 %v8102, %v8098
      %v8104 = vrot.slane %v8103, 4
      %v8106 = vshll.u32 %v7767, 16
      %v8108 = vrot.slane %v8106, 5
      %v8109 = vsel %vm346, %v8104, %v8108
      %v8111 = vshrl.u32 %v7768, 16
      %v8113 = vrot.slane %v8111, 4
      %v8114 = vshll.u32 %v7768, 16
      %v8116 = vrot.slane %v8114, 5
      %v8117 = vor.u32 %v8113, %v8116
      %v8118 = vrot.slane %v8117, 4
      %v8120 = vshll.u32 %v7769, 16
      %v8122 = vrot.slane %v8120, 5
      %v8123 = vsel %vm346, %v8118, %v8122
      %v8124 = vshrl.u32 %v7769, 16
      %v8126 = vrot.slane %v8124, 4
      %v8127 = vor.u32 %v8126, %v8122
      %v8128 = vrot.slane %v8127, 4
      %v8130 = vshll.u32 %v7770, 16
      %v8132 = vrot.slane %v8130, 5
      %v8133 = vsel %vm346, %v8128, %v8132
      %v8135 = vshrl.u32 %v7771, 16
      %v8137 = vrot.slane %v8135, 4
      %v8138 = vshll.u32 %v7771, 16
      %v8140 = vrot.slane %v8138, 5
      %v8141 = vor.u32 %v8137, %v8140
      %v8142 = vrot.slane %v8141, 4
      %v8144 = vshll.u32 %v7772, 16
      %v8146 = vrot.slane %v8144, 5
      %v8147 = vsel %vm346, %v8142, %v8146
      %v8148 = vshrl.u32 %v7772, 16
      %v8150 = vrot.slane %v8148, 4
      %v8151 = vor.u32 %v8150, %v8146
      %v8152 = vrot.slane %v8151, 4
      %v8154 = vshll.u32 %v7773, 16
      %v8156 = vrot.slane %v8154, 5
      %v8157 = vsel %vm346, %v8152, %v8156
      %s8158 = scalar_lea.vmem %s3, 256
      %v8159 = vld [vmem:[%s8158] sm:$0xf]
      %v8160 = vld [vmem:[%s8158 + $0x4] sm:$0xf]
      %v8161 = vld [vmem:[%s8158 + $0x8] sm:$0xf]
      %v8162 = vld [vmem:[%s8158 + $0xc] sm:$0xf]
      %v8163 = vld [vmem:[%s8158 + $0x10] sm:$0xf]
      %v8164 = vld [vmem:[%s8158 + $0x14] sm:$0xf]
      %v8165 = vld [vmem:[%s8158 + $0x18] sm:$0xf]
      %v8166 = vld [vmem:[%s8158 + $0x1c] sm:$0xf]
      %v8167 = vld [vmem:[%s8158 + $0x20] sm:$0xf]
      %v8168 = vld [vmem:[%s8158 + $0x24] sm:$0xf]
      %v8169 = vld [vmem:[%s8158 + $0x28] sm:$0xf]
      %v8170 = vld [vmem:[%s8158 + $0x2c] sm:$0xf]
      %v8171 = vld [vmem:[%s8158 + $0x30] sm:$0xf]
      %v8172 = vld [vmem:[%s8158 + $0x34] sm:$0xf]
      %v8173 = vld [vmem:[%s8158 + $0x38] sm:$0xf]
      %v8174 = vld [vmem:[%s8158 + $0x3c] sm:$0xf]
      %v8175 = vunpack.c.l.b16 %v7787
      %v8176 = vunpack.c.l.b16 %v7797
      %v8177 = vunpack.c.l.b16 %v7811
      %v8178 = vunpack.c.l.b16 %v7821
      %v8179 = vunpack.c.l.b16 %v7835
      %v8180 = vunpack.c.l.b16 %v7845
      %v8181 = vunpack.c.l.b16 %v7859
      %v8182 = vunpack.c.l.b16 %v7869
      %v8183 = vunpack.c.l.b16 %v7883
      %v8184 = vunpack.c.l.b16 %v7893
      %v8185 = vunpack.c.l.b16 %v7907
      %v8186 = vunpack.c.l.b16 %v7917
      %v8187 = vunpack.c.l.b16 %v7931
      %v8188 = vunpack.c.l.b16 %v7941
      %v8189 = vunpack.c.l.b16 %v7955
      %v8190 = vunpack.c.l.b16 %v7965
      %v8191 = vunpack.c.l.b16 %v7979
      %v8192 = vunpack.c.l.b16 %v7989
      %v8193 = vunpack.c.l.b16 %v8003
      %v8194 = vunpack.c.l.b16 %v8013
      %v8195 = vunpack.c.l.b16 %v8027
      %v8196 = vunpack.c.l.b16 %v8037
      %v8197 = vunpack.c.l.b16 %v8051
      %v8198 = vunpack.c.l.b16 %v8061
      %v8199 = vunpack.c.l.b16 %v8075
      %v8200 = vunpack.c.l.b16 %v8085
      %v8201 = vunpack.c.l.b16 %v8099
      %v8202 = vunpack.c.l.b16 %v8109
      %v8203 = vunpack.c.l.b16 %v8123
      %v8204 = vunpack.c.l.b16 %v8133
      %v8205 = vunpack.c.l.b16 %v8147
      %v8206 = vunpack.c.l.b16 %v8157
      %v8207 = vpack.c.b16 %v8176, %v8175
      %v8208 = vpack.c.b16 %v8178, %v8177
      %v8209 = vpack.c.b16 %v8180, %v8179
      %v8210 = vpack.c.b16 %v8182, %v8181
      %v8211 = vpack.c.b16 %v8184, %v8183
      %v8212 = vpack.c.b16 %v8186, %v8185
      %v8213 = vpack.c.b16 %v8188, %v8187
      %v8214 = vpack.c.b16 %v8190, %v8189
      %v8215 = vpack.c.b16 %v8192, %v8191
      %v8216 = vpack.c.b16 %v8194, %v8193
      %v8217 = vpack.c.b16 %v8196, %v8195
      %v8218 = vpack.c.b16 %v8198, %v8197
      %v8219 = vpack.c.b16 %v8200, %v8199
      %v8220 = vpack.c.b16 %v8202, %v8201
      %v8221 = vpack.c.b16 %v8204, %v8203
      %v8222 = vpack.c.b16 %v8206, %v8205
      %v8255 = vunpack.c.l.b16 %v8159
      %v8256 = vunpack.c.l.b16 %v8160
      %v8257 = vunpack.c.l.b16 %v8161
      %v8258 = vunpack.c.l.b16 %v8162
      %v8259 = vunpack.c.l.b16 %v8163
      %v8260 = vunpack.c.l.b16 %v8164
      %v8261 = vunpack.c.l.b16 %v8165
      %v8262 = vunpack.c.l.b16 %v8166
      %v8263 = vunpack.c.l.b16 %v8167
      %v8264 = vunpack.c.l.b16 %v8168
      %v8265 = vunpack.c.l.b16 %v8169
      %v8266 = vunpack.c.l.b16 %v8170
      %v8267 = vunpack.c.l.b16 %v8171
      %v8268 = vunpack.c.l.b16 %v8172
      %v8269 = vunpack.c.l.b16 %v8173
      %v8270 = vunpack.c.l.b16 %v8174
      %v8271 = vpack.c.b16 %v8256, %v8255
      %v8272 = vpack.c.b16 %v8258, %v8257
      %v8273 = vpack.c.b16 %v8260, %v8259
      %v8274 = vpack.c.b16 %v8262, %v8261
      %v8275 = vpack.c.b16 %v8264, %v8263
      %v8276 = vpack.c.b16 %v8266, %v8265
      %v8277 = vpack.c.b16 %v8268, %v8267
      %v8278 = vpack.c.b16 %v8270, %v8269
      %8287 = vmatprep.subr.bf16.mxu0 0
      %8288 = vmatpush1.bf16.msra.mxu0 %v8271
      %8289 = vmatprep.subr.bf16.mxu0 0
      %8290 = vmatpush1.bf16.msra.mxu0 %v8272
      %8291 = vmatprep.subr.bf16.mxu0 0
      %8292 = vmatpush1.bf16.msra.mxu0 %v8273
      %8293 = vmatprep.subr.bf16.mxu0 0
      %8294 = vmatpush1.bf16.msra.mxu0 %v8274
      %8295 = vmatprep.subr.bf16.mxu0 0
      %8296 = vmatpush1.bf16.msra.mxu0 %v8275
      %8297 = vmatprep.subr.bf16.mxu0 0
      %8298 = vmatpush1.bf16.msra.mxu0 %v8276
      %8299 = vmatprep.subr.bf16.mxu0 0
      %8300 = vmatpush1.bf16.msra.mxu0 %v8277
      %8301 = vmatprep.subr.bf16.mxu0 0
      %8302 = vmatpush1.bf16.msra.mxu0 %v8278
      %8303 = vmatprep.subr.bf16.mxu0 0
      %8304 = vmatpush1.bf16.msra.mxu0 0
      %8305 = vmatprep.subr.bf16.mxu0 0
      %8306 = vmatpush1.bf16.msra.mxu0 0
      %8307 = vmatprep.subr.bf16.mxu0 0
      %8308 = vmatpush1.bf16.msra.mxu0 0
      %8309 = vmatprep.subr.bf16.mxu0 0
      %8310 = vmatpush1.bf16.msra.mxu0 0
      %8311 = vmatprep.subr.bf16.mxu0 0
      %8312 = vmatpush1.bf16.msra.mxu0 0
      %8313 = vmatprep.subr.bf16.mxu0 0
      %8314 = vmatpush1.bf16.msra.mxu0 0
      %8315 = vmatprep.subr.bf16.mxu0 0
      %8316 = vmatpush1.bf16.msra.mxu0 0
      %8317 = vmatprep.subr.bf16.mxu0 0
      %8318 = vmatpush1.bf16.msra.mxu0 0
      %8319 = vmatprep.mubr.bf16.mxu0 0
      %8320 = vmatmul.mubr.bf16.gmra.mrb[0].mxu0 %v8207
      %v8321 = vpop.f32.mrb[0].mxu0
      %v8322 = vadd.f32 0.0, %v8321
      %v8323 = vpop.f32.mrb[0].mxu0
      %v8324 = vpop.f32.mrb[0].mxu0
      %v8325 = vadd.f32 0.0, %v8324
      %v8326 = vpop.f32.mrb[0].mxu0
      %8327 = vmatprep.mubr.bf16.mxu0 0
      %8328 = vmatmul.mubr.bf16.gmra.mrb[0].mxu0 %v8208
      %v8329 = vpop.f32.mrb[0].mxu0
      %v8330 = vadd.f32 0.0, %v8329
      %v8331 = vpop.f32.mrb[0].mxu0
      %v8332 = vpop.f32.mrb[0].mxu0
      %v8333 = vadd.f32 0.0, %v8332
      %v8334 = vpop.f32.mrb[0].mxu0
      %8335 = vmatprep.mubr.bf16.mxu0 0
      %8336 = vmatmul.mubr.bf16.gmra.mrb[0].mxu0 %v8209
      %v8337 = vpop.f32.mrb[0].mxu0
      %v8338 = vadd.f32 0.0, %v8337
      %v8339 = vpop.f32.mrb[0].mxu0
      %v8340 = vpop.f32.mrb[0].mxu0
      %v8341 = vadd.f32 0.0, %v8340
      %v8342 = vpop.f32.mrb[0].mxu0
      %8343 = vmatprep.mubr.bf16.mxu0 0
      %8344 = vmatmul.mubr.bf16.gmra.mrb[0].mxu0 %v8210
      %v8345 = vpop.f32.mrb[0].mxu0
      %v8346 = vadd.f32 0.0, %v8345
      %v8347 = vpop.f32.mrb[0].mxu0
      %v8348 = vpop.f32.mrb[0].mxu0
      %v8349 = vadd.f32 0.0, %v8348
      %v8350 = vpop.f32.mrb[0].mxu0
      %8351 = vmatprep.mubr.bf16.mxu0 0
      %8352 = vmatmul.mubr.bf16.gmra.mrb[0].mxu0 %v8211
      %v8353 = vpop.f32.mrb[0].mxu0
      %v8354 = vadd.f32 0.0, %v8353
      %v8355 = vpop.f32.mrb[0].mxu0
      %v8356 = vpop.f32.mrb[0].mxu0
      %v8357 = vadd.f32 0.0, %v8356
      %v8358 = vpop.f32.mrb[0].mxu0
      %8359 = vmatprep.mubr.bf16.mxu0 0
      %8360 = vmatmul.mubr.bf16.gmra.mrb[0].mxu0 %v8212
      %v8361 = vpop.f32.mrb[0].mxu0
      %v8362 = vadd.f32 0.0, %v8361
      %v8363 = vpop.f32.mrb[0].mxu0
      %v8364 = vpop.f32.mrb[0].mxu0
      %v8365 = vadd.f32 0.0, %v8364
      %v8366 = vpop.f32.mrb[0].mxu0
      %8367 = vmatprep.mubr.bf16.mxu0 0
      %8368 = vmatmul.mubr.bf16.gmra.mrb[0].mxu0 %v8213
      %v8369 = vpop.f32.mrb[0].mxu0
      %v8370 = vadd.f32 0.0, %v8369
      %v8371 = vpop.f32.mrb[0].mxu0
      %v8372 = vpop.f32.mrb[0].mxu0
      %v8373 = vadd.f32 0.0, %v8372
      %v8374 = vpop.f32.mrb[0].mxu0
      %8375 = vmatprep.mubr.bf16.mxu0 0
      %8376 = vmatmul.mubr.bf16.gmra.mrb[0].mxu0 %v8214
      %v8377 = vpop.f32.mrb[0].mxu0
      %v8378 = vadd.f32 0.0, %v8377
      %v8379 = vpop.f32.mrb[0].mxu0
      %v8380 = vpop.f32.mrb[0].mxu0
      %v8381 = vadd.f32 0.0, %v8380
      %v8382 = vpop.f32.mrb[0].mxu0
      %8383 = vmatprep.mubr.bf16.mxu0 0
      %8384 = vmatmul.mubr.bf16.gmra.mrb[0].mxu0 %v8215
      %v8385 = vpop.f32.mrb[0].mxu0
      %v8386 = vadd.f32 0.0, %v8385
      %v8387 = vpop.f32.mrb[0].mxu0
      %v8388 = vpop.f32.mrb[0].mxu0
      %v8389 = vadd.f32 0.0, %v8388
      %v8390 = vpop.f32.mrb[0].mxu0
      %8391 = vmatprep.mubr.bf16.mxu0 0
      %8392 = vmatmul.mubr.bf16.gmra.mrb[0].mxu0 %v8216
      %v8393 = vpop.f32.mrb[0].mxu0
      %v8394 = vadd.f32 0.0, %v8393
      %v8395 = vpop.f32.mrb[0].mxu0
      %v8396 = vpop.f32.mrb[0].mxu0
      %v8397 = vadd.f32 0.0, %v8396
      %v8398 = vpop.f32.mrb[0].mxu0
      %8399 = vmatprep.mubr.bf16.mxu0 0
      %8400 = vmatmul.mubr.bf16.gmra.mrb[0].mxu0 %v8217
      %v8401 = vpop.f32.mrb[0].mxu0
      %v8402 = vadd.f32 0.0, %v8401
      %v8403 = vpop.f32.mrb[0].mxu0
      %v8404 = vpop.f32.mrb[0].mxu0
      %v8405 = vadd.f32 0.0, %v8404
      %v8406 = vpop.f32.mrb[0].mxu0
      %8407 = vmatprep.mubr.bf16.mxu0 0
      %8408 = vmatmul.mubr.bf16.gmra.mrb[0].mxu0 %v8218
      %v8409 = vpop.f32.mrb[0].mxu0
      %v8410 = vadd.f32 0.0, %v8409
      %v8411 = vpop.f32.mrb[0].mxu0
      %v8412 = vpop.f32.mrb[0].mxu0
      %v8413 = vadd.f32 0.0, %v8412
      %v8414 = vpop.f32.mrb[0].mxu0
      %8415 = vmatprep.mubr.bf16.mxu0 0
      %8416 = vmatmul.mubr.bf16.gmra.mrb[0].mxu0 %v8219
      %v8417 = vpop.f32.mrb[0].mxu0
      %v8418 = vadd.f32 0.0, %v8417
      %v8419 = vpop.f32.mrb[0].mxu0
      %v8420 = vpop.f32.mrb[0].mxu0
      %v8421 = vadd.f32 0.0, %v8420
      %v8422 = vpop.f32.mrb[0].mxu0
      %8423 = vmatprep.mubr.bf16.mxu0 0
      %8424 = vmatmul.mubr.bf16.gmra.mrb[0].mxu0 %v8220
      %v8425 = vpop.f32.mrb[0].mxu0
      %v8426 = vadd.f32 0.0, %v8425
      %v8427 = vpop.f32.mrb[0].mxu0
      %v8428 = vpop.f32.mrb[0].mxu0
      %v8429 = vadd.f32 0.0, %v8428
      %v8430 = vpop.f32.mrb[0].mxu0
      %8431 = vmatprep.mubr.bf16.mxu0 0
      %8432 = vmatmul.mubr.bf16.gmra.mrb[0].mxu0 %v8221
      %v8433 = vpop.f32.mrb[0].mxu0
      %v8434 = vadd.f32 0.0, %v8433
      %v8435 = vpop.f32.mrb[0].mxu0
      %v8436 = vpop.f32.mrb[0].mxu0
      %v8437 = vadd.f32 0.0, %v8436
      %v8438 = vpop.f32.mrb[0].mxu0
      %8439 = vmatprep.mubr.bf16.mxu0 0
      %8440 = vmatmul.mubr.bf16.gmra.mrb[0].mxu0 %v8222
      %v8441 = vpop.f32.mrb[0].mxu0
      %v8442 = vadd.f32 0.0, %v8441
      %v8443 = vpop.f32.mrb[0].mxu0
      %v8444 = vpop.f32.mrb[0].mxu0
      %v8445 = vadd.f32 0.0, %v8444
      %v8446 = vpop.f32.mrb[0].mxu0
      %8447 = vdwg.mxu0
      %v8448 = vadd.f32 %v7694, %v8322
      %v8449 = vadd.f32 %v7695, %v8325
      %v8450 = vadd.f32 %v7696, %v8330
      %v8451 = vadd.f32 %v7697, %v8333
      %v8452 = vadd.f32 %v7698, %v8338
      %v8453 = vadd.f32 %v7699, %v8341
      %v8454 = vadd.f32 %v7700, %v8346
      %v8455 = vadd.f32 %v7701, %v8349
      %v8456 = vadd.f32 %v7702, %v8354
      %v8457 = vadd.f32 %v7703, %v8357
      %v8458 = vadd.f32 %v7704, %v8362
      %v8459 = vadd.f32 %v7705, %v8365
      %v8460 = vadd.f32 %v7706, %v8370
      %v8461 = vadd.f32 %v7707, %v8373
      %v8462 = vadd.f32 %v7708, %v8378
      %v8463 = vadd.f32 %v7709, %v8381
      %v8464 = vadd.f32 %v7710, %v8386
      %v8465 = vadd.f32 %v7711, %v8389
      %v8466 = vadd.f32 %v7712, %v8394
      %v8467 = vadd.f32 %v7713, %v8397
      %v8468 = vadd.f32 %v7714, %v8402
      %v8469 = vadd.f32 %v7715, %v8405
      %v8470 = vadd.f32 %v7716, %v8410
      %v8471 = vadd.f32 %v7717, %v8413
      %v8472 = vadd.f32 %v7718, %v8418
      %v8473 = vadd.f32 %v7719, %v8421
      %v8474 = vadd.f32 %v7720, %v8426
      %v8475 = vadd.f32 %v7721, %v8429
      %v8476 = vadd.f32 %v7722, %v8434
      %v8477 = vadd.f32 %v7723, %v8437
      %v8478 = vadd.f32 %v7724, %v8442
      %v8479 = vadd.f32 %v7725, %v8445
      %v8480 = vld [vmem:[%s5697] sm:$0xe]
      %v8481 = vld [vmem:[%s5697 + $0xc] sm:$0xe]
      %v8482 = vld [vmem:[%s5697 + $0x18] sm:$0xe]
      %v8483 = vld [vmem:[%s5697 + $0x24] sm:$0xe]
      %v8484 = vld [vmem:[%s5697 + $0x30] sm:$0xe]
      %v8485 = vld [vmem:[%s5697 + $0x3c] sm:$0xe]
      %v8486 = vld [vmem:[%s5697 + $0x48] sm:$0xe]
      %v8487 = vld [vmem:[%s5697 + $0x54] sm:$0xe]
      %v8488 = vld [vmem:[%s5697 + $0x60] sm:$0xe]
      %v8489 = vld [vmem:[%s5697 + $0x6c] sm:$0xe]
      %v8490 = vld [vmem:[%s5697 + $0x78] sm:$0xe]
      %v8491 = vld [vmem:[%s5697 + $0x84] sm:$0xe]
      %v8492 = vld [vmem:[%s5697 + $0x90] sm:$0xe]
      %v8493 = vld [vmem:[%s5697 + $0x9c] sm:$0xe]
      %v8494 = vld [vmem:[%s5697 + $0xa8] sm:$0xe]
      %v8495 = vld [vmem:[%s5697 + $0xb4] sm:$0xe]
      %v8544 = vrot.slane %v8480, 5
      %v8545 = vrot.slane %v8544, 4
      %v8546 = vrot.slane %v7727, 5
      %v8547 = vsel %vm1376, %v8545, %v8546
      %v8548 = vrot.slane %v8546, 4
      %v8549 = vrot.slane %v7728, 5
      %v8550 = vsel %vm1376, %v8548, %v8549
      %v8551 = vrot.slane %v8481, 5
      %v8552 = vrot.slane %v8551, 4
      %v8553 = vrot.slane %v7730, 5
      %v8554 = vsel %vm1376, %v8552, %v8553
      %v8555 = vrot.slane %v8553, 4
      %v8556 = vrot.slane %v7731, 5
      %v8557 = vsel %vm1376, %v8555, %v8556
      %v8558 = vrot.slane %v8482, 5
      %v8559 = vrot.slane %v8558, 4
      %v8560 = vrot.slane %v7733, 5
      %v8561 = vsel %vm1376, %v8559, %v8560
      %v8562 = vrot.slane %v8560, 4
      %v8563 = vrot.slane %v7734, 5
      %v8564 = vsel %vm1376, %v8562, %v8563
      %v8565 = vrot.slane %v8483, 5
      %v8566 = vrot.slane %v8565, 4
      %v8567 = vrot.slane %v7736, 5
      %v8568 = vsel %vm1376, %v8566, %v8567
      %v8569 = vrot.slane %v8567, 4
      %v8570 = vrot.slane %v7737, 5
      %v8571 = vsel %vm1376, %v8569, %v8570
      %v8572 = vrot.slane %v8484, 5
      %v8573 = vrot.slane %v8572, 4
      %v8574 = vrot.slane %v7739, 5
      %v8575 = vsel %vm1376, %v8573, %v8574
      %v8576 = vrot.slane %v8574, 4
      %v8577 = vrot.slane %v7740, 5
      %v8578 = vsel %vm1376, %v8576, %v8577
      %v8579 = vrot.slane %v8485, 5
      %v8580 = vrot.slane %v8579, 4
      %v8581 = vrot.slane %v7742, 5
      %v8582 = vsel %vm1376, %v8580, %v8581
      %v8583 = vrot.slane %v8581, 4
      %v8584 = vrot.slane %v7743, 5
      %v8585 = vsel %vm1376, %v8583, %v8584
      %v8586 = vrot.slane %v8486, 5
      %v8587 = vrot.slane %v8586, 4
      %v8588 = vrot.slane %v7745, 5
      %v8589 = vsel %vm1376, %v8587, %v8588
      %v8590 = vrot.slane %v8588, 4
      %v8591 = vrot.slane %v7746, 5
      %v8592 = vsel %vm1376, %v8590, %v8591
      %v8593 = vrot.slane %v8487, 5
      %v8594 = vrot.slane %v8593, 4
      %v8595 = vrot.slane %v7748, 5
      %v8596 = vsel %vm1376, %v8594, %v8595
      %v8597 = vrot.slane %v8595, 4
      %v8598 = vrot.slane %v7749, 5
      %v8599 = vsel %vm1376, %v8597, %v8598
      %v8600 = vrot.slane %v8488, 5
      %v8601 = vrot.slane %v8600, 4
      %v8602 = vrot.slane %v7751, 5
      %v8603 = vsel %vm1376, %v8601, %v8602
      %v8604 = vrot.slane %v8602, 4
      %v8605 = vrot.slane %v7752, 5
      %v8606 = vsel %vm1376, %v8604, %v8605
      %v8607 = vrot.slane %v8489, 5
      %v8608 = vrot.slane %v8607, 4
      %v8609 = vrot.slane %v7754, 5
      %v8610 = vsel %vm1376, %v8608, %v8609
      %v8611 = vrot.slane %v8609, 4
      %v8612 = vrot.slane %v7755, 5
      %v8613 = vsel %vm1376, %v8611, %v8612
      %v8614 = vrot.slane %v8490, 5
      %v8615 = vrot.slane %v8614, 4
      %v8616 = vrot.slane %v7757, 5
      %v8617 = vsel %vm1376, %v8615, %v8616
      %v8618 = vrot.slane %v8616, 4
      %v8619 = vrot.slane %v7758, 5
      %v8620 = vsel %vm1376, %v8618, %v8619
      %v8621 = vrot.slane %v8491, 5
      %v8622 = vrot.slane %v8621, 4
      %v8623 = vrot.slane %v7760, 5
      %v8624 = vsel %vm1376, %v8622, %v8623
      %v8625 = vrot.slane %v8623, 4
      %v8626 = vrot.slane %v7761, 5
      %v8627 = vsel %vm1376, %v8625, %v8626
      %v8628 = vrot.slane %v8492, 5
      %v8629 = vrot.slane %v8628, 4
      %v8630 = vrot.slane %v7763, 5
      %v8631 = vsel %vm1376, %v8629, %v8630
      %v8632 = vrot.slane %v8630, 4
      %v8633 = vrot.slane %v7764, 5
      %v8634 = vsel %vm1376, %v8632, %v8633
      %v8635 = vrot.slane %v8493, 5
      %v8636 = vrot.slane %v8635, 4
      %v8637 = vrot.slane %v7766, 5
      %v8638 = vsel %vm1376, %v8636, %v8637
      %v8639 = vrot.slane %v8637, 4
      %v8640 = vrot.slane %v7767, 5
      %v8641 = vsel %vm1376, %v8639, %v8640
      %v8642 = vrot.slane %v8494, 5
      %v8643 = vrot.slane %v8642, 4
      %v8644 = vrot.slane %v7769, 5
      %v8645 = vsel %vm1376, %v8643, %v8644
      %v8646 = vrot.slane %v8644, 4
      %v8647 = vrot.slane %v7770, 5
      %v8648 = vsel %vm1376, %v8646, %v8647
      %v8649 = vrot.slane %v8495, 5
      %v8650 = vrot.slane %v8649, 4
      %v8651 = vrot.slane %v7772, 5
      %v8652 = vsel %vm1376, %v8650, %v8651
      %v8653 = vrot.slane %v8651, 4
      %v8654 = vrot.slane %v7773, 5
      %v8655 = vsel %vm1376, %v8653, %v8654
      %s8656 = scalar_lea.vmem %s3, 320
      %v8657 = vld [vmem:[%s8656] sm:$0xf]
      %v8658 = vld [vmem:[%s8656 + $0x4] sm:$0xf]
      %v8659 = vld [vmem:[%s8656 + $0x8] sm:$0xf]
      %v8660 = vld [vmem:[%s8656 + $0xc] sm:$0xf]
      %v8661 = vld [vmem:[%s8656 + $0x10] sm:$0xf]
      %v8662 = vld [vmem:[%s8656 + $0x14] sm:$0xf]
      %v8663 = vld [vmem:[%s8656 + $0x18] sm:$0xf]
      %v8664 = vld [vmem:[%s8656 + $0x1c] sm:$0xf]
      %v8665 = vld [vmem:[%s8656 + $0x20] sm:$0xf]
      %v8666 = vld [vmem:[%s8656 + $0x24] sm:$0xf]
      %v8667 = vld [vmem:[%s8656 + $0x28] sm:$0xf]
      %v8668 = vld [vmem:[%s8656 + $0x2c] sm:$0xf]
      %v8669 = vld [vmem:[%s8656 + $0x30] sm:$0xf]
      %v8670 = vld [vmem:[%s8656 + $0x34] sm:$0xf]
      %v8671 = vld [vmem:[%s8656 + $0x38] sm:$0xf]
      %v8672 = vld [vmem:[%s8656 + $0x3c] sm:$0xf]
      %v8673 = vunpack.c.l.b16 %v8547
      %v8674 = vunpack.c.l.b16 %v8550
      %v8675 = vunpack.c.l.b16 %v8554
      %v8676 = vunpack.c.l.b16 %v8557
      %v8677 = vunpack.c.l.b16 %v8561
      %v8678 = vunpack.c.l.b16 %v8564
      %v8679 = vunpack.c.l.b16 %v8568
      %v8680 = vunpack.c.l.b16 %v8571
      %v8681 = vunpack.c.l.b16 %v8575
      %v8682 = vunpack.c.l.b16 %v8578
      %v8683 = vunpack.c.l.b16 %v8582
      %v8684 = vunpack.c.l.b16 %v8585
      %v8685 = vunpack.c.l.b16 %v8589
      %v8686 = vunpack.c.l.b16 %v8592
      %v8687 = vunpack.c.l.b16 %v8596
      %v8688 = vunpack.c.l.b16 %v8599
      %v8689 = vunpack.c.l.b16 %v8603
      %v8690 = vunpack.c.l.b16 %v8606
      %v8691 = vunpack.c.l.b16 %v8610
      %v8692 = vunpack.c.l.b16 %v8613
      %v8693 = vunpack.c.l.b16 %v8617
      %v8694 = vunpack.c.l.b16 %v8620
      %v8695 = vunpack.c.l.b16 %v8624
      %v8696 = vunpack.c.l.b16 %v8627
      %v8697 = vunpack.c.l.b16 %v8631
      %v8698 = vunpack.c.l.b16 %v8634
      %v8699 = vunpack.c.l.b16 %v8638
      %v8700 = vunpack.c.l.b16 %v8641
      %v8701 = vunpack.c.l.b16 %v8645
      %v8702 = vunpack.c.l.b16 %v8648
      %v8703 = vunpack.c.l.b16 %v8652
      %v8704 = vunpack.c.l.b16 %v8655
      %v8705 = vpack.c.b16 %v8674, %v8673
      %v8706 = vpack.c.b16 %v8676, %v8675
      %v8707 = vpack.c.b16 %v8678, %v8677
      %v8708 = vpack.c.b16 %v8680, %v8679
      %v8709 = vpack.c.b16 %v8682, %v8681
      %v8710 = vpack.c.b16 %v8684, %v8683
      %v8711 = vpack.c.b16 %v8686, %v8685
      %v8712 = vpack.c.b16 %v8688, %v8687
      %v8713 = vpack.c.b16 %v8690, %v8689
      %v8714 = vpack.c.b16 %v8692, %v8691
      %v8715 = vpack.c.b16 %v8694, %v8693
      %v8716 = vpack.c.b16 %v8696, %v8695
      %v8717 = vpack.c.b16 %v8698, %v8697
      %v8718 = vpack.c.b16 %v8700, %v8699
      %v8719 = vpack.c.b16 %v8702, %v8701
      %v8720 = vpack.c.b16 %v8704, %v8703
      %v8753 = vunpack.c.l.b16 %v8657
      %v8754 = vunpack.c.l.b16 %v8658
      %v8755 = vunpack.c.l.b16 %v8659
      %v8756 = vunpack.c.l.b16 %v8660
      %v8757 = vunpack.c.l.b16 %v8661
      %v8758 = vunpack.c.l.b16 %v8662
      %v8759 = vunpack.c.l.b16 %v8663
      %v8760 = vunpack.c.l.b16 %v8664
      %v8761 = vunpack.c.l.b16 %v8665
      %v8762 = vunpack.c.l.b16 %v8666
      %v8763 = vunpack.c.l.b16 %v8667
      %v8764 = vunpack.c.l.b16 %v8668
      %v8765 = vunpack.c.l.b16 %v8669
      %v8766 = vunpack.c.l.b16 %v8670
      %v8767 = vunpack.c.l.b16 %v8671
      %v8768 = vunpack.c.l.b16 %v8672
      %v8769 = vpack.c.b16 %v8754, %v8753
      %v8770 = vpack.c.b16 %v8756, %v8755
      %v8771 = vpack.c.b16 %v8758, %v8757
      %v8772 = vpack.c.b16 %v8760, %v8759
      %v8773 = vpack.c.b16 %v8762, %v8761
      %v8774 = vpack.c.b16 %v8764, %v8763
      %v8775 = vpack.c.b16 %v8766, %v8765
      %v8776 = vpack.c.b16 %v8768, %v8767
      %8785 = vmatprep.subr.bf16.mxu0 0
      %8786 = vmatpush1.bf16.msra.mxu0 %v8769
      %8787 = vmatprep.subr.bf16.mxu0 0
      %8788 = vmatpush1.bf16.msra.mxu0 %v8770
      %8789 = vmatprep.subr.bf16.mxu0 0
      %8790 = vmatpush1.bf16.msra.mxu0 %v8771
      %8791 = vmatprep.subr.bf16.mxu0 0
      %8792 = vmatpush1.bf16.msra.mxu0 %v8772
      %8793 = vmatprep.subr.bf16.mxu0 0
      %8794 = vmatpush1.bf16.msra.mxu0 %v8773
      %8795 = vmatprep.subr.bf16.mxu0 0
      %8796 = vmatpush1.bf16.msra.mxu0 %v8774
      %8797 = vmatprep.subr.bf16.mxu0 0
      %8798 = vmatpush1.bf16.msra.mxu0 %v8775
      %8799 = vmatprep.subr.bf16.mxu0 0
      %8800 = vmatpush1.bf16.msra.mxu0 %v8776
      %8801 = vmatprep.subr.bf16.mxu0 0
      %8802 = vmatpush1.bf16.msra.mxu0 0
      %8803 = vmatprep.subr.bf16.mxu0 0
      %8804 = vmatpush1.bf16.msra.mxu0 0
      %8805 = vmatprep.subr.bf16.mxu0 0
      %8806 = vmatpush1.bf16.msra.mxu0 0
      %8807 = vmatprep.subr.bf16.mxu0 0
      %8808 = vmatpush1.bf16.msra.mxu0 0
      %8809 = vmatprep.subr.bf16.mxu0 0
      %8810 = vmatpush1.bf16.msra.mxu0 0
      %8811 = vmatprep.subr.bf16.mxu0 0
      %8812 = vmatpush1.bf16.msra.mxu0 0
      %8813 = vmatprep.subr.bf16.mxu0 0
      %8814 = vmatpush1.bf16.msra.mxu0 0
      %8815 = vmatprep.subr.bf16.mxu0 0
      %8816 = vmatpush1.bf16.msra.mxu0 0
      %8817 = vmatprep.mubr.bf16.mxu0 0
      %8818 = vmatmul.mubr.bf16.gmra.mrb[0].mxu0 %v8705
      %v8819 = vpop.f32.mrb[0].mxu0
      %v8820 = vadd.f32 0.0, %v8819
      %v8821 = vpop.f32.mrb[0].mxu0
      %v8822 = vpop.f32.mrb[0].mxu0
      %v8823 = vadd.f32 0.0, %v8822
      %v8824 = vpop.f32.mrb[0].mxu0
      %8825 = vmatprep.mubr.bf16.mxu0 0
      %8826 = vmatmul.mubr.bf16.gmra.mrb[0].mxu0 %v8706
      %v8827 = vpop.f32.mrb[0].mxu0
      %v8828 = vadd.f32 0.0, %v8827
      %v8829 = vpop.f32.mrb[0].mxu0
      %v8830 = vpop.f32.mrb[0].mxu0
      %v8831 = vadd.f32 0.0, %v8830
      %v8832 = vpop.f32.mrb[0].mxu0
      %8833 = vmatprep.mubr.bf16.mxu0 0
      %8834 = vmatmul.mubr.bf16.gmra.mrb[0].mxu0 %v8707
      %v8835 = vpop.f32.mrb[0].mxu0
      %v8836 = vadd.f32 0.0, %v8835
      %v8837 = vpop.f32.mrb[0].mxu0
      %v8838 = vpop.f32.mrb[0].mxu0
      %v8839 = vadd.f32 0.0, %v8838
      %v8840 = vpop.f32.mrb[0].mxu0
      %8841 = vmatprep.mubr.bf16.mxu0 0
      %8842 = vmatmul.mubr.bf16.gmra.mrb[0].mxu0 %v8708
      %v8843 = vpop.f32.mrb[0].mxu0
      %v8844 = vadd.f32 0.0, %v8843
      %v8845 = vpop.f32.mrb[0].mxu0
      %v8846 = vpop.f32.mrb[0].mxu0
      %v8847 = vadd.f32 0.0, %v8846
      %v8848 = vpop.f32.mrb[0].mxu0
      %8849 = vmatprep.mubr.bf16.mxu0 0
      %8850 = vmatmul.mubr.bf16.gmra.mrb[0].mxu0 %v8709
      %v8851 = vpop.f32.mrb[0].mxu0
      %v8852 = vadd.f32 0.0, %v8851
      %v8853 = vpop.f32.mrb[0].mxu0
      %v8854 = vpop.f32.mrb[0].mxu0
      %v8855 = vadd.f32 0.0, %v8854
      %v8856 = vpop.f32.mrb[0].mxu0
      %8857 = vmatprep.mubr.bf16.mxu0 0
      %8858 = vmatmul.mubr.bf16.gmra.mrb[0].mxu0 %v8710
      %v8859 = vpop.f32.mrb[0].mxu0
      %v8860 = vadd.f32 0.0, %v8859
      %v8861 = vpop.f32.mrb[0].mxu0
      %v8862 = vpop.f32.mrb[0].mxu0
      %v8863 = vadd.f32 0.0, %v8862
      %v8864 = vpop.f32.mrb[0].mxu0
      %8865 = vmatprep.mubr.bf16.mxu0 0
      %8866 = vmatmul.mubr.bf16.gmra.mrb[0].mxu0 %v8711
      %v8867 = vpop.f32.mrb[0].mxu0
      %v8868 = vadd.f32 0.0, %v8867
      %v8869 = vpop.f32.mrb[0].mxu0
      %v8870 = vpop.f32.mrb[0].mxu0
      %v8871 = vadd.f32 0.0, %v8870
      %v8872 = vpop.f32.mrb[0].mxu0
      %8873 = vmatprep.mubr.bf16.mxu0 0
      %8874 = vmatmul.mubr.bf16.gmra.mrb[0].mxu0 %v8712
      %v8875 = vpop.f32.mrb[0].mxu0
      %v8876 = vadd.f32 0.0, %v8875
      %v8877 = vpop.f32.mrb[0].mxu0
      %v8878 = vpop.f32.mrb[0].mxu0
      %v8879 = vadd.f32 0.0, %v8878
      %v8880 = vpop.f32.mrb[0].mxu0
      %8881 = vmatprep.mubr.bf16.mxu0 0
      %8882 = vmatmul.mubr.bf16.gmra.mrb[0].mxu0 %v8713
      %v8883 = vpop.f32.mrb[0].mxu0
      %v8884 = vadd.f32 0.0, %v8883
      %v8885 = vpop.f32.mrb[0].mxu0
      %v8886 = vpop.f32.mrb[0].mxu0
      %v8887 = vadd.f32 0.0, %v8886
      %v8888 = vpop.f32.mrb[0].mxu0
      %8889 = vmatprep.mubr.bf16.mxu0 0
      %8890 = vmatmul.mubr.bf16.gmra.mrb[0].mxu0 %v8714
      %v8891 = vpop.f32.mrb[0].mxu0
      %v8892 = vadd.f32 0.0, %v8891
      %v8893 = vpop.f32.mrb[0].mxu0
      %v8894 = vpop.f32.mrb[0].mxu0
      %v8895 = vadd.f32 0.0, %v8894
      %v8896 = vpop.f32.mrb[0].mxu0
      %8897 = vmatprep.mubr.bf16.mxu0 0
      %8898 = vmatmul.mubr.bf16.gmra.mrb[0].mxu0 %v8715
      %v8899 = vpop.f32.mrb[0].mxu0
      %v8900 = vadd.f32 0.0, %v8899
      %v8901 = vpop.f32.mrb[0].mxu0
      %v8902 = vpop.f32.mrb[0].mxu0
      %v8903 = vadd.f32 0.0, %v8902
      %v8904 = vpop.f32.mrb[0].mxu0
      %8905 = vmatprep.mubr.bf16.mxu0 0
      %8906 = vmatmul.mubr.bf16.gmra.mrb[0].mxu0 %v8716
      %v8907 = vpop.f32.mrb[0].mxu0
      %v8908 = vadd.f32 0.0, %v8907
      %v8909 = vpop.f32.mrb[0].mxu0
      %v8910 = vpop.f32.mrb[0].mxu0
      %v8911 = vadd.f32 0.0, %v8910
      %v8912 = vpop.f32.mrb[0].mxu0
      %8913 = vmatprep.mubr.bf16.mxu0 0
      %8914 = vmatmul.mubr.bf16.gmra.mrb[0].mxu0 %v8717
      %v8915 = vpop.f32.mrb[0].mxu0
      %v8916 = vadd.f32 0.0, %v8915
      %v8917 = vpop.f32.mrb[0].mxu0
      %v8918 = vpop.f32.mrb[0].mxu0
      %v8919 = vadd.f32 0.0, %v8918
      %v8920 = vpop.f32.mrb[0].mxu0
      %8921 = vmatprep.mubr.bf16.mxu0 0
      %8922 = vmatmul.mubr.bf16.gmra.mrb[0].mxu0 %v8718
      %v8923 = vpop.f32.mrb[0].mxu0
      %v8924 = vadd.f32 0.0, %v8923
      %v8925 = vpop.f32.mrb[0].mxu0
      %v8926 = vpop.f32.mrb[0].mxu0
      %v8927 = vadd.f32 0.0, %v8926
      %v8928 = vpop.f32.mrb[0].mxu0
      %8929 = vmatprep.mubr.bf16.mxu0 0
      %8930 = vmatmul.mubr.bf16.gmra.mrb[0].mxu0 %v8719
      %v8931 = vpop.f32.mrb[0].mxu0
      %v8932 = vadd.f32 0.0, %v8931
      %v8933 = vpop.f32.mrb[0].mxu0
      %v8934 = vpop.f32.mrb[0].mxu0
      %v8935 = vadd.f32 0.0, %v8934
      %v8936 = vpop.f32.mrb[0].mxu0
      %8937 = vmatprep.mubr.bf16.mxu0 0
      %8938 = vmatmul.mubr.bf16.gmra.mrb[0].mxu0 %v8720
      %v8939 = vpop.f32.mrb[0].mxu0
      %v8940 = vadd.f32 0.0, %v8939
      %v8941 = vpop.f32.mrb[0].mxu0
      %v8942 = vpop.f32.mrb[0].mxu0
      %v8943 = vadd.f32 0.0, %v8942
      %v8944 = vpop.f32.mrb[0].mxu0
      %8945 = vdwg.mxu0
      %v8946 = vadd.f32 %v8448, %v8820
      %v8947 = vadd.f32 %v8449, %v8823
      %v8948 = vadd.f32 %v8450, %v8828
      %v8949 = vadd.f32 %v8451, %v8831
      %v8950 = vadd.f32 %v8452, %v8836
      %v8951 = vadd.f32 %v8453, %v8839
      %v8952 = vadd.f32 %v8454, %v8844
      %v8953 = vadd.f32 %v8455, %v8847
      %v8954 = vadd.f32 %v8456, %v8852
      %v8955 = vadd.f32 %v8457, %v8855
      %v8956 = vadd.f32 %v8458, %v8860
      %v8957 = vadd.f32 %v8459, %v8863
      %v8958 = vadd.f32 %v8460, %v8868
      %v8959 = vadd.f32 %v8461, %v8871
      %v8960 = vadd.f32 %v8462, %v8876
      %v8961 = vadd.f32 %v8463, %v8879
      %v8962 = vadd.f32 %v8464, %v8884
      %v8963 = vadd.f32 %v8465, %v8887
      %v8964 = vadd.f32 %v8466, %v8892
      %v8965 = vadd.f32 %v8467, %v8895
      %v8966 = vadd.f32 %v8468, %v8900
      %v8967 = vadd.f32 %v8469, %v8903
      %v8968 = vadd.f32 %v8470, %v8908
      %v8969 = vadd.f32 %v8471, %v8911
      %v8970 = vadd.f32 %v8472, %v8916
      %v8971 = vadd.f32 %v8473, %v8919
      %v8972 = vadd.f32 %v8474, %v8924
      %v8973 = vadd.f32 %v8475, %v8927
      %v8974 = vadd.f32 %v8476, %v8932
      %v8975 = vadd.f32 %v8477, %v8935
      %v8976 = vadd.f32 %v8478, %v8940
      %v8977 = vadd.f32 %v8479, %v8943
      %s8978 = scalar_lea.vmem [#allocation2], 24
      %v8979 = vld [vmem:[%s8978] sm:$0xf]
      %v8980 = vld [vmem:[%s8978 + $0x4] sm:$0xf]
      %v8981 = vld [vmem:[%s8978 + $0xc] sm:$0xf]
      %v8982 = vld [vmem:[%s8978 + $0x10] sm:$0xf]
      %v8983 = vld [vmem:[%s8978 + $0x18] sm:$0xf]
      %v8984 = vld [vmem:[%s8978 + $0x1c] sm:$0xf]
      %v8985 = vld [vmem:[%s8978 + $0x24] sm:$0xf]
      %v8986 = vld [vmem:[%s8978 + $0x28] sm:$0xf]
      %v8987 = vld [vmem:[%s8978 + $0x30] sm:$0xf]
      %v8988 = vld [vmem:[%s8978 + $0x34] sm:$0xf]
      %v8989 = vld [vmem:[%s8978 + $0x3c] sm:$0xf]
      %v8990 = vld [vmem:[%s8978 + $0x40] sm:$0xf]
      %v8991 = vld [vmem:[%s8978 + $0x48] sm:$0xf]
      %v8992 = vld [vmem:[%s8978 + $0x4c] sm:$0xf]
      %v8993 = vld [vmem:[%s8978 + $0x54] sm:$0xf]
      %v8994 = vld [vmem:[%s8978 + $0x58] sm:$0xf]
      %v8995 = vld [vmem:[%s8978 + $0x60] sm:$0xf]
      %v8996 = vld [vmem:[%s8978 + $0x64] sm:$0xf]
      %v8997 = vld [vmem:[%s8978 + $0x6c] sm:$0xf]
      %v8998 = vld [vmem:[%s8978 + $0x70] sm:$0xf]
      %v8999 = vld [vmem:[%s8978 + $0x78] sm:$0xf]
      %v9000 = vld [vmem:[%s8978 + $0x7c] sm:$0xf]
      %v9001 = vld [vmem:[%s8978 + $0x84] sm:$0xf]
      %v9002 = vld [vmem:[%s8978 + $0x88] sm:$0xf]
      %v9003 = vld [vmem:[%s8978 + $0x90] sm:$0xf]
      %v9004 = vld [vmem:[%s8978 + $0x94] sm:$0xf]
      %v9005 = vld [vmem:[%s8978 + $0x9c] sm:$0xf]
      %v9006 = vld [vmem:[%s8978 + $0xa0] sm:$0xf]
      %v9007 = vld [vmem:[%s8978 + $0xa8] sm:$0xf]
      %v9008 = vld [vmem:[%s8978 + $0xac] sm:$0xf]
      %v9009 = vld [vmem:[%s8978 + $0xb4] sm:$0xf]
      %v9010 = vld [vmem:[%s8978 + $0xb8] sm:$0xf]
      %s9011 = scalar_lea.vmem %s3, 384
      %v9012 = vld [vmem:[%s9011] sm:$0xf]
      %v9013 = vld [vmem:[%s9011 + $0x4] sm:$0xf]
      %v9014 = vld [vmem:[%s9011 + $0x8] sm:$0xf]
      %v9015 = vld [vmem:[%s9011 + $0xc] sm:$0xf]
      %v9016 = vld [vmem:[%s9011 + $0x10] sm:$0xf]
      %v9017 = vld [vmem:[%s9011 + $0x14] sm:$0xf]
      %v9018 = vld [vmem:[%s9011 + $0x18] sm:$0xf]
      %v9019 = vld [vmem:[%s9011 + $0x1c] sm:$0xf]
      %v9020 = vld [vmem:[%s9011 + $0x20] sm:$0xf]
      %v9021 = vld [vmem:[%s9011 + $0x24] sm:$0xf]
      %v9022 = vld [vmem:[%s9011 + $0x28] sm:$0xf]
      %v9023 = vld [vmem:[%s9011 + $0x2c] sm:$0xf]
      %v9024 = vld [vmem:[%s9011 + $0x30] sm:$0xf]
      %v9025 = vld [vmem:[%s9011 + $0x34] sm:$0xf]
      %v9026 = vld [vmem:[%s9011 + $0x38] sm:$0xf]
      %v9027 = vld [vmem:[%s9011 + $0x3c] sm:$0xf]
      %v9060 = vunpack.c.l.b16 %v8979
      %v9061 = vunpack.c.l.b16 %v8980
      %v9062 = vunpack.c.l.b16 %v8981
      %v9063 = vunpack.c.l.b16 %v8982
      %v9064 = vunpack.c.l.b16 %v8983
      %v9065 = vunpack.c.l.b16 %v8984
      %v9066 = vunpack.c.l.b16 %v8985
      %v9067 = vunpack.c.l.b16 %v8986
      %v9068 = vunpack.c.l.b16 %v8987
      %v9069 = vunpack.c.l.b16 %v8988
      %v9070 = vunpack.c.l.b16 %v8989
      %v9071 = vunpack.c.l.b16 %v8990
      %v9072 = vunpack.c.l.b16 %v8991
      %v9073 = vunpack.c.l.b16 %v8992
      %v9074 = vunpack.c.l.b16 %v8993
      %v9075 = vunpack.c.l.b16 %v8994
      %v9076 = vunpack.c.l.b16 %v8995
      %v9077 = vunpack.c.l.b16 %v8996
      %v9078 = vunpack.c.l.b16 %v8997
      %v9079 = vunpack.c.l.b16 %v8998
      %v9080 = vunpack.c.l.b16 %v8999
      %v9081 = vunpack.c.l.b16 %v9000
      %v9082 = vunpack.c.l.b16 %v9001
      %v9083 = vunpack.c.l.b16 %v9002
      %v9084 = vunpack.c.l.b16 %v9003
      %v9085 = vunpack.c.l.b16 %v9004
      %v9086 = vunpack.c.l.b16 %v9005
      %v9087 = vunpack.c.l.b16 %v9006
      %v9088 = vunpack.c.l.b16 %v9007
      %v9089 = vunpack.c.l.b16 %v9008
      %v9090 = vunpack.c.l.b16 %v9009
      %v9091 = vunpack.c.l.b16 %v9010
      %v9092 = vpack.c.b16 %v9061, %v9060
      %v9093 = vpack.c.b16 %v9063, %v9062
      %v9094 = vpack.c.b16 %v9065, %v9064
      %v9095 = vpack.c.b16 %v9067, %v9066
      %v9096 = vpack.c.b16 %v9069, %v9068
      %v9097 = vpack.c.b16 %v9071, %v9070
      %v9098 = vpack.c.b16 %v9073, %v9072
      %v9099 = vpack.c.b16 %v9075, %v9074
      %v9100 = vpack.c.b16 %v9077, %v9076
      %v9101 = vpack.c.b16 %v9079, %v9078
      %v9102 = vpack.c.b16 %v9081, %v9080
      %v9103 = vpack.c.b16 %v9083, %v9082
      %v9104 = vpack.c.b16 %v9085, %v9084
      %v9105 = vpack.c.b16 %v9087, %v9086
      %v9106 = vpack.c.b16 %v9089, %v9088
      %v9107 = vpack.c.b16 %v9091, %v9090
      %v9140 = vunpack.c.l.b16 %v9012
      %v9141 = vunpack.c.l.b16 %v9013
      %v9142 = vunpack.c.l.b16 %v9014
      %v9143 = vunpack.c.l.b16 %v9015
      %v9144 = vunpack.c.l.b16 %v9016
      %v9145 = vunpack.c.l.b16 %v9017
      %v9146 = vunpack.c.l.b16 %v9018
      %v9147 = vunpack.c.l.b16 %v9019
      %v9148 = vunpack.c.l.b16 %v9020
      %v9149 = vunpack.c.l.b16 %v9021
      %v9150 = vunpack.c.l.b16 %v9022
      %v9151 = vunpack.c.l.b16 %v9023
      %v9152 = vunpack.c.l.b16 %v9024
      %v9153 = vunpack.c.l.b16 %v9025
      %v9154 = vunpack.c.l.b16 %v9026
      %v9155 = vunpack.c.l.b16 %v9027
      %v9156 = vpack.c.b16 %v9141, %v9140
      %v9157 = vpack.c.b16 %v9143, %v9142
      %v9158 = vpack.c.b16 %v9145, %v9144
      %v9159 = vpack.c.b16 %v9147, %v9146
      %v9160 = vpack.c.b16 %v9149, %v9148
      %v9161 = vpack.c.b16 %v9151, %v9150
      %v9162 = vpack.c.b16 %v9153, %v9152
      %v9163 = vpack.c.b16 %v9155, %v9154
      %9172 = vmatprep.subr.bf16.mxu0 0
      %9173 = vmatpush1.bf16.msra.mxu0 %v9156
      %9174 = vmatprep.subr.bf16.mxu0 0
      %9175 = vmatpush1.bf16.msra.mxu0 %v9157
      %9176 = vmatprep.subr.bf16.mxu0 0
      %9177 = vmatpush1.bf16.msra.mxu0 %v9158
      %9178 = vmatprep.subr.bf16.mxu0 0
      %9179 = vmatpush1.bf16.msra.mxu0 %v9159
      %9180 = vmatprep.subr.bf16.mxu0 0
      %9181 = vmatpush1.bf16.msra.mxu0 %v9160
      %9182 = vmatprep.subr.bf16.mxu0 0
      %9183 = vmatpush1.bf16.msra.mxu0 %v9161
      %9184 = vmatprep.subr.bf16.mxu0 0
      %9185 = vmatpush1.bf16.msra.mxu0 %v9162
      %9186 = vmatprep.subr.bf16.mxu0 0
      %9187 = vmatpush1.bf16.msra.mxu0 %v9163
      %9188 = vmatprep.subr.bf16.mxu0 0
      %9189 = vmatpush1.bf16.msra.mxu0 0
      %9190 = vmatprep.subr.bf16.mxu0 0
      %9191 = vmatpush1.bf16.msra.mxu0 0
      %9192 = vmatprep.subr.bf16.mxu0 0
      %9193 = vmatpush1.bf16.msra.mxu0 0
      %9194 = vmatprep.subr.bf16.mxu0 0
      %9195 = vmatpush1.bf16.msra.mxu0 0
      %9196 = vmatprep.subr.bf16.mxu0 0
      %9197 = vmatpush1.bf16.msra.mxu0 0
      %9198 = vmatprep.subr.bf16.mxu0 0
      %9199 = vmatpush1.bf16.msra.mxu0 0
      %9200 = vmatprep.subr.bf16.mxu0 0
      %9201 = vmatpush1.bf16.msra.mxu0 0
      %9202 = vmatprep.subr.bf16.mxu0 0
      %9203 = vmatpush1.bf16.msra.mxu0 0
      %9204 = vmatprep.mubr.bf16.mxu0 0
      %9205 = vmatmul.mubr.bf16.gmra.mrb[0].mxu0 %v9092
      %v9206 = vpop.f32.mrb[0].mxu0
      %v9207 = vadd.f32 0.0, %v9206
      %v9208 = vpop.f32.mrb[0].mxu0
      %v9209 = vpop.f32.mrb[0].mxu0
      %v9210 = vadd.f32 0.0, %v9209
      %v9211 = vpop.f32.mrb[0].mxu0
      %9212 = vmatprep.mubr.bf16.mxu0 0
      %9213 = vmatmul.mubr.bf16.gmra.mrb[0].mxu0 %v9093
      %v9214 = vpop.f32.mrb[0].mxu0
      %v9215 = vadd.f32 0.0, %v9214
      %v9216 = vpop.f32.mrb[0].mxu0
      %v9217 = vpop.f32.mrb[0].mxu0
      %v9218 = vadd.f32 0.0, %v9217
      %v9219 = vpop.f32.mrb[0].mxu0
      %9220 = vmatprep.mubr.bf16.mxu0 0
      %9221 = vmatmul.mubr.bf16.gmra.mrb[0].mxu0 %v9094
      %v9222 = vpop.f32.mrb[0].mxu0
      %v9223 = vadd.f32 0.0, %v9222
      %v9224 = vpop.f32.mrb[0].mxu0
      %v9225 = vpop.f32.mrb[0].mxu0
      %v9226 = vadd.f32 0.0, %v9225
      %v9227 = vpop.f32.mrb[0].mxu0
      %9228 = vmatprep.mubr.bf16.mxu0 0
      %9229 = vmatmul.mubr.bf16.gmra.mrb[0].mxu0 %v9095
      %v9230 = vpop.f32.mrb[0].mxu0
      %v9231 = vadd.f32 0.0, %v9230
      %v9232 = vpop.f32.mrb[0].mxu0
      %v9233 = vpop.f32.mrb[0].mxu0
      %v9234 = vadd.f32 0.0, %v9233
      %v9235 = vpop.f32.mrb[0].mxu0
      %9236 = vmatprep.mubr.bf16.mxu0 0
      %9237 = vmatmul.mubr.bf16.gmra.mrb[0].mxu0 %v9096
      %v9238 = vpop.f32.mrb[0].mxu0
      %v9239 = vadd.f32 0.0, %v9238
      %v9240 = vpop.f32.mrb[0].mxu0
      %v9241 = vpop.f32.mrb[0].mxu0
      %v9242 = vadd.f32 0.0, %v9241
      %v9243 = vpop.f32.mrb[0].mxu0
      %9244 = vmatprep.mubr.bf16.mxu0 0
      %9245 = vmatmul.mubr.bf16.gmra.mrb[0].mxu0 %v9097
      %v9246 = vpop.f32.mrb[0].mxu0
      %v9247 = vadd.f32 0.0, %v9246
      %v9248 = vpop.f32.mrb[0].mxu0
      %v9249 = vpop.f32.mrb[0].mxu0
      %v9250 = vadd.f32 0.0, %v9249
      %v9251 = vpop.f32.mrb[0].mxu0
      %9252 = vmatprep.mubr.bf16.mxu0 0
      %9253 = vmatmul.mubr.bf16.gmra.mrb[0].mxu0 %v9098
      %v9254 = vpop.f32.mrb[0].mxu0
      %v9255 = vadd.f32 0.0, %v9254
      %v9256 = vpop.f32.mrb[0].mxu0
      %v9257 = vpop.f32.mrb[0].mxu0
      %v9258 = vadd.f32 0.0, %v9257
      %v9259 = vpop.f32.mrb[0].mxu0
      %9260 = vmatprep.mubr.bf16.mxu0 0
      %9261 = vmatmul.mubr.bf16.gmra.mrb[0].mxu0 %v9099
      %v9262 = vpop.f32.mrb[0].mxu0
      %v9263 = vadd.f32 0.0, %v9262
      %v9264 = vpop.f32.mrb[0].mxu0
      %v9265 = vpop.f32.mrb[0].mxu0
      %v9266 = vadd.f32 0.0, %v9265
      %v9267 = vpop.f32.mrb[0].mxu0
      %9268 = vmatprep.mubr.bf16.mxu0 0
      %9269 = vmatmul.mubr.bf16.gmra.mrb[0].mxu0 %v9100
      %v9270 = vpop.f32.mrb[0].mxu0
      %v9271 = vadd.f32 0.0, %v9270
      %v9272 = vpop.f32.mrb[0].mxu0
      %v9273 = vpop.f32.mrb[0].mxu0
      %v9274 = vadd.f32 0.0, %v9273
      %v9275 = vpop.f32.mrb[0].mxu0
      %9276 = vmatprep.mubr.bf16.mxu0 0
      %9277 = vmatmul.mubr.bf16.gmra.mrb[0].mxu0 %v9101
      %v9278 = vpop.f32.mrb[0].mxu0
      %v9279 = vadd.f32 0.0, %v9278
      %v9280 = vpop.f32.mrb[0].mxu0
      %v9281 = vpop.f32.mrb[0].mxu0
      %v9282 = vadd.f32 0.0, %v9281
      %v9283 = vpop.f32.mrb[0].mxu0
      %9284 = vmatprep.mubr.bf16.mxu0 0
      %9285 = vmatmul.mubr.bf16.gmra.mrb[0].mxu0 %v9102
      %v9286 = vpop.f32.mrb[0].mxu0
      %v9287 = vadd.f32 0.0, %v9286
      %v9288 = vpop.f32.mrb[0].mxu0
      %v9289 = vpop.f32.mrb[0].mxu0
      %v9290 = vadd.f32 0.0, %v9289
      %v9291 = vpop.f32.mrb[0].mxu0
      %9292 = vmatprep.mubr.bf16.mxu0 0
      %9293 = vmatmul.mubr.bf16.gmra.mrb[0].mxu0 %v9103
      %v9294 = vpop.f32.mrb[0].mxu0
      %v9295 = vadd.f32 0.0, %v9294
      %v9296 = vpop.f32.mrb[0].mxu0
      %v9297 = vpop.f32.mrb[0].mxu0
      %v9298 = vadd.f32 0.0, %v9297
      %v9299 = vpop.f32.mrb[0].mxu0
      %9300 = vmatprep.mubr.bf16.mxu0 0
      %9301 = vmatmul.mubr.bf16.gmra.mrb[0].mxu0 %v9104
      %v9302 = vpop.f32.mrb[0].mxu0
      %v9303 = vadd.f32 0.0, %v9302
      %v9304 = vpop.f32.mrb[0].mxu0
      %v9305 = vpop.f32.mrb[0].mxu0
      %v9306 = vadd.f32 0.0, %v9305
      %v9307 = vpop.f32.mrb[0].mxu0
      %9308 = vmatprep.mubr.bf16.mxu0 0
      %9309 = vmatmul.mubr.bf16.gmra.mrb[0].mxu0 %v9105
      %v9310 = vpop.f32.mrb[0].mxu0
      %v9311 = vadd.f32 0.0, %v9310
      %v9312 = vpop.f32.mrb[0].mxu0
      %v9313 = vpop.f32.mrb[0].mxu0
      %v9314 = vadd.f32 0.0, %v9313
      %v9315 = vpop.f32.mrb[0].mxu0
      %9316 = vmatprep.mubr.bf16.mxu0 0
      %9317 = vmatmul.mubr.bf16.gmra.mrb[0].mxu0 %v9106
      %v9318 = vpop.f32.mrb[0].mxu0
      %v9319 = vadd.f32 0.0, %v9318
      %v9320 = vpop.f32.mrb[0].mxu0
      %v9321 = vpop.f32.mrb[0].mxu0
      %v9322 = vadd.f32 0.0, %v9321
      %v9323 = vpop.f32.mrb[0].mxu0
      %9324 = vmatprep.mubr.bf16.mxu0 0
      %9325 = vmatmul.mubr.bf16.gmra.mrb[0].mxu0 %v9107
      %v9326 = vpop.f32.mrb[0].mxu0
      %v9327 = vadd.f32 0.0, %v9326
      %v9328 = vpop.f32.mrb[0].mxu0
      %v9329 = vpop.f32.mrb[0].mxu0
      %v9330 = vadd.f32 0.0, %v9329
      %v9331 = vpop.f32.mrb[0].mxu0
      %9332 = vdwg.mxu0
      %v9333 = vadd.f32 %v8946, %v9207
      %v9334 = vadd.f32 %v8947, %v9210
      %v9335 = vadd.f32 %v8948, %v9215
      %v9336 = vadd.f32 %v8949, %v9218
      %v9337 = vadd.f32 %v8950, %v9223
      %v9338 = vadd.f32 %v8951, %v9226
      %v9339 = vadd.f32 %v8952, %v9231
      %v9340 = vadd.f32 %v8953, %v9234
      %v9341 = vadd.f32 %v8954, %v9239
      %v9342 = vadd.f32 %v8955, %v9242
      %v9343 = vadd.f32 %v8956, %v9247
      %v9344 = vadd.f32 %v8957, %v9250
      %v9345 = vadd.f32 %v8958, %v9255
      %v9346 = vadd.f32 %v8959, %v9258
      %v9347 = vadd.f32 %v8960, %v9263
      %v9348 = vadd.f32 %v8961, %v9266
      %v9349 = vadd.f32 %v8962, %v9271
      %v9350 = vadd.f32 %v8963, %v9274
      %v9351 = vadd.f32 %v8964, %v9279
      %v9352 = vadd.f32 %v8965, %v9282
      %v9353 = vadd.f32 %v8966, %v9287
      %v9354 = vadd.f32 %v8967, %v9290
      %v9355 = vadd.f32 %v8968, %v9295
      %v9356 = vadd.f32 %v8969, %v9298
      %v9357 = vadd.f32 %v8970, %v9303
      %v9358 = vadd.f32 %v8971, %v9306
      %v9359 = vadd.f32 %v8972, %v9311
      %v9360 = vadd.f32 %v8973, %v9314
      %v9361 = vadd.f32 %v8974, %v9319
      %v9362 = vadd.f32 %v8975, %v9322
      %v9363 = vadd.f32 %v8976, %v9327
      %v9364 = vadd.f32 %v8977, %v9330
      %v9365 = vld [vmem:[%s8978] sm:$0xf]
      %v9366 = vld [vmem:[%s8978 + $0x4] sm:$0xf]
      %v9367 = vld [vmem:[%s8978 + $0x8] sm:$0x1]
      %v9368 = vld [vmem:[%s8978 + $0xc] sm:$0xf]
      %v9369 = vld [vmem:[%s8978 + $0x10] sm:$0xf]
      %v9370 = vld [vmem:[%s8978 + $0x14] sm:$0x1]
      %v9371 = vld [vmem:[%s8978 + $0x18] sm:$0xf]
      %v9372 = vld [vmem:[%s8978 + $0x1c] sm:$0xf]
      %v9373 = vld [vmem:[%s8978 + $0x20] sm:$0x1]
      %v9374 = vld [vmem:[%s8978 + $0x24] sm:$0xf]
      %v9375 = vld [vmem:[%s8978 + $0x28] sm:$0xf]
      %v9376 = vld [vmem:[%s8978 + $0x2c] sm:$0x1]
      %v9377 = vld [vmem:[%s8978 + $0x30] sm:$0xf]
      %v9378 = vld [vmem:[%s8978 + $0x34] sm:$0xf]
      %v9379 = vld [vmem:[%s8978 + $0x38] sm:$0x1]
      %v9380 = vld [vmem:[%s8978 + $0x3c] sm:$0xf]
      %v9381 = vld [vmem:[%s8978 + $0x40] sm:$0xf]
      %v9382 = vld [vmem:[%s8978 + $0x44] sm:$0x1]
      %v9383 = vld [vmem:[%s8978 + $0x48] sm:$0xf]
      %v9384 = vld [vmem:[%s8978 + $0x4c] sm:$0xf]
      %v9385 = vld [vmem:[%s8978 + $0x50] sm:$0x1]
      %v9386 = vld [vmem:[%s8978 + $0x54] sm:$0xf]
      %v9387 = vld [vmem:[%s8978 + $0x58] sm:$0xf]
      %v9388 = vld [vmem:[%s8978 + $0x5c] sm:$0x1]
      %v9389 = vld [vmem:[%s8978 + $0x60] sm:$0xf]
      %v9390 = vld [vmem:[%s8978 + $0x64] sm:$0xf]
      %v9391 = vld [vmem:[%s8978 + $0x68] sm:$0x1]
      %v9392 = vld [vmem:[%s8978 + $0x6c] sm:$0xf]
      %v9393 = vld [vmem:[%s8978 + $0x70] sm:$0xf]
      %v9394 = vld [vmem:[%s8978 + $0x74] sm:$0x1]
      %v9395 = vld [vmem:[%s8978 + $0x78] sm:$0xf]
      %v9396 = vld [vmem:[%s8978 + $0x7c] sm:$0xf]
      %v9397 = vld [vmem:[%s8978 + $0x80] sm:$0x1]
      %v9398 = vld [vmem:[%s8978 + $0x84] sm:$0xf]
      %v9399 = vld [vmem:[%s8978 + $0x88] sm:$0xf]
      %v9400 = vld [vmem:[%s8978 + $0x8c] sm:$0x1]
      %v9401 = vld [vmem:[%s8978 + $0x90] sm:$0xf]
      %v9402 = vld [vmem:[%s8978 + $0x94] sm:$0xf]
      %v9403 = vld [vmem:[%s8978 + $0x98] sm:$0x1]
      %v9404 = vld [vmem:[%s8978 + $0x9c] sm:$0xf]
      %v9405 = vld [vmem:[%s8978 + $0xa0] sm:$0xf]
      %v9406 = vld [vmem:[%s8978 + $0xa4] sm:$0x1]
      %v9407 = vld [vmem:[%s8978 + $0xa8] sm:$0xf]
      %v9408 = vld [vmem:[%s8978 + $0xac] sm:$0xf]
      %v9409 = vld [vmem:[%s8978 + $0xb0] sm:$0x1]
      %v9410 = vld [vmem:[%s8978 + $0xb4] sm:$0xf]
      %v9411 = vld [vmem:[%s8978 + $0xb8] sm:$0xf]
      %v9412 = vld [vmem:[%s8978 + $0xbc] sm:$0x1]
      %v9414 = vshrl.u32 %v9365, 16
      %v9416 = vrot.slane %v9414, 4
      %v9417 = vshll.u32 %v9365, 16
      %v9419 = vrot.slane %v9417, 5
      %v9420 = vor.u32 %v9416, %v9419
      %v9421 = vrot.slane %v9420, 4
      %v9423 = vshll.u32 %v9366, 16
      %v9425 = vrot.slane %v9423, 5
      %v9426 = vsel %vm346, %v9421, %v9425
      %v9427 = vshrl.u32 %v9366, 16
      %v9429 = vrot.slane %v9427, 4
      %v9430 = vor.u32 %v9429, %v9425
      %v9431 = vrot.slane %v9430, 4
      %v9433 = vshll.u32 %v9367, 16
      %v9435 = vrot.slane %v9433, 5
      %v9436 = vsel %vm346, %v9431, %v9435
      %v9438 = vshrl.u32 %v9368, 16
      %v9440 = vrot.slane %v9438, 4
      %v9441 = vshll.u32 %v9368, 16
      %v9443 = vrot.slane %v9441, 5
      %v9444 = vor.u32 %v9440, %v9443
      %v9445 = vrot.slane %v9444, 4
      %v9447 = vshll.u32 %v9369, 16
      %v9449 = vrot.slane %v9447, 5
      %v9450 = vsel %vm346, %v9445, %v9449
      %v9451 = vshrl.u32 %v9369, 16
      %v9453 = vrot.slane %v9451, 4
      %v9454 = vor.u32 %v9453, %v9449
      %v9455 = vrot.slane %v9454, 4
      %v9457 = vshll.u32 %v9370, 16
      %v9459 = vrot.slane %v9457, 5
      %v9460 = vsel %vm346, %v9455, %v9459
      %v9462 = vshrl.u32 %v9371, 16
      %v9464 = vrot.slane %v9462, 4
      %v9465 = vshll.u32 %v9371, 16
      %v9467 = vrot.slane %v9465, 5
      %v9468 = vor.u32 %v9464, %v9467
      %v9469 = vrot.slane %v9468, 4
      %v9471 = vshll.u32 %v9372, 16
      %v9473 = vrot.slane %v9471, 5
      %v9474 = vsel %vm346, %v9469, %v9473
      %v9475 = vshrl.u32 %v9372, 16
      %v9477 = vrot.slane %v9475, 4
      %v9478 = vor.u32 %v9477, %v9473
      %v9479 = vrot.slane %v9478, 4
      %v9481 = vshll.u32 %v9373, 16
      %v9483 = vrot.slane %v9481, 5
      %v9484 = vsel %vm346, %v9479, %v9483
      %v9486 = vshrl.u32 %v9374, 16
      %v9488 = vrot.slane %v9486, 4
      %v9489 = vshll.u32 %v9374, 16
      %v9491 = vrot.slane %v9489, 5
      %v9492 = vor.u32 %v9488, %v9491
      %v9493 = vrot.slane %v9492, 4
      %v9495 = vshll.u32 %v9375, 16
      %v9497 = vrot.slane %v9495, 5
      %v9498 = vsel %vm346, %v9493, %v9497
      %v9499 = vshrl.u32 %v9375, 16
      %v9501 = vrot.slane %v9499, 4
      %v9502 = vor.u32 %v9501, %v9497
      %v9503 = vrot.slane %v9502, 4
      %v9505 = vshll.u32 %v9376, 16
      %v9507 = vrot.slane %v9505, 5
      %v9508 = vsel %vm346, %v9503, %v9507
      %v9510 = vshrl.u32 %v9377, 16
      %v9512 = vrot.slane %v9510, 4
      %v9513 = vshll.u32 %v9377, 16
      %v9515 = vrot.slane %v9513, 5
      %v9516 = vor.u32 %v9512, %v9515
      %v9517 = vrot.slane %v9516, 4
      %v9519 = vshll.u32 %v9378, 16
      %v9521 = vrot.slane %v9519, 5
      %v9522 = vsel %vm346, %v9517, %v9521
      %v9523 = vshrl.u32 %v9378, 16
      %v9525 = vrot.slane %v9523, 4
      %v9526 = vor.u32 %v9525, %v9521
      %v9527 = vrot.slane %v9526, 4
      %v9529 = vshll.u32 %v9379, 16
      %v9531 = vrot.slane %v9529, 5
      %v9532 = vsel %vm346, %v9527, %v9531
      %v9534 = vshrl.u32 %v9380, 16
      %v9536 = vrot.slane %v9534, 4
      %v9537 = vshll.u32 %v9380, 16
      %v9539 = vrot.slane %v9537, 5
      %v9540 = vor.u32 %v9536, %v9539
      %v9541 = vrot.slane %v9540, 4
      %v9543 = vshll.u32 %v9381, 16
      %v9545 = vrot.slane %v9543, 5
      %v9546 = vsel %vm346, %v9541, %v9545
      %v9547 = vshrl.u32 %v9381, 16
      %v9549 = vrot.slane %v9547, 4
      %v9550 = vor.u32 %v9549, %v9545
      %v9551 = vrot.slane %v9550, 4
      %v9553 = vshll.u32 %v9382, 16
      %v9555 = vrot.slane %v9553, 5
      %v9556 = vsel %vm346, %v9551, %v9555
      %v9558 = vshrl.u32 %v9383, 16
      %v9560 = vrot.slane %v9558, 4
      %v9561 = vshll.u32 %v9383, 16
      %v9563 = vrot.slane %v9561, 5
      %v9564 = vor.u32 %v9560, %v9563
      %v9565 = vrot.slane %v9564, 4
      %v9567 = vshll.u32 %v9384, 16
      %v9569 = vrot.slane %v9567, 5
      %v9570 = vsel %vm346, %v9565, %v9569
      %v9571 = vshrl.u32 %v9384, 16
      %v9573 = vrot.slane %v9571, 4
      %v9574 = vor.u32 %v9573, %v9569
      %v9575 = vrot.slane %v9574, 4
      %v9577 = vshll.u32 %v9385, 16
      %v9579 = vrot.slane %v9577, 5
      %v9580 = vsel %vm346, %v9575, %v9579
      %v9582 = vshrl.u32 %v9386, 16
      %v9584 = vrot.slane %v9582, 4
      %v9585 = vshll.u32 %v9386, 16
      %v9587 = vrot.slane %v9585, 5
      %v9588 = vor.u32 %v9584, %v9587
      %v9589 = vrot.slane %v9588, 4
      %v9591 = vshll.u32 %v9387, 16
      %v9593 = vrot.slane %v9591, 5
      %v9594 = vsel %vm346, %v9589, %v9593
      %v9595 = vshrl.u32 %v9387, 16
      %v9597 = vrot.slane %v9595, 4
      %v9598 = vor.u32 %v9597, %v9593
      %v9599 = vrot.slane %v9598, 4
      %v9601 = vshll.u32 %v9388, 16
      %v9603 = vrot.slane %v9601, 5
      %v9604 = vsel %vm346, %v9599, %v9603
      %v9606 = vshrl.u32 %v9389, 16
      %v9608 = vrot.slane %v9606, 4
      %v9609 = vshll.u32 %v9389, 16
      %v9611 = vrot.slane %v9609, 5
      %v9612 = vor.u32 %v9608, %v9611
      %v9613 = vrot.slane %v9612, 4
      %v9615 = vshll.u32 %v9390, 16
      %v9617 = vrot.slane %v9615, 5
      %v9618 = vsel %vm346, %v9613, %v9617
      %v9619 = vshrl.u32 %v9390, 16
      %v9621 = vrot.slane %v9619, 4
      %v9622 = vor.u32 %v9621, %v9617
      %v9623 = vrot.slane %v9622, 4
      %v9625 = vshll.u32 %v9391, 16
      %v9627 = vrot.slane %v9625, 5
      %v9628 = vsel %vm346, %v9623, %v9627
      %v9630 = vshrl.u32 %v9392, 16
      %v9632 = vrot.slane %v9630, 4
      %v9633 = vshll.u32 %v9392, 16
      %v9635 = vrot.slane %v9633, 5
      %v9636 = vor.u32 %v9632, %v9635
      %v9637 = vrot.slane %v9636, 4
      %v9639 = vshll.u32 %v9393, 16
      %v9641 = vrot.slane %v9639, 5
      %v9642 = vsel %vm346, %v9637, %v9641
      %v9643 = vshrl.u32 %v9393, 16
      %v9645 = vrot.slane %v9643, 4
      %v9646 = vor.u32 %v9645, %v9641
      %v9647 = vrot.slane %v9646, 4
      %v9649 = vshll.u32 %v9394, 16
      %v9651 = vrot.slane %v9649, 5
      %v9652 = vsel %vm346, %v9647, %v9651
      %v9654 = vshrl.u32 %v9395, 16
      %v9656 = vrot.slane %v9654, 4
      %v9657 = vshll.u32 %v9395, 16
      %v9659 = vrot.slane %v9657, 5
      %v9660 = vor.u32 %v9656, %v9659
      %v9661 = vrot.slane %v9660, 4
      %v9663 = vshll.u32 %v9396, 16
      %v9665 = vrot.slane %v9663, 5
      %v9666 = vsel %vm346, %v9661, %v9665
      %v9667 = vshrl.u32 %v9396, 16
      %v9669 = vrot.slane %v9667, 4
      %v9670 = vor.u32 %v9669, %v9665
      %v9671 = vrot.slane %v9670, 4
      %v9673 = vshll.u32 %v9397, 16
      %v9675 = vrot.slane %v9673, 5
      %v9676 = vsel %vm346, %v9671, %v9675
      %v9678 = vshrl.u32 %v9398, 16
      %v9680 = vrot.slane %v9678, 4
      %v9681 = vshll.u32 %v9398, 16
      %v9683 = vrot.slane %v9681, 5
      %v9684 = vor.u32 %v9680, %v9683
      %v9685 = vrot.slane %v9684, 4
      %v9687 = vshll.u32 %v9399, 16
      %v9689 = vrot.slane %v9687, 5
      %v9690 = vsel %vm346, %v9685, %v9689
      %v9691 = vshrl.u32 %v9399, 16
      %v9693 = vrot.slane %v9691, 4
      %v9694 = vor.u32 %v9693, %v9689
      %v9695 = vrot.slane %v9694, 4
      %v9697 = vshll.u32 %v9400, 16
      %v9699 = vrot.slane %v9697, 5
      %v9700 = vsel %vm346, %v9695, %v9699
      %v9702 = vshrl.u32 %v9401, 16
      %v9704 = vrot.slane %v9702, 4
      %v9705 = vshll.u32 %v9401, 16
      %v9707 = vrot.slane %v9705, 5
      %v9708 = vor.u32 %v9704, %v9707
      %v9709 = vrot.slane %v9708, 4
      %v9711 = vshll.u32 %v9402, 16
      %v9713 = vrot.slane %v9711, 5
      %v9714 = vsel %vm346, %v9709, %v9713
      %v9715 = vshrl.u32 %v9402, 16
      %v9717 = vrot.slane %v9715, 4
      %v9718 = vor.u32 %v9717, %v9713
      %v9719 = vrot.slane %v9718, 4
      %v9721 = vshll.u32 %v9403, 16
      %v9723 = vrot.slane %v9721, 5
      %v9724 = vsel %vm346, %v9719, %v9723
      %v9726 = vshrl.u32 %v9404, 16
      %v9728 = vrot.slane %v9726, 4
      %v9729 = vshll.u32 %v9404, 16
      %v9731 = vrot.slane %v9729, 5
      %v9732 = vor.u32 %v9728, %v9731
      %v9733 = vrot.slane %v9732, 4
      %v9735 = vshll.u32 %v9405, 16
      %v9737 = vrot.slane %v9735, 5
      %v9738 = vsel %vm346, %v9733, %v9737
      %v9739 = vshrl.u32 %v9405, 16
      %v9741 = vrot.slane %v9739, 4
      %v9742 = vor.u32 %v9741, %v9737
      %v9743 = vrot.slane %v9742, 4
      %v9745 = vshll.u32 %v9406, 16
      %v9747 = vrot.slane %v9745, 5
      %v9748 = vsel %vm346, %v9743, %v9747
      %v9750 = vshrl.u32 %v9407, 16
      %v9752 = vrot.slane %v9750, 4
      %v9753 = vshll.u32 %v9407, 16
      %v9755 = vrot.slane %v9753, 5
      %v9756 = vor.u32 %v9752, %v9755
      %v9757 = vrot.slane %v9756, 4
      %v9759 = vshll.u32 %v9408, 16
      %v9761 = vrot.slane %v9759, 5
      %v9762 = vsel %vm346, %v9757, %v9761
      %v9763 = vshrl.u32 %v9408, 16
      %v9765 = vrot.slane %v9763, 4
      %v9766 = vor.u32 %v9765, %v9761
      %v9767 = vrot.slane %v9766, 4
      %v9769 = vshll.u32 %v9409, 16
      %v9771 = vrot.slane %v9769, 5
      %v9772 = vsel %vm346, %v9767, %v9771
      %v9774 = vshrl.u32 %v9410, 16
      %v9776 = vrot.slane %v9774, 4
      %v9777 = vshll.u32 %v9410, 16
      %v9779 = vrot.slane %v9777, 5
      %v9780 = vor.u32 %v9776, %v9779
      %v9781 = vrot.slane %v9780, 4
      %v9783 = vshll.u32 %v9411, 16
      %v9785 = vrot.slane %v9783, 5
      %v9786 = vsel %vm346, %v9781, %v9785
      %v9787 = vshrl.u32 %v9411, 16
      %v9789 = vrot.slane %v9787, 4
      %v9790 = vor.u32 %v9789, %v9785
      %v9791 = vrot.slane %v9790, 4
      %v9793 = vshll.u32 %v9412, 16
      %v9795 = vrot.slane %v9793, 5
      %v9796 = vsel %vm346, %v9791, %v9795
      %s9797 = scalar_lea.vmem %s3, 448
      %v9798 = vld [vmem:[%s9797] sm:$0xf]
      %v9799 = vld [vmem:[%s9797 + $0x4] sm:$0xf]
      %v9800 = vld [vmem:[%s9797 + $0x8] sm:$0xf]
      %v9801 = vld [vmem:[%s9797 + $0xc] sm:$0xf]
      %v9802 = vld [vmem:[%s9797 + $0x10] sm:$0xf]
      %v9803 = vld [vmem:[%s9797 + $0x14] sm:$0xf]
      %v9804 = vld [vmem:[%s9797 + $0x18] sm:$0xf]
      %v9805 = vld [vmem:[%s9797 + $0x1c] sm:$0xf]
      %v9806 = vld [vmem:[%s9797 + $0x20] sm:$0xf]
      %v9807 = vld [vmem:[%s9797 + $0x24] sm:$0xf]
      %v9808 = vld [vmem:[%s9797 + $0x28] sm:$0xf]
      %v9809 = vld [vmem:[%s9797 + $0x2c] sm:$0xf]
      %v9810 = vld [vmem:[%s9797 + $0x30] sm:$0xf]
      %v9811 = vld [vmem:[%s9797 + $0x34] sm:$0xf]
      %v9812 = vld [vmem:[%s9797 + $0x38] sm:$0xf]
      %v9813 = vld [vmem:[%s9797 + $0x3c] sm:$0xf]
      %v9814 = vunpack.c.l.b16 %v9426
      %v9815 = vunpack.c.l.b16 %v9436
      %v9816 = vunpack.c.l.b16 %v9450
      %v9817 = vunpack.c.l.b16 %v9460
      %v9818 = vunpack.c.l.b16 %v9474
      %v9819 = vunpack.c.l.b16 %v9484
      %v9820 = vunpack.c.l.b16 %v9498
      %v9821 = vunpack.c.l.b16 %v9508
      %v9822 = vunpack.c.l.b16 %v9522
      %v9823 = vunpack.c.l.b16 %v9532
      %v9824 = vunpack.c.l.b16 %v9546
      %v9825 = vunpack.c.l.b16 %v9556
      %v9826 = vunpack.c.l.b16 %v9570
      %v9827 = vunpack.c.l.b16 %v9580
      %v9828 = vunpack.c.l.b16 %v9594
      %v9829 = vunpack.c.l.b16 %v9604
      %v9830 = vunpack.c.l.b16 %v9618
      %v9831 = vunpack.c.l.b16 %v9628
      %v9832 = vunpack.c.l.b16 %v9642
      %v9833 = vunpack.c.l.b16 %v9652
      %v9834 = vunpack.c.l.b16 %v9666
      %v9835 = vunpack.c.l.b16 %v9676
      %v9836 = vunpack.c.l.b16 %v9690
      %v9837 = vunpack.c.l.b16 %v9700
      %v9838 = vunpack.c.l.b16 %v9714
      %v9839 = vunpack.c.l.b16 %v9724
      %v9840 = vunpack.c.l.b16 %v9738
      %v9841 = vunpack.c.l.b16 %v9748
      %v9842 = vunpack.c.l.b16 %v9762
      %v9843 = vunpack.c.l.b16 %v9772
      %v9844 = vunpack.c.l.b16 %v9786
      %v9845 = vunpack.c.l.b16 %v9796
      %v9846 = vpack.c.b16 %v9815, %v9814
      %v9847 = vpack.c.b16 %v9817, %v9816
      %v9848 = vpack.c.b16 %v9819, %v9818
      %v9849 = vpack.c.b16 %v9821, %v9820
      %v9850 = vpack.c.b16 %v9823, %v9822
      %v9851 = vpack.c.b16 %v9825, %v9824
      %v9852 = vpack.c.b16 %v9827, %v9826
      %v9853 = vpack.c.b16 %v9829, %v9828
      %v9854 = vpack.c.b16 %v9831, %v9830
      %v9855 = vpack.c.b16 %v9833, %v9832
      %v9856 = vpack.c.b16 %v9835, %v9834
      %v9857 = vpack.c.b16 %v9837, %v9836
      %v9858 = vpack.c.b16 %v9839, %v9838
      %v9859 = vpack.c.b16 %v9841, %v9840
      %v9860 = vpack.c.b16 %v9843, %v9842
      %v9861 = vpack.c.b16 %v9845, %v9844
      %v9894 = vunpack.c.l.b16 %v9798
      %v9895 = vunpack.c.l.b16 %v9799
      %v9896 = vunpack.c.l.b16 %v9800
      %v9897 = vunpack.c.l.b16 %v9801
      %v9898 = vunpack.c.l.b16 %v9802
      %v9899 = vunpack.c.l.b16 %v9803
      %v9900 = vunpack.c.l.b16 %v9804
      %v9901 = vunpack.c.l.b16 %v9805
      %v9902 = vunpack.c.l.b16 %v9806
      %v9903 = vunpack.c.l.b16 %v9807
      %v9904 = vunpack.c.l.b16 %v9808
      %v9905 = vunpack.c.l.b16 %v9809
      %v9906 = vunpack.c.l.b16 %v9810
      %v9907 = vunpack.c.l.b16 %v9811
      %v9908 = vunpack.c.l.b16 %v9812
      %v9909 = vunpack.c.l.b16 %v9813
      %v9910 = vpack.c.b16 %v9895, %v9894
      %v9911 = vpack.c.b16 %v9897, %v9896
      %v9912 = vpack.c.b16 %v9899, %v9898
      %v9913 = vpack.c.b16 %v9901, %v9900
      %v9914 = vpack.c.b16 %v9903, %v9902
      %v9915 = vpack.c.b16 %v9905, %v9904
      %v9916 = vpack.c.b16 %v9907, %v9906
      %v9917 = vpack.c.b16 %v9909, %v9908
      %9926 = vmatprep.subr.bf16.mxu0 0
      %9927 = vmatpush1.bf16.msra.mxu0 %v9910
      %9928 = vmatprep.subr.bf16.mxu0 0
      %9929 = vmatpush1.bf16.msra.mxu0 %v9911
      %9930 = vmatprep.subr.bf16.mxu0 0
      %9931 = vmatpush1.bf16.msra.mxu0 %v9912
      %9932 = vmatprep.subr.bf16.mxu0 0
      %9933 = vmatpush1.bf16.msra.mxu0 %v9913
      %9934 = vmatprep.subr.bf16.mxu0 0
      %9935 = vmatpush1.bf16.msra.mxu0 %v9914
      %9936 = vmatprep.subr.bf16.mxu0 0
      %9937 = vmatpush1.bf16.msra.mxu0 %v9915
      %9938 = vmatprep.subr.bf16.mxu0 0
      %9939 = vmatpush1.bf16.msra.mxu0 %v9916
      %9940 = vmatprep.subr.bf16.mxu0 0
      %9941 = vmatpush1.bf16.msra.mxu0 %v9917
      %9942 = vmatprep.subr.bf16.mxu0 0
      %9943 = vmatpush1.bf16.msra.mxu0 0
      %9944 = vmatprep.subr.bf16.mxu0 0
      %9945 = vmatpush1.bf16.msra.mxu0 0
      %9946 = vmatprep.subr.bf16.mxu0 0
      %9947 = vmatpush1.bf16.msra.mxu0 0
      %9948 = vmatprep.subr.bf16.mxu0 0
      %9949 = vmatpush1.bf16.msra.mxu0 0
      %9950 = vmatprep.subr.bf16.mxu0 0
      %9951 = vmatpush1.bf16.msra.mxu0 0
      %9952 = vmatprep.subr.bf16.mxu0 0
      %9953 = vmatpush1.bf16.msra.mxu0 0
      %9954 = vmatprep.subr.bf16.mxu0 0
      %9955 = vmatpush1.bf16.msra.mxu0 0
      %9956 = vmatprep.subr.bf16.mxu0 0
      %9957 = vmatpush1.bf16.msra.mxu0 0
      %9958 = vmatprep.mubr.bf16.mxu0 0
      %9959 = vmatmul.mubr.bf16.gmra.mrb[0].mxu0 %v9846
      %v9960 = vpop.f32.mrb[0].mxu0
      %v9961 = vadd.f32 0.0, %v9960
      %v9962 = vpop.f32.mrb[0].mxu0
      %v9963 = vpop.f32.mrb[0].mxu0
      %v9964 = vadd.f32 0.0, %v9963
      %v9965 = vpop.f32.mrb[0].mxu0
      %9966 = vmatprep.mubr.bf16.mxu0 0
      %9967 = vmatmul.mubr.bf16.gmra.mrb[0].mxu0 %v9847
      %v9968 = vpop.f32.mrb[0].mxu0
      %v9969 = vadd.f32 0.0, %v9968
      %v9970 = vpop.f32.mrb[0].mxu0
      %v9971 = vpop.f32.mrb[0].mxu0
      %v9972 = vadd.f32 0.0, %v9971
      %v9973 = vpop.f32.mrb[0].mxu0
      %9974 = vmatprep.mubr.bf16.mxu0 0
      %9975 = vmatmul.mubr.bf16.gmra.mrb[0].mxu0 %v9848
      %v9976 = vpop.f32.mrb[0].mxu0
      %v9977 = vadd.f32 0.0, %v9976
      %v9978 = vpop.f32.mrb[0].mxu0
      %v9979 = vpop.f32.mrb[0].mxu0
      %v9980 = vadd.f32 0.0, %v9979
      %v9981 = vpop.f32.mrb[0].mxu0
      %9982 = vmatprep.mubr.bf16.mxu0 0
      %9983 = vmatmul.mubr.bf16.gmra.mrb[0].mxu0 %v9849
      %v9984 = vpop.f32.mrb[0].mxu0
      %v9985 = vadd.f32 0.0, %v9984
      %v9986 = vpop.f32.mrb[0].mxu0
      %v9987 = vpop.f32.mrb[0].mxu0
      %v9988 = vadd.f32 0.0, %v9987
      %v9989 = vpop.f32.mrb[0].mxu0
      %9990 = vmatprep.mubr.bf16.mxu0 0
      %9991 = vmatmul.mubr.bf16.gmra.mrb[0].mxu0 %v9850
      %v9992 = vpop.f32.mrb[0].mxu0
      %v9993 = vadd.f32 0.0, %v9992
      %v9994 = vpop.f32.mrb[0].mxu0
      %v9995 = vpop.f32.mrb[0].mxu0
      %v9996 = vadd.f32 0.0, %v9995
      %v9997 = vpop.f32.mrb[0].mxu0
      %9998 = vmatprep.mubr.bf16.mxu0 0
      %9999 = vmatmul.mubr.bf16.gmra.mrb[0].mxu0 %v9851
      %v10000 = vpop.f32.mrb[0].mxu0
      %v10001 = vadd.f32 0.0, %v10000
      %v10002 = vpop.f32.mrb[0].mxu0
      %v10003 = vpop.f32.mrb[0].mxu0
      %v10004 = vadd.f32 0.0, %v10003
      %v10005 = vpop.f32.mrb[0].mxu0
      %10006 = vmatprep.mubr.bf16.mxu0 0
      %10007 = vmatmul.mubr.bf16.gmra.mrb[0].mxu0 %v9852
      %v10008 = vpop.f32.mrb[0].mxu0
      %v10009 = vadd.f32 0.0, %v10008
      %v10010 = vpop.f32.mrb[0].mxu0
      %v10011 = vpop.f32.mrb[0].mxu0
      %v10012 = vadd.f32 0.0, %v10011
      %v10013 = vpop.f32.mrb[0].mxu0
      %10014 = vmatprep.mubr.bf16.mxu0 0
      %10015 = vmatmul.mubr.bf16.gmra.mrb[0].mxu0 %v9853
      %v10016 = vpop.f32.mrb[0].mxu0
      %v10017 = vadd.f32 0.0, %v10016
      %v10018 = vpop.f32.mrb[0].mxu0
      %v10019 = vpop.f32.mrb[0].mxu0
      %v10020 = vadd.f32 0.0, %v10019
      %v10021 = vpop.f32.mrb[0].mxu0
      %10022 = vmatprep.mubr.bf16.mxu0 0
      %10023 = vmatmul.mubr.bf16.gmra.mrb[0].mxu0 %v9854
      %v10024 = vpop.f32.mrb[0].mxu0
      %v10025 = vadd.f32 0.0, %v10024
      %v10026 = vpop.f32.mrb[0].mxu0
      %v10027 = vpop.f32.mrb[0].mxu0
      %v10028 = vadd.f32 0.0, %v10027
      %v10029 = vpop.f32.mrb[0].mxu0
      %10030 = vmatprep.mubr.bf16.mxu0 0
      %10031 = vmatmul.mubr.bf16.gmra.mrb[0].mxu0 %v9855
      %v10032 = vpop.f32.mrb[0].mxu0
      %v10033 = vadd.f32 0.0, %v10032
      %v10034 = vpop.f32.mrb[0].mxu0
      %v10035 = vpop.f32.mrb[0].mxu0
      %v10036 = vadd.f32 0.0, %v10035
      %v10037 = vpop.f32.mrb[0].mxu0
      %10038 = vmatprep.mubr.bf16.mxu0 0
      %10039 = vmatmul.mubr.bf16.gmra.mrb[0].mxu0 %v9856
      %v10040 = vpop.f32.mrb[0].mxu0
      %v10041 = vadd.f32 0.0, %v10040
      %v10042 = vpop.f32.mrb[0].mxu0
      %v10043 = vpop.f32.mrb[0].mxu0
      %v10044 = vadd.f32 0.0, %v10043
      %v10045 = vpop.f32.mrb[0].mxu0
      %10046 = vmatprep.mubr.bf16.mxu0 0
      %10047 = vmatmul.mubr.bf16.gmra.mrb[0].mxu0 %v9857
      %v10048 = vpop.f32.mrb[0].mxu0
      %v10049 = vadd.f32 0.0, %v10048
      %v10050 = vpop.f32.mrb[0].mxu0
      %v10051 = vpop.f32.mrb[0].mxu0
      %v10052 = vadd.f32 0.0, %v10051
      %v10053 = vpop.f32.mrb[0].mxu0
      %10054 = vmatprep.mubr.bf16.mxu0 0
      %10055 = vmatmul.mubr.bf16.gmra.mrb[0].mxu0 %v9858
      %v10056 = vpop.f32.mrb[0].mxu0
      %v10057 = vadd.f32 0.0, %v10056
      %v10058 = vpop.f32.mrb[0].mxu0
      %v10059 = vpop.f32.mrb[0].mxu0
      %v10060 = vadd.f32 0.0, %v10059
      %v10061 = vpop.f32.mrb[0].mxu0
      %10062 = vmatprep.mubr.bf16.mxu0 0
      %10063 = vmatmul.mubr.bf16.gmra.mrb[0].mxu0 %v9859
      %v10064 = vpop.f32.mrb[0].mxu0
      %v10065 = vadd.f32 0.0, %v10064
      %v10066 = vpop.f32.mrb[0].mxu0
      %v10067 = vpop.f32.mrb[0].mxu0
      %v10068 = vadd.f32 0.0, %v10067
      %v10069 = vpop.f32.mrb[0].mxu0
      %10070 = vmatprep.mubr.bf16.mxu0 0
      %10071 = vmatmul.mubr.bf16.gmra.mrb[0].mxu0 %v9860
      %v10072 = vpop.f32.mrb[0].mxu0
      %v10073 = vadd.f32 0.0, %v10072
      %v10074 = vpop.f32.mrb[0].mxu0
      %v10075 = vpop.f32.mrb[0].mxu0
      %v10076 = vadd.f32 0.0, %v10075
      %v10077 = vpop.f32.mrb[0].mxu0
      %10078 = vmatprep.mubr.bf16.mxu0 0
      %10079 = vmatmul.mubr.bf16.gmra.mrb[0].mxu0 %v9861
      %v10080 = vpop.f32.mrb[0].mxu0
      %v10081 = vadd.f32 0.0, %v10080
      %v10082 = vpop.f32.mrb[0].mxu0
      %v10083 = vpop.f32.mrb[0].mxu0
      %v10084 = vadd.f32 0.0, %v10083
      %v10085 = vpop.f32.mrb[0].mxu0
      %10086 = vdwg.mxu0
      %v10087 = vadd.f32 %v9333, %v9961
      %v10088 = vadd.f32 %v9334, %v9964
      %v10089 = vadd.f32 %v9335, %v9969
      %v10090 = vadd.f32 %v9336, %v9972
      %v10091 = vadd.f32 %v9337, %v9977
      %v10092 = vadd.f32 %v9338, %v9980
      %v10093 = vadd.f32 %v9339, %v9985
      %v10094 = vadd.f32 %v9340, %v9988
      %v10095 = vadd.f32 %v9341, %v9993
      %v10096 = vadd.f32 %v9342, %v9996
      %v10097 = vadd.f32 %v9343, %v10001
      %v10098 = vadd.f32 %v9344, %v10004
      %v10099 = vadd.f32 %v9345, %v10009
      %v10100 = vadd.f32 %v9346, %v10012
      %v10101 = vadd.f32 %v9347, %v10017
      %v10102 = vadd.f32 %v9348, %v10020
      %v10103 = vadd.f32 %v9349, %v10025
      %v10104 = vadd.f32 %v9350, %v10028
      %v10105 = vadd.f32 %v9351, %v10033
      %v10106 = vadd.f32 %v9352, %v10036
      %v10107 = vadd.f32 %v9353, %v10041
      %v10108 = vadd.f32 %v9354, %v10044
      %v10109 = vadd.f32 %v9355, %v10049
      %v10110 = vadd.f32 %v9356, %v10052
      %v10111 = vadd.f32 %v9357, %v10057
      %v10112 = vadd.f32 %v9358, %v10060
      %v10113 = vadd.f32 %v9359, %v10065
      %v10114 = vadd.f32 %v9360, %v10068
      %v10115 = vadd.f32 %v9361, %v10073
      %v10116 = vadd.f32 %v9362, %v10076
      %v10117 = vadd.f32 %v9363, %v10081
      %v10118 = vadd.f32 %v9364, %v10084
      %v10119 = vld [vmem:[%s8978] sm:$0xe]
      %v10120 = vld [vmem:[%s8978 + $0xc] sm:$0xe]
      %v10121 = vld [vmem:[%s8978 + $0x18] sm:$0xe]
      %v10122 = vld [vmem:[%s8978 + $0x24] sm:$0xe]
      %v10123 = vld [vmem:[%s8978 + $0x30] sm:$0xe]
      %v10124 = vld [vmem:[%s8978 + $0x3c] sm:$0xe]
      %v10125 = vld [vmem:[%s8978 + $0x48] sm:$0xe]
      %v10126 = vld [vmem:[%s8978 + $0x54] sm:$0xe]
      %v10127 = vld [vmem:[%s8978 + $0x60] sm:$0xe]
      %v10128 = vld [vmem:[%s8978 + $0x6c] sm:$0xe]
      %v10129 = vld [vmem:[%s8978 + $0x78] sm:$0xe]
      %v10130 = vld [vmem:[%s8978 + $0x84] sm:$0xe]
      %v10131 = vld [vmem:[%s8978 + $0x90] sm:$0xe]
      %v10132 = vld [vmem:[%s8978 + $0x9c] sm:$0xe]
      %v10133 = vld [vmem:[%s8978 + $0xa8] sm:$0xe]
      %v10134 = vld [vmem:[%s8978 + $0xb4] sm:$0xe]
      %v10183 = vrot.slane %v10119, 5
      %v10184 = vrot.slane %v10183, 4
      %v10185 = vrot.slane %v9366, 5
      %v10186 = vsel %vm1376, %v10184, %v10185
      %v10187 = vrot.slane %v10185, 4
      %v10188 = vrot.slane %v9367, 5
      %v10189 = vsel %vm1376, %v10187, %v10188
      %v10190 = vrot.slane %v10120, 5
      %v10191 = vrot.slane %v10190, 4
      %v10192 = vrot.slane %v9369, 5
      %v10193 = vsel %vm1376, %v10191, %v10192
      %v10194 = vrot.slane %v10192, 4
      %v10195 = vrot.slane %v9370, 5
      %v10196 = vsel %vm1376, %v10194, %v10195
      %v10197 = vrot.slane %v10121, 5
      %v10198 = vrot.slane %v10197, 4
      %v10199 = vrot.slane %v9372, 5
      %v10200 = vsel %vm1376, %v10198, %v10199
      %v10201 = vrot.slane %v10199, 4
      %v10202 = vrot.slane %v9373, 5
      %v10203 = vsel %vm1376, %v10201, %v10202
      %v10204 = vrot.slane %v10122, 5
      %v10205 = vrot.slane %v10204, 4
      %v10206 = vrot.slane %v9375, 5
      %v10207 = vsel %vm1376, %v10205, %v10206
      %v10208 = vrot.slane %v10206, 4
      %v10209 = vrot.slane %v9376, 5
      %v10210 = vsel %vm1376, %v10208, %v10209
      %v10211 = vrot.slane %v10123, 5
      %v10212 = vrot.slane %v10211, 4
      %v10213 = vrot.slane %v9378, 5
      %v10214 = vsel %vm1376, %v10212, %v10213
      %v10215 = vrot.slane %v10213, 4
      %v10216 = vrot.slane %v9379, 5
      %v10217 = vsel %vm1376, %v10215, %v10216
      %v10218 = vrot.slane %v10124, 5
      %v10219 = vrot.slane %v10218, 4
      %v10220 = vrot.slane %v9381, 5
      %v10221 = vsel %vm1376, %v10219, %v10220
      %v10222 = vrot.slane %v10220, 4
      %v10223 = vrot.slane %v9382, 5
      %v10224 = vsel %vm1376, %v10222, %v10223
      %v10225 = vrot.slane %v10125, 5
      %v10226 = vrot.slane %v10225, 4
      %v10227 = vrot.slane %v9384, 5
      %v10228 = vsel %vm1376, %v10226, %v10227
      %v10229 = vrot.slane %v10227, 4
      %v10230 = vrot.slane %v9385, 5
      %v10231 = vsel %vm1376, %v10229, %v10230
      %v10232 = vrot.slane %v10126, 5
      %v10233 = vrot.slane %v10232, 4
      %v10234 = vrot.slane %v9387, 5
      %v10235 = vsel %vm1376, %v10233, %v10234
      %v10236 = vrot.slane %v10234, 4
      %v10237 = vrot.slane %v9388, 5
      %v10238 = vsel %vm1376, %v10236, %v10237
      %v10239 = vrot.slane %v10127, 5
      %v10240 = vrot.slane %v10239, 4
      %v10241 = vrot.slane %v9390, 5
      %v10242 = vsel %vm1376, %v10240, %v10241
      %v10243 = vrot.slane %v10241, 4
      %v10244 = vrot.slane %v9391, 5
      %v10245 = vsel %vm1376, %v10243, %v10244
      %v10246 = vrot.slane %v10128, 5
      %v10247 = vrot.slane %v10246, 4
      %v10248 = vrot.slane %v9393, 5
      %v10249 = vsel %vm1376, %v10247, %v10248
      %v10250 = vrot.slane %v10248, 4
      %v10251 = vrot.slane %v9394, 5
      %v10252 = vsel %vm1376, %v10250, %v10251
      %v10253 = vrot.slane %v10129, 5
      %v10254 = vrot.slane %v10253, 4
      %v10255 = vrot.slane %v9396, 5
      %v10256 = vsel %vm1376, %v10254, %v10255
      %v10257 = vrot.slane %v10255, 4
      %v10258 = vrot.slane %v9397, 5
      %v10259 = vsel %vm1376, %v10257, %v10258
      %v10260 = vrot.slane %v10130, 5
      %v10261 = vrot.slane %v10260, 4
      %v10262 = vrot.slane %v9399, 5
      %v10263 = vsel %vm1376, %v10261, %v10262
      %v10264 = vrot.slane %v10262, 4
      %v10265 = vrot.slane %v9400, 5
      %v10266 = vsel %vm1376, %v10264, %v10265
      %v10267 = vrot.slane %v10131, 5
      %v10268 = vrot.slane %v10267, 4
      %v10269 = vrot.slane %v9402, 5
      %v10270 = vsel %vm1376, %v10268, %v10269
      %v10271 = vrot.slane %v10269, 4
      %v10272 = vrot.slane %v9403, 5
      %v10273 = vsel %vm1376, %v10271, %v10272
      %v10274 = vrot.slane %v10132, 5
      %v10275 = vrot.slane %v10274, 4
      %v10276 = vrot.slane %v9405, 5
      %v10277 = vsel %vm1376, %v10275, %v10276
      %v10278 = vrot.slane %v10276, 4
      %v10279 = vrot.slane %v9406, 5
      %v10280 = vsel %vm1376, %v10278, %v10279
      %v10281 = vrot.slane %v10133, 5
      %v10282 = vrot.slane %v10281, 4
      %v10283 = vrot.slane %v9408, 5
      %v10284 = vsel %vm1376, %v10282, %v10283
      %v10285 = vrot.slane %v10283, 4
      %v10286 = vrot.slane %v9409, 5
      %v10287 = vsel %vm1376, %v10285, %v10286
      %v10288 = vrot.slane %v10134, 5
      %v10289 = vrot.slane %v10288, 4
      %v10290 = vrot.slane %v9411, 5
      %v10291 = vsel %vm1376, %v10289, %v10290
      %v10292 = vrot.slane %v10290, 4
      %v10293 = vrot.slane %v9412, 5
      %v10294 = vsel %vm1376, %v10292, %v10293
      %s10295 = scalar_lea.vmem %s3, 512
      %v10296 = vld [vmem:[%s10295] sm:$0xf]
      %v10297 = vld [vmem:[%s10295 + $0x4] sm:$0xf]
      %v10298 = vld [vmem:[%s10295 + $0x8] sm:$0xf]
      %v10299 = vld [vmem:[%s10295 + $0xc] sm:$0xf]
      %v10300 = vld [vmem:[%s10295 + $0x10] sm:$0xf]
      %v10301 = vld [vmem:[%s10295 + $0x14] sm:$0xf]
      %v10302 = vld [vmem:[%s10295 + $0x18] sm:$0xf]
      %v10303 = vld [vmem:[%s10295 + $0x1c] sm:$0xf]
      %v10304 = vld [vmem:[%s10295 + $0x20] sm:$0xf]
      %v10305 = vld [vmem:[%s10295 + $0x24] sm:$0xf]
      %v10306 = vld [vmem:[%s10295 + $0x28] sm:$0xf]
      %v10307 = vld [vmem:[%s10295 + $0x2c] sm:$0xf]
      %v10308 = vld [vmem:[%s10295 + $0x30] sm:$0xf]
      %v10309 = vld [vmem:[%s10295 + $0x34] sm:$0xf]
      %v10310 = vld [vmem:[%s10295 + $0x38] sm:$0xf]
      %v10311 = vld [vmem:[%s10295 + $0x3c] sm:$0xf]
      %v10312 = vunpack.c.l.b16 %v10186
      %v10313 = vunpack.c.l.b16 %v10189
      %v10314 = vunpack.c.l.b16 %v10193
      %v10315 = vunpack.c.l.b16 %v10196
      %v10316 = vunpack.c.l.b16 %v10200
      %v10317 = vunpack.c.l.b16 %v10203
      %v10318 = vunpack.c.l.b16 %v10207
      %v10319 = vunpack.c.l.b16 %v10210
      %v10320 = vunpack.c.l.b16 %v10214
      %v10321 = vunpack.c.l.b16 %v10217
      %v10322 = vunpack.c.l.b16 %v10221
      %v10323 = vunpack.c.l.b16 %v10224
      %v10324 = vunpack.c.l.b16 %v10228
      %v10325 = vunpack.c.l.b16 %v10231
      %v10326 = vunpack.c.l.b16 %v10235
      %v10327 = vunpack.c.l.b16 %v10238
      %v10328 = vunpack.c.l.b16 %v10242
      %v10329 = vunpack.c.l.b16 %v10245
      %v10330 = vunpack.c.l.b16 %v10249
      %v10331 = vunpack.c.l.b16 %v10252
      %v10332 = vunpack.c.l.b16 %v10256
      %v10333 = vunpack.c.l.b16 %v10259
      %v10334 = vunpack.c.l.b16 %v10263
      %v10335 = vunpack.c.l.b16 %v10266
      %v10336 = vunpack.c.l.b16 %v10270
      %v10337 = vunpack.c.l.b16 %v10273
      %v10338 = vunpack.c.l.b16 %v10277
      %v10339 = vunpack.c.l.b16 %v10280
      %v10340 = vunpack.c.l.b16 %v10284
      %v10341 = vunpack.c.l.b16 %v10287
      %v10342 = vunpack.c.l.b16 %v10291
      %v10343 = vunpack.c.l.b16 %v10294
      %v10344 = vpack.c.b16 %v10313, %v10312
      %v10345 = vpack.c.b16 %v10315, %v10314
      %v10346 = vpack.c.b16 %v10317, %v10316
      %v10347 = vpack.c.b16 %v10319, %v10318
      %v10348 = vpack.c.b16 %v10321, %v10320
      %v10349 = vpack.c.b16 %v10323, %v10322
      %v10350 = vpack.c.b16 %v10325, %v10324
      %v10351 = vpack.c.b16 %v10327, %v10326
      %v10352 = vpack.c.b16 %v10329, %v10328
      %v10353 = vpack.c.b16 %v10331, %v10330
      %v10354 = vpack.c.b16 %v10333, %v10332
      %v10355 = vpack.c.b16 %v10335, %v10334
      %v10356 = vpack.c.b16 %v10337, %v10336
      %v10357 = vpack.c.b16 %v10339, %v10338
      %v10358 = vpack.c.b16 %v10341, %v10340
      %v10359 = vpack.c.b16 %v10343, %v10342
      %v10392 = vunpack.c.l.b16 %v10296
      %v10393 = vunpack.c.l.b16 %v10297
      %v10394 = vunpack.c.l.b16 %v10298
      %v10395 = vunpack.c.l.b16 %v10299
      %v10396 = vunpack.c.l.b16 %v10300
      %v10397 = vunpack.c.l.b16 %v10301
      %v10398 = vunpack.c.l.b16 %v10302
      %v10399 = vunpack.c.l.b16 %v10303
      %v10400 = vunpack.c.l.b16 %v10304
      %v10401 = vunpack.c.l.b16 %v10305
      %v10402 = vunpack.c.l.b16 %v10306
      %v10403 = vunpack.c.l.b16 %v10307
      %v10404 = vunpack.c.l.b16 %v10308
      %v10405 = vunpack.c.l.b16 %v10309
      %v10406 = vunpack.c.l.b16 %v10310
      %v10407 = vunpack.c.l.b16 %v10311
      %v10408 = vpack.c.b16 %v10393, %v10392
      %v10409 = vpack.c.b16 %v10395, %v10394
      %v10410 = vpack.c.b16 %v10397, %v10396
      %v10411 = vpack.c.b16 %v10399, %v10398
      %v10412 = vpack.c.b16 %v10401, %v10400
      %v10413 = vpack.c.b16 %v10403, %v10402
      %v10414 = vpack.c.b16 %v10405, %v10404
      %v10415 = vpack.c.b16 %v10407, %v10406
      %10424 = vmatprep.subr.bf16.mxu0 0
      %10425 = vmatpush1.bf16.msra.mxu0 %v10408
      %10426 = vmatprep.subr.bf16.mxu0 0
      %10427 = vmatpush1.bf16.msra.mxu0 %v10409
      %10428 = vmatprep.subr.bf16.mxu0 0
      %10429 = vmatpush1.bf16.msra.mxu0 %v10410
      %10430 = vmatprep.subr.bf16.mxu0 0
      %10431 = vmatpush1.bf16.msra.mxu0 %v10411
      %10432 = vmatprep.subr.bf16.mxu0 0
      %10433 = vmatpush1.bf16.msra.mxu0 %v10412
      %10434 = vmatprep.subr.bf16.mxu0 0
      %10435 = vmatpush1.bf16.msra.mxu0 %v10413
      %10436 = vmatprep.subr.bf16.mxu0 0
      %10437 = vmatpush1.bf16.msra.mxu0 %v10414
      %10438 = vmatprep.subr.bf16.mxu0 0
      %10439 = vmatpush1.bf16.msra.mxu0 %v10415
      %10440 = vmatprep.subr.bf16.mxu0 0
      %10441 = vmatpush1.bf16.msra.mxu0 0
      %10442 = vmatprep.subr.bf16.mxu0 0
      %10443 = vmatpush1.bf16.msra.mxu0 0
      %10444 = vmatprep.subr.bf16.mxu0 0
      %10445 = vmatpush1.bf16.msra.mxu0 0
      %10446 = vmatprep.subr.bf16.mxu0 0
      %10447 = vmatpush1.bf16.msra.mxu0 0
      %10448 = vmatprep.subr.bf16.mxu0 0
      %10449 = vmatpush1.bf16.msra.mxu0 0
      %10450 = vmatprep.subr.bf16.mxu0 0
      %10451 = vmatpush1.bf16.msra.mxu0 0
      %10452 = vmatprep.subr.bf16.mxu0 0
      %10453 = vmatpush1.bf16.msra.mxu0 0
      %10454 = vmatprep.subr.bf16.mxu0 0
      %10455 = vmatpush1.bf16.msra.mxu0 0
      %10456 = vmatprep.mubr.bf16.mxu0 0
      %10457 = vmatmul.mubr.bf16.gmra.mrb[0].mxu0 %v10344
      %v10458 = vpop.f32.mrb[0].mxu0
      %v10459 = vadd.f32 0.0, %v10458
      %v10460 = vpop.f32.mrb[0].mxu0
      %v10461 = vpop.f32.mrb[0].mxu0
      %v10462 = vadd.f32 0.0, %v10461
      %v10463 = vpop.f32.mrb[0].mxu0
      %10464 = vmatprep.mubr.bf16.mxu0 0
      %10465 = vmatmul.mubr.bf16.gmra.mrb[0].mxu0 %v10345
      %v10466 = vpop.f32.mrb[0].mxu0
      %v10467 = vadd.f32 0.0, %v10466
      %v10468 = vpop.f32.mrb[0].mxu0
      %v10469 = vpop.f32.mrb[0].mxu0
      %v10470 = vadd.f32 0.0, %v10469
      %v10471 = vpop.f32.mrb[0].mxu0
      %10472 = vmatprep.mubr.bf16.mxu0 0
      %10473 = vmatmul.mubr.bf16.gmra.mrb[0].mxu0 %v10346
      %v10474 = vpop.f32.mrb[0].mxu0
      %v10475 = vadd.f32 0.0, %v10474
      %v10476 = vpop.f32.mrb[0].mxu0
      %v10477 = vpop.f32.mrb[0].mxu0
      %v10478 = vadd.f32 0.0, %v10477
      %v10479 = vpop.f32.mrb[0].mxu0
      %10480 = vmatprep.mubr.bf16.mxu0 0
      %10481 = vmatmul.mubr.bf16.gmra.mrb[0].mxu0 %v10347
      %v10482 = vpop.f32.mrb[0].mxu0
      %v10483 = vadd.f32 0.0, %v10482
      %v10484 = vpop.f32.mrb[0].mxu0
      %v10485 = vpop.f32.mrb[0].mxu0
      %v10486 = vadd.f32 0.0, %v10485
      %v10487 = vpop.f32.mrb[0].mxu0
      %10488 = vmatprep.mubr.bf16.mxu0 0
      %10489 = vmatmul.mubr.bf16.gmra.mrb[0].mxu0 %v10348
      %v10490 = vpop.f32.mrb[0].mxu0
      %v10491 = vadd.f32 0.0, %v10490
      %v10492 = vpop.f32.mrb[0].mxu0
      %v10493 = vpop.f32.mrb[0].mxu0
      %v10494 = vadd.f32 0.0, %v10493
      %v10495 = vpop.f32.mrb[0].mxu0
      %10496 = vmatprep.mubr.bf16.mxu0 0
      %10497 = vmatmul.mubr.bf16.gmra.mrb[0].mxu0 %v10349
      %v10498 = vpop.f32.mrb[0].mxu0
      %v10499 = vadd.f32 0.0, %v10498
      %v10500 = vpop.f32.mrb[0].mxu0
      %v10501 = vpop.f32.mrb[0].mxu0
      %v10502 = vadd.f32 0.0, %v10501
      %v10503 = vpop.f32.mrb[0].mxu0
      %10504 = vmatprep.mubr.bf16.mxu0 0
      %10505 = vmatmul.mubr.bf16.gmra.mrb[0].mxu0 %v10350
      %v10506 = vpop.f32.mrb[0].mxu0
      %v10507 = vadd.f32 0.0, %v10506
      %v10508 = vpop.f32.mrb[0].mxu0
      %v10509 = vpop.f32.mrb[0].mxu0
      %v10510 = vadd.f32 0.0, %v10509
      %v10511 = vpop.f32.mrb[0].mxu0
      %10512 = vmatprep.mubr.bf16.mxu0 0
      %10513 = vmatmul.mubr.bf16.gmra.mrb[0].mxu0 %v10351
      %v10514 = vpop.f32.mrb[0].mxu0
      %v10515 = vadd.f32 0.0, %v10514
      %v10516 = vpop.f32.mrb[0].mxu0
      %v10517 = vpop.f32.mrb[0].mxu0
      %v10518 = vadd.f32 0.0, %v10517
      %v10519 = vpop.f32.mrb[0].mxu0
      %10520 = vmatprep.mubr.bf16.mxu0 0
      %10521 = vmatmul.mubr.bf16.gmra.mrb[0].mxu0 %v10352
      %v10522 = vpop.f32.mrb[0].mxu0
      %v10523 = vadd.f32 0.0, %v10522
      %v10524 = vpop.f32.mrb[0].mxu0
      %v10525 = vpop.f32.mrb[0].mxu0
      %v10526 = vadd.f32 0.0, %v10525
      %v10527 = vpop.f32.mrb[0].mxu0
      %10528 = vmatprep.mubr.bf16.mxu0 0
      %10529 = vmatmul.mubr.bf16.gmra.mrb[0].mxu0 %v10353
      %v10530 = vpop.f32.mrb[0].mxu0
      %v10531 = vadd.f32 0.0, %v10530
      %v10532 = vpop.f32.mrb[0].mxu0
      %v10533 = vpop.f32.mrb[0].mxu0
      %v10534 = vadd.f32 0.0, %v10533
      %v10535 = vpop.f32.mrb[0].mxu0
      %10536 = vmatprep.mubr.bf16.mxu0 0
      %10537 = vmatmul.mubr.bf16.gmra.mrb[0].mxu0 %v10354
      %v10538 = vpop.f32.mrb[0].mxu0
      %v10539 = vadd.f32 0.0, %v10538
      %v10540 = vpop.f32.mrb[0].mxu0
      %v10541 = vpop.f32.mrb[0].mxu0
      %v10542 = vadd.f32 0.0, %v10541
      %v10543 = vpop.f32.mrb[0].mxu0
      %10544 = vmatprep.mubr.bf16.mxu0 0
      %10545 = vmatmul.mubr.bf16.gmra.mrb[0].mxu0 %v10355
      %v10546 = vpop.f32.mrb[0].mxu0
      %v10547 = vadd.f32 0.0, %v10546
      %v10548 = vpop.f32.mrb[0].mxu0
      %v10549 = vpop.f32.mrb[0].mxu0
      %v10550 = vadd.f32 0.0, %v10549
      %v10551 = vpop.f32.mrb[0].mxu0
      %10552 = vmatprep.mubr.bf16.mxu0 0
      %10553 = vmatmul.mubr.bf16.gmra.mrb[0].mxu0 %v10356
      %v10554 = vpop.f32.mrb[0].mxu0
      %v10555 = vadd.f32 0.0, %v10554
      %v10556 = vpop.f32.mrb[0].mxu0
      %v10557 = vpop.f32.mrb[0].mxu0
      %v10558 = vadd.f32 0.0, %v10557
      %v10559 = vpop.f32.mrb[0].mxu0
      %10560 = vmatprep.mubr.bf16.mxu0 0
      %10561 = vmatmul.mubr.bf16.gmra.mrb[0].mxu0 %v10357
      %v10562 = vpop.f32.mrb[0].mxu0
      %v10563 = vadd.f32 0.0, %v10562
      %v10564 = vpop.f32.mrb[0].mxu0
      %v10565 = vpop.f32.mrb[0].mxu0
      %v10566 = vadd.f32 0.0, %v10565
      %v10567 = vpop.f32.mrb[0].mxu0
      %10568 = vmatprep.mubr.bf16.mxu0 0
      %10569 = vmatmul.mubr.bf16.gmra.mrb[0].mxu0 %v10358
      %v10570 = vpop.f32.mrb[0].mxu0
      %v10571 = vadd.f32 0.0, %v10570
      %v10572 = vpop.f32.mrb[0].mxu0
      %v10573 = vpop.f32.mrb[0].mxu0
      %v10574 = vadd.f32 0.0, %v10573
      %v10575 = vpop.f32.mrb[0].mxu0
      %10576 = vmatprep.mubr.bf16.mxu0 0
      %10577 = vmatmul.mubr.bf16.gmra.mrb[0].mxu0 %v10359
      %v10578 = vpop.f32.mrb[0].mxu0
      %v10579 = vadd.f32 0.0, %v10578
      %v10580 = vpop.f32.mrb[0].mxu0
      %v10581 = vpop.f32.mrb[0].mxu0
      %v10582 = vadd.f32 0.0, %v10581
      %v10583 = vpop.f32.mrb[0].mxu0
      %10584 = vdwg.mxu0
      %v10585 = vadd.f32 %v10087, %v10459
      %v10586 = vadd.f32 %v10088, %v10462
      %v10587 = vadd.f32 %v10089, %v10467
      %v10588 = vadd.f32 %v10090, %v10470
      %v10589 = vadd.f32 %v10091, %v10475
      %v10590 = vadd.f32 %v10092, %v10478
      %v10591 = vadd.f32 %v10093, %v10483
      %v10592 = vadd.f32 %v10094, %v10486
      %v10593 = vadd.f32 %v10095, %v10491
      %v10594 = vadd.f32 %v10096, %v10494
      %v10595 = vadd.f32 %v10097, %v10499
      %v10596 = vadd.f32 %v10098, %v10502
      %v10597 = vadd.f32 %v10099, %v10507
      %v10598 = vadd.f32 %v10100, %v10510
      %v10599 = vadd.f32 %v10101, %v10515
      %v10600 = vadd.f32 %v10102, %v10518
      %v10601 = vadd.f32 %v10103, %v10523
      %v10602 = vadd.f32 %v10104, %v10526
      %v10603 = vadd.f32 %v10105, %v10531
      %v10604 = vadd.f32 %v10106, %v10534
      %v10605 = vadd.f32 %v10107, %v10539
      %v10606 = vadd.f32 %v10108, %v10542
      %v10607 = vadd.f32 %v10109, %v10547
      %v10608 = vadd.f32 %v10110, %v10550
      %v10609 = vadd.f32 %v10111, %v10555
      %v10610 = vadd.f32 %v10112, %v10558
      %v10611 = vadd.f32 %v10113, %v10563
      %v10612 = vadd.f32 %v10114, %v10566
      %v10613 = vadd.f32 %v10115, %v10571
      %v10614 = vadd.f32 %v10116, %v10574
      %v10615 = vadd.f32 %v10117, %v10579
      %v10616 = vadd.f32 %v10118, %v10582
      %v10617 = vld [vmem:[%s4] sm:$0x1]
      %v10619 = vlaneseq
      %v10620 = vshrl.u32 %v10619, 7
      %v10621 = vsub.s32 0, %v10620
      %v10622 = vrot.slane %v10617, %v10621
      %v10624 = vadd.f32 %v10585, %v10622
      %v10625 = vadd.f32 %v10586, %v10622
      %v10626 = vadd.f32 %v10587, %v10622
      %v10627 = vadd.f32 %v10588, %v10622
      %v10628 = vadd.f32 %v10589, %v10622
      %v10629 = vadd.f32 %v10590, %v10622
      %v10630 = vadd.f32 %v10591, %v10622
      %v10631 = vadd.f32 %v10592, %v10622
      %v10632 = vadd.f32 %v10593, %v10622
      %v10633 = vadd.f32 %v10594, %v10622
      %v10634 = vadd.f32 %v10595, %v10622
      %v10635 = vadd.f32 %v10596, %v10622
      %v10636 = vadd.f32 %v10597, %v10622
      %v10637 = vadd.f32 %v10598, %v10622
      %v10638 = vadd.f32 %v10599, %v10622
      %v10639 = vadd.f32 %v10600, %v10622
      %v10640 = vadd.f32 %v10601, %v10622
      %v10641 = vadd.f32 %v10602, %v10622
      %v10642 = vadd.f32 %v10603, %v10622
      %v10643 = vadd.f32 %v10604, %v10622
      %v10644 = vadd.f32 %v10605, %v10622
      %v10645 = vadd.f32 %v10606, %v10622
      %v10646 = vadd.f32 %v10607, %v10622
      %v10647 = vadd.f32 %v10608, %v10622
      %v10648 = vadd.f32 %v10609, %v10622
      %v10649 = vadd.f32 %v10610, %v10622
      %v10650 = vadd.f32 %v10611, %v10622
      %v10651 = vadd.f32 %v10612, %v10622
      %v10652 = vadd.f32 %v10613, %v10622
      %v10653 = vadd.f32 %v10614, %v10622
      %v10654 = vadd.f32 %v10615, %v10622
      %v10655 = vadd.f32 %v10616, %v10622
      %vm10656 = vcmp.gt.f32.partialorder %v10624, 0.0
      %vm10657 = vcmp.gt.f32.partialorder %v10625, 0.0
      %vm10658 = vcmp.gt.f32.partialorder %v10626, 0.0
      %vm10659 = vcmp.gt.f32.partialorder %v10627, 0.0
      %vm10660 = vcmp.gt.f32.partialorder %v10628, 0.0
      %vm10661 = vcmp.gt.f32.partialorder %v10629, 0.0
      %vm10662 = vcmp.gt.f32.partialorder %v10630, 0.0
      %vm10663 = vcmp.gt.f32.partialorder %v10631, 0.0
      %vm10664 = vcmp.gt.f32.partialorder %v10632, 0.0
      %vm10665 = vcmp.gt.f32.partialorder %v10633, 0.0
      %vm10666 = vcmp.gt.f32.partialorder %v10634, 0.0
      %vm10667 = vcmp.gt.f32.partialorder %v10635, 0.0
      %vm10668 = vcmp.gt.f32.partialorder %v10636, 0.0
      %vm10669 = vcmp.gt.f32.partialorder %v10637, 0.0
      %vm10670 = vcmp.gt.f32.partialorder %v10638, 0.0
      %vm10671 = vcmp.gt.f32.partialorder %v10639, 0.0
      %vm10672 = vcmp.gt.f32.partialorder %v10640, 0.0
      %vm10673 = vcmp.gt.f32.partialorder %v10641, 0.0
      %vm10674 = vcmp.gt.f32.partialorder %v10642, 0.0
      %vm10675 = vcmp.gt.f32.partialorder %v10643, 0.0
      %vm10676 = vcmp.gt.f32.partialorder %v10644, 0.0
      %vm10677 = vcmp.gt.f32.partialorder %v10645, 0.0
      %vm10678 = vcmp.gt.f32.partialorder %v10646, 0.0
      %vm10679 = vcmp.gt.f32.partialorder %v10647, 0.0
      %vm10680 = vcmp.gt.f32.partialorder %v10648, 0.0
      %vm10681 = vcmp.gt.f32.partialorder %v10649, 0.0
      %vm10682 = vcmp.gt.f32.partialorder %v10650, 0.0
      %vm10683 = vcmp.gt.f32.partialorder %v10651, 0.0
      %vm10684 = vcmp.gt.f32.partialorder %v10652, 0.0
      %vm10685 = vcmp.gt.f32.partialorder %v10653, 0.0
      %vm10686 = vcmp.gt.f32.partialorder %v10654, 0.0
      %vm10687 = vcmp.gt.f32.partialorder %v10655, 0.0
      %v10688 = vmul.f32 %v10624, 0.01
      %v10689 = vmul.f32 %v10625, 0.01
      %v10690 = vmul.f32 %v10626, 0.01
      %v10691 = vmul.f32 %v10627, 0.01
      %v10692 = vmul.f32 %v10628, 0.01
      %v10693 = vmul.f32 %v10629, 0.01
      %v10694 = vmul.f32 %v10630, 0.01
      %v10695 = vmul.f32 %v10631, 0.01
      %v10696 = vmul.f32 %v10632, 0.01
      %v10697 = vmul.f32 %v10633, 0.01
      %v10698 = vmul.f32 %v10634, 0.01
      %v10699 = vmul.f32 %v10635, 0.01
      %v10700 = vmul.f32 %v10636, 0.01
      %v10701 = vmul.f32 %v10637, 0.01
      %v10702 = vmul.f32 %v10638, 0.01
      %v10703 = vmul.f32 %v10639, 0.01
      %v10704 = vmul.f32 %v10640, 0.01
      %v10705 = vmul.f32 %v10641, 0.01
      %v10706 = vmul.f32 %v10642, 0.01
      %v10707 = vmul.f32 %v10643, 0.01
      %v10708 = vmul.f32 %v10644, 0.01
      %v10709 = vmul.f32 %v10645, 0.01
      %v10710 = vmul.f32 %v10646, 0.01
      %v10711 = vmul.f32 %v10647, 0.01
      %v10712 = vmul.f32 %v10648, 0.01
      %v10713 = vmul.f32 %v10649, 0.01
      %v10714 = vmul.f32 %v10650, 0.01
      %v10715 = vmul.f32 %v10651, 0.01
      %v10716 = vmul.f32 %v10652, 0.01
      %v10717 = vmul.f32 %v10653, 0.01
      %v10718 = vmul.f32 %v10654, 0.01
      %v10719 = vmul.f32 %v10655, 0.01
      %v10720 = vsel %vm10656, %v10624, %v10688
      %v10721 = vsel %vm10657, %v10625, %v10689
      %v10722 = vsel %vm10658, %v10626, %v10690
      %v10723 = vsel %vm10659, %v10627, %v10691
      %v10724 = vsel %vm10660, %v10628, %v10692
      %v10725 = vsel %vm10661, %v10629, %v10693
      %v10726 = vsel %vm10662, %v10630, %v10694
      %v10727 = vsel %vm10663, %v10631, %v10695
      %v10728 = vsel %vm10664, %v10632, %v10696
      %v10729 = vsel %vm10665, %v10633, %v10697
      %v10730 = vsel %vm10666, %v10634, %v10698
      %v10731 = vsel %vm10667, %v10635, %v10699
      %v10732 = vsel %vm10668, %v10636, %v10700
      %v10733 = vsel %vm10669, %v10637, %v10701
      %v10734 = vsel %vm10670, %v10638, %v10702
      %v10735 = vsel %vm10671, %v10639, %v10703
      %v10736 = vsel %vm10672, %v10640, %v10704
      %v10737 = vsel %vm10673, %v10641, %v10705
      %v10738 = vsel %vm10674, %v10642, %v10706
      %v10739 = vsel %vm10675, %v10643, %v10707
      %v10740 = vsel %vm10676, %v10644, %v10708
      %v10741 = vsel %vm10677, %v10645, %v10709
      %v10742 = vsel %vm10678, %v10646, %v10710
      %v10743 = vsel %vm10679, %v10647, %v10711
      %v10744 = vsel %vm10680, %v10648, %v10712
      %v10745 = vsel %vm10681, %v10649, %v10713
      %v10746 = vsel %vm10682, %v10650, %v10714
      %v10747 = vsel %vm10683, %v10651, %v10715
      %v10748 = vsel %vm10684, %v10652, %v10716
      %v10749 = vsel %vm10685, %v10653, %v10717
      %v10750 = vsel %vm10686, %v10654, %v10718
      %v10751 = vsel %vm10687, %v10655, %v10719
      %v10752 = vld [vmem:[%s1811] sm:$0xf]
      %v10753 = vld [vmem:[%s1811 + $0x4] sm:$0xf]
      %v10754 = vld [vmem:[%s1811 + $0x8] sm:$0x1]
      %v10755 = vld [vmem:[%s1811 + $0xc] sm:$0xf]
      %v10756 = vld [vmem:[%s1811 + $0x10] sm:$0xf]
      %v10757 = vld [vmem:[%s1811 + $0x14] sm:$0x1]
      %v10758 = vld [vmem:[%s1811 + $0x18] sm:$0xf]
      %v10759 = vld [vmem:[%s1811 + $0x1c] sm:$0xf]
      %v10760 = vld [vmem:[%s1811 + $0x20] sm:$0x1]
      %v10761 = vld [vmem:[%s1811 + $0x24] sm:$0xf]
      %v10762 = vld [vmem:[%s1811 + $0x28] sm:$0xf]
      %v10763 = vld [vmem:[%s1811 + $0x2c] sm:$0x1]
      %v10764 = vld [vmem:[%s1811 + $0x30] sm:$0xf]
      %v10765 = vld [vmem:[%s1811 + $0x34] sm:$0xf]
      %v10766 = vld [vmem:[%s1811 + $0x38] sm:$0x1]
      %v10767 = vld [vmem:[%s1811 + $0x3c] sm:$0xf]
      %v10768 = vld [vmem:[%s1811 + $0x40] sm:$0xf]
      %v10769 = vld [vmem:[%s1811 + $0x44] sm:$0x1]
      %v10770 = vld [vmem:[%s1811 + $0x48] sm:$0xf]
      %v10771 = vld [vmem:[%s1811 + $0x4c] sm:$0xf]
      %v10772 = vld [vmem:[%s1811 + $0x50] sm:$0x1]
      %v10773 = vld [vmem:[%s1811 + $0x54] sm:$0xf]
      %v10774 = vld [vmem:[%s1811 + $0x58] sm:$0xf]
      %v10775 = vld [vmem:[%s1811 + $0x5c] sm:$0x1]
      %v10776 = vld [vmem:[%s1811 + $0x60] sm:$0xf]
      %v10777 = vld [vmem:[%s1811 + $0x64] sm:$0xf]
      %v10778 = vld [vmem:[%s1811 + $0x68] sm:$0x1]
      %v10779 = vld [vmem:[%s1811 + $0x6c] sm:$0xf]
      %v10780 = vld [vmem:[%s1811 + $0x70] sm:$0xf]
      %v10781 = vld [vmem:[%s1811 + $0x74] sm:$0x1]
      %v10782 = vld [vmem:[%s1811 + $0x78] sm:$0xf]
      %v10783 = vld [vmem:[%s1811 + $0x7c] sm:$0xf]
      %v10784 = vld [vmem:[%s1811 + $0x80] sm:$0x1]
      %v10785 = vld [vmem:[%s1811 + $0x84] sm:$0xf]
      %v10786 = vld [vmem:[%s1811 + $0x88] sm:$0xf]
      %v10787 = vld [vmem:[%s1811 + $0x8c] sm:$0x1]
      %v10788 = vld [vmem:[%s1811 + $0x90] sm:$0xf]
      %v10789 = vld [vmem:[%s1811 + $0x94] sm:$0xf]
      %v10790 = vld [vmem:[%s1811 + $0x98] sm:$0x1]
      %v10791 = vld [vmem:[%s1811 + $0x9c] sm:$0xf]
      %v10792 = vld [vmem:[%s1811 + $0xa0] sm:$0xf]
      %v10793 = vld [vmem:[%s1811 + $0xa4] sm:$0x1]
      %v10794 = vld [vmem:[%s1811 + $0xa8] sm:$0xf]
      %v10795 = vld [vmem:[%s1811 + $0xac] sm:$0xf]
      %v10796 = vld [vmem:[%s1811 + $0xb0] sm:$0x1]
      %v10797 = vld [vmem:[%s1811 + $0xb4] sm:$0xf]
      %v10798 = vld [vmem:[%s1811 + $0xb8] sm:$0xf]
      %v10799 = vld [vmem:[%s1811 + $0xbc] sm:$0x1]
      %v10801 = vshrl.u32 %v10752, 16
      %v10803 = vrot.slane %v10801, 4
      %v10804 = vshll.u32 %v10752, 16
      %v10806 = vrot.slane %v10804, 5
      %v10807 = vor.u32 %v10803, %v10806
      %v10808 = vrot.slane %v10807, 4
      %v10810 = vshll.u32 %v10753, 16
      %v10812 = vrot.slane %v10810, 5
      %v10813 = vsel %vm346, %v10808, %v10812
      %v10814 = vshrl.u32 %v10753, 16
      %v10816 = vrot.slane %v10814, 4
      %v10817 = vor.u32 %v10816, %v10812
      %v10818 = vrot.slane %v10817, 4
      %v10820 = vshll.u32 %v10754, 16
      %v10822 = vrot.slane %v10820, 5
      %v10823 = vsel %vm346, %v10818, %v10822
      %v10825 = vshrl.u32 %v10755, 16
      %v10827 = vrot.slane %v10825, 4
      %v10828 = vshll.u32 %v10755, 16
      %v10830 = vrot.slane %v10828, 5
      %v10831 = vor.u32 %v10827, %v10830
      %v10832 = vrot.slane %v10831, 4
      %v10834 = vshll.u32 %v10756, 16
      %v10836 = vrot.slane %v10834, 5
      %v10837 = vsel %vm346, %v10832, %v10836
      %v10838 = vshrl.u32 %v10756, 16
      %v10840 = vrot.slane %v10838, 4
      %v10841 = vor.u32 %v10840, %v10836
      %v10842 = vrot.slane %v10841, 4
      %v10844 = vshll.u32 %v10757, 16
      %v10846 = vrot.slane %v10844, 5
      %v10847 = vsel %vm346, %v10842, %v10846
      %v10849 = vshrl.u32 %v10758, 16
      %v10851 = vrot.slane %v10849, 4
      %v10852 = vshll.u32 %v10758, 16
      %v10854 = vrot.slane %v10852, 5
      %v10855 = vor.u32 %v10851, %v10854
      %v10856 = vrot.slane %v10855, 4
      %v10858 = vshll.u32 %v10759, 16
      %v10860 = vrot.slane %v10858, 5
      %v10861 = vsel %vm346, %v10856, %v10860
      %v10862 = vshrl.u32 %v10759, 16
      %v10864 = vrot.slane %v10862, 4
      %v10865 = vor.u32 %v10864, %v10860
      %v10866 = vrot.slane %v10865, 4
      %v10868 = vshll.u32 %v10760, 16
      %v10870 = vrot.slane %v10868, 5
      %v10871 = vsel %vm346, %v10866, %v10870
      %v10873 = vshrl.u32 %v10761, 16
      %v10875 = vrot.slane %v10873, 4
      %v10876 = vshll.u32 %v10761, 16
      %v10878 = vrot.slane %v10876, 5
      %v10879 = vor.u32 %v10875, %v10878
      %v10880 = vrot.slane %v10879, 4
      %v10882 = vshll.u32 %v10762, 16
      %v10884 = vrot.slane %v10882, 5
      %v10885 = vsel %vm346, %v10880, %v10884
      %v10886 = vshrl.u32 %v10762, 16
      %v10888 = vrot.slane %v10886, 4
      %v10889 = vor.u32 %v10888, %v10884
      %v10890 = vrot.slane %v10889, 4
      %v10892 = vshll.u32 %v10763, 16
      %v10894 = vrot.slane %v10892, 5
      %v10895 = vsel %vm346, %v10890, %v10894
      %v10897 = vshrl.u32 %v10764, 16
      %v10899 = vrot.slane %v10897, 4
      %v10900 = vshll.u32 %v10764, 16
      %v10902 = vrot.slane %v10900, 5
      %v10903 = vor.u32 %v10899, %v10902
      %v10904 = vrot.slane %v10903, 4
      %v10906 = vshll.u32 %v10765, 16
      %v10908 = vrot.slane %v10906, 5
      %v10909 = vsel %vm346, %v10904, %v10908
      %v10910 = vshrl.u32 %v10765, 16
      %v10912 = vrot.slane %v10910, 4
      %v10913 = vor.u32 %v10912, %v10908
      %v10914 = vrot.slane %v10913, 4
      %v10916 = vshll.u32 %v10766, 16
      %v10918 = vrot.slane %v10916, 5
      %v10919 = vsel %vm346, %v10914, %v10918
      %v10921 = vshrl.u32 %v10767, 16
      %v10923 = vrot.slane %v10921, 4
      %v10924 = vshll.u32 %v10767, 16
      %v10926 = vrot.slane %v10924, 5
      %v10927 = vor.u32 %v10923, %v10926
      %v10928 = vrot.slane %v10927, 4
      %v10930 = vshll.u32 %v10768, 16
      %v10932 = vrot.slane %v10930, 5
      %v10933 = vsel %vm346, %v10928, %v10932
      %v10934 = vshrl.u32 %v10768, 16
      %v10936 = vrot.slane %v10934, 4
      %v10937 = vor.u32 %v10936, %v10932
      %v10938 = vrot.slane %v10937, 4
      %v10940 = vshll.u32 %v10769, 16
      %v10942 = vrot.slane %v10940, 5
      %v10943 = vsel %vm346, %v10938, %v10942
      %v10945 = vshrl.u32 %v10770, 16
      %v10947 = vrot.slane %v10945, 4
      %v10948 = vshll.u32 %v10770, 16
      %v10950 = vrot.slane %v10948, 5
      %v10951 = vor.u32 %v10947, %v10950
      %v10952 = vrot.slane %v10951, 4
      %v10954 = vshll.u32 %v10771, 16
      %v10956 = vrot.slane %v10954, 5
      %v10957 = vsel %vm346, %v10952, %v10956
      %v10958 = vshrl.u32 %v10771, 16
      %v10960 = vrot.slane %v10958, 4
      %v10961 = vor.u32 %v10960, %v10956
      %v10962 = vrot.slane %v10961, 4
      %v10964 = vshll.u32 %v10772, 16
      %v10966 = vrot.slane %v10964, 5
      %v10967 = vsel %vm346, %v10962, %v10966
      %v10969 = vshrl.u32 %v10773, 16
      %v10971 = vrot.slane %v10969, 4
      %v10972 = vshll.u32 %v10773, 16
      %v10974 = vrot.slane %v10972, 5
      %v10975 = vor.u32 %v10971, %v10974
      %v10976 = vrot.slane %v10975, 4
      %v10978 = vshll.u32 %v10774, 16
      %v10980 = vrot.slane %v10978, 5
      %v10981 = vsel %vm346, %v10976, %v10980
      %v10982 = vshrl.u32 %v10774, 16
      %v10984 = vrot.slane %v10982, 4
      %v10985 = vor.u32 %v10984, %v10980
      %v10986 = vrot.slane %v10985, 4
      %v10988 = vshll.u32 %v10775, 16
      %v10990 = vrot.slane %v10988, 5
      %v10991 = vsel %vm346, %v10986, %v10990
      %v10993 = vshrl.u32 %v10776, 16
      %v10995 = vrot.slane %v10993, 4
      %v10996 = vshll.u32 %v10776, 16
      %v10998 = vrot.slane %v10996, 5
      %v10999 = vor.u32 %v10995, %v10998
      %v11000 = vrot.slane %v10999, 4
      %v11002 = vshll.u32 %v10777, 16
      %v11004 = vrot.slane %v11002, 5
      %v11005 = vsel %vm346, %v11000, %v11004
      %v11006 = vshrl.u32 %v10777, 16
      %v11008 = vrot.slane %v11006, 4
      %v11009 = vor.u32 %v11008, %v11004
      %v11010 = vrot.slane %v11009, 4
      %v11012 = vshll.u32 %v10778, 16
      %v11014 = vrot.slane %v11012, 5
      %v11015 = vsel %vm346, %v11010, %v11014
      %v11017 = vshrl.u32 %v10779, 16
      %v11019 = vrot.slane %v11017, 4
      %v11020 = vshll.u32 %v10779, 16
      %v11022 = vrot.slane %v11020, 5
      %v11023 = vor.u32 %v11019, %v11022
      %v11024 = vrot.slane %v11023, 4
      %v11026 = vshll.u32 %v10780, 16
      %v11028 = vrot.slane %v11026, 5
      %v11029 = vsel %vm346, %v11024, %v11028
      %v11030 = vshrl.u32 %v10780, 16
      %v11032 = vrot.slane %v11030, 4
      %v11033 = vor.u32 %v11032, %v11028
      %v11034 = vrot.slane %v11033, 4
      %v11036 = vshll.u32 %v10781, 16
      %v11038 = vrot.slane %v11036, 5
      %v11039 = vsel %vm346, %v11034, %v11038
      %v11041 = vshrl.u32 %v10782, 16
      %v11043 = vrot.slane %v11041, 4
      %v11044 = vshll.u32 %v10782, 16
      %v11046 = vrot.slane %v11044, 5
      %v11047 = vor.u32 %v11043, %v11046
      %v11048 = vrot.slane %v11047, 4
      %v11050 = vshll.u32 %v10783, 16
      %v11052 = vrot.slane %v11050, 5
      %v11053 = vsel %vm346, %v11048, %v11052
      %v11054 = vshrl.u32 %v10783, 16
      %v11056 = vrot.slane %v11054, 4
      %v11057 = vor.u32 %v11056, %v11052
      %v11058 = vrot.slane %v11057, 4
      %v11060 = vshll.u32 %v10784, 16
      %v11062 = vrot.slane %v11060, 5
      %v11063 = vsel %vm346, %v11058, %v11062
      %v11065 = vshrl.u32 %v10785, 16
      %v11067 = vrot.slane %v11065, 4
      %v11068 = vshll.u32 %v10785, 16
      %v11070 = vrot.slane %v11068, 5
      %v11071 = vor.u32 %v11067, %v11070
      %v11072 = vrot.slane %v11071, 4
      %v11074 = vshll.u32 %v10786, 16
      %v11076 = vrot.slane %v11074, 5
      %v11077 = vsel %vm346, %v11072, %v11076
      %v11078 = vshrl.u32 %v10786, 16
      %v11080 = vrot.slane %v11078, 4
      %v11081 = vor.u32 %v11080, %v11076
      %v11082 = vrot.slane %v11081, 4
      %v11084 = vshll.u32 %v10787, 16
      %v11086 = vrot.slane %v11084, 5
      %v11087 = vsel %vm346, %v11082, %v11086
      %v11089 = vshrl.u32 %v10788, 16
      %v11091 = vrot.slane %v11089, 4
      %v11092 = vshll.u32 %v10788, 16
      %v11094 = vrot.slane %v11092, 5
      %v11095 = vor.u32 %v11091, %v11094
      %v11096 = vrot.slane %v11095, 4
      %v11098 = vshll.u32 %v10789, 16
      %v11100 = vrot.slane %v11098, 5
      %v11101 = vsel %vm346, %v11096, %v11100
      %v11102 = vshrl.u32 %v10789, 16
      %v11104 = vrot.slane %v11102, 4
      %v11105 = vor.u32 %v11104, %v11100
      %v11106 = vrot.slane %v11105, 4
      %v11108 = vshll.u32 %v10790, 16
      %v11110 = vrot.slane %v11108, 5
      %v11111 = vsel %vm346, %v11106, %v11110
      %v11113 = vshrl.u32 %v10791, 16
      %v11115 = vrot.slane %v11113, 4
      %v11116 = vshll.u32 %v10791, 16
      %v11118 = vrot.slane %v11116, 5
      %v11119 = vor.u32 %v11115, %v11118
      %v11120 = vrot.slane %v11119, 4
      %v11122 = vshll.u32 %v10792, 16
      %v11124 = vrot.slane %v11122, 5
      %v11125 = vsel %vm346, %v11120, %v11124
      %v11126 = vshrl.u32 %v10792, 16
      %v11128 = vrot.slane %v11126, 4
      %v11129 = vor.u32 %v11128, %v11124
      %v11130 = vrot.slane %v11129, 4
      %v11132 = vshll.u32 %v10793, 16
      %v11134 = vrot.slane %v11132, 5
      %v11135 = vsel %vm346, %v11130, %v11134
      %v11137 = vshrl.u32 %v10794, 16
      %v11139 = vrot.slane %v11137, 4
      %v11140 = vshll.u32 %v10794, 16
      %v11142 = vrot.slane %v11140, 5
      %v11143 = vor.u32 %v11139, %v11142
      %v11144 = vrot.slane %v11143, 4
      %v11146 = vshll.u32 %v10795, 16
      %v11148 = vrot.slane %v11146, 5
      %v11149 = vsel %vm346, %v11144, %v11148
      %v11150 = vshrl.u32 %v10795, 16
      %v11152 = vrot.slane %v11150, 4
      %v11153 = vor.u32 %v11152, %v11148
      %v11154 = vrot.slane %v11153, 4
      %v11156 = vshll.u32 %v10796, 16
      %v11158 = vrot.slane %v11156, 5
      %v11159 = vsel %vm346, %v11154, %v11158
      %v11161 = vshrl.u32 %v10797, 16
      %v11163 = vrot.slane %v11161, 4
      %v11164 = vshll.u32 %v10797, 16
      %v11166 = vrot.slane %v11164, 5
      %v11167 = vor.u32 %v11163, %v11166
      %v11168 = vrot.slane %v11167, 4
      %v11170 = vshll.u32 %v10798, 16
      %v11172 = vrot.slane %v11170, 5
      %v11173 = vsel %vm346, %v11168, %v11172
      %v11174 = vshrl.u32 %v10798, 16
      %v11176 = vrot.slane %v11174, 4
      %v11177 = vor.u32 %v11176, %v11172
      %v11178 = vrot.slane %v11177, 4
      %v11180 = vshll.u32 %v10799, 16
      %v11182 = vrot.slane %v11180, 5
      %v11183 = vsel %vm346, %v11178, %v11182
      %v11184 = vld [vmem:[%s5] sm:$0xf]
      %v11185 = vld [vmem:[%s5 + $0x4] sm:$0xf]
      %v11186 = vld [vmem:[%s5 + $0x8] sm:$0xf]
      %v11187 = vld [vmem:[%s5 + $0xc] sm:$0xf]
      %v11188 = vld [vmem:[%s5 + $0x10] sm:$0xf]
      %v11189 = vld [vmem:[%s5 + $0x14] sm:$0xf]
      %v11190 = vld [vmem:[%s5 + $0x18] sm:$0xf]
      %v11191 = vld [vmem:[%s5 + $0x1c] sm:$0xf]
      %v11192 = vld [vmem:[%s5 + $0x20] sm:$0xf]
      %v11193 = vld [vmem:[%s5 + $0x24] sm:$0xf]
      %v11194 = vld [vmem:[%s5 + $0x28] sm:$0xf]
      %v11195 = vld [vmem:[%s5 + $0x2c] sm:$0xf]
      %v11196 = vld [vmem:[%s5 + $0x30] sm:$0xf]
      %v11197 = vld [vmem:[%s5 + $0x34] sm:$0xf]
      %v11198 = vld [vmem:[%s5 + $0x38] sm:$0xf]
      %v11199 = vld [vmem:[%s5 + $0x3c] sm:$0xf]
      %v11200 = vld [vmem:[%s6] sm:$0x1]
      %v11202 = vlaneseq
      %v11203 = vshrl.u32 %v11202, 7
      %v11204 = vsub.s32 0, %v11203
      %v11205 = vrot.slane %v11200, %v11204
      %v11207 = vunpack.c.l.b16 %v10813
      %v11208 = vunpack.c.l.b16 %v10823
      %v11209 = vunpack.c.l.b16 %v10837
      %v11210 = vunpack.c.l.b16 %v10847
      %v11211 = vunpack.c.l.b16 %v10861
      %v11212 = vunpack.c.l.b16 %v10871
      %v11213 = vunpack.c.l.b16 %v10885
      %v11214 = vunpack.c.l.b16 %v10895
      %v11215 = vunpack.c.l.b16 %v10909
      %v11216 = vunpack.c.l.b16 %v10919
      %v11217 = vunpack.c.l.b16 %v10933
      %v11218 = vunpack.c.l.b16 %v10943
      %v11219 = vunpack.c.l.b16 %v10957
      %v11220 = vunpack.c.l.b16 %v10967
      %v11221 = vunpack.c.l.b16 %v10981
      %v11222 = vunpack.c.l.b16 %v10991
      %v11223 = vunpack.c.l.b16 %v11005
      %v11224 = vunpack.c.l.b16 %v11015
      %v11225 = vunpack.c.l.b16 %v11029
      %v11226 = vunpack.c.l.b16 %v11039
      %v11227 = vunpack.c.l.b16 %v11053
      %v11228 = vunpack.c.l.b16 %v11063
      %v11229 = vunpack.c.l.b16 %v11077
      %v11230 = vunpack.c.l.b16 %v11087
      %v11231 = vunpack.c.l.b16 %v11101
      %v11232 = vunpack.c.l.b16 %v11111
      %v11233 = vunpack.c.l.b16 %v11125
      %v11234 = vunpack.c.l.b16 %v11135
      %v11235 = vunpack.c.l.b16 %v11149
      %v11236 = vunpack.c.l.b16 %v11159
      %v11237 = vunpack.c.l.b16 %v11173
      %v11238 = vunpack.c.l.b16 %v11183
      %v11239 = vpack.c.b16 %v11208, %v11207
      %v11240 = vpack.c.b16 %v11210, %v11209
      %v11241 = vpack.c.b16 %v11212, %v11211
      %v11242 = vpack.c.b16 %v11214, %v11213
      %v11243 = vpack.c.b16 %v11216, %v11215
      %v11244 = vpack.c.b16 %v11218, %v11217
      %v11245 = vpack.c.b16 %v11220, %v11219
      %v11246 = vpack.c.b16 %v11222, %v11221
      %v11247 = vpack.c.b16 %v11224, %v11223
      %v11248 = vpack.c.b16 %v11226, %v11225
      %v11249 = vpack.c.b16 %v11228, %v11227
      %v11250 = vpack.c.b16 %v11230, %v11229
      %v11251 = vpack.c.b16 %v11232, %v11231
      %v11252 = vpack.c.b16 %v11234, %v11233
      %v11253 = vpack.c.b16 %v11236, %v11235
      %v11254 = vpack.c.b16 %v11238, %v11237
      %v11287 = vunpack.c.l.b16 %v11184
      %v11288 = vunpack.c.l.b16 %v11185
      %v11289 = vunpack.c.l.b16 %v11186
      %v11290 = vunpack.c.l.b16 %v11187
      %v11291 = vunpack.c.l.b16 %v11188
      %v11292 = vunpack.c.l.b16 %v11189
      %v11293 = vunpack.c.l.b16 %v11190
      %v11294 = vunpack.c.l.b16 %v11191
      %v11295 = vunpack.c.l.b16 %v11192
      %v11296 = vunpack.c.l.b16 %v11193
      %v11297 = vunpack.c.l.b16 %v11194
      %v11298 = vunpack.c.l.b16 %v11195
      %v11299 = vunpack.c.l.b16 %v11196
      %v11300 = vunpack.c.l.b16 %v11197
      %v11301 = vunpack.c.l.b16 %v11198
      %v11302 = vunpack.c.l.b16 %v11199
      %v11303 = vpack.c.b16 %v11288, %v11287
      %v11304 = vpack.c.b16 %v11290, %v11289
      %v11305 = vpack.c.b16 %v11292, %v11291
      %v11306 = vpack.c.b16 %v11294, %v11293
      %v11307 = vpack.c.b16 %v11296, %v11295
      %v11308 = vpack.c.b16 %v11298, %v11297
      %v11309 = vpack.c.b16 %v11300, %v11299
      %v11310 = vpack.c.b16 %v11302, %v11301
      %11319 = vmatprep.subr.bf16.mxu0 0
      %11320 = vmatpush1.bf16.msra.mxu0 %v11303
      %11321 = vmatprep.subr.bf16.mxu0 0
      %11322 = vmatpush1.bf16.msra.mxu0 %v11304
      %11323 = vmatprep.subr.bf16.mxu0 0
      %11324 = vmatpush1.bf16.msra.mxu0 %v11305
      %11325 = vmatprep.subr.bf16.mxu0 0
      %11326 = vmatpush1.bf16.msra.mxu0 %v11306
      %11327 = vmatprep.subr.bf16.mxu0 0
      %11328 = vmatpush1.bf16.msra.mxu0 %v11307
      %11329 = vmatprep.subr.bf16.mxu0 0
      %11330 = vmatpush1.bf16.msra.mxu0 %v11308
      %11331 = vmatprep.subr.bf16.mxu0 0
      %11332 = vmatpush1.bf16.msra.mxu0 %v11309
      %11333 = vmatprep.subr.bf16.mxu0 0
      %11334 = vmatpush1.bf16.msra.mxu0 %v11310
      %11335 = vmatprep.subr.bf16.mxu0 0
      %11336 = vmatpush1.bf16.msra.mxu0 0
      %11337 = vmatprep.subr.bf16.mxu0 0
      %11338 = vmatpush1.bf16.msra.mxu0 0
      %11339 = vmatprep.subr.bf16.mxu0 0
      %11340 = vmatpush1.bf16.msra.mxu0 0
      %11341 = vmatprep.subr.bf16.mxu0 0
      %11342 = vmatpush1.bf16.msra.mxu0 0
      %11343 = vmatprep.subr.bf16.mxu0 0
      %11344 = vmatpush1.bf16.msra.mxu0 0
      %11345 = vmatprep.subr.bf16.mxu0 0
      %11346 = vmatpush1.bf16.msra.mxu0 0
      %11347 = vmatprep.subr.bf16.mxu0 0
      %11348 = vmatpush1.bf16.msra.mxu0 0
      %11349 = vmatprep.subr.bf16.mxu0 0
      %11350 = vmatpush1.bf16.msra.mxu0 0
      %11351 = vmatprep.mubr.bf16.mxu0 0
      %11352 = vmatmul.mubr.bf16.gmra.mrb[0].mxu0 %v11239
      %v11353 = vpop.f32.mrb[0].mxu0
      %v11354 = vadd.f32 %v11205, %v11353
      %v11355 = vpop.f32.mrb[0].mxu0
      %v11356 = vpop.f32.mrb[0].mxu0
      %v11357 = vadd.f32 %v11205, %v11356
      %v11358 = vpop.f32.mrb[0].mxu0
      %11359 = vmatprep.mubr.bf16.mxu0 0
      %11360 = vmatmul.mubr.bf16.gmra.mrb[0].mxu0 %v11240
      %v11361 = vpop.f32.mrb[0].mxu0
      %v11362 = vadd.f32 %v11205, %v11361
      %v11363 = vpop.f32.mrb[0].mxu0
      %v11364 = vpop.f32.mrb[0].mxu0
      %v11365 = vadd.f32 %v11205, %v11364
      %v11366 = vpop.f32.mrb[0].mxu0
      %11367 = vmatprep.mubr.bf16.mxu0 0
      %11368 = vmatmul.mubr.bf16.gmra.mrb[0].mxu0 %v11241
      %v11369 = vpop.f32.mrb[0].mxu0
      %v11370 = vadd.f32 %v11205, %v11369
      %v11371 = vpop.f32.mrb[0].mxu0
      %v11372 = vpop.f32.mrb[0].mxu0
      %v11373 = vadd.f32 %v11205, %v11372
      %v11374 = vpop.f32.mrb[0].mxu0
      %11375 = vmatprep.mubr.bf16.mxu0 0
      %11376 = vmatmul.mubr.bf16.gmra.mrb[0].mxu0 %v11242
      %v11377 = vpop.f32.mrb[0].mxu0
      %v11378 = vadd.f32 %v11205, %v11377
      %v11379 = vpop.f32.mrb[0].mxu0
      %v11380 = vpop.f32.mrb[0].mxu0
      %v11381 = vadd.f32 %v11205, %v11380
      %v11382 = vpop.f32.mrb[0].mxu0
      %11383 = vmatprep.mubr.bf16.mxu0 0
      %11384 = vmatmul.mubr.bf16.gmra.mrb[0].mxu0 %v11243
      %v11385 = vpop.f32.mrb[0].mxu0
      %v11386 = vadd.f32 %v11205, %v11385
      %v11387 = vpop.f32.mrb[0].mxu0
      %v11388 = vpop.f32.mrb[0].mxu0
      %v11389 = vadd.f32 %v11205, %v11388
      %v11390 = vpop.f32.mrb[0].mxu0
      %11391 = vmatprep.mubr.bf16.mxu0 0
      %11392 = vmatmul.mubr.bf16.gmra.mrb[0].mxu0 %v11244
      %v11393 = vpop.f32.mrb[0].mxu0
      %v11394 = vadd.f32 %v11205, %v11393
      %v11395 = vpop.f32.mrb[0].mxu0
      %v11396 = vpop.f32.mrb[0].mxu0
      %v11397 = vadd.f32 %v11205, %v11396
      %v11398 = vpop.f32.mrb[0].mxu0
      %11399 = vmatprep.mubr.bf16.mxu0 0
      %11400 = vmatmul.mubr.bf16.gmra.mrb[0].mxu0 %v11245
      %v11401 = vpop.f32.mrb[0].mxu0
      %v11402 = vadd.f32 %v11205, %v11401
      %v11403 = vpop.f32.mrb[0].mxu0
      %v11404 = vpop.f32.mrb[0].mxu0
      %v11405 = vadd.f32 %v11205, %v11404
      %v11406 = vpop.f32.mrb[0].mxu0
      %11407 = vmatprep.mubr.bf16.mxu0 0
      %11408 = vmatmul.mubr.bf16.gmra.mrb[0].mxu0 %v11246
      %v11409 = vpop.f32.mrb[0].mxu0
      %v11410 = vadd.f32 %v11205, %v11409
      %v11411 = vpop.f32.mrb[0].mxu0
      %v11412 = vpop.f32.mrb[0].mxu0
      %v11413 = vadd.f32 %v11205, %v11412
      %v11414 = vpop.f32.mrb[0].mxu0
      %11415 = vmatprep.mubr.bf16.mxu0 0
      %11416 = vmatmul.mubr.bf16.gmra.mrb[0].mxu0 %v11247
      %v11417 = vpop.f32.mrb[0].mxu0
      %v11418 = vadd.f32 %v11205, %v11417
      %v11419 = vpop.f32.mrb[0].mxu0
      %v11420 = vpop.f32.mrb[0].mxu0
      %v11421 = vadd.f32 %v11205, %v11420
      %v11422 = vpop.f32.mrb[0].mxu0
      %11423 = vmatprep.mubr.bf16.mxu0 0
      %11424 = vmatmul.mubr.bf16.gmra.mrb[0].mxu0 %v11248
      %v11425 = vpop.f32.mrb[0].mxu0
      %v11426 = vadd.f32 %v11205, %v11425
      %v11427 = vpop.f32.mrb[0].mxu0
      %v11428 = vpop.f32.mrb[0].mxu0
      %v11429 = vadd.f32 %v11205, %v11428
      %v11430 = vpop.f32.mrb[0].mxu0
      %11431 = vmatprep.mubr.bf16.mxu0 0
      %11432 = vmatmul.mubr.bf16.gmra.mrb[0].mxu0 %v11249
      %v11433 = vpop.f32.mrb[0].mxu0
      %v11434 = vadd.f32 %v11205, %v11433
      %v11435 = vpop.f32.mrb[0].mxu0
      %v11436 = vpop.f32.mrb[0].mxu0
      %v11437 = vadd.f32 %v11205, %v11436
      %v11438 = vpop.f32.mrb[0].mxu0
      %11439 = vmatprep.mubr.bf16.mxu0 0
      %11440 = vmatmul.mubr.bf16.gmra.mrb[0].mxu0 %v11250
      %v11441 = vpop.f32.mrb[0].mxu0
      %v11442 = vadd.f32 %v11205, %v11441
      %v11443 = vpop.f32.mrb[0].mxu0
      %v11444 = vpop.f32.mrb[0].mxu0
      %v11445 = vadd.f32 %v11205, %v11444
      %v11446 = vpop.f32.mrb[0].mxu0
      %11447 = vmatprep.mubr.bf16.mxu0 0
      %11448 = vmatmul.mubr.bf16.gmra.mrb[0].mxu0 %v11251
      %v11449 = vpop.f32.mrb[0].mxu0
      %v11450 = vadd.f32 %v11205, %v11449
      %v11451 = vpop.f32.mrb[0].mxu0
      %v11452 = vpop.f32.mrb[0].mxu0
      %v11453 = vadd.f32 %v11205, %v11452
      %v11454 = vpop.f32.mrb[0].mxu0
      %11455 = vmatprep.mubr.bf16.mxu0 0
      %11456 = vmatmul.mubr.bf16.gmra.mrb[0].mxu0 %v11252
      %v11457 = vpop.f32.mrb[0].mxu0
      %v11458 = vadd.f32 %v11205, %v11457
      %v11459 = vpop.f32.mrb[0].mxu0
      %v11460 = vpop.f32.mrb[0].mxu0
      %v11461 = vadd.f32 %v11205, %v11460
      %v11462 = vpop.f32.mrb[0].mxu0
      %11463 = vmatprep.mubr.bf16.mxu0 0
      %11464 = vmatmul.mubr.bf16.gmra.mrb[0].mxu0 %v11253
      %v11465 = vpop.f32.mrb[0].mxu0
      %v11466 = vadd.f32 %v11205, %v11465
      %v11467 = vpop.f32.mrb[0].mxu0
      %v11468 = vpop.f32.mrb[0].mxu0
      %v11469 = vadd.f32 %v11205, %v11468
      %v11470 = vpop.f32.mrb[0].mxu0
      %11471 = vmatprep.mubr.bf16.mxu0 0
      %11472 = vmatmul.mubr.bf16.gmra.mrb[0].mxu0 %v11254
      %v11473 = vpop.f32.mrb[0].mxu0
      %v11474 = vadd.f32 %v11205, %v11473
      %v11475 = vpop.f32.mrb[0].mxu0
      %v11476 = vpop.f32.mrb[0].mxu0
      %v11477 = vadd.f32 %v11205, %v11476
      %v11478 = vpop.f32.mrb[0].mxu0
      %11479 = vdwg.mxu0
      %v11480 = vadd.f32 %v10720, %v11354
      %v11481 = vadd.f32 %v10721, %v11357
      %v11482 = vadd.f32 %v10722, %v11362
      %v11483 = vadd.f32 %v10723, %v11365
      %v11484 = vadd.f32 %v10724, %v11370
      %v11485 = vadd.f32 %v10725, %v11373
      %v11486 = vadd.f32 %v10726, %v11378
      %v11487 = vadd.f32 %v10727, %v11381
      %v11488 = vadd.f32 %v10728, %v11386
      %v11489 = vadd.f32 %v10729, %v11389
      %v11490 = vadd.f32 %v10730, %v11394
      %v11491 = vadd.f32 %v10731, %v11397
      %v11492 = vadd.f32 %v10732, %v11402
      %v11493 = vadd.f32 %v10733, %v11405
      %v11494 = vadd.f32 %v10734, %v11410
      %v11495 = vadd.f32 %v10735, %v11413
      %v11496 = vadd.f32 %v10736, %v11418
      %v11497 = vadd.f32 %v10737, %v11421
      %v11498 = vadd.f32 %v10738, %v11426
      %v11499 = vadd.f32 %v10739, %v11429
      %v11500 = vadd.f32 %v10740, %v11434
      %v11501 = vadd.f32 %v10741, %v11437
      %v11502 = vadd.f32 %v10742, %v11442
      %v11503 = vadd.f32 %v10743, %v11445
      %v11504 = vadd.f32 %v10744, %v11450
      %v11505 = vadd.f32 %v10745, %v11453
      %v11506 = vadd.f32 %v10746, %v11458
      %v11507 = vadd.f32 %v10747, %v11461
      %v11508 = vadd.f32 %v10748, %v11466
      %v11509 = vadd.f32 %v10749, %v11469
      %v11510 = vadd.f32 %v10750, %v11474
      %v11511 = vadd.f32 %v10751, %v11477
      %11512 = vst [vmem:[%s278] sm:$0xff] %v11480
      %11513 = vst [vmem:[%s278 + $0x8] sm:$0xff] %v11481
      %11514 = vst [vmem:[%s278 + $0x10] sm:$0xff] %v11482
      %11515 = vst [vmem:[%s278 + $0x18] sm:$0xff] %v11483
      %11516 = vst [vmem:[%s278 + $0x20] sm:$0xff] %v11484
      %11517 = vst [vmem:[%s278 + $0x28] sm:$0xff] %v11485
      %11518 = vst [vmem:[%s278 + $0x30] sm:$0xff] %v11486
      %11519 = vst [vmem:[%s278 + $0x38] sm:$0xff] %v11487
      %11520 = vst [vmem:[%s278 + $0x40] sm:$0xff] %v11488
      %11521 = vst [vmem:[%s278 + $0x48] sm:$0xff] %v11489
      %11522 = vst [vmem:[%s278 + $0x50] sm:$0xff] %v11490
      %11523 = vst [vmem:[%s278 + $0x58] sm:$0xff] %v11491
      %11524 = vst [vmem:[%s278 + $0x60] sm:$0xff] %v11492
      %11525 = vst [vmem:[%s278 + $0x68] sm:$0xff] %v11493
      %11526 = vst [vmem:[%s278 + $0x70] sm:$0xff] %v11494
      %11527 = vst [vmem:[%s278 + $0x78] sm:$0xff] %v11495
      %11528 = vst [vmem:[%s278 + $0x80] sm:$0xff] %v11496
      %11529 = vst [vmem:[%s278 + $0x88] sm:$0xff] %v11497
      %11530 = vst [vmem:[%s278 + $0x90] sm:$0xff] %v11498
      %11531 = vst [vmem:[%s278 + $0x98] sm:$0xff] %v11499
      %11532 = vst [vmem:[%s278 + $0xa0] sm:$0xff] %v11500
      %11533 = vst [vmem:[%s278 + $0xa8] sm:$0xff] %v11501
      %11534 = vst [vmem:[%s278 + $0xb0] sm:$0xff] %v11502
      %11535 = vst [vmem:[%s278 + $0xb8] sm:$0xff] %v11503
      %11536 = vst [vmem:[%s278 + $0xc0] sm:$0xff] %v11504
      %11537 = vst [vmem:[%s278 + $0xc8] sm:$0xff] %v11505
      %11538 = vst [vmem:[%s278 + $0xd0] sm:$0xff] %v11506
      %11539 = vst [vmem:[%s278 + $0xd8] sm:$0xff] %v11507
      %11540 = vst [vmem:[%s278 + $0xe0] sm:$0xff] %v11508
      %11541 = vst [vmem:[%s278 + $0xe8] sm:$0xff] %v11509
      %11542 = vst [vmem:[%s278 + $0xf0] sm:$0xff] %v11510
      %11543 = vst [vmem:[%s278 + $0xf8] sm:$0xff] %v11511
      %p11544 = scmp.lt.s32.totalorder %s18, 1
      %s11545 = scalar_select %p11544, %s18, 1
      %s11546 = smul.addr %s11545, 32
      %s11547 = smul.addr %s11546, 8
      %s11548 = scalar_lea.vmem %s7, %s11547
      // Predicated region
      $region49: #{residual_block_pallas.1} parent=47 // pred_check
        %p11549 = pneg %p188
      $region50: #{residual_block_pallas.1} parent=47 // pred_check_branch
        %11551 = sbr.rel (%p11549) target = $region52
      $region51: #{residual_block_pallas.1} parent=47 // pred_region
        _
      $region52: #{residual_block_pallas.1} parent=47 // pred_fallthru
        _
    $region48: #{residual_block_pallas.1} parent=5 // pred_fallthru
      _
    %p11552 = scmp.le.s32.totalorder 2, %s13
    // Predicated region
    $region53: #{residual_block_pallas.1} parent=5 // pred_check
      %p11553 = pneg %p11552
    $region54: #{residual_block_pallas.1} parent=5 // pred_check_branch
      %11555 = sbr.rel (%p11553) target = $region56
    $region55: #{residual_block_pallas.1} parent=5 // pred_region
      %s11556 = ssub.s32 %s13, 2
      // Predicated region
      $region57: #{residual_block_pallas.1} parent=55 // pred_check
        %p11557 = pneg %p194
      $region58: #{residual_block_pallas.1} parent=55 // pred_check_branch
        %11559 = sbr.rel (%p11557) target = $region60
      $region59: #{residual_block_pallas.1} parent=55 // pred_region
        %p11560 = scmp.lt.s32.totalorder %s19, 1
        %s11561 = scalar_select %p11560, %s19, 1
        %s11562 = smul.addr %s11561, 32
        %s11563 = smul.addr %s11562, 8
        %s11564 = scalar_lea.vmem %s7, %s11563
      $region60: #{residual_block_pallas.1} parent=55 // pred_fallthru
        _
    $region56: #{residual_block_pallas.1} parent=5 // pred_fallthru
      _
  $region6: #{residual_block_pallas.1} parent=0 // loop_footer
    %s17 = sadd.s32 1, %s13
  $region7: #{residual_block_pallas.1} parent=0 // loop_footer_branch
    %12 = sbr.rel target = $region3
  $region8: #{residual_block_pallas.1} parent=0 // loop_exit
    _

</llo_original>
